<compile_context>
chip_gen: v5e
topology: v5e:2x2
jax: 0.10.0
libtpu: 0.0.40
codegen_flags: <defaults>
</compile_context>

<pallas_src>
import functools
import math

import jax
import jax.numpy as jnp
from jax.experimental import pallas as pl
from jax.experimental.pallas import tpu as pltpu


# Indices into the packed square-matrix slab (N_MAT, D, D).
MAT_GROUP_AVG, MAT_CONV1F, MAT_CA_Q, MAT_FF1, MAT_CONV2T = range(5)
N_MAT = 5

# Indices into the packed bias / LayerNorm vector slab (N_VEC, D).
(VEC_SA_O_B, VEC_LN2_W, VEC_LN2_B, VEC_CA_Q_B, VEC_CA_O_B,
 VEC_LN3_W, VEC_LN3_B, VEC_FF1_B, VEC_LN4_W, VEC_LN4_B, VEC_CONV2_B) = range(11)
N_VEC = 11


# ----------------------------- in-kernel helpers -----------------------------

def _erf_f32(x):
    # TODO(synk): lax.erf has no Mosaic lowering; Abramowitz-Stegun 7.1.26
    # polynomial (max abs error ~1.5e-7, i.e. f32-exact) built from exp/mul/add.
    a1, a2, a3, a4, a5 = 0.254829592, -0.284496736, 1.421413741, -1.453152027, 1.061405429
    p = 0.3275911
    ax = jnp.abs(x)
    t = 1.0 / (1.0 + p * ax)
    poly = ((((a5 * t + a4) * t + a3) * t + a2) * t + a1) * t
    y = 1.0 - poly * jnp.exp(-ax * ax)
    return jnp.where(x < 0.0, -y, y)


def _gelu_exact(x):
    # matches torch.nn.functional.gelu (erf-based, default)
    return 0.5 * x * (1.0 + _erf_f32(x * (1.0 / math.sqrt(2.0))))


def _softmax_last(s):
    m = jnp.max(s, axis=-1, keepdims=True)
    e = jnp.exp(s - m)
    return e / jnp.sum(e, axis=-1, keepdims=True)   # exact divide (fidelity)


# --------------------------------- fused kernel -------------------------------

def fused_transformer_kernel(x_ref, slots_ref, c1b_ref, wqkv_s_ref, bqkv_s_ref,
                             wkv_c_ref, bkv_c_ref, wo_s_ref, wo_c_ref,
                             mats_ref, vecs_ref, out_ref, *,
                             batch, seq_len, num_slots, num_heads, head_dim,
                             hid_dim, repeat, eps):
    f32 = jnp.float32

    def vrow(i):                                 # (1, D) bias / LN row, loaded at use
        return vecs_ref[pl.ds(i, 1), :]

    def layer_norm(x, wi, bi):
        mu = jnp.mean(x, axis=-1, keepdims=True)
        var = jnp.mean((x - mu) * (x - mu), axis=-1, keepdims=True)
        return (x - mu) * jax.lax.rsqrt(var + eps) * vrow(wi) + vrow(bi)

    def attend(q_all, kv_all, q_off, k_off, v_off, kv_rows, wo_ref):
        """Batch-folded multi-head attention.  q_all: (B*L, *), kv_all: (B*kv_rows, *).
        Head outputs accumulate through the per-head rows of the output projection.
        head_dim=32 lane slices may cost an XLU realign per head; XLU slots are
        otherwise idle here, so this is off the critical VALU/MXU path."""
        rows = []
        for b in range(batch):
            zb = None
            for h in range(num_heads):
                a = h * head_dim
                q = q_all[b * seq_len:(b + 1) * seq_len, q_off + a:q_off + a + head_dim]
                k = kv_all[b * kv_rows:(b + 1) * kv_rows, k_off + a:k_off + a + head_dim]
                v = kv_all[b * kv_rows:(b + 1) * kv_rows, v_off + a:v_off + a + head_dim]
                s = jax.lax.dot_general(q, k, (((1,), (1,)), ((), ())),
                                        preferred_element_type=f32)        # (L, kv)
                p = _softmax_last(s)
                o = jnp.dot(p, v, preferred_element_type=f32)               # (L, hd)
                zh = jnp.dot(o, wo_ref[h], preferred_element_type=f32)      # (L, D)
                zb = zh if zb is None else zb + zh
            rows.append(zb)
        return jnp.concatenate(rows, axis=0)                                # (B*L, D)

    # --- GroupNorm (+affine, folded) + 1x1 conv1 from the (HW, C) NHWC view ---
    # Output is produced directly in the (C, HW) sequence orientation via a
    # transposed-RHS dot_general; no host- or kernel-side activation transpose.
    rows = []
    for b in range(batch):
        xb = x_ref[b]                                                  # (HW, C)
        s1 = jnp.sum(xb, axis=0, keepdims=True)                        # (1, C)
        s2 = jnp.sum(xb * xb, axis=0, keepdims=True)                   # (1, C)
        g = jnp.dot(jnp.concatenate([s1, s2], axis=0),
                    mats_ref[MAT_GROUP_AVG], preferred_element_type=f32)  # (2, C) fused stats
        mean = g[0:1, :]
        var = jnp.maximum(g[1:2, :] - mean * mean, 0.0)                # clamp cancellation
        rstd = jax.lax.rsqrt(var + eps)
        w_scaled = mats_ref[MAT_CONV1F] * rstd                         # cols scaled by rstd[c_in]
        shift = jnp.sum(w_scaled * mean, axis=1, keepdims=True)        # (C, 1)
        yb = jax.lax.dot_general(w_scaled, xb, (((1,), (1,)), ((), ())),
                                 preferred_element_type=f32)           # (C_out, HW)
        rows.append(yb - shift + c1b_ref[...])
    x0 = jnp.concatenate(rows, axis=0)                                 # (B*L, D), batch folded

    # Cross-attention K/V depend only on `slots` -> hoisted out of the repeat
    # loop and computed for the whole batch in one (B*S, D) x (D, 2*hid) matmul.
    kv_c = (jnp.dot(slots_ref[...], wkv_c_ref[...], preferred_element_type=f32)
            + bkv_c_ref[...])                                          # (B*S, 2*hid)

    def block(_, x_cur):
        # self-attention: fused QKV projection at M = B*L; score scale folded into Q
        qkv = (jnp.dot(x_cur, wqkv_s_ref[...], preferred_element_type=f32)
               + bqkv_s_ref[...])                                      # (B*L, 3*hid)
        z = attend(qkv, qkv, 0, hid_dim, 2 * hid_dim, seq_len, wo_s_ref) + vrow(VEC_SA_O_B)
        x1 = _gelu_exact(layer_norm(z, VEC_LN2_W, VEC_LN2_B) + x_cur)

        # cross-attention over slots
        q_c = (jnp.dot(x1, mats_ref[MAT_CA_Q], preferred_element_type=f32)
               + vrow(VEC_CA_Q_B))
        z = attend(q_c, kv_c, 0, 0, hid_dim, num_slots, wo_c_ref) + vrow(VEC_CA_O_B)
        x2 = layer_norm(z, VEC_LN3_W, VEC_LN3_B) + x1

        # feed-forward
        z = jnp.dot(x2, mats_ref[MAT_FF1], preferred_element_type=f32) + vrow(VEC_FF1_B)
        return layer_norm(z, VEC_LN4_W, VEC_LN4_B) + x2

    if repeat <= 4:
        x_cur = x0
        for _ in range(repeat):                  # small static repeat: plain unroll
            x_cur = block(0, x_cur)
    else:
        # large repeat: visible loop keeps code size / live ranges bounded
        x_cur = jax.lax.fori_loop(0, repeat, block, x0)

    # final 1x1 conv2 as a pointwise channel matmul in the folded (B*L, D) layout
    out_ref[...] = (jnp.dot(x_cur, mats_ref[MAT_CONV2T], preferred_element_type=f32)
                    + vrow(VEC_CONV2_B))


# -------------------------------- wrapper -------------------------------------

def run_fused(x_hwc, slots2d, pk, *, num_heads, head_dim, hid_dim, repeat):
    b, hw, c = x_hwc.shape
    bs, _ = slots2d.shape
    num_slots = bs // b
    kernel = functools.partial(
        fused_transformer_kernel, batch=b, seq_len=c, num_slots=num_slots,
        num_heads=num_heads, head_dim=head_dim, hid_dim=hid_dim,
        repeat=repeat, eps=1e-5)

    def vmem():
        return pl.BlockSpec(memory_space=pltpu.MemorySpace.VMEM)

    # Grid-free single invocation: everything (activations + ~230 KB of weights)
    # is VMEM-resident; one HBM read per input and one HBM write of the output.
    return pl.pallas_call(
        kernel,
        out_shape=jax.ShapeDtypeStruct((b * c, hw), jnp.float32),
        in_specs=[vmem() for _ in range(11)],
        out_specs=vmem(),
    )(x_hwc, slots2d, pk['conv1_b_col'], pk['w_qkv_s'], pk['b_qkv_s'],
      pk['w_kv_c'], pk['b_kv_c'], pk['wo_s_heads'], pk['wo_c_heads'],
      pk['mats'], pk['vecs'])


def transformer_forward(x, slots, pk, *, repeat, num_heads, head_dim, hid_dim):
    b, h, w, f = x.shape
    hw = h * w
    # The fused kernel reinterprets the (C, HW) conv1 output tile directly as the
    # (L, D) sequence tile; that equals PyTorch's row-major `.view(b, -1, f)` only
    # when C == H*W.
    # TODO(synk): the general C != H*W case needs an explicit in-kernel relayout.
    assert f == hw, "fused kernel requires x_in_dim == H*W"
    x_hwc = x.reshape(b, hw, f)                               # pure NHWC reshape, no transpose
    slots2d = slots.reshape(b * slots.shape[1], slots.shape[2])
    out = run_fused(x_hwc, slots2d, pk, num_heads=num_heads,
                    head_dim=head_dim, hid_dim=hid_dim, repeat=repeat)
    return out.reshape(b, h, w, f)


# ----------------------------- host-side packing ------------------------------

def pack_params(p, *, num_groups, hw, num_heads, head_dim, hid_dim):
    """One-time host-side weight prep: fold GN affine into conv1, fold the
    1/sqrt(hid_dim) score scale into Q, fuse QKV / KV weights, split Wo per head,
    and pack the remaining small tensors into two slabs."""
    d = p['conv1_w'].shape[0]
    assert hid_dim == d, "slab packing assumes attention_hidden_dim == x_in_dim"
    assert num_heads * head_dim == hid_dim
    gs = d // num_groups
    inv = 1.0 / math.sqrt(float(hid_dim))   # reference scales scores by 1/sqrt(hid_dim)

    gid = jnp.arange(d, dtype=jnp.int32) // gs
    group_avg = (gid[:, None] == gid[None, :]).astype(jnp.float32) / float(gs * hw)

    conv1f = p['conv1_w'] * p['gn_w'][None, :]                           # gamma folded
    conv1_b_col = (p['conv1_w'] @ p['gn_b'] + p['conv1_b'])[:, None]     # (d, 1)

    w_qkv_s = jnp.concatenate(
        [p['sa_q_w'].T * inv, p['sa_k_w'].T, p['sa_v_w'].T], axis=1)     # (d, 3*hid)
    b_qkv_s = jnp.concatenate(
        [p['sa_q_b'] * inv, p['sa_k_b'], p['sa_v_b']])[None, :]          # (1, 3*hid)
    w_kv_c = jnp.concatenate([p['ca_k_w'].T, p['ca_v_w'].T], axis=1)     # (d, 2*hid)
    b_kv_c = jnp.concatenate([p['ca_k_b'], p['ca_v_b']])[None, :]        # (1, 2*hid)

    wo_s_heads = p['sa_o_w'].T.reshape(num_heads, head_dim, d)
    wo_c_heads = p['ca_o_w'].T.reshape(num_heads, head_dim, d)

    mats = jnp.stack([group_avg, conv1f, p['ca_q_w'].T * inv,
                      p['ff1_w'].T, p['conv2_w'].T])                     # (5, d, d)
    vecs = jnp.stack([p['sa_o_b'], p['ln2_w'], p['ln2_b'], p['ca_q_b'] * inv,
                      p['ca_o_b'], p['ln3_w'], p['ln3_b'], p['ff1_b'],
                      p['ln4_w'], p['ln4_b'], p['conv2_b']])             # (11, d)
    return dict(conv1_b_col=conv1_b_col, w_qkv_s=w_qkv_s, b_qkv_s=b_qkv_s,
                w_kv_c=w_kv_c, b_kv_c=b_kv_c, wo_s_heads=wo_s_heads,
                wo_c_heads=wo_c_heads, mats=mats, vecs=vecs)


# ----------------------------- parameter init ---------------------------------

def init_params(key, d, hid):
    """Parameters in natural PyTorch layout (Linear weights are (out, in))."""
    keys = iter(jax.random.split(key, 32))

    def linear(k, in_dim, out_dim):
        kw, kb = jax.random.split(k)
        w = jax.random.normal(kw, (out_dim, in_dim), jnp.float32) / math.sqrt(in_dim)
        b_ = 0.02 * jax.random.normal(kb, (out_dim,), jnp.float32)
        return w, b_

    p = {}
    k1, k2 = jax.random.split(next(keys))
    p['gn_w'] = 1.0 + 0.02 * jax.random.normal(k1, (d,), jnp.float32)
    p['gn_b'] = 0.02 * jax.random.normal(k2, (d,), jnp.float32)
    p['conv1_w'], p['conv1_b'] = linear(next(keys), d, d)
    p['conv2_w'], p['conv2_b'] = linear(next(keys), d, d)
    for pre in ('sa', 'ca'):
        p[f'{pre}_k_w'], p[f'{pre}_k_b'] = linear(next(keys), d, hid)
        p[f'{pre}_q_w'], p[f'{pre}_q_b'] = linear(next(keys), d, hid)
        p[f'{pre}_v_w'], p[f'{pre}_v_b'] = linear(next(keys), d, hid)
        p[f'{pre}_o_w'], p[f'{pre}_o_b'] = linear(next(keys), hid, d)
    for name in ('ln2', 'ln3', 'ln4'):
        k1, k2 = jax.random.split(next(keys))
        p[f'{name}_w'] = 1.0 + 0.02 * jax.random.normal(k1, (d,), jnp.float32)
        p[f'{name}_b'] = 0.02 * jax.random.normal(k2, (d,), jnp.float32)
    p['ff1_w'], p['ff1_b'] = linear(next(keys), d, d)
    return p


# -------------------------- pure-JAX reference ---------------------------------

def reference_forward(x, slots, p, *, num_groups, repeat, num_heads, head_dim, hid_dim):
    """Direct transcription of the PyTorch module (for verification)."""
    b, h, w, f = x.shape
    eps = 1e-5
    xt = jnp.transpose(x, (0, 3, 1, 2))                                   # NCHW
    xg = xt.reshape(b, num_groups, -1)
    mu = jnp.mean(xg, axis=-1, keepdims=True)
    var = jnp.mean((xg - mu) ** 2, axis=-1, keepdims=True)
    xn = ((xg - mu) / jnp.sqrt(var + eps)).reshape(b, f, h, w)
    xn = xn * p['gn_w'][None, :, None, None] + p['gn_b'][None, :, None, None]
    y = jnp.einsum('oc,bchw->bohw', p['conv1_w'], xn) + p['conv1_b'][None, :, None, None]
    seq = y.reshape(b, -1, f)

    def ln(z, wg, bg):
        m_ = jnp.mean(z, axis=-1, keepdims=True)
        v_ = jnp.mean((z - m_) ** 2, axis=-1, keepdims=True)
        return (z - m_) / jnp.sqrt(v_ + eps) * wg + bg

    def mha(xq, kv, pre):
        q = xq @ p[f'{pre}_q_w'].T + p[f'{pre}_q_b']
        k = kv @ p[f'{pre}_k_w'].T + p[f'{pre}_k_b']
        v = kv @ p[f'{pre}_v_w'].T + p[f'{pre}_v_b']
        outs = []
        for hh in range(num_heads):
            a, e = hh * head_dim, (hh + 1) * head_dim
            s = jnp.einsum('bld,bmd->blm', q[..., a:e], k[..., a:e]) / math.sqrt(hid_dim)
            pr = jax.nn.softmax(s, axis=-1)
            outs.append(jnp.einsum('blm,bmd->bld', pr, v[..., a:e]))
        z = jnp.concatenate(outs, axis=-1)
        return z @ p[f'{pre}_o_w'].T + p[f'{pre}_o_b']

    xx = seq
    for _ in range(repeat):
        xx = jax.nn.gelu(ln(mha(xx, xx, 'sa'), p['ln2_w'], p['ln2_b']) + xx,
                         approximate=False)
        xx = ln(mha(xx, slots, 'ca'), p['ln3_w'], p['ln3_b']) + xx
        xx = ln(xx @ p['ff1_w'].T + p['ff1_b'], p['ln4_w'], p['ln4_b']) + xx
    xv = xx.reshape(b, h, w, f)
    xc = jnp.transpose(xv, (0, 3, 1, 2))
    y2 = jnp.einsum('oc,bchw->bohw', p['conv2_w'], xc) + p['conv2_b'][None, :, None, None]
    return jnp.transpose(y2, (0, 2, 3, 1))


# ---------------------------------- main ---------------------------------------

if __name__ == "__main__":
    B, H, W, F_DIM = 2, 8, 8, 64        # x_in_dim = 64 (heads = 64 // 32 = 2)
    NUM_SLOTS = 8
    ATT_HID = 64                        # attention_hidden_dim
    NUM_GROUPS = 4
    REPEAT = 1
    HEAD_DIM = 32
    NUM_HEADS = F_DIM // 32

    key = jax.random.PRNGKey(0)
    kx, kslots, kp = jax.random.split(key, 3)
    x = jax.random.normal(kx, (B, H, W, F_DIM), dtype=jnp.float32)
    slots = jax.random.normal(kslots, (B, NUM_SLOTS, F_DIM), dtype=jnp.float32)
    params = init_params(kp, F_DIM, ATT_HID)

    # Host-side weight packing happens ONCE, outside the jitted per-call path.
    pk = pack_params(params, num_groups=NUM_GROUPS, hw=H * W,
                     num_heads=NUM_HEADS, head_dim=HEAD_DIM, hid_dim=ATT_HID)

    fwd = jax.jit(functools.partial(transformer_forward, repeat=REPEAT,
                                    num_heads=NUM_HEADS, head_dim=HEAD_DIM,
                                    hid_dim=ATT_HID))
    out = fwd(x, slots, pk)
    jax.block_until_ready(out)
    assert out.shape == (B, H, W, F_DIM) and out.dtype == jnp.float32

    # Pure-JAX reference check (f32-precision matmuls to match the in-kernel MXU).
    with jax.default_matmul_precision("float32"):
        ref = reference_forward(x, slots, params, num_groups=NUM_GROUPS,
                                repeat=REPEAT, num_heads=NUM_HEADS,
                                head_dim=HEAD_DIM, hid_dim=ATT_HID)
    err = float(jnp.max(jnp.abs(out - ref)))
    assert err < 2e-3, f"kernel/reference mismatch: max abs err {err}"
    print("KERNEL_OK")
</pallas_src>

<mosaic_0001>
module attributes {stable_mosaic.version = 11 : i64} {
  func.func @fused_transformer_kernel(%arg0: memref<2x64x64xf32, #tpu.memory_space<vmem>>, %arg1: memref<16x64xf32, #tpu.memory_space<vmem>>, %arg2: memref<64x1xf32, #tpu.memory_space<vmem>>, %arg3: memref<64x192xf32, #tpu.memory_space<vmem>>, %arg4: memref<1x192xf32, #tpu.memory_space<vmem>>, %arg5: memref<64x128xf32, #tpu.memory_space<vmem>>, %arg6: memref<1x128xf32, #tpu.memory_space<vmem>>, %arg7: memref<2x32x64xf32, #tpu.memory_space<vmem>>, %arg8: memref<2x32x64xf32, #tpu.memory_space<vmem>>, %arg9: memref<5x64x64xf32, #tpu.memory_space<vmem>>, %arg10: memref<11x64xf32, #tpu.memory_space<vmem>>, %arg11: memref<128x64xf32, #tpu.memory_space<vmem>>) attributes {dimension_semantics = [], scalar_prefetch = 0 : i64, scratch_operands = 0 : i64, tpu.core_type = #tpu.core_type<tc>} {
    %c0 = arith.constant 0 : index
    %c0_0 = arith.constant 0 : index
    %c0_1 = arith.constant 0 : index
    %0 = vector.load %arg0[%c0, %c0_0, %c0_1] : memref<2x64x64xf32, #tpu.memory_space<vmem>>, vector<1x64x64xf32>
    %1 = vector.shape_cast %0 : vector<1x64x64xf32> to vector<64x64xf32>
    %cst = arith.constant dense<0.000000e+00> : vector<64xf32>
    %2 = vector.multi_reduction <add>, %1, %cst [0] : vector<64x64xf32> to vector<64xf32>
    %3 = vector.shape_cast %2 : vector<64xf32> to vector<1x64xf32>
    %4 = arith.mulf %1, %1 : vector<64x64xf32>
    %cst_2 = arith.constant dense<0.000000e+00> : vector<64xf32>
    %5 = vector.multi_reduction <add>, %4, %cst_2 [0] : vector<64x64xf32> to vector<64xf32>
    %6 = vector.shape_cast %5 : vector<64xf32> to vector<1x64xf32>
    %7 = tpu.concatenate %3, %6 in 0 : vector<1x64xf32>, vector<1x64xf32> -> vector<2x64xf32>
    %c0_3 = arith.constant 0 : index
    %c0_4 = arith.constant 0 : index
    %c0_5 = arith.constant 0 : index
    %8 = vector.load %arg9[%c0_3, %c0_4, %c0_5] : memref<5x64x64xf32, #tpu.memory_space<vmem>>, vector<1x64x64xf32>
    %9 = vector.shape_cast %8 : vector<1x64x64xf32> to vector<64x64xf32>
    %cst_6 = arith.constant dense<0.000000e+00> : vector<2x64xf32>
    %10 = tpu.matmul %7, %9, %cst_6 {dimension_numbers = #tpu.dot_dimension_numbers<[1], [0], [0], [1], [0, 0, 1, 1], [], []>} : vector<2x64xf32>, vector<64x64xf32>, vector<2x64xf32> -> vector<2x64xf32>
    %11 = vector.extract_strided_slice %10 {offsets = [0, 0], sizes = [1, 64], strides = [1, 1]} : vector<2x64xf32> to vector<1x64xf32>
    %12 = vector.extract_strided_slice %10 {offsets = [1, 0], sizes = [1, 64], strides = [1, 1]} : vector<2x64xf32> to vector<1x64xf32>
    %13 = arith.mulf %11, %11 : vector<1x64xf32>
    %14 = arith.subf %12, %13 : vector<1x64xf32>
    %cst_7 = arith.constant 0.000000e+00 : f32
    %15 = vector.broadcast %cst_7 : f32 to vector<1x64xf32>
    %16 = arith.maximumf %14, %15 : vector<1x64xf32>
    %cst_8 = arith.constant 9.99999974E-6 : f32
    %17 = vector.broadcast %cst_8 : f32 to vector<1x64xf32>
    %18 = arith.addf %16, %17 : vector<1x64xf32>
    %19 = math.rsqrt %18 : vector<1x64xf32>
    %c1 = arith.constant 1 : index
    %c0_9 = arith.constant 0 : index
    %c0_10 = arith.constant 0 : index
    %20 = vector.load %arg9[%c1, %c0_9, %c0_10] : memref<5x64x64xf32, #tpu.memory_space<vmem>>, vector<1x64x64xf32>
    %21 = vector.shape_cast %20 : vector<1x64x64xf32> to vector<64x64xf32>
    %22 = vector.broadcast %19 : vector<1x64xf32> to vector<64x64xf32>
    %23 = arith.mulf %21, %22 : vector<64x64xf32>
    %24 = vector.broadcast %11 : vector<1x64xf32> to vector<64x64xf32>
    %25 = arith.mulf %23, %24 : vector<64x64xf32>
    %cst_11 = arith.constant dense<0.000000e+00> : vector<64xf32>
    %26 = vector.multi_reduction <add>, %25, %cst_11 [1] : vector<64x64xf32> to vector<64xf32>
    %27 = vector.shape_cast %26 : vector<64xf32> to vector<64x1xf32>
    %cst_12 = arith.constant dense<0.000000e+00> : vector<64x64xf32>
    %28 = tpu.matmul %23, %1, %cst_12 {dimension_numbers = #tpu.dot_dimension_numbers<[1], [1], [0], [0], [0, 0, 1, 0], [], []>} : vector<64x64xf32>, vector<64x64xf32>, vector<64x64xf32> -> vector<64x64xf32>
    %29 = vector.broadcast %27 : vector<64x1xf32> to vector<64x64xf32>
    %30 = arith.subf %28, %29 : vector<64x64xf32>
    %c0_13 = arith.constant 0 : index
    %c0_14 = arith.constant 0 : index
    %31 = vector.load %arg2[%c0_13, %c0_14] : memref<64x1xf32, #tpu.memory_space<vmem>>, vector<64x1xf32>
    %32 = vector.broadcast %31 : vector<64x1xf32> to vector<64x64xf32>
    %33 = arith.addf %30, %32 : vector<64x64xf32>
    %c1_15 = arith.constant 1 : index
    %c0_16 = arith.constant 0 : index
    %c0_17 = arith.constant 0 : index
    %34 = vector.load %arg0[%c1_15, %c0_16, %c0_17] : memref<2x64x64xf32, #tpu.memory_space<vmem>>, vector<1x64x64xf32>
    %35 = vector.shape_cast %34 : vector<1x64x64xf32> to vector<64x64xf32>
    %cst_18 = arith.constant dense<0.000000e+00> : vector<64xf32>
    %36 = vector.multi_reduction <add>, %35, %cst_18 [0] : vector<64x64xf32> to vector<64xf32>
    %37 = vector.shape_cast %36 : vector<64xf32> to vector<1x64xf32>
    %38 = arith.mulf %35, %35 : vector<64x64xf32>
    %cst_19 = arith.constant dense<0.000000e+00> : vector<64xf32>
    %39 = vector.multi_reduction <add>, %38, %cst_19 [0] : vector<64x64xf32> to vector<64xf32>
    %40 = vector.shape_cast %39 : vector<64xf32> to vector<1x64xf32>
    %41 = tpu.concatenate %37, %40 in 0 : vector<1x64xf32>, vector<1x64xf32> -> vector<2x64xf32>
    %c0_20 = arith.constant 0 : index
    %c0_21 = arith.constant 0 : index
    %c0_22 = arith.constant 0 : index
    %42 = vector.load %arg9[%c0_20, %c0_21, %c0_22] : memref<5x64x64xf32, #tpu.memory_space<vmem>>, vector<1x64x64xf32>
    %43 = vector.shape_cast %42 : vector<1x64x64xf32> to vector<64x64xf32>
    %cst_23 = arith.constant dense<0.000000e+00> : vector<2x64xf32>
    %44 = tpu.matmul %41, %43, %cst_23 {dimension_numbers = #tpu.dot_dimension_numbers<[1], [0], [0], [1], [0, 0, 1, 1], [], []>} : vector<2x64xf32>, vector<64x64xf32>, vector<2x64xf32> -> vector<2x64xf32>
    %45 = vector.extract_strided_slice %44 {offsets = [0, 0], sizes = [1, 64], strides = [1, 1]} : vector<2x64xf32> to vector<1x64xf32>
    %46 = vector.extract_strided_slice %44 {offsets = [1, 0], sizes = [1, 64], strides = [1, 1]} : vector<2x64xf32> to vector<1x64xf32>
    %47 = arith.mulf %45, %45 : vector<1x64xf32>
    %48 = arith.subf %46, %47 : vector<1x64xf32>
    %cst_24 = arith.constant 0.000000e+00 : f32
    %49 = vector.broadcast %cst_24 : f32 to vector<1x64xf32>
    %50 = arith.maximumf %48, %49 : vector<1x64xf32>
    %cst_25 = arith.constant 9.99999974E-6 : f32
    %51 = vector.broadcast %cst_25 : f32 to vector<1x64xf32>
    %52 = arith.addf %50, %51 : vector<1x64xf32>
    %53 = math.rsqrt %52 : vector<1x64xf32>
    %c1_26 = arith.constant 1 : index
    %c0_27 = arith.constant 0 : index
    %c0_28 = arith.constant 0 : index
    %54 = vector.load %arg9[%c1_26, %c0_27, %c0_28] : memref<5x64x64xf32, #tpu.memory_space<vmem>>, vector<1x64x64xf32>
    %55 = vector.shape_cast %54 : vector<1x64x64xf32> to vector<64x64xf32>
    %56 = vector.broadcast %53 : vector<1x64xf32> to vector<64x64xf32>
    %57 = arith.mulf %55, %56 : vector<64x64xf32>
    %58 = vector.broadcast %45 : vector<1x64xf32> to vector<64x64xf32>
    %59 = arith.mulf %57, %58 : vector<64x64xf32>
    %cst_29 = arith.constant dense<0.000000e+00> : vector<64xf32>
    %60 = vector.multi_reduction <add>, %59, %cst_29 [1] : vector<64x64xf32> to vector<64xf32>
    %61 = vector.shape_cast %60 : vector<64xf32> to vector<64x1xf32>
    %cst_30 = arith.constant dense<0.000000e+00> : vector<64x64xf32>
    %62 = tpu.matmul %57, %35, %cst_30 {dimension_numbers = #tpu.dot_dimension_numbers<[1], [1], [0], [0], [0, 0, 1, 0], [], []>} : vector<64x64xf32>, vector<64x64xf32>, vector<64x64xf32> -> vector<64x64xf32>
    %63 = vector.broadcast %61 : vector<64x1xf32> to vector<64x64xf32>
    %64 = arith.subf %62, %63 : vector<64x64xf32>
    %c0_31 = arith.constant 0 : index
    %c0_32 = arith.constant 0 : index
    %65 = vector.load %arg2[%c0_31, %c0_32] : memref<64x1xf32, #tpu.memory_space<vmem>>, vector<64x1xf32>
    %66 = vector.broadcast %65 : vector<64x1xf32> to vector<64x64xf32>
    %67 = arith.addf %64, %66 : vector<64x64xf32>
    %68 = tpu.concatenate %33, %67 in 0 : vector<64x64xf32>, vector<64x64xf32> -> vector<128x64xf32>
    %c0_33 = arith.constant 0 : index
    %c0_34 = arith.constant 0 : index
    %69 = vector.load %arg1[%c0_33, %c0_34] : memref<16x64xf32, #tpu.memory_space<vmem>>, vector<16x64xf32>
    %c0_35 = arith.constant 0 : index
    %c0_36 = arith.constant 0 : index
    %70 = vector.load %arg5[%c0_35, %c0_36] : memref<64x128xf32, #tpu.memory_space<vmem>>, vector<64x128xf32>
    %cst_37 = arith.constant dense<0.000000e+00> : vector<16x128xf32>
    %71 = tpu.matmul %69, %70, %cst_37 {dimension_numbers = #tpu.dot_dimension_numbers<[1], [0], [0], [1], [0, 0, 1, 1], [], []>} : vector<16x64xf32>, vector<64x128xf32>, vector<16x128xf32> -> vector<16x128xf32>
    %c0_38 = arith.constant 0 : index
    %c0_39 = arith.constant 0 : index
    %72 = vector.load %arg6[%c0_38, %c0_39] : memref<1x128xf32, #tpu.memory_space<vmem>>, vector<1x128xf32>
    %73 = vector.broadcast %72 : vector<1x128xf32> to vector<16x128xf32>
    %74 = arith.addf %71, %73 : vector<16x128xf32>
    %c0_40 = arith.constant 0 : index
    %c0_41 = arith.constant 0 : index
    %75 = vector.load %arg3[%c0_40, %c0_41] : memref<64x192xf32, #tpu.memory_space<vmem>>, vector<64x192xf32>
    %cst_42 = arith.constant dense<0.000000e+00> : vector<128x192xf32>
    %76 = tpu.matmul %68, %75, %cst_42 {dimension_numbers = #tpu.dot_dimension_numbers<[1], [0], [0], [1], [0, 0, 1, 1], [], []>} : vector<128x64xf32>, vector<64x192xf32>, vector<128x192xf32> -> vector<128x192xf32>
    %c0_43 = arith.constant 0 : index
    %c0_44 = arith.constant 0 : index
    %77 = vector.load %arg4[%c0_43, %c0_44] : memref<1x192xf32, #tpu.memory_space<vmem>>, vector<1x192xf32>
    %78 = vector.broadcast %77 : vector<1x192xf32> to vector<128x192xf32>
    %79 = arith.addf %76, %78 : vector<128x192xf32>
    %80 = vector.extract_strided_slice %79 {offsets = [0, 0], sizes = [64, 32], strides = [1, 1]} : vector<128x192xf32> to vector<64x32xf32>
    %81 = vector.extract_strided_slice %79 {offsets = [0, 64], sizes = [64, 32], strides = [1, 1]} : vector<128x192xf32> to vector<64x32xf32>
    %82 = vector.extract_strided_slice %79 {offsets = [0, 128], sizes = [64, 32], strides = [1, 1]} : vector<128x192xf32> to vector<64x32xf32>
    %cst_45 = arith.constant dense<0.000000e+00> : vector<64x64xf32>
    %83 = tpu.matmul %80, %81, %cst_45 {dimension_numbers = #tpu.dot_dimension_numbers<[1], [1], [0], [0], [0, 0, 1, 0], [], []>} : vector<64x32xf32>, vector<64x32xf32>, vector<64x64xf32> -> vector<64x64xf32>
    %cst_46 = arith.constant dense<0xFF800000> : vector<64xf32>
    %84 = vector.multi_reduction <maximumf>, %83, %cst_46 [1] : vector<64x64xf32> to vector<64xf32>
    %85 = vector.shape_cast %84 : vector<64xf32> to vector<64x1xf32>
    %86 = vector.broadcast %85 : vector<64x1xf32> to vector<64x64xf32>
    %87 = arith.subf %83, %86 : vector<64x64xf32>
    %88 = math.exp %87 : vector<64x64xf32>
    %cst_47 = arith.constant dense<0.000000e+00> : vector<64xf32>
    %89 = vector.multi_reduction <add>, %88, %cst_47 [1] : vector<64x64xf32> to vector<64xf32>
    %90 = vector.shape_cast %89 : vector<64xf32> to vector<64x1xf32>
    %91 = vector.broadcast %90 : vector<64x1xf32> to vector<64x64xf32>
    %92 = arith.divf %88, %91 : vector<64x64xf32>
    %cst_48 = arith.constant dense<0.000000e+00> : vector<64x32xf32>
    %93 = tpu.matmul %92, %82, %cst_48 {dimension_numbers = #tpu.dot_dimension_numbers<[1], [0], [0], [1], [0, 0, 1, 1], [], []>} : vector<64x64xf32>, vector<64x32xf32>, vector<64x32xf32> -> vector<64x32xf32>
    %c0_49 = arith.constant 0 : index
    %c0_50 = arith.constant 0 : index
    %c0_51 = arith.constant 0 : index
    %94 = vector.load %arg7[%c0_49, %c0_50, %c0_51] : memref<2x32x64xf32, #tpu.memory_space<vmem>>, vector<1x32x64xf32>
    %95 = vector.shape_cast %94 : vector<1x32x64xf32> to vector<32x64xf32>
    %cst_52 = arith.constant dense<0.000000e+00> : vector<64x64xf32>
    %96 = tpu.matmul %93, %95, %cst_52 {dimension_numbers = #tpu.dot_dimension_numbers<[1], [0], [0], [1], [0, 0, 1, 1], [], []>} : vector<64x32xf32>, vector<32x64xf32>, vector<64x64xf32> -> vector<64x64xf32>
    %97 = vector.extract_strided_slice %79 {offsets = [0, 32], sizes = [64, 32], strides = [1, 1]} : vector<128x192xf32> to vector<64x32xf32>
    %98 = vector.extract_strided_slice %79 {offsets = [0, 96], sizes = [64, 32], strides = [1, 1]} : vector<128x192xf32> to vector<64x32xf32>
    %99 = vector.extract_strided_slice %79 {offsets = [0, 160], sizes = [64, 32], strides = [1, 1]} : vector<128x192xf32> to vector<64x32xf32>
    %cst_53 = arith.constant dense<0.000000e+00> : vector<64x64xf32>
    %100 = tpu.matmul %97, %98, %cst_53 {dimension_numbers = #tpu.dot_dimension_numbers<[1], [1], [0], [0], [0, 0, 1, 0], [], []>} : vector<64x32xf32>, vector<64x32xf32>, vector<64x64xf32> -> vector<64x64xf32>
    %cst_54 = arith.constant dense<0xFF800000> : vector<64xf32>
    %101 = vector.multi_reduction <maximumf>, %100, %cst_54 [1] : vector<64x64xf32> to vector<64xf32>
    %102 = vector.shape_cast %101 : vector<64xf32> to vector<64x1xf32>
    %103 = vector.broadcast %102 : vector<64x1xf32> to vector<64x64xf32>
    %104 = arith.subf %100, %103 : vector<64x64xf32>
    %105 = math.exp %104 : vector<64x64xf32>
    %cst_55 = arith.constant dense<0.000000e+00> : vector<64xf32>
    %106 = vector.multi_reduction <add>, %105, %cst_55 [1] : vector<64x64xf32> to vector<64xf32>
    %107 = vector.shape_cast %106 : vector<64xf32> to vector<64x1xf32>
    %108 = vector.broadcast %107 : vector<64x1xf32> to vector<64x64xf32>
    %109 = arith.divf %105, %108 : vector<64x64xf32>
    %cst_56 = arith.constant dense<0.000000e+00> : vector<64x32xf32>
    %110 = tpu.matmul %109, %99, %cst_56 {dimension_numbers = #tpu.dot_dimension_numbers<[1], [0], [0], [1], [0, 0, 1, 1], [], []>} : vector<64x64xf32>, vector<64x32xf32>, vector<64x32xf32> -> vector<64x32xf32>
    %c1_57 = arith.constant 1 : index
    %c0_58 = arith.constant 0 : index
    %c0_59 = arith.constant 0 : index
    %111 = vector.load %arg7[%c1_57, %c0_58, %c0_59] : memref<2x32x64xf32, #tpu.memory_space<vmem>>, vector<1x32x64xf32>
    %112 = vector.shape_cast %111 : vector<1x32x64xf32> to vector<32x64xf32>
    %cst_60 = arith.constant dense<0.000000e+00> : vector<64x64xf32>
    %113 = tpu.matmul %110, %112, %cst_60 {dimension_numbers = #tpu.dot_dimension_numbers<[1], [0], [0], [1], [0, 0, 1, 1], [], []>} : vector<64x32xf32>, vector<32x64xf32>, vector<64x64xf32> -> vector<64x64xf32>
    %114 = arith.addf %96, %113 : vector<64x64xf32>
    %115 = vector.extract_strided_slice %79 {offsets = [64, 0], sizes = [64, 32], strides = [1, 1]} : vector<128x192xf32> to vector<64x32xf32>
    %116 = vector.extract_strided_slice %79 {offsets = [64, 64], sizes = [64, 32], strides = [1, 1]} : vector<128x192xf32> to vector<64x32xf32>
    %117 = vector.extract_strided_slice %79 {offsets = [64, 128], sizes = [64, 32], strides = [1, 1]} : vector<128x192xf32> to vector<64x32xf32>
    %cst_61 = arith.constant dense<0.000000e+00> : vector<64x64xf32>
    %118 = tpu.matmul %115, %116, %cst_61 {dimension_numbers = #tpu.dot_dimension_numbers<[1], [1], [0], [0], [0, 0, 1, 0], [], []>} : vector<64x32xf32>, vector<64x32xf32>, vector<64x64xf32> -> vector<64x64xf32>
    %cst_62 = arith.constant dense<0xFF800000> : vector<64xf32>
    %119 = vector.multi_reduction <maximumf>, %118, %cst_62 [1] : vector<64x64xf32> to vector<64xf32>
    %120 = vector.shape_cast %119 : vector<64xf32> to vector<64x1xf32>
    %121 = vector.broadcast %120 : vector<64x1xf32> to vector<64x64xf32>
    %122 = arith.subf %118, %121 : vector<64x64xf32>
    %123 = math.exp %122 : vector<64x64xf32>
    %cst_63 = arith.constant dense<0.000000e+00> : vector<64xf32>
    %124 = vector.multi_reduction <add>, %123, %cst_63 [1] : vector<64x64xf32> to vector<64xf32>
    %125 = vector.shape_cast %124 : vector<64xf32> to vector<64x1xf32>
    %126 = vector.broadcast %125 : vector<64x1xf32> to vector<64x64xf32>
    %127 = arith.divf %123, %126 : vector<64x64xf32>
    %cst_64 = arith.constant dense<0.000000e+00> : vector<64x32xf32>
    %128 = tpu.matmul %127, %117, %cst_64 {dimension_numbers = #tpu.dot_dimension_numbers<[1], [0], [0], [1], [0, 0, 1, 1], [], []>} : vector<64x64xf32>, vector<64x32xf32>, vector<64x32xf32> -> vector<64x32xf32>
    %c0_65 = arith.constant 0 : index
    %c0_66 = arith.constant 0 : index
    %c0_67 = arith.constant 0 : index
    %129 = vector.load %arg7[%c0_65, %c0_66, %c0_67] : memref<2x32x64xf32, #tpu.memory_space<vmem>>, vector<1x32x64xf32>
    %130 = vector.shape_cast %129 : vector<1x32x64xf32> to vector<32x64xf32>
    %cst_68 = arith.constant dense<0.000000e+00> : vector<64x64xf32>
    %131 = tpu.matmul %128, %130, %cst_68 {dimension_numbers = #tpu.dot_dimension_numbers<[1], [0], [0], [1], [0, 0, 1, 1], [], []>} : vector<64x32xf32>, vector<32x64xf32>, vector<64x64xf32> -> vector<64x64xf32>
    %132 = vector.extract_strided_slice %79 {offsets = [64, 32], sizes = [64, 32], strides = [1, 1]} : vector<128x192xf32> to vector<64x32xf32>
    %133 = vector.extract_strided_slice %79 {offsets = [64, 96], sizes = [64, 32], strides = [1, 1]} : vector<128x192xf32> to vector<64x32xf32>
    %134 = vector.extract_strided_slice %79 {offsets = [64, 160], sizes = [64, 32], strides = [1, 1]} : vector<128x192xf32> to vector<64x32xf32>
    %cst_69 = arith.constant dense<0.000000e+00> : vector<64x64xf32>
    %135 = tpu.matmul %132, %133, %cst_69 {dimension_numbers = #tpu.dot_dimension_numbers<[1], [1], [0], [0], [0, 0, 1, 0], [], []>} : vector<64x32xf32>, vector<64x32xf32>, vector<64x64xf32> -> vector<64x64xf32>
    %cst_70 = arith.constant dense<0xFF800000> : vector<64xf32>
    %136 = vector.multi_reduction <maximumf>, %135, %cst_70 [1] : vector<64x64xf32> to vector<64xf32>
    %137 = vector.shape_cast %136 : vector<64xf32> to vector<64x1xf32>
    %138 = vector.broadcast %137 : vector<64x1xf32> to vector<64x64xf32>
    %139 = arith.subf %135, %138 : vector<64x64xf32>
    %140 = math.exp %139 : vector<64x64xf32>
    %cst_71 = arith.constant dense<0.000000e+00> : vector<64xf32>
    %141 = vector.multi_reduction <add>, %140, %cst_71 [1] : vector<64x64xf32> to vector<64xf32>
    %142 = vector.shape_cast %141 : vector<64xf32> to vector<64x1xf32>
    %143 = vector.broadcast %142 : vector<64x1xf32> to vector<64x64xf32>
    %144 = arith.divf %140, %143 : vector<64x64xf32>
    %cst_72 = arith.constant dense<0.000000e+00> : vector<64x32xf32>
    %145 = tpu.matmul %144, %134, %cst_72 {dimension_numbers = #tpu.dot_dimension_numbers<[1], [0], [0], [1], [0, 0, 1, 1], [], []>} : vector<64x64xf32>, vector<64x32xf32>, vector<64x32xf32> -> vector<64x32xf32>
    %c1_73 = arith.constant 1 : index
    %c0_74 = arith.constant 0 : index
    %c0_75 = arith.constant 0 : index
    %146 = vector.load %arg7[%c1_73, %c0_74, %c0_75] : memref<2x32x64xf32, #tpu.memory_space<vmem>>, vector<1x32x64xf32>
    %147 = vector.shape_cast %146 : vector<1x32x64xf32> to vector<32x64xf32>
    %cst_76 = arith.constant dense<0.000000e+00> : vector<64x64xf32>
    %148 = tpu.matmul %145, %147, %cst_76 {dimension_numbers = #tpu.dot_dimension_numbers<[1], [0], [0], [1], [0, 0, 1, 1], [], []>} : vector<64x32xf32>, vector<32x64xf32>, vector<64x64xf32> -> vector<64x64xf32>
    %149 = arith.addf %131, %148 : vector<64x64xf32>
    %150 = tpu.concatenate %114, %149 in 0 : vector<64x64xf32>, vector<64x64xf32> -> vector<128x64xf32>
    %c0_77 = arith.constant 0 : index
    %c0_78 = arith.constant 0 : index
    %151 = vector.load %arg10[%c0_77, %c0_78] : memref<11x64xf32, #tpu.memory_space<vmem>>, vector<1x64xf32>
    %152 = vector.broadcast %151 : vector<1x64xf32> to vector<128x64xf32>
    %153 = arith.addf %150, %152 : vector<128x64xf32>
    %cst_79 = arith.constant dense<0.000000e+00> : vector<128xf32>
    %154 = vector.multi_reduction <add>, %153, %cst_79 [1] : vector<128x64xf32> to vector<128xf32>
    %155 = vector.shape_cast %154 : vector<128xf32> to vector<128x1xf32>
    %cst_80 = arith.constant 6.400000e+01 : f32
    %156 = vector.broadcast %cst_80 : f32 to vector<128x1xf32>
    %157 = arith.divf %155, %156 : vector<128x1xf32>
    %158 = vector.broadcast %157 : vector<128x1xf32> to vector<128x64xf32>
    %159 = arith.subf %153, %158 : vector<128x64xf32>
    %160 = vector.broadcast %157 : vector<128x1xf32> to vector<128x64xf32>
    %161 = arith.subf %153, %160 : vector<128x64xf32>
    %162 = arith.mulf %159, %161 : vector<128x64xf32>
    %cst_81 = arith.constant dense<0.000000e+00> : vector<128xf32>
    %163 = vector.multi_reduction <add>, %162, %cst_81 [1] : vector<128x64xf32> to vector<128xf32>
    %164 = vector.shape_cast %163 : vector<128xf32> to vector<128x1xf32>
    %cst_82 = arith.constant 6.400000e+01 : f32
    %165 = vector.broadcast %cst_82 : f32 to vector<128x1xf32>
    %166 = arith.divf %164, %165 : vector<128x1xf32>
    %167 = vector.broadcast %157 : vector<128x1xf32> to vector<128x64xf32>
    %168 = arith.subf %153, %167 : vector<128x64xf32>
    %cst_83 = arith.constant 9.99999974E-6 : f32
    %169 = vector.broadcast %cst_83 : f32 to vector<128x1xf32>
    %170 = arith.addf %166, %169 : vector<128x1xf32>
    %171 = math.rsqrt %170 : vector<128x1xf32>
    %172 = vector.broadcast %171 : vector<128x1xf32> to vector<128x64xf32>
    %173 = arith.mulf %168, %172 : vector<128x64xf32>
    %c1_84 = arith.constant 1 : index
    %c0_85 = arith.constant 0 : index
    %174 = vector.load %arg10[%c1_84, %c0_85] : memref<11x64xf32, #tpu.memory_space<vmem>>, vector<1x64xf32>
    %175 = vector.broadcast %174 : vector<1x64xf32> to vector<128x64xf32>
    %176 = arith.mulf %173, %175 : vector<128x64xf32>
    %c2 = arith.constant 2 : index
    %c0_86 = arith.constant 0 : index
    %177 = vector.load %arg10[%c2, %c0_86] : memref<11x64xf32, #tpu.memory_space<vmem>>, vector<1x64xf32>
    %178 = vector.broadcast %177 : vector<1x64xf32> to vector<128x64xf32>
    %179 = arith.addf %176, %178 : vector<128x64xf32>
    %180 = arith.addf %179, %68 : vector<128x64xf32>
    %cst_87 = arith.constant 5.000000e-01 : f32
    %181 = vector.broadcast %cst_87 : f32 to vector<128x64xf32>
    %182 = arith.mulf %181, %180 : vector<128x64xf32>
    %cst_88 = arith.constant 0.707106769 : f32
    %183 = vector.broadcast %cst_88 : f32 to vector<128x64xf32>
    %184 = arith.mulf %180, %183 : vector<128x64xf32>
    %185 = math.absf %184 : vector<128x64xf32>
    %cst_89 = arith.constant 0.327591091 : f32
    %186 = vector.broadcast %cst_89 : f32 to vector<128x64xf32>
    %187 = arith.mulf %186, %185 : vector<128x64xf32>
    %cst_90 = arith.constant 1.000000e+00 : f32
    %188 = vector.broadcast %cst_90 : f32 to vector<128x64xf32>
    %189 = arith.addf %188, %187 : vector<128x64xf32>
    %cst_91 = arith.constant 1.000000e+00 : f32
    %190 = vector.broadcast %cst_91 : f32 to vector<128x64xf32>
    %191 = arith.divf %190, %189 : vector<128x64xf32>
    %cst_92 = arith.constant 1.06140542 : f32
    %192 = vector.broadcast %cst_92 : f32 to vector<128x64xf32>
    %193 = arith.mulf %192, %191 : vector<128x64xf32>
    %cst_93 = arith.constant -1.45315206 : f32
    %194 = vector.broadcast %cst_93 : f32 to vector<128x64xf32>
    %195 = arith.addf %193, %194 : vector<128x64xf32>
    %196 = arith.mulf %195, %191 : vector<128x64xf32>
    %cst_94 = arith.constant 1.42141378 : f32
    %197 = vector.broadcast %cst_94 : f32 to vector<128x64xf32>
    %198 = arith.addf %196, %197 : vector<128x64xf32>
    %199 = arith.mulf %198, %191 : vector<128x64xf32>
    %cst_95 = arith.constant -0.284496725 : f32
    %200 = vector.broadcast %cst_95 : f32 to vector<128x64xf32>
    %201 = arith.addf %199, %200 : vector<128x64xf32>
    %202 = arith.mulf %201, %191 : vector<128x64xf32>
    %cst_96 = arith.constant 0.254829586 : f32
    %203 = vector.broadcast %cst_96 : f32 to vector<128x64xf32>
    %204 = arith.addf %202, %203 : vector<128x64xf32>
    %205 = arith.mulf %204, %191 : vector<128x64xf32>
    %cst_97 = arith.constant 0.000000e+00 : f32
    %206 = vector.broadcast %cst_97 : f32 to vector<128x64xf32>
    %207 = arith.subf %206, %185 : vector<128x64xf32>
    %208 = arith.mulf %207, %185 : vector<128x64xf32>
    %209 = math.exp %208 : vector<128x64xf32>
    %210 = arith.mulf %205, %209 : vector<128x64xf32>
    %cst_98 = arith.constant 1.000000e+00 : f32
    %211 = vector.broadcast %cst_98 : f32 to vector<128x64xf32>
    %212 = arith.subf %211, %210 : vector<128x64xf32>
    %cst_99 = arith.constant 0.000000e+00 : f32
    %213 = vector.broadcast %cst_99 : f32 to vector<128x64xf32>
    %214 = arith.cmpf olt, %184, %213 : vector<128x64xf32>
    %cst_100 = arith.constant 0.000000e+00 : f32
    %215 = vector.broadcast %cst_100 : f32 to vector<128x64xf32>
    %216 = arith.subf %215, %212 : vector<128x64xf32>
    %217 = arith.select %214, %216, %212 : vector<128x64xi1>, vector<128x64xf32>
    %cst_101 = arith.constant 1.000000e+00 : f32
    %218 = vector.broadcast %cst_101 : f32 to vector<128x64xf32>
    %219 = arith.addf %218, %217 : vector<128x64xf32>
    %220 = arith.mulf %182, %219 : vector<128x64xf32>
    %c2_102 = arith.constant 2 : index
    %c0_103 = arith.constant 0 : index
    %c0_104 = arith.constant 0 : index
    %221 = vector.load %arg9[%c2_102, %c0_103, %c0_104] : memref<5x64x64xf32, #tpu.memory_space<vmem>>, vector<1x64x64xf32>
    %222 = vector.shape_cast %221 : vector<1x64x64xf32> to vector<64x64xf32>
    %cst_105 = arith.constant dense<0.000000e+00> : vector<128x64xf32>
    %223 = tpu.matmul %220, %222, %cst_105 {dimension_numbers = #tpu.dot_dimension_numbers<[1], [0], [0], [1], [0, 0, 1, 1], [], []>} : vector<128x64xf32>, vector<64x64xf32>, vector<128x64xf32> -> vector<128x64xf32>
    %c3 = arith.constant 3 : index
    %c0_106 = arith.constant 0 : index
    %224 = vector.load %arg10[%c3, %c0_106] : memref<11x64xf32, #tpu.memory_space<vmem>>, vector<1x64xf32>
    %225 = vector.broadcast %224 : vector<1x64xf32> to vector<128x64xf32>
    %226 = arith.addf %223, %225 : vector<128x64xf32>
    %227 = vector.extract_strided_slice %226 {offsets = [0, 0], sizes = [64, 32], strides = [1, 1]} : vector<128x64xf32> to vector<64x32xf32>
    %228 = vector.extract_strided_slice %74 {offsets = [0, 0], sizes = [8, 32], strides = [1, 1]} : vector<16x128xf32> to vector<8x32xf32>
    %229 = vector.extract_strided_slice %74 {offsets = [0, 64], sizes = [8, 32], strides = [1, 1]} : vector<16x128xf32> to vector<8x32xf32>
    %cst_107 = arith.constant dense<0.000000e+00> : vector<64x8xf32>
    %230 = tpu.matmul %227, %228, %cst_107 {dimension_numbers = #tpu.dot_dimension_numbers<[1], [1], [0], [0], [0, 0, 1, 0], [], []>} : vector<64x32xf32>, vector<8x32xf32>, vector<64x8xf32> -> vector<64x8xf32>
    %cst_108 = arith.constant dense<0xFF800000> : vector<64xf32>
    %231 = vector.multi_reduction <maximumf>, %230, %cst_108 [1] : vector<64x8xf32> to vector<64xf32>
    %232 = vector.shape_cast %231 : vector<64xf32> to vector<64x1xf32>
    %233 = vector.broadcast %232 : vector<64x1xf32> to vector<64x8xf32>
    %234 = arith.subf %230, %233 : vector<64x8xf32>
    %235 = math.exp %234 : vector<64x8xf32>
    %cst_109 = arith.constant dense<0.000000e+00> : vector<64xf32>
    %236 = vector.multi_reduction <add>, %235, %cst_109 [1] : vector<64x8xf32> to vector<64xf32>
    %237 = vector.shape_cast %236 : vector<64xf32> to vector<64x1xf32>
    %238 = vector.broadcast %237 : vector<64x1xf32> to vector<64x8xf32>
    %239 = arith.divf %235, %238 : vector<64x8xf32>
    %cst_110 = arith.constant dense<0.000000e+00> : vector<64x32xf32>
    %240 = tpu.matmul %239, %229, %cst_110 {dimension_numbers = #tpu.dot_dimension_numbers<[1], [0], [0], [1], [0, 0, 1, 1], [], []>} : vector<64x8xf32>, vector<8x32xf32>, vector<64x32xf32> -> vector<64x32xf32>
    %c0_111 = arith.constant 0 : index
    %c0_112 = arith.constant 0 : index
    %c0_113 = arith.constant 0 : index
    %241 = vector.load %arg8[%c0_111, %c0_112, %c0_113] : memref<2x32x64xf32, #tpu.memory_space<vmem>>, vector<1x32x64xf32>
    %242 = vector.shape_cast %241 : vector<1x32x64xf32> to vector<32x64xf32>
    %cst_114 = arith.constant dense<0.000000e+00> : vector<64x64xf32>
    %243 = tpu.matmul %240, %242, %cst_114 {dimension_numbers = #tpu.dot_dimension_numbers<[1], [0], [0], [1], [0, 0, 1, 1], [], []>} : vector<64x32xf32>, vector<32x64xf32>, vector<64x64xf32> -> vector<64x64xf32>
    %244 = vector.extract_strided_slice %226 {offsets = [0, 32], sizes = [64, 32], strides = [1, 1]} : vector<128x64xf32> to vector<64x32xf32>
    %245 = vector.extract_strided_slice %74 {offsets = [0, 32], sizes = [8, 32], strides = [1, 1]} : vector<16x128xf32> to vector<8x32xf32>
    %246 = vector.extract_strided_slice %74 {offsets = [0, 96], sizes = [8, 32], strides = [1, 1]} : vector<16x128xf32> to vector<8x32xf32>
    %cst_115 = arith.constant dense<0.000000e+00> : vector<64x8xf32>
    %247 = tpu.matmul %244, %245, %cst_115 {dimension_numbers = #tpu.dot_dimension_numbers<[1], [1], [0], [0], [0, 0, 1, 0], [], []>} : vector<64x32xf32>, vector<8x32xf32>, vector<64x8xf32> -> vector<64x8xf32>
    %cst_116 = arith.constant dense<0xFF800000> : vector<64xf32>
    %248 = vector.multi_reduction <maximumf>, %247, %cst_116 [1] : vector<64x8xf32> to vector<64xf32>
    %249 = vector.shape_cast %248 : vector<64xf32> to vector<64x1xf32>
    %250 = vector.broadcast %249 : vector<64x1xf32> to vector<64x8xf32>
    %251 = arith.subf %247, %250 : vector<64x8xf32>
    %252 = math.exp %251 : vector<64x8xf32>
    %cst_117 = arith.constant dense<0.000000e+00> : vector<64xf32>
    %253 = vector.multi_reduction <add>, %252, %cst_117 [1] : vector<64x8xf32> to vector<64xf32>
    %254 = vector.shape_cast %253 : vector<64xf32> to vector<64x1xf32>
    %255 = vector.broadcast %254 : vector<64x1xf32> to vector<64x8xf32>
    %256 = arith.divf %252, %255 : vector<64x8xf32>
    %cst_118 = arith.constant dense<0.000000e+00> : vector<64x32xf32>
    %257 = tpu.matmul %256, %246, %cst_118 {dimension_numbers = #tpu.dot_dimension_numbers<[1], [0], [0], [1], [0, 0, 1, 1], [], []>} : vector<64x8xf32>, vector<8x32xf32>, vector<64x32xf32> -> vector<64x32xf32>
    %c1_119 = arith.constant 1 : index
    %c0_120 = arith.constant 0 : index
    %c0_121 = arith.constant 0 : index
    %258 = vector.load %arg8[%c1_119, %c0_120, %c0_121] : memref<2x32x64xf32, #tpu.memory_space<vmem>>, vector<1x32x64xf32>
    %259 = vector.shape_cast %258 : vector<1x32x64xf32> to vector<32x64xf32>
    %cst_122 = arith.constant dense<0.000000e+00> : vector<64x64xf32>
    %260 = tpu.matmul %257, %259, %cst_122 {dimension_numbers = #tpu.dot_dimension_numbers<[1], [0], [0], [1], [0, 0, 1, 1], [], []>} : vector<64x32xf32>, vector<32x64xf32>, vector<64x64xf32> -> vector<64x64xf32>
    %261 = arith.addf %243, %260 : vector<64x64xf32>
    %262 = vector.extract_strided_slice %226 {offsets = [64, 0], sizes = [64, 32], strides = [1, 1]} : vector<128x64xf32> to vector<64x32xf32>
    %263 = vector.extract_strided_slice %74 {offsets = [8, 0], sizes = [8, 32], strides = [1, 1]} : vector<16x128xf32> to vector<8x32xf32>
    %264 = vector.extract_strided_slice %74 {offsets = [8, 64], sizes = [8, 32], strides = [1, 1]} : vector<16x128xf32> to vector<8x32xf32>
    %cst_123 = arith.constant dense<0.000000e+00> : vector<64x8xf32>
    %265 = tpu.matmul %262, %263, %cst_123 {dimension_numbers = #tpu.dot_dimension_numbers<[1], [1], [0], [0], [0, 0, 1, 0], [], []>} : vector<64x32xf32>, vector<8x32xf32>, vector<64x8xf32> -> vector<64x8xf32>
    %cst_124 = arith.constant dense<0xFF800000> : vector<64xf32>
    %266 = vector.multi_reduction <maximumf>, %265, %cst_124 [1] : vector<64x8xf32> to vector<64xf32>
    %267 = vector.shape_cast %266 : vector<64xf32> to vector<64x1xf32>
    %268 = vector.broadcast %267 : vector<64x1xf32> to vector<64x8xf32>
    %269 = arith.subf %265, %268 : vector<64x8xf32>
    %270 = math.exp %269 : vector<64x8xf32>
    %cst_125 = arith.constant dense<0.000000e+00> : vector<64xf32>
    %271 = vector.multi_reduction <add>, %270, %cst_125 [1] : vector<64x8xf32> to vector<64xf32>
    %272 = vector.shape_cast %271 : vector<64xf32> to vector<64x1xf32>
    %273 = vector.broadcast %272 : vector<64x1xf32> to vector<64x8xf32>
    %274 = arith.divf %270, %273 : vector<64x8xf32>
    %cst_126 = arith.constant dense<0.000000e+00> : vector<64x32xf32>
    %275 = tpu.matmul %274, %264, %cst_126 {dimension_numbers = #tpu.dot_dimension_numbers<[1], [0], [0], [1], [0, 0, 1, 1], [], []>} : vector<64x8xf32>, vector<8x32xf32>, vector<64x32xf32> -> vector<64x32xf32>
    %c0_127 = arith.constant 0 : index
    %c0_128 = arith.constant 0 : index
    %c0_129 = arith.constant 0 : index
    %276 = vector.load %arg8[%c0_127, %c0_128, %c0_129] : memref<2x32x64xf32, #tpu.memory_space<vmem>>, vector<1x32x64xf32>
    %277 = vector.shape_cast %276 : vector<1x32x64xf32> to vector<32x64xf32>
    %cst_130 = arith.constant dense<0.000000e+00> : vector<64x64xf32>
    %278 = tpu.matmul %275, %277, %cst_130 {dimension_numbers = #tpu.dot_dimension_numbers<[1], [0], [0], [1], [0, 0, 1, 1], [], []>} : vector<64x32xf32>, vector<32x64xf32>, vector<64x64xf32> -> vector<64x64xf32>
    %279 = vector.extract_strided_slice %226 {offsets = [64, 32], sizes = [64, 32], strides = [1, 1]} : vector<128x64xf32> to vector<64x32xf32>
    %280 = vector.extract_strided_slice %74 {offsets = [8, 32], sizes = [8, 32], strides = [1, 1]} : vector<16x128xf32> to vector<8x32xf32>
    %281 = vector.extract_strided_slice %74 {offsets = [8, 96], sizes = [8, 32], strides = [1, 1]} : vector<16x128xf32> to vector<8x32xf32>
    %cst_131 = arith.constant dense<0.000000e+00> : vector<64x8xf32>
    %282 = tpu.matmul %279, %280, %cst_131 {dimension_numbers = #tpu.dot_dimension_numbers<[1], [1], [0], [0], [0, 0, 1, 0], [], []>} : vector<64x32xf32>, vector<8x32xf32>, vector<64x8xf32> -> vector<64x8xf32>
    %cst_132 = arith.constant dense<0xFF800000> : vector<64xf32>
    %283 = vector.multi_reduction <maximumf>, %282, %cst_132 [1] : vector<64x8xf32> to vector<64xf32>
    %284 = vector.shape_cast %283 : vector<64xf32> to vector<64x1xf32>
    %285 = vector.broadcast %284 : vector<64x1xf32> to vector<64x8xf32>
    %286 = arith.subf %282, %285 : vector<64x8xf32>
    %287 = math.exp %286 : vector<64x8xf32>
    %cst_133 = arith.constant dense<0.000000e+00> : vector<64xf32>
    %288 = vector.multi_reduction <add>, %287, %cst_133 [1] : vector<64x8xf32> to vector<64xf32>
    %289 = vector.shape_cast %288 : vector<64xf32> to vector<64x1xf32>
    %290 = vector.broadcast %289 : vector<64x1xf32> to vector<64x8xf32>
    %291 = arith.divf %287, %290 : vector<64x8xf32>
    %cst_134 = arith.constant dense<0.000000e+00> : vector<64x32xf32>
    %292 = tpu.matmul %291, %281, %cst_134 {dimension_numbers = #tpu.dot_dimension_numbers<[1], [0], [0], [1], [0, 0, 1, 1], [], []>} : vector<64x8xf32>, vector<8x32xf32>, vector<64x32xf32> -> vector<64x32xf32>
    %c1_135 = arith.constant 1 : index
    %c0_136 = arith.constant 0 : index
    %c0_137 = arith.constant 0 : index
    %293 = vector.load %arg8[%c1_135, %c0_136, %c0_137] : memref<2x32x64xf32, #tpu.memory_space<vmem>>, vector<1x32x64xf32>
    %294 = vector.shape_cast %293 : vector<1x32x64xf32> to vector<32x64xf32>
    %cst_138 = arith.constant dense<0.000000e+00> : vector<64x64xf32>
    %295 = tpu.matmul %292, %294, %cst_138 {dimension_numbers = #tpu.dot_dimension_numbers<[1], [0], [0], [1], [0, 0, 1, 1], [], []>} : vector<64x32xf32>, vector<32x64xf32>, vector<64x64xf32> -> vector<64x64xf32>
    %296 = arith.addf %278, %295 : vector<64x64xf32>
    %297 = tpu.concatenate %261, %296 in 0 : vector<64x64xf32>, vector<64x64xf32> -> vector<128x64xf32>
    %c4 = arith.constant 4 : index
    %c0_139 = arith.constant 0 : index
    %298 = vector.load %arg10[%c4, %c0_139] : memref<11x64xf32, #tpu.memory_space<vmem>>, vector<1x64xf32>
    %299 = vector.broadcast %298 : vector<1x64xf32> to vector<128x64xf32>
    %300 = arith.addf %297, %299 : vector<128x64xf32>
    %cst_140 = arith.constant dense<0.000000e+00> : vector<128xf32>
    %301 = vector.multi_reduction <add>, %300, %cst_140 [1] : vector<128x64xf32> to vector<128xf32>
    %302 = vector.shape_cast %301 : vector<128xf32> to vector<128x1xf32>
    %cst_141 = arith.constant 6.400000e+01 : f32
    %303 = vector.broadcast %cst_141 : f32 to vector<128x1xf32>
    %304 = arith.divf %302, %303 : vector<128x1xf32>
    %305 = vector.broadcast %304 : vector<128x1xf32> to vector<128x64xf32>
    %306 = arith.subf %300, %305 : vector<128x64xf32>
    %307 = vector.broadcast %304 : vector<128x1xf32> to vector<128x64xf32>
    %308 = arith.subf %300, %307 : vector<128x64xf32>
    %309 = arith.mulf %306, %308 : vector<128x64xf32>
    %cst_142 = arith.constant dense<0.000000e+00> : vector<128xf32>
    %310 = vector.multi_reduction <add>, %309, %cst_142 [1] : vector<128x64xf32> to vector<128xf32>
    %311 = vector.shape_cast %310 : vector<128xf32> to vector<128x1xf32>
    %cst_143 = arith.constant 6.400000e+01 : f32
    %312 = vector.broadcast %cst_143 : f32 to vector<128x1xf32>
    %313 = arith.divf %311, %312 : vector<128x1xf32>
    %314 = vector.broadcast %304 : vector<128x1xf32> to vector<128x64xf32>
    %315 = arith.subf %300, %314 : vector<128x64xf32>
    %cst_144 = arith.constant 9.99999974E-6 : f32
    %316 = vector.broadcast %cst_144 : f32 to vector<128x1xf32>
    %317 = arith.addf %313, %316 : vector<128x1xf32>
    %318 = math.rsqrt %317 : vector<128x1xf32>
    %319 = vector.broadcast %318 : vector<128x1xf32> to vector<128x64xf32>
    %320 = arith.mulf %315, %319 : vector<128x64xf32>
    %c5 = arith.constant 5 : index
    %c0_145 = arith.constant 0 : index
    %321 = vector.load %arg10[%c5, %c0_145] : memref<11x64xf32, #tpu.memory_space<vmem>>, vector<1x64xf32>
    %322 = vector.broadcast %321 : vector<1x64xf32> to vector<128x64xf32>
    %323 = arith.mulf %320, %322 : vector<128x64xf32>
    %c6 = arith.constant 6 : index
    %c0_146 = arith.constant 0 : index
    %324 = vector.load %arg10[%c6, %c0_146] : memref<11x64xf32, #tpu.memory_space<vmem>>, vector<1x64xf32>
    %325 = vector.broadcast %324 : vector<1x64xf32> to vector<128x64xf32>
    %326 = arith.addf %323, %325 : vector<128x64xf32>
    %327 = arith.addf %326, %220 : vector<128x64xf32>
    %c3_147 = arith.constant 3 : index
    %c0_148 = arith.constant 0 : index
    %c0_149 = arith.constant 0 : index
    %328 = vector.load %arg9[%c3_147, %c0_148, %c0_149] : memref<5x64x64xf32, #tpu.memory_space<vmem>>, vector<1x64x64xf32>
    %329 = vector.shape_cast %328 : vector<1x64x64xf32> to vector<64x64xf32>
    %cst_150 = arith.constant dense<0.000000e+00> : vector<128x64xf32>
    %330 = tpu.matmul %327, %329, %cst_150 {dimension_numbers = #tpu.dot_dimension_numbers<[1], [0], [0], [1], [0, 0, 1, 1], [], []>} : vector<128x64xf32>, vector<64x64xf32>, vector<128x64xf32> -> vector<128x64xf32>
    %c7 = arith.constant 7 : index
    %c0_151 = arith.constant 0 : index
    %331 = vector.load %arg10[%c7, %c0_151] : memref<11x64xf32, #tpu.memory_space<vmem>>, vector<1x64xf32>
    %332 = vector.broadcast %331 : vector<1x64xf32> to vector<128x64xf32>
    %333 = arith.addf %330, %332 : vector<128x64xf32>
    %cst_152 = arith.constant dense<0.000000e+00> : vector<128xf32>
    %334 = vector.multi_reduction <add>, %333, %cst_152 [1] : vector<128x64xf32> to vector<128xf32>
    %335 = vector.shape_cast %334 : vector<128xf32> to vector<128x1xf32>
    %cst_153 = arith.constant 6.400000e+01 : f32
    %336 = vector.broadcast %cst_153 : f32 to vector<128x1xf32>
    %337 = arith.divf %335, %336 : vector<128x1xf32>
    %338 = vector.broadcast %337 : vector<128x1xf32> to vector<128x64xf32>
    %339 = arith.subf %333, %338 : vector<128x64xf32>
    %340 = vector.broadcast %337 : vector<128x1xf32> to vector<128x64xf32>
    %341 = arith.subf %333, %340 : vector<128x64xf32>
    %342 = arith.mulf %339, %341 : vector<128x64xf32>
    %cst_154 = arith.constant dense<0.000000e+00> : vector<128xf32>
    %343 = vector.multi_reduction <add>, %342, %cst_154 [1] : vector<128x64xf32> to vector<128xf32>
    %344 = vector.shape_cast %343 : vector<128xf32> to vector<128x1xf32>
    %cst_155 = arith.constant 6.400000e+01 : f32
    %345 = vector.broadcast %cst_155 : f32 to vector<128x1xf32>
    %346 = arith.divf %344, %345 : vector<128x1xf32>
    %347 = vector.broadcast %337 : vector<128x1xf32> to vector<128x64xf32>
    %348 = arith.subf %333, %347 : vector<128x64xf32>
    %cst_156 = arith.constant 9.99999974E-6 : f32
    %349 = vector.broadcast %cst_156 : f32 to vector<128x1xf32>
    %350 = arith.addf %346, %349 : vector<128x1xf32>
    %351 = math.rsqrt %350 : vector<128x1xf32>
    %352 = vector.broadcast %351 : vector<128x1xf32> to vector<128x64xf32>
    %353 = arith.mulf %348, %352 : vector<128x64xf32>
    %c8 = arith.constant 8 : index
    %c0_157 = arith.constant 0 : index
    %354 = vector.load %arg10[%c8, %c0_157] : memref<11x64xf32, #tpu.memory_space<vmem>>, vector<1x64xf32>
    %355 = vector.broadcast %354 : vector<1x64xf32> to vector<128x64xf32>
    %356 = arith.mulf %353, %355 : vector<128x64xf32>
    %c9 = arith.constant 9 : index
    %c0_158 = arith.constant 0 : index
    %357 = vector.load %arg10[%c9, %c0_158] : memref<11x64xf32, #tpu.memory_space<vmem>>, vector<1x64xf32>
    %358 = vector.broadcast %357 : vector<1x64xf32> to vector<128x64xf32>
    %359 = arith.addf %356, %358 : vector<128x64xf32>
    %360 = arith.addf %359, %327 : vector<128x64xf32>
    %c4_159 = arith.constant 4 : index
    %c0_160 = arith.constant 0 : index
    %c0_161 = arith.constant 0 : index
    %361 = vector.load %arg9[%c4_159, %c0_160, %c0_161] : memref<5x64x64xf32, #tpu.memory_space<vmem>>, vector<1x64x64xf32>
    %362 = vector.shape_cast %361 : vector<1x64x64xf32> to vector<64x64xf32>
    %cst_162 = arith.constant dense<0.000000e+00> : vector<128x64xf32>
    %363 = tpu.matmul %360, %362, %cst_162 {dimension_numbers = #tpu.dot_dimension_numbers<[1], [0], [0], [1], [0, 0, 1, 1], [], []>} : vector<128x64xf32>, vector<64x64xf32>, vector<128x64xf32> -> vector<128x64xf32>
    %c10 = arith.constant 10 : index
    %c0_163 = arith.constant 0 : index
    %364 = vector.load %arg10[%c10, %c0_163] : memref<11x64xf32, #tpu.memory_space<vmem>>, vector<1x64xf32>
    %365 = vector.broadcast %364 : vector<1x64xf32> to vector<128x64xf32>
    %366 = arith.addf %363, %365 : vector<128x64xf32>
    %c0_164 = arith.constant 0 : index
    %c0_165 = arith.constant 0 : index
    %367 = vector.load %arg11[%c0_164, %c0_165] : memref<128x64xf32, #tpu.memory_space<vmem>>, vector<128x64xf32>
    tpu.vector_store %arg11[%c0_164, %c0_165], %366 {strides = array<i32>} : memref<128x64xf32, #tpu.memory_space<vmem>>, vector<128x64xf32>,
    return
  }
}

</mosaic_0001>

<llo_original>
// kernel: transformer_forward.1
$region0: #{transformer_forward.1}
  #allocation0 [shape = 'u32[]', space=smem, size = 0x4, offset = 0x4, fixed_abs, tag = 'smem constant byte address 0x4 - core index']
  #allocation1 [shape = 'u32[72,128]{1,0:T(1,128)}', space=vmem, size = 0x9000, scoped, tag = 'internal scratch']
  %s0 = inlined_call_operand.hbm [shape: f32[2,64,64], index: 0, kind: input, shape index: {}]
  %s1 = inlined_call_operand.hbm [shape: f32[16,64], index: 1, kind: input, shape index: {}]
  %s2 = inlined_call_operand.vmem [shape: f32[64,1], index: 2, kind: input, shape index: {}]
  %s3 = inlined_call_operand.hbm [shape: f32[64,192], index: 3, kind: input, shape index: {}]
  %s4 = inlined_call_operand.vmem [shape: f32[1,192], index: 4, kind: input, shape index: {}]
  %s5 = inlined_call_operand.vmem [shape: f32[64,128], index: 5, kind: input, shape index: {}]
  %s6 = inlined_call_operand.vmem [shape: f32[1,128], index: 6, kind: input, shape index: {}]
  %s7 = inlined_call_operand.hbm [shape: f32[2,32,64], index: 7, kind: input, shape index: {}]
  %s8 = inlined_call_operand.hbm [shape: f32[2,32,64], index: 8, kind: input, shape index: {}]
  %s9 = inlined_call_operand.hbm [shape: f32[5,64,64], index: 9, kind: input, shape index: {}]
  %s10 = inlined_call_operand.hbm [shape: f32[11,64], index: 10, kind: input, shape index: {}]
  %s11 = inlined_call_operand.hbm [shape: f32[128,64], index: 11, kind: output, shape index: {}]
  %s12 = sld [smem:[#allocation0]]
  $region82: #{transformer_forward.1} parent=0
    _
  %s14 = ssub.s32 1, %s12
  %s15 = scalar_select 0, %s14, %s12
  $region1: #{transformer_forward.1} parent=0
    #allocation2 [shape = 'u8[65536]{0}', space=vmem, size = 0x10000, scoped, tag = 'input window, operand 0, single buffered']
    #allocation3 [shape = 's32[1]{0}', space=sflag, size = 0x4, scoped, tag = 'scoped memory for transformer_forward.1']
    #allocation4 [shape = 's32[1]{0}', space=sflag, size = 0x4, scoped, tag = 'scoped memory for transformer_forward.1']
    #allocation5 [shape = 'u8[8192]{0}', space=vmem, size = 0x2000, scoped, tag = 'input window, operand 1, single buffered']
    #allocation6 [shape = 's32[1]{0}', space=sflag, size = 0x4, scoped, tag = 'scoped memory for transformer_forward.1']
    #allocation7 [shape = 'u8[65536]{0}', space=vmem, size = 0x10000, scoped, tag = 'input window, operand 3, single buffered']
    #allocation8 [shape = 'u8[32768]{0}', space=vmem, size = 0x8000, scoped, tag = 'input window, operand 7, single buffered']
    #allocation9 [shape = 's32[1]{0}', space=sflag, size = 0x4, scoped, tag = 'scoped memory for transformer_forward.1']
    #allocation10 [shape = 'u8[32768]{0}', space=vmem, size = 0x8000, scoped, tag = 'input window, operand 8, single buffered']
    #allocation11 [shape = 'u8[163840]{0}', space=vmem, size = 0x28000, scoped, tag = 'input window, operand 9, single buffered']
    #allocation12 [shape = 's32[1]{0}', space=sflag, size = 0x4, scoped, tag = 'scoped memory for transformer_forward.1']
    #allocation13 [shape = 'u8[8192]{0}', space=vmem, size = 0x2000, scoped, tag = 'input window, operand 10, single buffered']
    #allocation14 [shape = 'u8[65536]{0}', space=vmem, size = 0x10000, scoped, tag = 'output window, operand 0, single buffered']
    %16 = vsyncpa [#allocation3], 0
    %17 = vsyncpa [#allocation6], 0
    %18 = vsyncpa [#allocation9], 0
    %19 = vsyncpa [#allocation12], 0
    %20 = vsyncpa [#allocation4], 0
    // Predicated region
    $region2: #{transformer_forward.1} parent=1 // pred_check
      _
    $region3: #{transformer_forward.1} parent=1 // pred_check_branch
      %22 = sbr.rel (0) target = $region5
    $region4: #{transformer_forward.1} parent=1 // pred_region
      %24 = vsyncadd [#allocation3], 0
      %s25 = sshll.u32 %s0, 4
      %s26 = int_to_ptr.hbm [resolvable:$true] %s25
      %s27 = sshll.u32 [#allocation2], 4
      %s28 = int_to_ptr.vmem [resolvable:$true] %s27
      %33 = dma.hbm_to_vmem [thread:$0]  %s26, 2048, %s28, [#allocation3], 128, 128, 8
    $region5: #{transformer_forward.1} parent=1 // pred_fallthru
      _
    // Predicated region
    $region6: #{transformer_forward.1} parent=1 // pred_check
      _
    $region7: #{transformer_forward.1} parent=1 // pred_check_branch
      %35 = sbr.rel (0) target = $region9
    $region8: #{transformer_forward.1} parent=1 // pred_region
      %37 = vsyncadd [#allocation6], 0
      %s38 = sshll.u32 %s1, 4
      %s39 = int_to_ptr.hbm [resolvable:$true] %s38
      %s40 = sshll.u32 [#allocation5], 4
      %s41 = int_to_ptr.vmem [resolvable:$true] %s40
      %46 = dma.hbm_to_vmem [thread:$0]  %s39, 256, %s41, [#allocation6], 128, 128, 8
    $region9: #{transformer_forward.1} parent=1 // pred_fallthru
      _
    // Predicated region
    $region10: #{transformer_forward.1} parent=1 // pred_check
      _
    $region11: #{transformer_forward.1} parent=1 // pred_check_branch
      %48 = sbr.rel (0) target = $region13
    $region12: #{transformer_forward.1} parent=1 // pred_region
      _
    $region13: #{transformer_forward.1} parent=1 // pred_fallthru
      _
    // Predicated region
    $region14: #{transformer_forward.1} parent=1 // pred_check
      _
    $region15: #{transformer_forward.1} parent=1 // pred_check_branch
      %50 = sbr.rel (0) target = $region17
    $region16: #{transformer_forward.1} parent=1 // pred_region
      %52 = vsyncadd [#allocation6], 0
      %s53 = sshll.u32 %s3, 4
      %s54 = int_to_ptr.hbm [resolvable:$true] %s53
      %s55 = sshll.u32 [#allocation7], 4
      %s56 = int_to_ptr.vmem [resolvable:$true] %s55
      %61 = dma.hbm_to_vmem [thread:$0]  %s54, 2048, %s56, [#allocation6], 256, 256, 16
    $region17: #{transformer_forward.1} parent=1 // pred_fallthru
      _
    // Predicated region
    $region18: #{transformer_forward.1} parent=1 // pred_check
      _
    $region19: #{transformer_forward.1} parent=1 // pred_check_branch
      %63 = sbr.rel (0) target = $region21
    $region20: #{transformer_forward.1} parent=1 // pred_region
      _
    $region21: #{transformer_forward.1} parent=1 // pred_fallthru
      _
    // Predicated region
    $region22: #{transformer_forward.1} parent=1 // pred_check
      _
    $region23: #{transformer_forward.1} parent=1 // pred_check_branch
      %65 = sbr.rel (0) target = $region25
    $region24: #{transformer_forward.1} parent=1 // pred_region
      _
    $region25: #{transformer_forward.1} parent=1 // pred_fallthru
      _
    // Predicated region
    $region26: #{transformer_forward.1} parent=1 // pred_check
      _
    $region27: #{transformer_forward.1} parent=1 // pred_check_branch
      %67 = sbr.rel (0) target = $region29
    $region28: #{transformer_forward.1} parent=1 // pred_region
      _
    $region29: #{transformer_forward.1} parent=1 // pred_fallthru
      _
    // Predicated region
    $region30: #{transformer_forward.1} parent=1 // pred_check
      _
    $region31: #{transformer_forward.1} parent=1 // pred_check_branch
      %69 = sbr.rel (0) target = $region33
    $region32: #{transformer_forward.1} parent=1 // pred_region
      %71 = vsyncadd [#allocation9], 0
      %s72 = sshll.u32 %s7, 4
      %s73 = int_to_ptr.hbm [resolvable:$true] %s72
      %s74 = sshll.u32 [#allocation8], 4
      %s75 = int_to_ptr.vmem [resolvable:$true] %s74
      %80 = dma.hbm_to_vmem [thread:$0]  %s73, 1024, %s75, [#allocation9], 128, 128, 8
    $region33: #{transformer_forward.1} parent=1 // pred_fallthru
      _
    // Predicated region
    $region34: #{transformer_forward.1} parent=1 // pred_check
      _
    $region35: #{transformer_forward.1} parent=1 // pred_check_branch
      %82 = sbr.rel (0) target = $region37
    $region36: #{transformer_forward.1} parent=1 // pred_region
      %84 = vsyncadd [#allocation9], 0
      %s85 = sshll.u32 %s8, 4
      %s86 = int_to_ptr.hbm [resolvable:$true] %s85
      %s87 = sshll.u32 [#allocation10], 4
      %s88 = int_to_ptr.vmem [resolvable:$true] %s87
      %93 = dma.hbm_to_vmem [thread:$0]  %s86, 1024, %s88, [#allocation9], 128, 128, 8
    $region37: #{transformer_forward.1} parent=1 // pred_fallthru
      _
    // Predicated region
    $region38: #{transformer_forward.1} parent=1 // pred_check
      _
    $region39: #{transformer_forward.1} parent=1 // pred_check_branch
      %95 = sbr.rel (0) target = $region41
    $region40: #{transformer_forward.1} parent=1 // pred_region
      %97 = vsyncadd [#allocation12], 0
      %s98 = sshll.u32 %s9, 4
      %s99 = int_to_ptr.hbm [resolvable:$true] %s98
      %s100 = sshll.u32 [#allocation11], 4
      %s101 = int_to_ptr.vmem [resolvable:$true] %s100
      %106 = dma.hbm_to_vmem [thread:$0]  %s99, 5120, %s101, [#allocation12], 128, 128, 8
    $region41: #{transformer_forward.1} parent=1 // pred_fallthru
      _
    // Predicated region
    $region42: #{transformer_forward.1} parent=1 // pred_check
      _
    $region43: #{transformer_forward.1} parent=1 // pred_check_branch
      %108 = sbr.rel (0) target = $region45
    $region44: #{transformer_forward.1} parent=1 // pred_region
      %110 = vsyncadd [#allocation12], 0
      %s111 = sshll.u32 %s10, 4
      %s112 = int_to_ptr.hbm [resolvable:$true] %s111
      %s113 = sshll.u32 [#allocation13], 4
      %s114 = int_to_ptr.vmem [resolvable:$true] %s113
      %119 = dma.hbm_to_vmem [thread:$0]  %s112, 256, %s114, [#allocation12], 128, 128, 8
    $region45: #{transformer_forward.1} parent=1 // pred_fallthru
      _
    // Predicated region
    $region46: #{transformer_forward.1} parent=1 // pred_check
      _
    $region47: #{transformer_forward.1} parent=1 // pred_check_branch
      %121 = sbr.rel (0) target = $region49
    $region48: #{transformer_forward.1} parent=1 // pred_region
      %123 = dma.done [#allocation3], 2048
    $region49: #{transformer_forward.1} parent=1 // pred_fallthru
      _
    // Predicated region
    $region50: #{transformer_forward.1} parent=1 // pred_check
      _
    $region51: #{transformer_forward.1} parent=1 // pred_check_branch
      %125 = sbr.rel (0) target = $region53
    $region52: #{transformer_forward.1} parent=1 // pred_region
      %127 = dma.done [#allocation6], 256
    $region53: #{transformer_forward.1} parent=1 // pred_fallthru
      _
    // Predicated region
    $region54: #{transformer_forward.1} parent=1 // pred_check
      _
    $region55: #{transformer_forward.1} parent=1 // pred_check_branch
      %129 = sbr.rel (0) target = $region57
    $region56: #{transformer_forward.1} parent=1 // pred_region
      %131 = dma.done [#allocation6], 2048
    $region57: #{transformer_forward.1} parent=1 // pred_fallthru
      _
    // Predicated region
    $region58: #{transformer_forward.1} parent=1 // pred_check
      _
    $region59: #{transformer_forward.1} parent=1 // pred_check_branch
      %133 = sbr.rel (0) target = $region61
    $region60: #{transformer_forward.1} parent=1 // pred_region
      %135 = dma.done [#allocation9], 1024
    $region61: #{transformer_forward.1} parent=1 // pred_fallthru
      _
    // Predicated region
    $region62: #{transformer_forward.1} parent=1 // pred_check
      _
    $region63: #{transformer_forward.1} parent=1 // pred_check_branch
      %137 = sbr.rel (0) target = $region65
    $region64: #{transformer_forward.1} parent=1 // pred_region
      %139 = dma.done [#allocation9], 1024
    $region65: #{transformer_forward.1} parent=1 // pred_fallthru
      _
    // Predicated region
    $region66: #{transformer_forward.1} parent=1 // pred_check
      _
    $region67: #{transformer_forward.1} parent=1 // pred_check_branch
      %141 = sbr.rel (0) target = $region69
    $region68: #{transformer_forward.1} parent=1 // pred_region
      %143 = dma.done [#allocation12], 5120
    $region69: #{transformer_forward.1} parent=1 // pred_fallthru
      _
    // Predicated region
    $region70: #{transformer_forward.1} parent=1 // pred_check
      _
    $region71: #{transformer_forward.1} parent=1 // pred_check_branch
      %145 = sbr.rel (0) target = $region73
    $region72: #{transformer_forward.1} parent=1 // pred_region
      %147 = dma.done [#allocation12], 256
    $region73: #{transformer_forward.1} parent=1 // pred_fallthru
      _
    %v148 = vld [vmem:[#allocation2] sm:$0xff]
    %v149 = vld [vmem:[#allocation2 + $0x8] sm:$0xff]
    %v150 = vld [vmem:[#allocation2 + $0x10] sm:$0xff]
    %v151 = vld [vmem:[#allocation2 + $0x18] sm:$0xff]
    %v152 = vld [vmem:[#allocation2 + $0x20] sm:$0xff]
    %v153 = vld [vmem:[#allocation2 + $0x28] sm:$0xff]
    %v154 = vld [vmem:[#allocation2 + $0x30] sm:$0xff]
    %v155 = vld [vmem:[#allocation2 + $0x38] sm:$0xff]
    %vm156 = vcmask 523264
    %v157 = vsel %vm156, %v148, 0.0
    %v158 = vsel %vm156, %v149, 0.0
    %v159 = vadd.f32 %v157, %v158
    %v160 = vsel %vm156, %v150, 0.0
    %v161 = vadd.f32 %v159, %v160
    %v162 = vsel %vm156, %v151, 0.0
    %v163 = vadd.f32 %v161, %v162
    %v164 = vsel %vm156, %v152, 0.0
    %v165 = vadd.f32 %v163, %v164
    %v166 = vsel %vm156, %v153, 0.0
    %v167 = vadd.f32 %v165, %v166
    %v168 = vsel %vm156, %v154, 0.0
    %v169 = vadd.f32 %v167, %v168
    %v170 = vsel %vm156, %v155, 0.0
    %v171 = vadd.f32 %v169, %v170
    %v172 = vrot.slane %v171, 4
    %v173 = vadd.f32 %v171, %v172
    %v174 = vrot.slane %v173, 2
    %v175 = vadd.f32 %v173, %v174
    %v176 = vrot.slane %v175, 1
    %v177 = vadd.f32 %v175, %v176
    %v178 = vmul.f32 %v148, %v148
    %v179 = vmul.f32 %v149, %v149
    %v180 = vmul.f32 %v150, %v150
    %v181 = vmul.f32 %v151, %v151
    %v182 = vmul.f32 %v152, %v152
    %v183 = vmul.f32 %v153, %v153
    %v184 = vmul.f32 %v154, %v154
    %v185 = vmul.f32 %v155, %v155
    %v186 = vsel %vm156, %v178, 0.0
    %v187 = vsel %vm156, %v179, 0.0
    %v188 = vadd.f32 %v186, %v187
    %v189 = vsel %vm156, %v180, 0.0
    %v190 = vadd.f32 %v188, %v189
    %v191 = vsel %vm156, %v181, 0.0
    %v192 = vadd.f32 %v190, %v191
    %v193 = vsel %vm156, %v182, 0.0
    %v194 = vadd.f32 %v192, %v193
    %v195 = vsel %vm156, %v183, 0.0
    %v196 = vadd.f32 %v194, %v195
    %v197 = vsel %vm156, %v184, 0.0
    %v198 = vadd.f32 %v196, %v197
    %v199 = vsel %vm156, %v185, 0.0
    %v200 = vadd.f32 %v198, %v199
    %v201 = vrot.slane %v200, 4
    %v202 = vadd.f32 %v200, %v201
    %v203 = vrot.slane %v202, 2
    %v204 = vadd.f32 %v202, %v203
    %v205 = vrot.slane %v204, 1
    %v206 = vadd.f32 %v204, %v205
    %vm207 = vcmask 1040384
    %v208 = vsel %vm207, %v177, %v206
    %v209 = vld [vmem:[#allocation11] sm:$0xff]
    %v210 = vld [vmem:[#allocation11 + $0x8] sm:$0xff]
    %v211 = vld [vmem:[#allocation11 + $0x10] sm:$0xff]
    %v212 = vld [vmem:[#allocation11 + $0x18] sm:$0xff]
    %v213 = vld [vmem:[#allocation11 + $0x20] sm:$0xff]
    %v214 = vld [vmem:[#allocation11 + $0x28] sm:$0xff]
    %v215 = vld [vmem:[#allocation11 + $0x30] sm:$0xff]
    %v216 = vld [vmem:[#allocation11 + $0x38] sm:$0xff]
    %v218 = vsel %vm156, %v208, 0
    %220 = vmatpush.msra.mxu0 0.0
    %221 = vmatpush.msra.mxu0 0.0
    %222 = vmatpush.msra.mxu0 0.0
    %223 = vmatpush.msra.mxu0 0.0
    %224 = vmatpush.msra.mxu0 0.0
    %225 = vmatpush.msra.mxu0 0.0
    %226 = vmatpush.msra.mxu0 0.0
    %227 = vmatpush.msra.mxu0 0.0
    %228 = vmatpush.msra.mxu0 %v216
    %229 = vmatpush.msra.mxu0 %v215
    %230 = vmatpush.msra.mxu0 %v214
    %231 = vmatpush.msra.mxu0 %v213
    %232 = vmatpush.msra.mxu0 %v212
    %233 = vmatpush.msra.mxu0 %v211
    %234 = vmatpush.msra.mxu0 %v210
    %235 = vmatpush.msra.mxu0 %v209
    %236 = vmatmul.f32.gmra.mxu0 %v218
    %v237 = vpop.f32.mrf.mxu0
    %v238 = vadd.f32 0.0, %v237
    %239 = vdwg.mxu0
    %v240 = vmul.f32 %v238, %v238
    %v242 = vrot.slane %v240, 7
    %v244 = vsub.f32 %v238, %v242
    %v245 = vmax.f32 %v244, 0.0
    %v246 = vadd.f32 %v245, 1e-05
    %v247 = vrsqrt.pop %v246
    %v248 = vmul.f32 %v247, %v246
    %v249 = vmul.f32 %v248, %v247
    %v250 = vmul.f32 0.5, %v249
    %v251 = vsub.f32 1.5, %v250
    %v252 = vmul.f32 %v247, %v251
    %vm253 = vweird.f32 %v246
    %vm254 = vweird.f32 %v247
    %vm255 = vmor %vm253, %vm254
    %v256 = vsel %vm255, %v247, %v252
    %s257 = scalar_lea.vmem [#allocation11], 64
    %v258 = vld [vmem:[%s257] sm:$0xff]
    %v259 = vld [vmem:[%s257 + $0x8] sm:$0xff]
    %v260 = vld [vmem:[%s257 + $0x10] sm:$0xff]
    %v261 = vld [vmem:[%s257 + $0x18] sm:$0xff]
    %v262 = vld [vmem:[%s257 + $0x20] sm:$0xff]
    %v263 = vld [vmem:[%s257 + $0x28] sm:$0xff]
    %v264 = vld [vmem:[%s257 + $0x30] sm:$0xff]
    %v265 = vld [vmem:[%s257 + $0x38] sm:$0xff]
    %v266 = vperm.slane %v256, 1
    %v267 = vmul.f32 %v258, %v266
    %v268 = vmul.f32 %v259, %v266
    %v269 = vmul.f32 %v260, %v266
    %v270 = vmul.f32 %v261, %v266
    %v271 = vmul.f32 %v262, %v266
    %v272 = vmul.f32 %v263, %v266
    %v273 = vmul.f32 %v264, %v266
    %v274 = vmul.f32 %v265, %v266
    %v275 = vperm.slane %v238, 0
    %v276 = vmul.f32 %v267, %v275
    %v277 = vmul.f32 %v268, %v275
    %v278 = vmul.f32 %v269, %v275
    %v279 = vmul.f32 %v270, %v275
    %v280 = vmul.f32 %v271, %v275
    %v281 = vmul.f32 %v272, %v275
    %v282 = vmul.f32 %v273, %v275
    %v283 = vmul.f32 %v274, %v275
    %v284 = vsel %vm156, %v276, 0.0
    %285 = vadd.xlane.f32.xlu0 %v284
    %v286 = vpop.xlane.xlu0 %285
    %v287 = vsel %vm156, %v277, 0.0
    %288 = vadd.xlane.f32.xlu0 %v287
    %v289 = vpop.xlane.xlu0 %288
    %v290 = vsel %vm156, %v278, 0.0
    %291 = vadd.xlane.f32.xlu0 %v290
    %v292 = vpop.xlane.xlu0 %291
    %v293 = vsel %vm156, %v279, 0.0
    %294 = vadd.xlane.f32.xlu0 %v293
    %v295 = vpop.xlane.xlu0 %294
    %v296 = vsel %vm156, %v280, 0.0
    %297 = vadd.xlane.f32.xlu0 %v296
    %v298 = vpop.xlane.xlu0 %297
    %v299 = vsel %vm156, %v281, 0.0
    %300 = vadd.xlane.f32.xlu0 %v299
    %v301 = vpop.xlane.xlu0 %300
    %v302 = vsel %vm156, %v282, 0.0
    %303 = vadd.xlane.f32.xlu0 %v302
    %v304 = vpop.xlane.xlu0 %303
    %v305 = vsel %vm156, %v283, 0.0
    %306 = vadd.xlane.f32.xlu0 %v305
    %v307 = vpop.xlane.xlu0 %306
    %v309 = vsel %vm156, %v267, 0
    %v312 = vsel %vm156, %v268, 0
    %v315 = vsel %vm156, %v269, 0
    %v318 = vsel %vm156, %v270, 0
    %v321 = vsel %vm156, %v271, 0
    %v324 = vsel %vm156, %v272, 0
    %v327 = vsel %vm156, %v273, 0
    %v330 = vsel %vm156, %v274, 0
    %v333 = vsel %vm156, %v148, 0
    %v336 = vsel %vm156, %v149, 0
    %v339 = vsel %vm156, %v150, 0
    %v342 = vsel %vm156, %v151, 0
    %v345 = vsel %vm156, %v152, 0
    %v348 = vsel %vm156, %v153, 0
    %v351 = vsel %vm156, %v154, 0
    %v354 = vsel %vm156, %v155, 0
    %356 = vmatpush.xpose.msra.mxu0 0.0
    %357 = vmatpush.xpose.msra.mxu0 0.0
    %358 = vmatpush.xpose.msra.mxu0 0.0
    %359 = vmatpush.xpose.msra.mxu0 0.0
    %360 = vmatpush.xpose.msra.mxu0 0.0
    %361 = vmatpush.xpose.msra.mxu0 0.0
    %362 = vmatpush.xpose.msra.mxu0 0.0
    %363 = vmatpush.xpose.msra.mxu0 0.0
    %364 = vmatpush.xpose.msra.mxu0 %v354
    %365 = vmatpush.xpose.msra.mxu0 %v351
    %366 = vmatpush.xpose.msra.mxu0 %v348
    %367 = vmatpush.xpose.msra.mxu0 %v345
    %368 = vmatpush.xpose.msra.mxu0 %v342
    %369 = vmatpush.xpose.msra.mxu0 %v339
    %370 = vmatpush.xpose.msra.mxu0 %v336
    %371 = vmatpush.xpose.msra.mxu0 %v333
    %372 = vmatmul.f32.gmra.mxu0 %v309
    %v373 = vpop.f32.mrf.mxu0
    %v374 = vadd.f32 0.0, %v373
    %375 = vmatmul.f32.gmra.mxu0 %v312
    %v376 = vpop.f32.mrf.mxu0
    %v377 = vadd.f32 0.0, %v376
    %378 = vmatmul.f32.gmra.mxu0 %v315
    %v379 = vpop.f32.mrf.mxu0
    %v380 = vadd.f32 0.0, %v379
    %381 = vmatmul.f32.gmra.mxu0 %v318
    %v382 = vpop.f32.mrf.mxu0
    %v383 = vadd.f32 0.0, %v382
    %384 = vmatmul.f32.gmra.mxu0 %v321
    %v385 = vpop.f32.mrf.mxu0
    %v386 = vadd.f32 0.0, %v385
    %387 = vmatmul.f32.gmra.mxu0 %v324
    %v388 = vpop.f32.mrf.mxu0
    %v389 = vadd.f32 0.0, %v388
    %390 = vmatmul.f32.gmra.mxu0 %v327
    %v391 = vpop.f32.mrf.mxu0
    %v392 = vadd.f32 0.0, %v391
    %393 = vmatmul.f32.gmra.mxu0 %v330
    %v394 = vpop.f32.mrf.mxu0
    %v395 = vadd.f32 0.0, %v394
    %396 = vdwg.mxu0
    %v397 = vsub.f32 %v374, %v286
    %v398 = vsub.f32 %v377, %v289
    %v399 = vsub.f32 %v380, %v292
    %v400 = vsub.f32 %v383, %v295
    %v401 = vsub.f32 %v386, %v298
    %v402 = vsub.f32 %v389, %v301
    %v403 = vsub.f32 %v392, %v304
    %v404 = vsub.f32 %v395, %v307
    %v405 = vld [vmem:[%s2] sm:$0xff]
    %v406 = vld [vmem:[%s2 + $0x8] sm:$0xff]
    %v407 = vld [vmem:[%s2 + $0x10] sm:$0xff]
    %v408 = vld [vmem:[%s2 + $0x18] sm:$0xff]
    %v409 = vld [vmem:[%s2 + $0x20] sm:$0xff]
    %v410 = vld [vmem:[%s2 + $0x28] sm:$0xff]
    %v411 = vld [vmem:[%s2 + $0x30] sm:$0xff]
    %v412 = vld [vmem:[%s2 + $0x38] sm:$0xff]
    %414 = vset.pattern.permute.xlu0 0
    %415 = vperm.xlu0 %414, %v405
    %v416 = vpop.permute.xlu0 %415
    %419 = vset.pattern.permute.xlu0 0
    %420 = vperm.xlu0 %419, %v406
    %v421 = vpop.permute.xlu0 %420
    %424 = vset.pattern.permute.xlu0 0
    %425 = vperm.xlu0 %424, %v407
    %v426 = vpop.permute.xlu0 %425
    %429 = vset.pattern.permute.xlu0 0
    %430 = vperm.xlu0 %429, %v408
    %v431 = vpop.permute.xlu0 %430
    %434 = vset.pattern.permute.xlu0 0
    %435 = vperm.xlu0 %434, %v409
    %v436 = vpop.permute.xlu0 %435
    %439 = vset.pattern.permute.xlu0 0
    %440 = vperm.xlu0 %439, %v410
    %v441 = vpop.permute.xlu0 %440
    %444 = vset.pattern.permute.xlu0 0
    %445 = vperm.xlu0 %444, %v411
    %v446 = vpop.permute.xlu0 %445
    %449 = vset.pattern.permute.xlu0 0
    %450 = vperm.xlu0 %449, %v412
    %v451 = vpop.permute.xlu0 %450
    %v453 = vadd.f32 %v397, %v416
    %v454 = vadd.f32 %v398, %v421
    %v455 = vadd.f32 %v399, %v426
    %v456 = vadd.f32 %v400, %v431
    %v457 = vadd.f32 %v401, %v436
    %v458 = vadd.f32 %v402, %v441
    %v459 = vadd.f32 %v403, %v446
    %v460 = vadd.f32 %v404, %v451
    %s461 = scalar_lea.vmem [#allocation2], 64
    %v462 = vld [vmem:[%s461] sm:$0xff]
    %v463 = vld [vmem:[%s461 + $0x8] sm:$0xff]
    %v464 = vld [vmem:[%s461 + $0x10] sm:$0xff]
    %v465 = vld [vmem:[%s461 + $0x18] sm:$0xff]
    %v466 = vld [vmem:[%s461 + $0x20] sm:$0xff]
    %v467 = vld [vmem:[%s461 + $0x28] sm:$0xff]
    %v468 = vld [vmem:[%s461 + $0x30] sm:$0xff]
    %v469 = vld [vmem:[%s461 + $0x38] sm:$0xff]
    %v470 = vsel %vm156, %v462, 0.0
    %v471 = vsel %vm156, %v463, 0.0
    %v472 = vadd.f32 %v470, %v471
    %v473 = vsel %vm156, %v464, 0.0
    %v474 = vadd.f32 %v472, %v473
    %v475 = vsel %vm156, %v465, 0.0
    %v476 = vadd.f32 %v474, %v475
    %v477 = vsel %vm156, %v466, 0.0
    %v478 = vadd.f32 %v476, %v477
    %v479 = vsel %vm156, %v467, 0.0
    %v480 = vadd.f32 %v478, %v479
    %v481 = vsel %vm156, %v468, 0.0
    %v482 = vadd.f32 %v480, %v481
    %v483 = vsel %vm156, %v469, 0.0
    %v484 = vadd.f32 %v482, %v483
    %v485 = vrot.slane %v484, 4
    %v486 = vadd.f32 %v484, %v485
    %v487 = vrot.slane %v486, 2
    %v488 = vadd.f32 %v486, %v487
    %v489 = vrot.slane %v488, 1
    %v490 = vadd.f32 %v488, %v489
    %v491 = vmul.f32 %v462, %v462
    %v492 = vmul.f32 %v463, %v463
    %v493 = vmul.f32 %v464, %v464
    %v494 = vmul.f32 %v465, %v465
    %v495 = vmul.f32 %v466, %v466
    %v496 = vmul.f32 %v467, %v467
    %v497 = vmul.f32 %v468, %v468
    %v498 = vmul.f32 %v469, %v469
    %v499 = vsel %vm156, %v491, 0.0
    %v500 = vsel %vm156, %v492, 0.0
    %v501 = vadd.f32 %v499, %v500
    %v502 = vsel %vm156, %v493, 0.0
    %v503 = vadd.f32 %v501, %v502
    %v504 = vsel %vm156, %v494, 0.0
    %v505 = vadd.f32 %v503, %v504
    %v506 = vsel %vm156, %v495, 0.0
    %v507 = vadd.f32 %v505, %v506
    %v508 = vsel %vm156, %v496, 0.0
    %v509 = vadd.f32 %v507, %v508
    %v510 = vsel %vm156, %v497, 0.0
    %v511 = vadd.f32 %v509, %v510
    %v512 = vsel %vm156, %v498, 0.0
    %v513 = vadd.f32 %v511, %v512
    %v514 = vrot.slane %v513, 4
    %v515 = vadd.f32 %v513, %v514
    %v516 = vrot.slane %v515, 2
    %v517 = vadd.f32 %v515, %v516
    %v518 = vrot.slane %v517, 1
    %v519 = vadd.f32 %v517, %v518
    %v520 = vsel %vm207, %v490, %v519
    %v522 = vsel %vm156, %v520, 0
    %524 = vmatpush.msra.mxu0 0.0
    %525 = vmatpush.msra.mxu0 0.0
    %526 = vmatpush.msra.mxu0 0.0
    %527 = vmatpush.msra.mxu0 0.0
    %528 = vmatpush.msra.mxu0 0.0
    %529 = vmatpush.msra.mxu0 0.0
    %530 = vmatpush.msra.mxu0 0.0
    %531 = vmatpush.msra.mxu0 0.0
    %532 = vmatpush.msra.mxu0 %v216
    %533 = vmatpush.msra.mxu0 %v215
    %534 = vmatpush.msra.mxu0 %v214
    %535 = vmatpush.msra.mxu0 %v213
    %536 = vmatpush.msra.mxu0 %v212
    %537 = vmatpush.msra.mxu0 %v211
    %538 = vmatpush.msra.mxu0 %v210
    %539 = vmatpush.msra.mxu0 %v209
    %540 = vmatmul.f32.gmra.mxu0 %v522
    %v541 = vpop.f32.mrf.mxu0
    %v542 = vadd.f32 0.0, %v541
    %543 = vdwg.mxu0
    %v544 = vmul.f32 %v542, %v542
    %v546 = vrot.slane %v544, 7
    %v548 = vsub.f32 %v542, %v546
    %v549 = vmax.f32 %v548, 0.0
    %v550 = vadd.f32 %v549, 1e-05
    %v551 = vrsqrt.pop %v550
    %v552 = vmul.f32 %v551, %v550
    %v553 = vmul.f32 %v552, %v551
    %v554 = vmul.f32 0.5, %v553
    %v555 = vsub.f32 1.5, %v554
    %v556 = vmul.f32 %v551, %v555
    %vm557 = vweird.f32 %v550
    %vm558 = vweird.f32 %v551
    %vm559 = vmor %vm557, %vm558
    %v560 = vsel %vm559, %v551, %v556
    %v561 = vperm.slane %v560, 1
    %v562 = vmul.f32 %v258, %v561
    %v563 = vmul.f32 %v259, %v561
    %v564 = vmul.f32 %v260, %v561
    %v565 = vmul.f32 %v261, %v561
    %v566 = vmul.f32 %v262, %v561
    %v567 = vmul.f32 %v263, %v561
    %v568 = vmul.f32 %v264, %v561
    %v569 = vmul.f32 %v265, %v561
    %v570 = vperm.slane %v542, 0
    %v571 = vmul.f32 %v562, %v570
    %v572 = vmul.f32 %v563, %v570
    %v573 = vmul.f32 %v564, %v570
    %v574 = vmul.f32 %v565, %v570
    %v575 = vmul.f32 %v566, %v570
    %v576 = vmul.f32 %v567, %v570
    %v577 = vmul.f32 %v568, %v570
    %v578 = vmul.f32 %v569, %v570
    %v579 = vsel %vm156, %v571, 0.0
    %580 = vadd.xlane.f32.xlu0 %v579
    %v581 = vpop.xlane.xlu0 %580
    %v582 = vsel %vm156, %v572, 0.0
    %583 = vadd.xlane.f32.xlu0 %v582
    %v584 = vpop.xlane.xlu0 %583
    %v585 = vsel %vm156, %v573, 0.0
    %586 = vadd.xlane.f32.xlu0 %v585
    %v587 = vpop.xlane.xlu0 %586
    %v588 = vsel %vm156, %v574, 0.0
    %589 = vadd.xlane.f32.xlu0 %v588
    %v590 = vpop.xlane.xlu0 %589
    %v591 = vsel %vm156, %v575, 0.0
    %592 = vadd.xlane.f32.xlu0 %v591
    %v593 = vpop.xlane.xlu0 %592
    %v594 = vsel %vm156, %v576, 0.0
    %595 = vadd.xlane.f32.xlu0 %v594
    %v596 = vpop.xlane.xlu0 %595
    %v597 = vsel %vm156, %v577, 0.0
    %598 = vadd.xlane.f32.xlu0 %v597
    %v599 = vpop.xlane.xlu0 %598
    %v600 = vsel %vm156, %v578, 0.0
    %601 = vadd.xlane.f32.xlu0 %v600
    %v602 = vpop.xlane.xlu0 %601
    %v604 = vsel %vm156, %v562, 0
    %v607 = vsel %vm156, %v563, 0
    %v610 = vsel %vm156, %v564, 0
    %v613 = vsel %vm156, %v565, 0
    %v616 = vsel %vm156, %v566, 0
    %v619 = vsel %vm156, %v567, 0
    %v622 = vsel %vm156, %v568, 0
    %v625 = vsel %vm156, %v569, 0
    %v628 = vsel %vm156, %v462, 0
    %v631 = vsel %vm156, %v463, 0
    %v634 = vsel %vm156, %v464, 0
    %v637 = vsel %vm156, %v465, 0
    %v640 = vsel %vm156, %v466, 0
    %v643 = vsel %vm156, %v467, 0
    %v646 = vsel %vm156, %v468, 0
    %v649 = vsel %vm156, %v469, 0
    %651 = vmatpush.xpose.msra.mxu0 0.0
    %652 = vmatpush.xpose.msra.mxu0 0.0
    %653 = vmatpush.xpose.msra.mxu0 0.0
    %654 = vmatpush.xpose.msra.mxu0 0.0
    %655 = vmatpush.xpose.msra.mxu0 0.0
    %656 = vmatpush.xpose.msra.mxu0 0.0
    %657 = vmatpush.xpose.msra.mxu0 0.0
    %658 = vmatpush.xpose.msra.mxu0 0.0
    %659 = vmatpush.xpose.msra.mxu0 %v649
    %660 = vmatpush.xpose.msra.mxu0 %v646
    %661 = vmatpush.xpose.msra.mxu0 %v643
    %662 = vmatpush.xpose.msra.mxu0 %v640
    %663 = vmatpush.xpose.msra.mxu0 %v637
    %664 = vmatpush.xpose.msra.mxu0 %v634
    %665 = vmatpush.xpose.msra.mxu0 %v631
    %666 = vmatpush.xpose.msra.mxu0 %v628
    %667 = vmatmul.f32.gmra.mxu0 %v604
    %v668 = vpop.f32.mrf.mxu0
    %v669 = vadd.f32 0.0, %v668
    %670 = vmatmul.f32.gmra.mxu0 %v607
    %v671 = vpop.f32.mrf.mxu0
    %v672 = vadd.f32 0.0, %v671
    %673 = vmatmul.f32.gmra.mxu0 %v610
    %v674 = vpop.f32.mrf.mxu0
    %v675 = vadd.f32 0.0, %v674
    %676 = vmatmul.f32.gmra.mxu0 %v613
    %v677 = vpop.f32.mrf.mxu0
    %v678 = vadd.f32 0.0, %v677
    %679 = vmatmul.f32.gmra.mxu0 %v616
    %v680 = vpop.f32.mrf.mxu0
    %v681 = vadd.f32 0.0, %v680
    %682 = vmatmul.f32.gmra.mxu0 %v619
    %v683 = vpop.f32.mrf.mxu0
    %v684 = vadd.f32 0.0, %v683
    %685 = vmatmul.f32.gmra.mxu0 %v622
    %v686 = vpop.f32.mrf.mxu0
    %v687 = vadd.f32 0.0, %v686
    %688 = vmatmul.f32.gmra.mxu0 %v625
    %v689 = vpop.f32.mrf.mxu0
    %v690 = vadd.f32 0.0, %v689
    %691 = vdwg.mxu0
    %v692 = vsub.f32 %v669, %v581
    %v693 = vsub.f32 %v672, %v584
    %v694 = vsub.f32 %v675, %v587
    %v695 = vsub.f32 %v678, %v590
    %v696 = vsub.f32 %v681, %v593
    %v697 = vsub.f32 %v684, %v596
    %v698 = vsub.f32 %v687, %v599
    %v699 = vsub.f32 %v690, %v602
    %v700 = vadd.f32 %v692, %v416
    %v701 = vadd.f32 %v693, %v421
    %v702 = vadd.f32 %v694, %v426
    %v703 = vadd.f32 %v695, %v431
    %v704 = vadd.f32 %v696, %v436
    %v705 = vadd.f32 %v697, %v441
    %v706 = vadd.f32 %v698, %v446
    %v707 = vadd.f32 %v699, %v451
    %v708 = vld [vmem:[#allocation5] sm:$0xff]
    %v709 = vld [vmem:[#allocation5 + $0x8] sm:$0xff]
    %v710 = vld [vmem:[%s5] sm:$0xff]
    %v711 = vld [vmem:[%s5 + $0x8] sm:$0xff]
    %v712 = vld [vmem:[%s5 + $0x10] sm:$0xff]
    %v713 = vld [vmem:[%s5 + $0x18] sm:$0xff]
    %v714 = vld [vmem:[%s5 + $0x20] sm:$0xff]
    %v715 = vld [vmem:[%s5 + $0x28] sm:$0xff]
    %v716 = vld [vmem:[%s5 + $0x30] sm:$0xff]
    %v717 = vld [vmem:[%s5 + $0x38] sm:$0xff]
    %v718 = vld [vmem:[%s6] sm:$0x1]
    %v720 = vperm.slane %v718, 0
    %v723 = vsel %vm156, %v708, 0
    %v726 = vsel %vm156, %v709, 0
    %728 = vmatpush.msra.mxu0 0.0
    %729 = vmatpush.msra.mxu0 0.0
    %730 = vmatpush.msra.mxu0 0.0
    %731 = vmatpush.msra.mxu0 0.0
    %732 = vmatpush.msra.mxu0 0.0
    %733 = vmatpush.msra.mxu0 0.0
    %734 = vmatpush.msra.mxu0 0.0
    %735 = vmatpush.msra.mxu0 0.0
    %736 = vmatpush.msra.mxu0 %v717
    %737 = vmatpush.msra.mxu0 %v716
    %738 = vmatpush.msra.mxu0 %v715
    %739 = vmatpush.msra.mxu0 %v714
    %740 = vmatpush.msra.mxu0 %v713
    %741 = vmatpush.msra.mxu0 %v712
    %742 = vmatpush.msra.mxu0 %v711
    %743 = vmatpush.msra.mxu0 %v710
    %744 = vmatmul.f32.gmra.mxu0 %v723
    %v745 = vpop.f32.mrf.mxu0
    %v746 = vadd.f32 %v720, %v745
    %747 = vmatmul.f32.gmra.mxu0 %v726
    %v748 = vpop.f32.mrf.mxu0
    %v749 = vadd.f32 %v720, %v748
    %750 = vdwg.mxu0
    %v751 = vld [vmem:[#allocation7] sm:$0xff]
    %v752 = vld [vmem:[#allocation7 + $0x8] sm:$0xff]
    %v753 = vld [vmem:[#allocation7 + $0x10] sm:$0xff]
    %v754 = vld [vmem:[#allocation7 + $0x18] sm:$0xff]
    %v755 = vld [vmem:[#allocation7 + $0x20] sm:$0xff]
    %v756 = vld [vmem:[#allocation7 + $0x28] sm:$0xff]
    %v757 = vld [vmem:[#allocation7 + $0x30] sm:$0xff]
    %v758 = vld [vmem:[#allocation7 + $0x38] sm:$0xff]
    %v759 = vld [vmem:[#allocation7 + $0x40] sm:$0xff]
    %v760 = vld [vmem:[#allocation7 + $0x48] sm:$0xff]
    %v761 = vld [vmem:[#allocation7 + $0x50] sm:$0xff]
    %v762 = vld [vmem:[#allocation7 + $0x58] sm:$0xff]
    %v763 = vld [vmem:[#allocation7 + $0x60] sm:$0xff]
    %v764 = vld [vmem:[#allocation7 + $0x68] sm:$0xff]
    %v765 = vld [vmem:[#allocation7 + $0x70] sm:$0xff]
    %v766 = vld [vmem:[#allocation7 + $0x78] sm:$0xff]
    %v767 = vld [vmem:[%s4] sm:$0x3]
    %v769 = vperm.slane %v767, 0
    %v770 = vperm.slane %v767, 1
    %v774 = vsel %vm156, %v453, 0
    %v777 = vsel %vm156, %v454, 0
    %v780 = vsel %vm156, %v455, 0
    %v783 = vsel %vm156, %v456, 0
    %v786 = vsel %vm156, %v457, 0
    %v789 = vsel %vm156, %v458, 0
    %v792 = vsel %vm156, %v459, 0
    %v795 = vsel %vm156, %v460, 0
    %v798 = vsel %vm156, %v700, 0
    %v801 = vsel %vm156, %v701, 0
    %v804 = vsel %vm156, %v702, 0
    %v807 = vsel %vm156, %v703, 0
    %v810 = vsel %vm156, %v704, 0
    %v813 = vsel %vm156, %v705, 0
    %v816 = vsel %vm156, %v706, 0
    %v819 = vsel %vm156, %v707, 0
    %821 = vmatpush.msra.mxu0 0.0
    %822 = vmatpush.msra.mxu0 0.0
    %823 = vmatpush.msra.mxu0 0.0
    %824 = vmatpush.msra.mxu0 0.0
    %825 = vmatpush.msra.mxu0 0.0
    %826 = vmatpush.msra.mxu0 0.0
    %827 = vmatpush.msra.mxu0 0.0
    %828 = vmatpush.msra.mxu0 0.0
    %829 = vmatpush.msra.mxu0 %v765
    %830 = vmatpush.msra.mxu0 %v763
    %831 = vmatpush.msra.mxu0 %v761
    %832 = vmatpush.msra.mxu0 %v759
    %833 = vmatpush.msra.mxu0 %v757
    %834 = vmatpush.msra.mxu0 %v755
    %835 = vmatpush.msra.mxu0 %v753
    %836 = vmatpush.msra.mxu0 %v751
    %837 = vmatmul.f32.gmra.mxu0 %v774
    %v838 = vpop.f32.mrf.mxu0
    %v839 = vadd.f32 %v769, %v838
    %840 = vmatmul.f32.gmra.mxu0 %v777
    %v841 = vpop.f32.mrf.mxu0
    %v842 = vadd.f32 %v769, %v841
    %843 = vmatmul.f32.gmra.mxu0 %v780
    %v844 = vpop.f32.mrf.mxu0
    %v845 = vadd.f32 %v769, %v844
    %846 = vmatmul.f32.gmra.mxu0 %v783
    %v847 = vpop.f32.mrf.mxu0
    %v848 = vadd.f32 %v769, %v847
    %849 = vmatmul.f32.gmra.mxu0 %v786
    %v850 = vpop.f32.mrf.mxu0
    %v851 = vadd.f32 %v769, %v850
    %852 = vmatmul.f32.gmra.mxu0 %v789
    %v853 = vpop.f32.mrf.mxu0
    %v854 = vadd.f32 %v769, %v853
    %855 = vmatmul.f32.gmra.mxu0 %v792
    %v856 = vpop.f32.mrf.mxu0
    %v857 = vadd.f32 %v769, %v856
    %858 = vmatmul.f32.gmra.mxu0 %v795
    %v859 = vpop.f32.mrf.mxu0
    %v860 = vadd.f32 %v769, %v859
    %861 = vmatmul.f32.gmra.mxu0 %v798
    %v862 = vpop.f32.mrf.mxu0
    %v863 = vadd.f32 %v769, %v862
    %864 = vmatmul.f32.gmra.mxu0 %v801
    %v865 = vpop.f32.mrf.mxu0
    %v866 = vadd.f32 %v769, %v865
    %867 = vmatmul.f32.gmra.mxu0 %v804
    %v868 = vpop.f32.mrf.mxu0
    %v869 = vadd.f32 %v769, %v868
    %870 = vmatmul.f32.gmra.mxu0 %v807
    %v871 = vpop.f32.mrf.mxu0
    %v872 = vadd.f32 %v769, %v871
    %873 = vmatmul.f32.gmra.mxu0 %v810
    %v874 = vpop.f32.mrf.mxu0
    %v875 = vadd.f32 %v769, %v874
    %876 = vmatmul.f32.gmra.mxu0 %v813
    %v877 = vpop.f32.mrf.mxu0
    %v878 = vadd.f32 %v769, %v877
    %879 = vmatmul.f32.gmra.mxu0 %v816
    %v880 = vpop.f32.mrf.mxu0
    %v881 = vadd.f32 %v769, %v880
    %882 = vmatmul.f32.gmra.mxu0 %v819
    %v883 = vpop.f32.mrf.mxu0
    %v884 = vadd.f32 %v769, %v883
    %885 = vdwg.mxu0
    %886 = vmatpush.msra.mxu0 0.0
    %887 = vmatpush.msra.mxu0 0.0
    %888 = vmatpush.msra.mxu0 0.0
    %889 = vmatpush.msra.mxu0 0.0
    %890 = vmatpush.msra.mxu0 0.0
    %891 = vmatpush.msra.mxu0 0.0
    %892 = vmatpush.msra.mxu0 0.0
    %893 = vmatpush.msra.mxu0 0.0
    %894 = vmatpush.msra.mxu0 %v766
    %895 = vmatpush.msra.mxu0 %v764
    %896 = vmatpush.msra.mxu0 %v762
    %897 = vmatpush.msra.mxu0 %v760
    %898 = vmatpush.msra.mxu0 %v758
    %899 = vmatpush.msra.mxu0 %v756
    %900 = vmatpush.msra.mxu0 %v754
    %901 = vmatpush.msra.mxu0 %v752
    %902 = vmatmul.f32.gmra.mxu0 %v774
    %v903 = vpop.f32.mrf.mxu0
    %v904 = vadd.f32 %v770, %v903
    %905 = vmatmul.f32.gmra.mxu0 %v777
    %v906 = vpop.f32.mrf.mxu0
    %v907 = vadd.f32 %v770, %v906
    %908 = vmatmul.f32.gmra.mxu0 %v780
    %v909 = vpop.f32.mrf.mxu0
    %v910 = vadd.f32 %v770, %v909
    %911 = vmatmul.f32.gmra.mxu0 %v783
    %v912 = vpop.f32.mrf.mxu0
    %v913 = vadd.f32 %v770, %v912
    %914 = vmatmul.f32.gmra.mxu0 %v786
    %v915 = vpop.f32.mrf.mxu0
    %v916 = vadd.f32 %v770, %v915
    %917 = vmatmul.f32.gmra.mxu0 %v789
    %v918 = vpop.f32.mrf.mxu0
    %v919 = vadd.f32 %v770, %v918
    %920 = vmatmul.f32.gmra.mxu0 %v792
    %v921 = vpop.f32.mrf.mxu0
    %v922 = vadd.f32 %v770, %v921
    %923 = vmatmul.f32.gmra.mxu0 %v795
    %v924 = vpop.f32.mrf.mxu0
    %v925 = vadd.f32 %v770, %v924
    %926 = vmatmul.f32.gmra.mxu0 %v798
    %v927 = vpop.f32.mrf.mxu0
    %v928 = vadd.f32 %v770, %v927
    %929 = vmatmul.f32.gmra.mxu0 %v801
    %v930 = vpop.f32.mrf.mxu0
    %v931 = vadd.f32 %v770, %v930
    %932 = vmatmul.f32.gmra.mxu0 %v804
    %v933 = vpop.f32.mrf.mxu0
    %v934 = vadd.f32 %v770, %v933
    %935 = vmatmul.f32.gmra.mxu0 %v807
    %v936 = vpop.f32.mrf.mxu0
    %v937 = vadd.f32 %v770, %v936
    %938 = vmatmul.f32.gmra.mxu0 %v810
    %v939 = vpop.f32.mrf.mxu0
    %v940 = vadd.f32 %v770, %v939
    %941 = vmatmul.f32.gmra.mxu0 %v813
    %v942 = vpop.f32.mrf.mxu0
    %v943 = vadd.f32 %v770, %v942
    %944 = vmatmul.f32.gmra.mxu0 %v816
    %v945 = vpop.f32.mrf.mxu0
    %v946 = vadd.f32 %v770, %v945
    %947 = vmatmul.f32.gmra.mxu0 %v819
    %v948 = vpop.f32.mrf.mxu0
    %v949 = vadd.f32 %v770, %v948
    %950 = vdwg.mxu0
    %959 = vrot.lane.b32.xlu0 %v839, 64
    %v960 = vpop.permute.xlu0 %959
    %961 = vrot.lane.b32.xlu0 %v842, 64
    %v962 = vpop.permute.xlu0 %961
    %963 = vrot.lane.b32.xlu0 %v845, 64
    %v964 = vpop.permute.xlu0 %963
    %965 = vrot.lane.b32.xlu0 %v848, 64
    %v966 = vpop.permute.xlu0 %965
    %967 = vrot.lane.b32.xlu0 %v851, 64
    %v968 = vpop.permute.xlu0 %967
    %969 = vrot.lane.b32.xlu0 %v854, 64
    %v970 = vpop.permute.xlu0 %969
    %971 = vrot.lane.b32.xlu0 %v857, 64
    %v972 = vpop.permute.xlu0 %971
    %973 = vrot.lane.b32.xlu0 %v860, 64
    %v974 = vpop.permute.xlu0 %973
    %vm975 = vcmask 261120
    %v976 = vsel %vm975, %v839, 0
    %v978 = vsel %vm975, %v842, 0
    %v980 = vsel %vm975, %v845, 0
    %v982 = vsel %vm975, %v848, 0
    %v984 = vsel %vm975, %v851, 0
    %v986 = vsel %vm975, %v854, 0
    %v988 = vsel %vm975, %v857, 0
    %v990 = vsel %vm975, %v860, 0
    %v992 = vsel %vm975, %v960, 0
    %v994 = vsel %vm975, %v962, 0
    %v996 = vsel %vm975, %v964, 0
    %v998 = vsel %vm975, %v966, 0
    %v1000 = vsel %vm975, %v968, 0
    %v1002 = vsel %vm975, %v970, 0
    %v1004 = vsel %vm975, %v972, 0
    %v1006 = vsel %vm975, %v974, 0
    %1008 = vmatpush.xpose.msra.mxu0 0.0
    %1009 = vmatpush.xpose.msra.mxu0 0.0
    %1010 = vmatpush.xpose.msra.mxu0 0.0
    %1011 = vmatpush.xpose.msra.mxu0 0.0
    %1012 = vmatpush.xpose.msra.mxu0 0.0
    %1013 = vmatpush.xpose.msra.mxu0 0.0
    %1014 = vmatpush.xpose.msra.mxu0 0.0
    %1015 = vmatpush.xpose.msra.mxu0 0.0
    %1016 = vmatpush.xpose.msra.mxu0 %v1006
    %1017 = vmatpush.xpose.msra.mxu0 %v1004
    %1018 = vmatpush.xpose.msra.mxu0 %v1002
    %1019 = vmatpush.xpose.msra.mxu0 %v1000
    %1020 = vmatpush.xpose.msra.mxu0 %v998
    %1021 = vmatpush.xpose.msra.mxu0 %v996
    %1022 = vmatpush.xpose.msra.mxu0 %v994
    %1023 = vmatpush.xpose.msra.mxu0 %v992
    %1024 = vmatmul.f32.gmra.mxu0 %v976
    %v1025 = vpop.f32.mrf.mxu0
    %v1026 = vadd.f32 0.0, %v1025
    %1027 = vmatmul.f32.gmra.mxu0 %v978
    %v1028 = vpop.f32.mrf.mxu0
    %v1029 = vadd.f32 0.0, %v1028
    %1030 = vmatmul.f32.gmra.mxu0 %v980
    %v1031 = vpop.f32.mrf.mxu0
    %v1032 = vadd.f32 0.0, %v1031
    %1033 = vmatmul.f32.gmra.mxu0 %v982
    %v1034 = vpop.f32.mrf.mxu0
    %v1035 = vadd.f32 0.0, %v1034
    %1036 = vmatmul.f32.gmra.mxu0 %v984
    %v1037 = vpop.f32.mrf.mxu0
    %v1038 = vadd.f32 0.0, %v1037
    %1039 = vmatmul.f32.gmra.mxu0 %v986
    %v1040 = vpop.f32.mrf.mxu0
    %v1041 = vadd.f32 0.0, %v1040
    %1042 = vmatmul.f32.gmra.mxu0 %v988
    %v1043 = vpop.f32.mrf.mxu0
    %v1044 = vadd.f32 0.0, %v1043
    %1045 = vmatmul.f32.gmra.mxu0 %v990
    %v1046 = vpop.f32.mrf.mxu0
    %v1047 = vadd.f32 0.0, %v1046
    %1048 = vdwg.mxu0
    %v1049 = vsel %vm156, %v1026, -inf
    %1050 = vmax.xlane.f32.xlu0 %v1049
    %v1051 = vpop.xlane.xlu0 %1050
    %v1052 = vsel %vm156, %v1029, -inf
    %1053 = vmax.xlane.f32.xlu0 %v1052
    %v1054 = vpop.xlane.xlu0 %1053
    %v1055 = vsel %vm156, %v1032, -inf
    %1056 = vmax.xlane.f32.xlu0 %v1055
    %v1057 = vpop.xlane.xlu0 %1056
    %v1058 = vsel %vm156, %v1035, -inf
    %1059 = vmax.xlane.f32.xlu0 %v1058
    %v1060 = vpop.xlane.xlu0 %1059
    %v1061 = vsel %vm156, %v1038, -inf
    %1062 = vmax.xlane.f32.xlu0 %v1061
    %v1063 = vpop.xlane.xlu0 %1062
    %v1064 = vsel %vm156, %v1041, -inf
    %1065 = vmax.xlane.f32.xlu0 %v1064
    %v1066 = vpop.xlane.xlu0 %1065
    %v1067 = vsel %vm156, %v1044, -inf
    %1068 = vmax.xlane.f32.xlu0 %v1067
    %v1069 = vpop.xlane.xlu0 %1068
    %v1070 = vsel %vm156, %v1047, -inf
    %1071 = vmax.xlane.f32.xlu0 %v1070
    %v1072 = vpop.xlane.xlu0 %1071
    %v1073 = vsub.f32 %v1026, %v1051
    %v1074 = vsub.f32 %v1029, %v1054
    %v1075 = vsub.f32 %v1032, %v1057
    %v1076 = vsub.f32 %v1035, %v1060
    %v1077 = vsub.f32 %v1038, %v1063
    %v1078 = vsub.f32 %v1041, %v1066
    %v1079 = vsub.f32 %v1044, %v1069
    %v1080 = vsub.f32 %v1047, %v1072
    %v1081 = vmul.f32 %v1073, 1.442695
    %v1082 = vpow.pop %v1081
    %v1083 = vmul.f32 %v1074, 1.442695
    %v1084 = vpow.pop %v1083
    %v1085 = vmul.f32 %v1075, 1.442695
    %v1086 = vpow.pop %v1085
    %v1087 = vmul.f32 %v1076, 1.442695
    %v1088 = vpow.pop %v1087
    %v1089 = vmul.f32 %v1077, 1.442695
    %v1090 = vpow.pop %v1089
    %v1091 = vmul.f32 %v1078, 1.442695
    %v1092 = vpow.pop %v1091
    %v1093 = vmul.f32 %v1079, 1.442695
    %v1094 = vpow.pop %v1093
    %v1095 = vmul.f32 %v1080, 1.442695
    %v1096 = vpow.pop %v1095
    %v1097 = vsel %vm156, %v1082, 0.0
    %1098 = vadd.xlane.f32.xlu0 %v1097
    %v1099 = vpop.xlane.xlu0 %1098
    %v1100 = vsel %vm156, %v1084, 0.0
    %1101 = vadd.xlane.f32.xlu0 %v1100
    %v1102 = vpop.xlane.xlu0 %1101
    %v1103 = vsel %vm156, %v1086, 0.0
    %1104 = vadd.xlane.f32.xlu0 %v1103
    %v1105 = vpop.xlane.xlu0 %1104
    %v1106 = vsel %vm156, %v1088, 0.0
    %1107 = vadd.xlane.f32.xlu0 %v1106
    %v1108 = vpop.xlane.xlu0 %1107
    %v1109 = vsel %vm156, %v1090, 0.0
    %1110 = vadd.xlane.f32.xlu0 %v1109
    %v1111 = vpop.xlane.xlu0 %1110
    %v1112 = vsel %vm156, %v1092, 0.0
    %1113 = vadd.xlane.f32.xlu0 %v1112
    %v1114 = vpop.xlane.xlu0 %1113
    %v1115 = vsel %vm156, %v1094, 0.0
    %1116 = vadd.xlane.f32.xlu0 %v1115
    %v1117 = vpop.xlane.xlu0 %1116
    %v1118 = vsel %vm156, %v1096, 0.0
    %1119 = vadd.xlane.f32.xlu0 %v1118
    %v1120 = vpop.xlane.xlu0 %1119
    %v1121 = vrcp.pop %v1099
    %v1122 = vmul.f32 %v1099, %v1121
    %v1123 = vsub.f32 1.0, %v1122
    %v1124 = vmul.f32 %v1121, %v1123
    %v1125 = vadd.f32 %v1121, %v1124
    %vm1126 = vweird.f32 %v1099
    %vm1127 = vweird.f32 %v1121
    %vm1128 = vmor %vm1126, %vm1127
    %v1129 = vsel %vm1128, %v1121, %v1125
    %v1130 = vand.u32 2147483647, %v1099
    %vm1131 = vcmp.eq.f32.partialorder %v1130, 8.507059e+37
    %v1132 = vand.u32 %v1099, 2147483648
    %v1133 = vor.u32 1.1754944e-38, %v1132
    %v1134 = vsel %vm1131, %v1133, %v1129
    %v1135 = vmul.f32 %v1082, %v1134
    %v1136 = vrcp.pop %v1102
    %v1137 = vmul.f32 %v1102, %v1136
    %v1138 = vsub.f32 1.0, %v1137
    %v1139 = vmul.f32 %v1136, %v1138
    %v1140 = vadd.f32 %v1136, %v1139
    %vm1141 = vweird.f32 %v1102
    %vm1142 = vweird.f32 %v1136
    %vm1143 = vmor %vm1141, %vm1142
    %v1144 = vsel %vm1143, %v1136, %v1140
    %v1145 = vand.u32 2147483647, %v1102
    %vm1146 = vcmp.eq.f32.partialorder %v1145, 8.507059e+37
    %v1147 = vand.u32 %v1102, 2147483648
    %v1148 = vor.u32 1.1754944e-38, %v1147
    %v1149 = vsel %vm1146, %v1148, %v1144
    %v1150 = vmul.f32 %v1084, %v1149
    %v1151 = vrcp.pop %v1105
    %v1152 = vmul.f32 %v1105, %v1151
    %v1153 = vsub.f32 1.0, %v1152
    %v1154 = vmul.f32 %v1151, %v1153
    %v1155 = vadd.f32 %v1151, %v1154
    %vm1156 = vweird.f32 %v1105
    %vm1157 = vweird.f32 %v1151
    %vm1158 = vmor %vm1156, %vm1157
    %v1159 = vsel %vm1158, %v1151, %v1155
    %v1160 = vand.u32 2147483647, %v1105
    %vm1161 = vcmp.eq.f32.partialorder %v1160, 8.507059e+37
    %v1162 = vand.u32 %v1105, 2147483648
    %v1163 = vor.u32 1.1754944e-38, %v1162
    %v1164 = vsel %vm1161, %v1163, %v1159
    %v1165 = vmul.f32 %v1086, %v1164
    %v1166 = vrcp.pop %v1108
    %v1167 = vmul.f32 %v1108, %v1166
    %v1168 = vsub.f32 1.0, %v1167
    %v1169 = vmul.f32 %v1166, %v1168
    %v1170 = vadd.f32 %v1166, %v1169
    %vm1171 = vweird.f32 %v1108
    %vm1172 = vweird.f32 %v1166
    %vm1173 = vmor %vm1171, %vm1172
    %v1174 = vsel %vm1173, %v1166, %v1170
    %v1175 = vand.u32 2147483647, %v1108
    %vm1176 = vcmp.eq.f32.partialorder %v1175, 8.507059e+37
    %v1177 = vand.u32 %v1108, 2147483648
    %v1178 = vor.u32 1.1754944e-38, %v1177
    %v1179 = vsel %vm1176, %v1178, %v1174
    %v1180 = vmul.f32 %v1088, %v1179
    %v1181 = vrcp.pop %v1111
    %v1182 = vmul.f32 %v1111, %v1181
    %v1183 = vsub.f32 1.0, %v1182
    %v1184 = vmul.f32 %v1181, %v1183
    %v1185 = vadd.f32 %v1181, %v1184
    %vm1186 = vweird.f32 %v1111
    %vm1187 = vweird.f32 %v1181
    %vm1188 = vmor %vm1186, %vm1187
    %v1189 = vsel %vm1188, %v1181, %v1185
    %v1190 = vand.u32 2147483647, %v1111
    %vm1191 = vcmp.eq.f32.partialorder %v1190, 8.507059e+37
    %v1192 = vand.u32 %v1111, 2147483648
    %v1193 = vor.u32 1.1754944e-38, %v1192
    %v1194 = vsel %vm1191, %v1193, %v1189
    %v1195 = vmul.f32 %v1090, %v1194
    %v1196 = vrcp.pop %v1114
    %v1197 = vmul.f32 %v1114, %v1196
    %v1198 = vsub.f32 1.0, %v1197
    %v1199 = vmul.f32 %v1196, %v1198
    %v1200 = vadd.f32 %v1196, %v1199
    %vm1201 = vweird.f32 %v1114
    %vm1202 = vweird.f32 %v1196
    %vm1203 = vmor %vm1201, %vm1202
    %v1204 = vsel %vm1203, %v1196, %v1200
    %v1205 = vand.u32 2147483647, %v1114
    %vm1206 = vcmp.eq.f32.partialorder %v1205, 8.507059e+37
    %v1207 = vand.u32 %v1114, 2147483648
    %v1208 = vor.u32 1.1754944e-38, %v1207
    %v1209 = vsel %vm1206, %v1208, %v1204
    %v1210 = vmul.f32 %v1092, %v1209
    %v1211 = vrcp.pop %v1117
    %v1212 = vmul.f32 %v1117, %v1211
    %v1213 = vsub.f32 1.0, %v1212
    %v1214 = vmul.f32 %v1211, %v1213
    %v1215 = vadd.f32 %v1211, %v1214
    %vm1216 = vweird.f32 %v1117
    %vm1217 = vweird.f32 %v1211
    %vm1218 = vmor %vm1216, %vm1217
    %v1219 = vsel %vm1218, %v1211, %v1215
    %v1220 = vand.u32 2147483647, %v1117
    %vm1221 = vcmp.eq.f32.partialorder %v1220, 8.507059e+37
    %v1222 = vand.u32 %v1117, 2147483648
    %v1223 = vor.u32 1.1754944e-38, %v1222
    %v1224 = vsel %vm1221, %v1223, %v1219
    %v1225 = vmul.f32 %v1094, %v1224
    %v1226 = vrcp.pop %v1120
    %v1227 = vmul.f32 %v1120, %v1226
    %v1228 = vsub.f32 1.0, %v1227
    %v1229 = vmul.f32 %v1226, %v1228
    %v1230 = vadd.f32 %v1226, %v1229
    %vm1231 = vweird.f32 %v1120
    %vm1232 = vweird.f32 %v1226
    %vm1233 = vmor %vm1231, %vm1232
    %v1234 = vsel %vm1233, %v1226, %v1230
    %v1235 = vand.u32 2147483647, %v1120
    %vm1236 = vcmp.eq.f32.partialorder %v1235, 8.507059e+37
    %v1237 = vand.u32 %v1120, 2147483648
    %v1238 = vor.u32 1.1754944e-38, %v1237
    %v1239 = vsel %vm1236, %v1238, %v1234
    %v1240 = vmul.f32 %v1096, %v1239
    %v1242 = vsel %vm156, %v1135, 0
    %v1245 = vsel %vm156, %v1150, 0
    %v1248 = vsel %vm156, %v1165, 0
    %v1251 = vsel %vm156, %v1180, 0
    %v1254 = vsel %vm156, %v1195, 0
    %v1257 = vsel %vm156, %v1210, 0
    %v1260 = vsel %vm156, %v1225, 0
    %v1263 = vsel %vm156, %v1240, 0
    %1265 = vmatpush.msra.mxu0 0.0
    %1266 = vmatpush.msra.mxu0 0.0
    %1267 = vmatpush.msra.mxu0 0.0
    %1268 = vmatpush.msra.mxu0 0.0
    %1269 = vmatpush.msra.mxu0 0.0
    %1270 = vmatpush.msra.mxu0 0.0
    %1271 = vmatpush.msra.mxu0 0.0
    %1272 = vmatpush.msra.mxu0 0.0
    %1273 = vmatpush.msra.mxu0 %v925
    %1274 = vmatpush.msra.mxu0 %v922
    %1275 = vmatpush.msra.mxu0 %v919
    %1276 = vmatpush.msra.mxu0 %v916
    %1277 = vmatpush.msra.mxu0 %v913
    %1278 = vmatpush.msra.mxu0 %v910
    %1279 = vmatpush.msra.mxu0 %v907
    %1280 = vmatpush.msra.mxu0 %v904
    %1281 = vmatmul.f32.gmra.mxu0 %v1242
    %v1282 = vpop.f32.mrf.mxu0
    %v1283 = vadd.f32 0.0, %v1282
    %1284 = vmatmul.f32.gmra.mxu0 %v1245
    %v1285 = vpop.f32.mrf.mxu0
    %v1286 = vadd.f32 0.0, %v1285
    %1287 = vmatmul.f32.gmra.mxu0 %v1248
    %v1288 = vpop.f32.mrf.mxu0
    %v1289 = vadd.f32 0.0, %v1288
    %1290 = vmatmul.f32.gmra.mxu0 %v1251
    %v1291 = vpop.f32.mrf.mxu0
    %v1292 = vadd.f32 0.0, %v1291
    %1293 = vmatmul.f32.gmra.mxu0 %v1254
    %v1294 = vpop.f32.mrf.mxu0
    %v1295 = vadd.f32 0.0, %v1294
    %1296 = vmatmul.f32.gmra.mxu0 %v1257
    %v1297 = vpop.f32.mrf.mxu0
    %v1298 = vadd.f32 0.0, %v1297
    %1299 = vmatmul.f32.gmra.mxu0 %v1260
    %v1300 = vpop.f32.mrf.mxu0
    %v1301 = vadd.f32 0.0, %v1300
    %1302 = vmatmul.f32.gmra.mxu0 %v1263
    %v1303 = vpop.f32.mrf.mxu0
    %v1304 = vadd.f32 0.0, %v1303
    %1305 = vdwg.mxu0
    %v1306 = vld [vmem:[#allocation8] sm:$0xff]
    %v1307 = vld [vmem:[#allocation8 + $0x8] sm:$0xff]
    %v1308 = vld [vmem:[#allocation8 + $0x10] sm:$0xff]
    %v1309 = vld [vmem:[#allocation8 + $0x18] sm:$0xff]
    %1310 = vrot.lane.b32.xlu0 %v839, 96
    %v1311 = vpop.permute.xlu0 %1310
    %1312 = vrot.lane.b32.xlu0 %v842, 96
    %v1313 = vpop.permute.xlu0 %1312
    %1314 = vrot.lane.b32.xlu0 %v845, 96
    %v1315 = vpop.permute.xlu0 %1314
    %1316 = vrot.lane.b32.xlu0 %v848, 96
    %v1317 = vpop.permute.xlu0 %1316
    %1318 = vrot.lane.b32.xlu0 %v851, 96
    %v1319 = vpop.permute.xlu0 %1318
    %1320 = vrot.lane.b32.xlu0 %v854, 96
    %v1321 = vpop.permute.xlu0 %1320
    %1322 = vrot.lane.b32.xlu0 %v857, 96
    %v1323 = vpop.permute.xlu0 %1322
    %1324 = vrot.lane.b32.xlu0 %v860, 96
    %v1325 = vpop.permute.xlu0 %1324
    %1326 = vrot.lane.b32.xlu0 %v839, 32
    %v1327 = vpop.permute.xlu0 %1326
    %1328 = vrot.lane.b32.xlu0 %v842, 32
    %v1329 = vpop.permute.xlu0 %1328
    %1330 = vrot.lane.b32.xlu0 %v845, 32
    %v1331 = vpop.permute.xlu0 %1330
    %1332 = vrot.lane.b32.xlu0 %v848, 32
    %v1333 = vpop.permute.xlu0 %1332
    %1334 = vrot.lane.b32.xlu0 %v851, 32
    %v1335 = vpop.permute.xlu0 %1334
    %1336 = vrot.lane.b32.xlu0 %v854, 32
    %v1337 = vpop.permute.xlu0 %1336
    %1338 = vrot.lane.b32.xlu0 %v857, 32
    %v1339 = vpop.permute.xlu0 %1338
    %1340 = vrot.lane.b32.xlu0 %v860, 32
    %v1341 = vpop.permute.xlu0 %1340
    %v1342 = vsel %vm975, %v1311, 0
    %v1344 = vsel %vm975, %v1313, 0
    %v1346 = vsel %vm975, %v1315, 0
    %v1348 = vsel %vm975, %v1317, 0
    %v1350 = vsel %vm975, %v1319, 0
    %v1352 = vsel %vm975, %v1321, 0
    %v1354 = vsel %vm975, %v1323, 0
    %v1356 = vsel %vm975, %v1325, 0
    %v1358 = vsel %vm975, %v1327, 0
    %v1360 = vsel %vm975, %v1329, 0
    %v1362 = vsel %vm975, %v1331, 0
    %v1364 = vsel %vm975, %v1333, 0
    %v1366 = vsel %vm975, %v1335, 0
    %v1368 = vsel %vm975, %v1337, 0
    %v1370 = vsel %vm975, %v1339, 0
    %v1372 = vsel %vm975, %v1341, 0
    %1374 = vmatpush.xpose.msra.mxu0 0.0
    %1375 = vmatpush.xpose.msra.mxu0 0.0
    %1376 = vmatpush.xpose.msra.mxu0 0.0
    %1377 = vmatpush.xpose.msra.mxu0 0.0
    %1378 = vmatpush.xpose.msra.mxu0 0.0
    %1379 = vmatpush.xpose.msra.mxu0 0.0
    %1380 = vmatpush.xpose.msra.mxu0 0.0
    %1381 = vmatpush.xpose.msra.mxu0 0.0
    %1382 = vmatpush.xpose.msra.mxu0 %v1372
    %1383 = vmatpush.xpose.msra.mxu0 %v1370
    %1384 = vmatpush.xpose.msra.mxu0 %v1368
    %1385 = vmatpush.xpose.msra.mxu0 %v1366
    %1386 = vmatpush.xpose.msra.mxu0 %v1364
    %1387 = vmatpush.xpose.msra.mxu0 %v1362
    %1388 = vmatpush.xpose.msra.mxu0 %v1360
    %1389 = vmatpush.xpose.msra.mxu0 %v1358
    %1390 = vmatmul.f32.gmra.mxu0 %v1342
    %v1391 = vpop.f32.mrf.mxu0
    %v1392 = vadd.f32 0.0, %v1391
    %1393 = vmatmul.f32.gmra.mxu0 %v1344
    %v1394 = vpop.f32.mrf.mxu0
    %v1395 = vadd.f32 0.0, %v1394
    %1396 = vmatmul.f32.gmra.mxu0 %v1346
    %v1397 = vpop.f32.mrf.mxu0
    %v1398 = vadd.f32 0.0, %v1397
    %1399 = vmatmul.f32.gmra.mxu0 %v1348
    %v1400 = vpop.f32.mrf.mxu0
    %v1401 = vadd.f32 0.0, %v1400
    %1402 = vmatmul.f32.gmra.mxu0 %v1350
    %v1403 = vpop.f32.mrf.mxu0
    %v1404 = vadd.f32 0.0, %v1403
    %1405 = vmatmul.f32.gmra.mxu0 %v1352
    %v1406 = vpop.f32.mrf.mxu0
    %v1407 = vadd.f32 0.0, %v1406
    %1408 = vmatmul.f32.gmra.mxu0 %v1354
    %v1409 = vpop.f32.mrf.mxu0
    %v1410 = vadd.f32 0.0, %v1409
    %1411 = vmatmul.f32.gmra.mxu0 %v1356
    %v1412 = vpop.f32.mrf.mxu0
    %v1413 = vadd.f32 0.0, %v1412
    %1414 = vdwg.mxu0
    %v1415 = vsel %vm156, %v1392, -inf
    %1416 = vmax.xlane.f32.xlu0 %v1415
    %v1417 = vpop.xlane.xlu0 %1416
    %v1418 = vsel %vm156, %v1395, -inf
    %1419 = vmax.xlane.f32.xlu0 %v1418
    %v1420 = vpop.xlane.xlu0 %1419
    %v1421 = vsel %vm156, %v1398, -inf
    %1422 = vmax.xlane.f32.xlu0 %v1421
    %v1423 = vpop.xlane.xlu0 %1422
    %v1424 = vsel %vm156, %v1401, -inf
    %1425 = vmax.xlane.f32.xlu0 %v1424
    %v1426 = vpop.xlane.xlu0 %1425
    %v1427 = vsel %vm156, %v1404, -inf
    %1428 = vmax.xlane.f32.xlu0 %v1427
    %v1429 = vpop.xlane.xlu0 %1428
    %v1430 = vsel %vm156, %v1407, -inf
    %1431 = vmax.xlane.f32.xlu0 %v1430
    %v1432 = vpop.xlane.xlu0 %1431
    %v1433 = vsel %vm156, %v1410, -inf
    %1434 = vmax.xlane.f32.xlu0 %v1433
    %v1435 = vpop.xlane.xlu0 %1434
    %v1436 = vsel %vm156, %v1413, -inf
    %1437 = vmax.xlane.f32.xlu0 %v1436
    %v1438 = vpop.xlane.xlu0 %1437
    %v1439 = vsub.f32 %v1392, %v1417
    %v1440 = vsub.f32 %v1395, %v1420
    %v1441 = vsub.f32 %v1398, %v1423
    %v1442 = vsub.f32 %v1401, %v1426
    %v1443 = vsub.f32 %v1404, %v1429
    %v1444 = vsub.f32 %v1407, %v1432
    %v1445 = vsub.f32 %v1410, %v1435
    %v1446 = vsub.f32 %v1413, %v1438
    %v1447 = vmul.f32 %v1439, 1.442695
    %v1448 = vpow.pop %v1447
    %v1449 = vmul.f32 %v1440, 1.442695
    %v1450 = vpow.pop %v1449
    %v1451 = vmul.f32 %v1441, 1.442695
    %v1452 = vpow.pop %v1451
    %v1453 = vmul.f32 %v1442, 1.442695
    %v1454 = vpow.pop %v1453
    %v1455 = vmul.f32 %v1443, 1.442695
    %v1456 = vpow.pop %v1455
    %v1457 = vmul.f32 %v1444, 1.442695
    %v1458 = vpow.pop %v1457
    %v1459 = vmul.f32 %v1445, 1.442695
    %v1460 = vpow.pop %v1459
    %v1461 = vmul.f32 %v1446, 1.442695
    %v1462 = vpow.pop %v1461
    %v1463 = vsel %vm156, %v1448, 0.0
    %1464 = vadd.xlane.f32.xlu0 %v1463
    %v1465 = vpop.xlane.xlu0 %1464
    %v1466 = vsel %vm156, %v1450, 0.0
    %1467 = vadd.xlane.f32.xlu0 %v1466
    %v1468 = vpop.xlane.xlu0 %1467
    %v1469 = vsel %vm156, %v1452, 0.0
    %1470 = vadd.xlane.f32.xlu0 %v1469
    %v1471 = vpop.xlane.xlu0 %1470
    %v1472 = vsel %vm156, %v1454, 0.0
    %1473 = vadd.xlane.f32.xlu0 %v1472
    %v1474 = vpop.xlane.xlu0 %1473
    %v1475 = vsel %vm156, %v1456, 0.0
    %1476 = vadd.xlane.f32.xlu0 %v1475
    %v1477 = vpop.xlane.xlu0 %1476
    %v1478 = vsel %vm156, %v1458, 0.0
    %1479 = vadd.xlane.f32.xlu0 %v1478
    %v1480 = vpop.xlane.xlu0 %1479
    %v1481 = vsel %vm156, %v1460, 0.0
    %1482 = vadd.xlane.f32.xlu0 %v1481
    %v1483 = vpop.xlane.xlu0 %1482
    %v1484 = vsel %vm156, %v1462, 0.0
    %1485 = vadd.xlane.f32.xlu0 %v1484
    %v1486 = vpop.xlane.xlu0 %1485
    %v1487 = vrcp.pop %v1465
    %v1488 = vmul.f32 %v1465, %v1487
    %v1489 = vsub.f32 1.0, %v1488
    %v1490 = vmul.f32 %v1487, %v1489
    %v1491 = vadd.f32 %v1487, %v1490
    %vm1492 = vweird.f32 %v1465
    %vm1493 = vweird.f32 %v1487
    %vm1494 = vmor %vm1492, %vm1493
    %v1495 = vsel %vm1494, %v1487, %v1491
    %v1496 = vand.u32 2147483647, %v1465
    %vm1497 = vcmp.eq.f32.partialorder %v1496, 8.507059e+37
    %v1498 = vand.u32 %v1465, 2147483648
    %v1499 = vor.u32 1.1754944e-38, %v1498
    %v1500 = vsel %vm1497, %v1499, %v1495
    %v1501 = vmul.f32 %v1448, %v1500
    %v1502 = vrcp.pop %v1468
    %v1503 = vmul.f32 %v1468, %v1502
    %v1504 = vsub.f32 1.0, %v1503
    %v1505 = vmul.f32 %v1502, %v1504
    %v1506 = vadd.f32 %v1502, %v1505
    %vm1507 = vweird.f32 %v1468
    %vm1508 = vweird.f32 %v1502
    %vm1509 = vmor %vm1507, %vm1508
    %v1510 = vsel %vm1509, %v1502, %v1506
    %v1511 = vand.u32 2147483647, %v1468
    %vm1512 = vcmp.eq.f32.partialorder %v1511, 8.507059e+37
    %v1513 = vand.u32 %v1468, 2147483648
    %v1514 = vor.u32 1.1754944e-38, %v1513
    %v1515 = vsel %vm1512, %v1514, %v1510
    %v1516 = vmul.f32 %v1450, %v1515
    %v1517 = vrcp.pop %v1471
    %v1518 = vmul.f32 %v1471, %v1517
    %v1519 = vsub.f32 1.0, %v1518
    %v1520 = vmul.f32 %v1517, %v1519
    %v1521 = vadd.f32 %v1517, %v1520
    %vm1522 = vweird.f32 %v1471
    %vm1523 = vweird.f32 %v1517
    %vm1524 = vmor %vm1522, %vm1523
    %v1525 = vsel %vm1524, %v1517, %v1521
    %v1526 = vand.u32 2147483647, %v1471
    %vm1527 = vcmp.eq.f32.partialorder %v1526, 8.507059e+37
    %v1528 = vand.u32 %v1471, 2147483648
    %v1529 = vor.u32 1.1754944e-38, %v1528
    %v1530 = vsel %vm1527, %v1529, %v1525
    %v1531 = vmul.f32 %v1452, %v1530
    %v1532 = vrcp.pop %v1474
    %v1533 = vmul.f32 %v1474, %v1532
    %v1534 = vsub.f32 1.0, %v1533
    %v1535 = vmul.f32 %v1532, %v1534
    %v1536 = vadd.f32 %v1532, %v1535
    %vm1537 = vweird.f32 %v1474
    %vm1538 = vweird.f32 %v1532
    %vm1539 = vmor %vm1537, %vm1538
    %v1540 = vsel %vm1539, %v1532, %v1536
    %v1541 = vand.u32 2147483647, %v1474
    %vm1542 = vcmp.eq.f32.partialorder %v1541, 8.507059e+37
    %v1543 = vand.u32 %v1474, 2147483648
    %v1544 = vor.u32 1.1754944e-38, %v1543
    %v1545 = vsel %vm1542, %v1544, %v1540
    %v1546 = vmul.f32 %v1454, %v1545
    %v1547 = vrcp.pop %v1477
    %v1548 = vmul.f32 %v1477, %v1547
    %v1549 = vsub.f32 1.0, %v1548
    %v1550 = vmul.f32 %v1547, %v1549
    %v1551 = vadd.f32 %v1547, %v1550
    %vm1552 = vweird.f32 %v1477
    %vm1553 = vweird.f32 %v1547
    %vm1554 = vmor %vm1552, %vm1553
    %v1555 = vsel %vm1554, %v1547, %v1551
    %v1556 = vand.u32 2147483647, %v1477
    %vm1557 = vcmp.eq.f32.partialorder %v1556, 8.507059e+37
    %v1558 = vand.u32 %v1477, 2147483648
    %v1559 = vor.u32 1.1754944e-38, %v1558
    %v1560 = vsel %vm1557, %v1559, %v1555
    %v1561 = vmul.f32 %v1456, %v1560
    %v1562 = vrcp.pop %v1480
    %v1563 = vmul.f32 %v1480, %v1562
    %v1564 = vsub.f32 1.0, %v1563
    %v1565 = vmul.f32 %v1562, %v1564
    %v1566 = vadd.f32 %v1562, %v1565
    %vm1567 = vweird.f32 %v1480
    %vm1568 = vweird.f32 %v1562
    %vm1569 = vmor %vm1567, %vm1568
    %v1570 = vsel %vm1569, %v1562, %v1566
    %v1571 = vand.u32 2147483647, %v1480
    %vm1572 = vcmp.eq.f32.partialorder %v1571, 8.507059e+37
    %v1573 = vand.u32 %v1480, 2147483648
    %v1574 = vor.u32 1.1754944e-38, %v1573
    %v1575 = vsel %vm1572, %v1574, %v1570
    %v1576 = vmul.f32 %v1458, %v1575
    %v1577 = vrcp.pop %v1483
    %v1578 = vmul.f32 %v1483, %v1577
    %v1579 = vsub.f32 1.0, %v1578
    %v1580 = vmul.f32 %v1577, %v1579
    %v1581 = vadd.f32 %v1577, %v1580
    %vm1582 = vweird.f32 %v1483
    %vm1583 = vweird.f32 %v1577
    %vm1584 = vmor %vm1582, %vm1583
    %v1585 = vsel %vm1584, %v1577, %v1581
    %v1586 = vand.u32 2147483647, %v1483
    %vm1587 = vcmp.eq.f32.partialorder %v1586, 8.507059e+37
    %v1588 = vand.u32 %v1483, 2147483648
    %v1589 = vor.u32 1.1754944e-38, %v1588
    %v1590 = vsel %vm1587, %v1589, %v1585
    %v1591 = vmul.f32 %v1460, %v1590
    %v1592 = vrcp.pop %v1486
    %v1593 = vmul.f32 %v1486, %v1592
    %v1594 = vsub.f32 1.0, %v1593
    %v1595 = vmul.f32 %v1592, %v1594
    %v1596 = vadd.f32 %v1592, %v1595
    %vm1597 = vweird.f32 %v1486
    %vm1598 = vweird.f32 %v1592
    %vm1599 = vmor %vm1597, %vm1598
    %v1600 = vsel %vm1599, %v1592, %v1596
    %v1601 = vand.u32 2147483647, %v1486
    %vm1602 = vcmp.eq.f32.partialorder %v1601, 8.507059e+37
    %v1603 = vand.u32 %v1486, 2147483648
    %v1604 = vor.u32 1.1754944e-38, %v1603
    %v1605 = vsel %vm1602, %v1604, %v1600
    %v1606 = vmul.f32 %v1462, %v1605
    %1615 = vrot.lane.b32.xlu0 %v904, 96
    %v1616 = vpop.permute.xlu0 %1615
    %1617 = vrot.lane.b32.xlu0 %v907, 96
    %v1618 = vpop.permute.xlu0 %1617
    %1619 = vrot.lane.b32.xlu0 %v910, 96
    %v1620 = vpop.permute.xlu0 %1619
    %1621 = vrot.lane.b32.xlu0 %v913, 96
    %v1622 = vpop.permute.xlu0 %1621
    %1623 = vrot.lane.b32.xlu0 %v916, 96
    %v1624 = vpop.permute.xlu0 %1623
    %1625 = vrot.lane.b32.xlu0 %v919, 96
    %v1626 = vpop.permute.xlu0 %1625
    %1627 = vrot.lane.b32.xlu0 %v922, 96
    %v1628 = vpop.permute.xlu0 %1627
    %1629 = vrot.lane.b32.xlu0 %v925, 96
    %v1630 = vpop.permute.xlu0 %1629
    %v1640 = vsel %vm156, %v1501, 0
    %v1643 = vsel %vm156, %v1516, 0
    %v1646 = vsel %vm156, %v1531, 0
    %v1649 = vsel %vm156, %v1546, 0
    %v1652 = vsel %vm156, %v1561, 0
    %v1655 = vsel %vm156, %v1576, 0
    %v1658 = vsel %vm156, %v1591, 0
    %v1661 = vsel %vm156, %v1606, 0
    %1663 = vmatpush.msra.mxu0 0.0
    %1664 = vmatpush.msra.mxu0 0.0
    %1665 = vmatpush.msra.mxu0 0.0
    %1666 = vmatpush.msra.mxu0 0.0
    %1667 = vmatpush.msra.mxu0 0.0
    %1668 = vmatpush.msra.mxu0 0.0
    %1669 = vmatpush.msra.mxu0 0.0
    %1670 = vmatpush.msra.mxu0 0.0
    %1671 = vmatpush.msra.mxu0 %v1630
    %1672 = vmatpush.msra.mxu0 %v1628
    %1673 = vmatpush.msra.mxu0 %v1626
    %1674 = vmatpush.msra.mxu0 %v1624
    %1675 = vmatpush.msra.mxu0 %v1622
    %1676 = vmatpush.msra.mxu0 %v1620
    %1677 = vmatpush.msra.mxu0 %v1618
    %1678 = vmatpush.msra.mxu0 %v1616
    %1679 = vmatmul.f32.gmra.mxu0 %v1640
    %v1680 = vpop.f32.mrf.mxu0
    %v1681 = vadd.f32 0.0, %v1680
    %1682 = vmatmul.f32.gmra.mxu0 %v1643
    %v1683 = vpop.f32.mrf.mxu0
    %v1684 = vadd.f32 0.0, %v1683
    %1685 = vmatmul.f32.gmra.mxu0 %v1646
    %v1686 = vpop.f32.mrf.mxu0
    %v1687 = vadd.f32 0.0, %v1686
    %1688 = vmatmul.f32.gmra.mxu0 %v1649
    %v1689 = vpop.f32.mrf.mxu0
    %v1690 = vadd.f32 0.0, %v1689
    %1691 = vmatmul.f32.gmra.mxu0 %v1652
    %v1692 = vpop.f32.mrf.mxu0
    %v1693 = vadd.f32 0.0, %v1692
    %1694 = vmatmul.f32.gmra.mxu0 %v1655
    %v1695 = vpop.f32.mrf.mxu0
    %v1696 = vadd.f32 0.0, %v1695
    %1697 = vmatmul.f32.gmra.mxu0 %v1658
    %v1698 = vpop.f32.mrf.mxu0
    %v1699 = vadd.f32 0.0, %v1698
    %1700 = vmatmul.f32.gmra.mxu0 %v1661
    %v1701 = vpop.f32.mrf.mxu0
    %v1702 = vadd.f32 0.0, %v1701
    %1703 = vdwg.mxu0
    %s1704 = scalar_lea.vmem [#allocation8], 32
    %v1705 = vld [vmem:[%s1704] sm:$0xff]
    %v1706 = vld [vmem:[%s1704 + $0x8] sm:$0xff]
    %v1707 = vld [vmem:[%s1704 + $0x10] sm:$0xff]
    %v1708 = vld [vmem:[%s1704 + $0x18] sm:$0xff]
    %v1710 = vsel %vm975, %v1681, 0
    %v1713 = vsel %vm975, %v1684, 0
    %v1716 = vsel %vm975, %v1687, 0
    %v1719 = vsel %vm975, %v1690, 0
    %v1722 = vsel %vm975, %v1693, 0
    %v1725 = vsel %vm975, %v1696, 0
    %v1728 = vsel %vm975, %v1699, 0
    %v1731 = vsel %vm975, %v1702, 0
    %1733 = vmatpush.msra.mxu0 0.0
    %1734 = vmatpush.msra.mxu0 0.0
    %1735 = vmatpush.msra.mxu0 0.0
    %1736 = vmatpush.msra.mxu0 0.0
    %1737 = vmatpush.msra.mxu0 0.0
    %1738 = vmatpush.msra.mxu0 0.0
    %1739 = vmatpush.msra.mxu0 0.0
    %1740 = vmatpush.msra.mxu0 0.0
    %1741 = vmatpush.msra.mxu0 0.0
    %1742 = vmatpush.msra.mxu0 0.0
    %1743 = vmatpush.msra.mxu0 0.0
    %1744 = vmatpush.msra.mxu0 0.0
    %1745 = vmatpush.msra.mxu0 %v1708
    %1746 = vmatpush.msra.mxu0 %v1707
    %1747 = vmatpush.msra.mxu0 %v1706
    %1748 = vmatpush.msra.mxu0 %v1705
    %1749 = vmatmul.f32.gmra.mxu0 %v1710
    %v1750 = vpop.f32.mrf.mxu0
    %v1751 = vadd.f32 0.0, %v1750
    %1752 = vmatmul.f32.gmra.mxu0 %v1713
    %v1753 = vpop.f32.mrf.mxu0
    %v1754 = vadd.f32 0.0, %v1753
    %1755 = vmatmul.f32.gmra.mxu0 %v1716
    %v1756 = vpop.f32.mrf.mxu0
    %v1757 = vadd.f32 0.0, %v1756
    %1758 = vmatmul.f32.gmra.mxu0 %v1719
    %v1759 = vpop.f32.mrf.mxu0
    %v1760 = vadd.f32 0.0, %v1759
    %1761 = vmatmul.f32.gmra.mxu0 %v1722
    %v1762 = vpop.f32.mrf.mxu0
    %v1763 = vadd.f32 0.0, %v1762
    %1764 = vmatmul.f32.gmra.mxu0 %v1725
    %v1765 = vpop.f32.mrf.mxu0
    %v1766 = vadd.f32 0.0, %v1765
    %1767 = vmatmul.f32.gmra.mxu0 %v1728
    %v1768 = vpop.f32.mrf.mxu0
    %v1769 = vadd.f32 0.0, %v1768
    %1770 = vmatmul.f32.gmra.mxu0 %v1731
    %v1771 = vpop.f32.mrf.mxu0
    %v1772 = vadd.f32 0.0, %v1771
    %1773 = vdwg.mxu0
    %v1775 = vsel %vm975, %v1283, 0
    %v1778 = vsel %vm975, %v1286, 0
    %v1781 = vsel %vm975, %v1289, 0
    %v1784 = vsel %vm975, %v1292, 0
    %v1787 = vsel %vm975, %v1295, 0
    %v1790 = vsel %vm975, %v1298, 0
    %v1793 = vsel %vm975, %v1301, 0
    %v1796 = vsel %vm975, %v1304, 0
    %1798 = vmatpush.msra.mxu0 0.0
    %1799 = vmatpush.msra.mxu0 0.0
    %1800 = vmatpush.msra.mxu0 0.0
    %1801 = vmatpush.msra.mxu0 0.0
    %1802 = vmatpush.msra.mxu0 0.0
    %1803 = vmatpush.msra.mxu0 0.0
    %1804 = vmatpush.msra.mxu0 0.0
    %1805 = vmatpush.msra.mxu0 0.0
    %1806 = vmatpush.msra.mxu0 0.0
    %1807 = vmatpush.msra.mxu0 0.0
    %1808 = vmatpush.msra.mxu0 0.0
    %1809 = vmatpush.msra.mxu0 0.0
    %1810 = vmatpush.msra.mxu0 %v1309
    %1811 = vmatpush.msra.mxu0 %v1308
    %1812 = vmatpush.msra.mxu0 %v1307
    %1813 = vmatpush.msra.mxu0 %v1306
    %1814 = vmatmul.f32.gmra.mxu0 %v1775
    %v1815 = vpop.f32.mrf.mxu0
    %v1816 = vadd.f32 %v1751, %v1815
    %1817 = vmatmul.f32.gmra.mxu0 %v1778
    %v1818 = vpop.f32.mrf.mxu0
    %v1819 = vadd.f32 %v1754, %v1818
    %1820 = vmatmul.f32.gmra.mxu0 %v1781
    %v1821 = vpop.f32.mrf.mxu0
    %v1822 = vadd.f32 %v1757, %v1821
    %1823 = vmatmul.f32.gmra.mxu0 %v1784
    %v1824 = vpop.f32.mrf.mxu0
    %v1825 = vadd.f32 %v1760, %v1824
    %1826 = vmatmul.f32.gmra.mxu0 %v1787
    %v1827 = vpop.f32.mrf.mxu0
    %v1828 = vadd.f32 %v1763, %v1827
    %1829 = vmatmul.f32.gmra.mxu0 %v1790
    %v1830 = vpop.f32.mrf.mxu0
    %v1831 = vadd.f32 %v1766, %v1830
    %1832 = vmatmul.f32.gmra.mxu0 %v1793
    %v1833 = vpop.f32.mrf.mxu0
    %v1834 = vadd.f32 %v1769, %v1833
    %1835 = vmatmul.f32.gmra.mxu0 %v1796
    %v1836 = vpop.f32.mrf.mxu0
    %v1837 = vadd.f32 %v1772, %v1836
    %1838 = vdwg.mxu0
    %1847 = vrot.lane.b32.xlu0 %v863, 64
    %v1848 = vpop.permute.xlu0 %1847
    %1849 = vrot.lane.b32.xlu0 %v866, 64
    %v1850 = vpop.permute.xlu0 %1849
    %1851 = vrot.lane.b32.xlu0 %v869, 64
    %v1852 = vpop.permute.xlu0 %1851
    %1853 = vrot.lane.b32.xlu0 %v872, 64
    %v1854 = vpop.permute.xlu0 %1853
    %1855 = vrot.lane.b32.xlu0 %v875, 64
    %v1856 = vpop.permute.xlu0 %1855
    %1857 = vrot.lane.b32.xlu0 %v878, 64
    %v1858 = vpop.permute.xlu0 %1857
    %1859 = vrot.lane.b32.xlu0 %v881, 64
    %v1860 = vpop.permute.xlu0 %1859
    %1861 = vrot.lane.b32.xlu0 %v884, 64
    %v1862 = vpop.permute.xlu0 %1861
    %v1863 = vsel %vm975, %v863, 0
    %v1865 = vsel %vm975, %v866, 0
    %v1867 = vsel %vm975, %v869, 0
    %v1869 = vsel %vm975, %v872, 0
    %v1871 = vsel %vm975, %v875, 0
    %v1873 = vsel %vm975, %v878, 0
    %v1875 = vsel %vm975, %v881, 0
    %v1877 = vsel %vm975, %v884, 0
    %v1879 = vsel %vm975, %v1848, 0
    %v1881 = vsel %vm975, %v1850, 0
    %v1883 = vsel %vm975, %v1852, 0
    %v1885 = vsel %vm975, %v1854, 0
    %v1887 = vsel %vm975, %v1856, 0
    %v1889 = vsel %vm975, %v1858, 0
    %v1891 = vsel %vm975, %v1860, 0
    %v1893 = vsel %vm975, %v1862, 0
    %1895 = vmatpush.xpose.msra.mxu0 0.0
    %1896 = vmatpush.xpose.msra.mxu0 0.0
    %1897 = vmatpush.xpose.msra.mxu0 0.0
    %1898 = vmatpush.xpose.msra.mxu0 0.0
    %1899 = vmatpush.xpose.msra.mxu0 0.0
    %1900 = vmatpush.xpose.msra.mxu0 0.0
    %1901 = vmatpush.xpose.msra.mxu0 0.0
    %1902 = vmatpush.xpose.msra.mxu0 0.0
    %1903 = vmatpush.xpose.msra.mxu0 %v1893
    %1904 = vmatpush.xpose.msra.mxu0 %v1891
    %1905 = vmatpush.xpose.msra.mxu0 %v1889
    %1906 = vmatpush.xpose.msra.mxu0 %v1887
    %1907 = vmatpush.xpose.msra.mxu0 %v1885
    %1908 = vmatpush.xpose.msra.mxu0 %v1883
    %1909 = vmatpush.xpose.msra.mxu0 %v1881
    %1910 = vmatpush.xpose.msra.mxu0 %v1879
    %1911 = vmatmul.f32.gmra.mxu0 %v1863
    %v1912 = vpop.f32.mrf.mxu0
    %v1913 = vadd.f32 0.0, %v1912
    %1914 = vmatmul.f32.gmra.mxu0 %v1865
    %v1915 = vpop.f32.mrf.mxu0
    %v1916 = vadd.f32 0.0, %v1915
    %1917 = vmatmul.f32.gmra.mxu0 %v1867
    %v1918 = vpop.f32.mrf.mxu0
    %v1919 = vadd.f32 0.0, %v1918
    %1920 = vmatmul.f32.gmra.mxu0 %v1869
    %v1921 = vpop.f32.mrf.mxu0
    %v1922 = vadd.f32 0.0, %v1921
    %1923 = vmatmul.f32.gmra.mxu0 %v1871
    %v1924 = vpop.f32.mrf.mxu0
    %v1925 = vadd.f32 0.0, %v1924
    %1926 = vmatmul.f32.gmra.mxu0 %v1873
    %v1927 = vpop.f32.mrf.mxu0
    %v1928 = vadd.f32 0.0, %v1927
    %1929 = vmatmul.f32.gmra.mxu0 %v1875
    %v1930 = vpop.f32.mrf.mxu0
    %v1931 = vadd.f32 0.0, %v1930
    %1932 = vmatmul.f32.gmra.mxu0 %v1877
    %v1933 = vpop.f32.mrf.mxu0
    %v1934 = vadd.f32 0.0, %v1933
    %1935 = vdwg.mxu0
    %v1936 = vsel %vm156, %v1913, -inf
    %1937 = vmax.xlane.f32.xlu0 %v1936
    %v1938 = vpop.xlane.xlu0 %1937
    %v1939 = vsel %vm156, %v1916, -inf
    %1940 = vmax.xlane.f32.xlu0 %v1939
    %v1941 = vpop.xlane.xlu0 %1940
    %v1942 = vsel %vm156, %v1919, -inf
    %1943 = vmax.xlane.f32.xlu0 %v1942
    %v1944 = vpop.xlane.xlu0 %1943
    %v1945 = vsel %vm156, %v1922, -inf
    %1946 = vmax.xlane.f32.xlu0 %v1945
    %v1947 = vpop.xlane.xlu0 %1946
    %v1948 = vsel %vm156, %v1925, -inf
    %1949 = vmax.xlane.f32.xlu0 %v1948
    %v1950 = vpop.xlane.xlu0 %1949
    %v1951 = vsel %vm156, %v1928, -inf
    %1952 = vmax.xlane.f32.xlu0 %v1951
    %v1953 = vpop.xlane.xlu0 %1952
    %v1954 = vsel %vm156, %v1931, -inf
    %1955 = vmax.xlane.f32.xlu0 %v1954
    %v1956 = vpop.xlane.xlu0 %1955
    %v1957 = vsel %vm156, %v1934, -inf
    %1958 = vmax.xlane.f32.xlu0 %v1957
    %v1959 = vpop.xlane.xlu0 %1958
    %v1960 = vsub.f32 %v1913, %v1938
    %v1961 = vsub.f32 %v1916, %v1941
    %v1962 = vsub.f32 %v1919, %v1944
    %v1963 = vsub.f32 %v1922, %v1947
    %v1964 = vsub.f32 %v1925, %v1950
    %v1965 = vsub.f32 %v1928, %v1953
    %v1966 = vsub.f32 %v1931, %v1956
    %v1967 = vsub.f32 %v1934, %v1959
    %v1968 = vmul.f32 %v1960, 1.442695
    %v1969 = vpow.pop %v1968
    %v1970 = vmul.f32 %v1961, 1.442695
    %v1971 = vpow.pop %v1970
    %v1972 = vmul.f32 %v1962, 1.442695
    %v1973 = vpow.pop %v1972
    %v1974 = vmul.f32 %v1963, 1.442695
    %v1975 = vpow.pop %v1974
    %v1976 = vmul.f32 %v1964, 1.442695
    %v1977 = vpow.pop %v1976
    %v1978 = vmul.f32 %v1965, 1.442695
    %v1979 = vpow.pop %v1978
    %v1980 = vmul.f32 %v1966, 1.442695
    %v1981 = vpow.pop %v1980
    %v1982 = vmul.f32 %v1967, 1.442695
    %v1983 = vpow.pop %v1982
    %v1984 = vsel %vm156, %v1969, 0.0
    %1985 = vadd.xlane.f32.xlu0 %v1984
    %v1986 = vpop.xlane.xlu0 %1985
    %v1987 = vsel %vm156, %v1971, 0.0
    %1988 = vadd.xlane.f32.xlu0 %v1987
    %v1989 = vpop.xlane.xlu0 %1988
    %v1990 = vsel %vm156, %v1973, 0.0
    %1991 = vadd.xlane.f32.xlu0 %v1990
    %v1992 = vpop.xlane.xlu0 %1991
    %v1993 = vsel %vm156, %v1975, 0.0
    %1994 = vadd.xlane.f32.xlu0 %v1993
    %v1995 = vpop.xlane.xlu0 %1994
    %v1996 = vsel %vm156, %v1977, 0.0
    %1997 = vadd.xlane.f32.xlu0 %v1996
    %v1998 = vpop.xlane.xlu0 %1997
    %v1999 = vsel %vm156, %v1979, 0.0
    %2000 = vadd.xlane.f32.xlu0 %v1999
    %v2001 = vpop.xlane.xlu0 %2000
    %v2002 = vsel %vm156, %v1981, 0.0
    %2003 = vadd.xlane.f32.xlu0 %v2002
    %v2004 = vpop.xlane.xlu0 %2003
    %v2005 = vsel %vm156, %v1983, 0.0
    %2006 = vadd.xlane.f32.xlu0 %v2005
    %v2007 = vpop.xlane.xlu0 %2006
    %v2008 = vrcp.pop %v1986
    %v2009 = vmul.f32 %v1986, %v2008
    %v2010 = vsub.f32 1.0, %v2009
    %v2011 = vmul.f32 %v2008, %v2010
    %v2012 = vadd.f32 %v2008, %v2011
    %vm2013 = vweird.f32 %v1986
    %vm2014 = vweird.f32 %v2008
    %vm2015 = vmor %vm2013, %vm2014
    %v2016 = vsel %vm2015, %v2008, %v2012
    %v2017 = vand.u32 2147483647, %v1986
    %vm2018 = vcmp.eq.f32.partialorder %v2017, 8.507059e+37
    %v2019 = vand.u32 %v1986, 2147483648
    %v2020 = vor.u32 1.1754944e-38, %v2019
    %v2021 = vsel %vm2018, %v2020, %v2016
    %v2022 = vmul.f32 %v1969, %v2021
    %v2023 = vrcp.pop %v1989
    %v2024 = vmul.f32 %v1989, %v2023
    %v2025 = vsub.f32 1.0, %v2024
    %v2026 = vmul.f32 %v2023, %v2025
    %v2027 = vadd.f32 %v2023, %v2026
    %vm2028 = vweird.f32 %v1989
    %vm2029 = vweird.f32 %v2023
    %vm2030 = vmor %vm2028, %vm2029
    %v2031 = vsel %vm2030, %v2023, %v2027
    %v2032 = vand.u32 2147483647, %v1989
    %vm2033 = vcmp.eq.f32.partialorder %v2032, 8.507059e+37
    %v2034 = vand.u32 %v1989, 2147483648
    %v2035 = vor.u32 1.1754944e-38, %v2034
    %v2036 = vsel %vm2033, %v2035, %v2031
    %v2037 = vmul.f32 %v1971, %v2036
    %v2038 = vrcp.pop %v1992
    %v2039 = vmul.f32 %v1992, %v2038
    %v2040 = vsub.f32 1.0, %v2039
    %v2041 = vmul.f32 %v2038, %v2040
    %v2042 = vadd.f32 %v2038, %v2041
    %vm2043 = vweird.f32 %v1992
    %vm2044 = vweird.f32 %v2038
    %vm2045 = vmor %vm2043, %vm2044
    %v2046 = vsel %vm2045, %v2038, %v2042
    %v2047 = vand.u32 2147483647, %v1992
    %vm2048 = vcmp.eq.f32.partialorder %v2047, 8.507059e+37
    %v2049 = vand.u32 %v1992, 2147483648
    %v2050 = vor.u32 1.1754944e-38, %v2049
    %v2051 = vsel %vm2048, %v2050, %v2046
    %v2052 = vmul.f32 %v1973, %v2051
    %v2053 = vrcp.pop %v1995
    %v2054 = vmul.f32 %v1995, %v2053
    %v2055 = vsub.f32 1.0, %v2054
    %v2056 = vmul.f32 %v2053, %v2055
    %v2057 = vadd.f32 %v2053, %v2056
    %vm2058 = vweird.f32 %v1995
    %vm2059 = vweird.f32 %v2053
    %vm2060 = vmor %vm2058, %vm2059
    %v2061 = vsel %vm2060, %v2053, %v2057
    %v2062 = vand.u32 2147483647, %v1995
    %vm2063 = vcmp.eq.f32.partialorder %v2062, 8.507059e+37
    %v2064 = vand.u32 %v1995, 2147483648
    %v2065 = vor.u32 1.1754944e-38, %v2064
    %v2066 = vsel %vm2063, %v2065, %v2061
    %v2067 = vmul.f32 %v1975, %v2066
    %v2068 = vrcp.pop %v1998
    %v2069 = vmul.f32 %v1998, %v2068
    %v2070 = vsub.f32 1.0, %v2069
    %v2071 = vmul.f32 %v2068, %v2070
    %v2072 = vadd.f32 %v2068, %v2071
    %vm2073 = vweird.f32 %v1998
    %vm2074 = vweird.f32 %v2068
    %vm2075 = vmor %vm2073, %vm2074
    %v2076 = vsel %vm2075, %v2068, %v2072
    %v2077 = vand.u32 2147483647, %v1998
    %vm2078 = vcmp.eq.f32.partialorder %v2077, 8.507059e+37
    %v2079 = vand.u32 %v1998, 2147483648
    %v2080 = vor.u32 1.1754944e-38, %v2079
    %v2081 = vsel %vm2078, %v2080, %v2076
    %v2082 = vmul.f32 %v1977, %v2081
    %v2083 = vrcp.pop %v2001
    %v2084 = vmul.f32 %v2001, %v2083
    %v2085 = vsub.f32 1.0, %v2084
    %v2086 = vmul.f32 %v2083, %v2085
    %v2087 = vadd.f32 %v2083, %v2086
    %vm2088 = vweird.f32 %v2001
    %vm2089 = vweird.f32 %v2083
    %vm2090 = vmor %vm2088, %vm2089
    %v2091 = vsel %vm2090, %v2083, %v2087
    %v2092 = vand.u32 2147483647, %v2001
    %vm2093 = vcmp.eq.f32.partialorder %v2092, 8.507059e+37
    %v2094 = vand.u32 %v2001, 2147483648
    %v2095 = vor.u32 1.1754944e-38, %v2094
    %v2096 = vsel %vm2093, %v2095, %v2091
    %v2097 = vmul.f32 %v1979, %v2096
    %v2098 = vrcp.pop %v2004
    %v2099 = vmul.f32 %v2004, %v2098
    %v2100 = vsub.f32 1.0, %v2099
    %v2101 = vmul.f32 %v2098, %v2100
    %v2102 = vadd.f32 %v2098, %v2101
    %vm2103 = vweird.f32 %v2004
    %vm2104 = vweird.f32 %v2098
    %vm2105 = vmor %vm2103, %vm2104
    %v2106 = vsel %vm2105, %v2098, %v2102
    %v2107 = vand.u32 2147483647, %v2004
    %vm2108 = vcmp.eq.f32.partialorder %v2107, 8.507059e+37
    %v2109 = vand.u32 %v2004, 2147483648
    %v2110 = vor.u32 1.1754944e-38, %v2109
    %v2111 = vsel %vm2108, %v2110, %v2106
    %v2112 = vmul.f32 %v1981, %v2111
    %v2113 = vrcp.pop %v2007
    %v2114 = vmul.f32 %v2007, %v2113
    %v2115 = vsub.f32 1.0, %v2114
    %v2116 = vmul.f32 %v2113, %v2115
    %v2117 = vadd.f32 %v2113, %v2116
    %vm2118 = vweird.f32 %v2007
    %vm2119 = vweird.f32 %v2113
    %vm2120 = vmor %vm2118, %vm2119
    %v2121 = vsel %vm2120, %v2113, %v2117
    %v2122 = vand.u32 2147483647, %v2007
    %vm2123 = vcmp.eq.f32.partialorder %v2122, 8.507059e+37
    %v2124 = vand.u32 %v2007, 2147483648
    %v2125 = vor.u32 1.1754944e-38, %v2124
    %v2126 = vsel %vm2123, %v2125, %v2121
    %v2127 = vmul.f32 %v1983, %v2126
    %v2129 = vsel %vm156, %v2022, 0
    %v2132 = vsel %vm156, %v2037, 0
    %v2135 = vsel %vm156, %v2052, 0
    %v2138 = vsel %vm156, %v2067, 0
    %v2141 = vsel %vm156, %v2082, 0
    %v2144 = vsel %vm156, %v2097, 0
    %v2147 = vsel %vm156, %v2112, 0
    %v2150 = vsel %vm156, %v2127, 0
    %2152 = vmatpush.msra.mxu0 0.0
    %2153 = vmatpush.msra.mxu0 0.0
    %2154 = vmatpush.msra.mxu0 0.0
    %2155 = vmatpush.msra.mxu0 0.0
    %2156 = vmatpush.msra.mxu0 0.0
    %2157 = vmatpush.msra.mxu0 0.0
    %2158 = vmatpush.msra.mxu0 0.0
    %2159 = vmatpush.msra.mxu0 0.0
    %2160 = vmatpush.msra.mxu0 %v949
    %2161 = vmatpush.msra.mxu0 %v946
    %2162 = vmatpush.msra.mxu0 %v943
    %2163 = vmatpush.msra.mxu0 %v940
    %2164 = vmatpush.msra.mxu0 %v937
    %2165 = vmatpush.msra.mxu0 %v934
    %2166 = vmatpush.msra.mxu0 %v931
    %2167 = vmatpush.msra.mxu0 %v928
    %2168 = vmatmul.f32.gmra.mxu0 %v2129
    %v2169 = vpop.f32.mrf.mxu0
    %v2170 = vadd.f32 0.0, %v2169
    %2171 = vmatmul.f32.gmra.mxu0 %v2132
    %v2172 = vpop.f32.mrf.mxu0
    %v2173 = vadd.f32 0.0, %v2172
    %2174 = vmatmul.f32.gmra.mxu0 %v2135
    %v2175 = vpop.f32.mrf.mxu0
    %v2176 = vadd.f32 0.0, %v2175
    %2177 = vmatmul.f32.gmra.mxu0 %v2138
    %v2178 = vpop.f32.mrf.mxu0
    %v2179 = vadd.f32 0.0, %v2178
    %2180 = vmatmul.f32.gmra.mxu0 %v2141
    %v2181 = vpop.f32.mrf.mxu0
    %v2182 = vadd.f32 0.0, %v2181
    %2183 = vmatmul.f32.gmra.mxu0 %v2144
    %v2184 = vpop.f32.mrf.mxu0
    %v2185 = vadd.f32 0.0, %v2184
    %2186 = vmatmul.f32.gmra.mxu0 %v2147
    %v2187 = vpop.f32.mrf.mxu0
    %v2188 = vadd.f32 0.0, %v2187
    %2189 = vmatmul.f32.gmra.mxu0 %v2150
    %v2190 = vpop.f32.mrf.mxu0
    %v2191 = vadd.f32 0.0, %v2190
    %2192 = vdwg.mxu0
    %2193 = vrot.lane.b32.xlu0 %v863, 96
    %v2194 = vpop.permute.xlu0 %2193
    %2195 = vrot.lane.b32.xlu0 %v866, 96
    %v2196 = vpop.permute.xlu0 %2195
    %2197 = vrot.lane.b32.xlu0 %v869, 96
    %v2198 = vpop.permute.xlu0 %2197
    %2199 = vrot.lane.b32.xlu0 %v872, 96
    %v2200 = vpop.permute.xlu0 %2199
    %2201 = vrot.lane.b32.xlu0 %v875, 96
    %v2202 = vpop.permute.xlu0 %2201
    %2203 = vrot.lane.b32.xlu0 %v878, 96
    %v2204 = vpop.permute.xlu0 %2203
    %2205 = vrot.lane.b32.xlu0 %v881, 96
    %v2206 = vpop.permute.xlu0 %2205
    %2207 = vrot.lane.b32.xlu0 %v884, 96
    %v2208 = vpop.permute.xlu0 %2207
    %2209 = vrot.lane.b32.xlu0 %v863, 32
    %v2210 = vpop.permute.xlu0 %2209
    %2211 = vrot.lane.b32.xlu0 %v866, 32
    %v2212 = vpop.permute.xlu0 %2211
    %2213 = vrot.lane.b32.xlu0 %v869, 32
    %v2214 = vpop.permute.xlu0 %2213
    %2215 = vrot.lane.b32.xlu0 %v872, 32
    %v2216 = vpop.permute.xlu0 %2215
    %2217 = vrot.lane.b32.xlu0 %v875, 32
    %v2218 = vpop.permute.xlu0 %2217
    %2219 = vrot.lane.b32.xlu0 %v878, 32
    %v2220 = vpop.permute.xlu0 %2219
    %2221 = vrot.lane.b32.xlu0 %v881, 32
    %v2222 = vpop.permute.xlu0 %2221
    %2223 = vrot.lane.b32.xlu0 %v884, 32
    %v2224 = vpop.permute.xlu0 %2223
    %v2225 = vsel %vm975, %v2194, 0
    %v2227 = vsel %vm975, %v2196, 0
    %v2229 = vsel %vm975, %v2198, 0
    %v2231 = vsel %vm975, %v2200, 0
    %v2233 = vsel %vm975, %v2202, 0
    %v2235 = vsel %vm975, %v2204, 0
    %v2237 = vsel %vm975, %v2206, 0
    %v2239 = vsel %vm975, %v2208, 0
    %v2241 = vsel %vm975, %v2210, 0
    %v2243 = vsel %vm975, %v2212, 0
    %v2245 = vsel %vm975, %v2214, 0
    %v2247 = vsel %vm975, %v2216, 0
    %v2249 = vsel %vm975, %v2218, 0
    %v2251 = vsel %vm975, %v2220, 0
    %v2253 = vsel %vm975, %v2222, 0
    %v2255 = vsel %vm975, %v2224, 0
    %2257 = vmatpush.xpose.msra.mxu0 0.0
    %2258 = vmatpush.xpose.msra.mxu0 0.0
    %2259 = vmatpush.xpose.msra.mxu0 0.0
    %2260 = vmatpush.xpose.msra.mxu0 0.0
    %2261 = vmatpush.xpose.msra.mxu0 0.0
    %2262 = vmatpush.xpose.msra.mxu0 0.0
    %2263 = vmatpush.xpose.msra.mxu0 0.0
    %2264 = vmatpush.xpose.msra.mxu0 0.0
    %2265 = vmatpush.xpose.msra.mxu0 %v2255
    %2266 = vmatpush.xpose.msra.mxu0 %v2253
    %2267 = vmatpush.xpose.msra.mxu0 %v2251
    %2268 = vmatpush.xpose.msra.mxu0 %v2249
    %2269 = vmatpush.xpose.msra.mxu0 %v2247
    %2270 = vmatpush.xpose.msra.mxu0 %v2245
    %2271 = vmatpush.xpose.msra.mxu0 %v2243
    %2272 = vmatpush.xpose.msra.mxu0 %v2241
    %2273 = vmatmul.f32.gmra.mxu0 %v2225
    %v2274 = vpop.f32.mrf.mxu0
    %v2275 = vadd.f32 0.0, %v2274
    %2276 = vmatmul.f32.gmra.mxu0 %v2227
    %v2277 = vpop.f32.mrf.mxu0
    %v2278 = vadd.f32 0.0, %v2277
    %2279 = vmatmul.f32.gmra.mxu0 %v2229
    %v2280 = vpop.f32.mrf.mxu0
    %v2281 = vadd.f32 0.0, %v2280
    %2282 = vmatmul.f32.gmra.mxu0 %v2231
    %v2283 = vpop.f32.mrf.mxu0
    %v2284 = vadd.f32 0.0, %v2283
    %2285 = vmatmul.f32.gmra.mxu0 %v2233
    %v2286 = vpop.f32.mrf.mxu0
    %v2287 = vadd.f32 0.0, %v2286
    %2288 = vmatmul.f32.gmra.mxu0 %v2235
    %v2289 = vpop.f32.mrf.mxu0
    %v2290 = vadd.f32 0.0, %v2289
    %2291 = vmatmul.f32.gmra.mxu0 %v2237
    %v2292 = vpop.f32.mrf.mxu0
    %v2293 = vadd.f32 0.0, %v2292
    %2294 = vmatmul.f32.gmra.mxu0 %v2239
    %v2295 = vpop.f32.mrf.mxu0
    %v2296 = vadd.f32 0.0, %v2295
    %2297 = vdwg.mxu0
    %v2298 = vsel %vm156, %v2275, -inf
    %2299 = vmax.xlane.f32.xlu0 %v2298
    %v2300 = vpop.xlane.xlu0 %2299
    %v2301 = vsel %vm156, %v2278, -inf
    %2302 = vmax.xlane.f32.xlu0 %v2301
    %v2303 = vpop.xlane.xlu0 %2302
    %v2304 = vsel %vm156, %v2281, -inf
    %2305 = vmax.xlane.f32.xlu0 %v2304
    %v2306 = vpop.xlane.xlu0 %2305
    %v2307 = vsel %vm156, %v2284, -inf
    %2308 = vmax.xlane.f32.xlu0 %v2307
    %v2309 = vpop.xlane.xlu0 %2308
    %v2310 = vsel %vm156, %v2287, -inf
    %2311 = vmax.xlane.f32.xlu0 %v2310
    %v2312 = vpop.xlane.xlu0 %2311
    %v2313 = vsel %vm156, %v2290, -inf
    %2314 = vmax.xlane.f32.xlu0 %v2313
    %v2315 = vpop.xlane.xlu0 %2314
    %v2316 = vsel %vm156, %v2293, -inf
    %2317 = vmax.xlane.f32.xlu0 %v2316
    %v2318 = vpop.xlane.xlu0 %2317
    %v2319 = vsel %vm156, %v2296, -inf
    %2320 = vmax.xlane.f32.xlu0 %v2319
    %v2321 = vpop.xlane.xlu0 %2320
    %v2322 = vsub.f32 %v2275, %v2300
    %v2323 = vsub.f32 %v2278, %v2303
    %v2324 = vsub.f32 %v2281, %v2306
    %v2325 = vsub.f32 %v2284, %v2309
    %v2326 = vsub.f32 %v2287, %v2312
    %v2327 = vsub.f32 %v2290, %v2315
    %v2328 = vsub.f32 %v2293, %v2318
    %v2329 = vsub.f32 %v2296, %v2321
    %v2330 = vmul.f32 %v2322, 1.442695
    %v2331 = vpow.pop %v2330
    %v2332 = vmul.f32 %v2323, 1.442695
    %v2333 = vpow.pop %v2332
    %v2334 = vmul.f32 %v2324, 1.442695
    %v2335 = vpow.pop %v2334
    %v2336 = vmul.f32 %v2325, 1.442695
    %v2337 = vpow.pop %v2336
    %v2338 = vmul.f32 %v2326, 1.442695
    %v2339 = vpow.pop %v2338
    %v2340 = vmul.f32 %v2327, 1.442695
    %v2341 = vpow.pop %v2340
    %v2342 = vmul.f32 %v2328, 1.442695
    %v2343 = vpow.pop %v2342
    %v2344 = vmul.f32 %v2329, 1.442695
    %v2345 = vpow.pop %v2344
    %v2346 = vsel %vm156, %v2331, 0.0
    %2347 = vadd.xlane.f32.xlu0 %v2346
    %v2348 = vpop.xlane.xlu0 %2347
    %v2349 = vsel %vm156, %v2333, 0.0
    %2350 = vadd.xlane.f32.xlu0 %v2349
    %v2351 = vpop.xlane.xlu0 %2350
    %v2352 = vsel %vm156, %v2335, 0.0
    %2353 = vadd.xlane.f32.xlu0 %v2352
    %v2354 = vpop.xlane.xlu0 %2353
    %v2355 = vsel %vm156, %v2337, 0.0
    %2356 = vadd.xlane.f32.xlu0 %v2355
    %v2357 = vpop.xlane.xlu0 %2356
    %v2358 = vsel %vm156, %v2339, 0.0
    %2359 = vadd.xlane.f32.xlu0 %v2358
    %v2360 = vpop.xlane.xlu0 %2359
    %v2361 = vsel %vm156, %v2341, 0.0
    %2362 = vadd.xlane.f32.xlu0 %v2361
    %v2363 = vpop.xlane.xlu0 %2362
    %v2364 = vsel %vm156, %v2343, 0.0
    %2365 = vadd.xlane.f32.xlu0 %v2364
    %v2366 = vpop.xlane.xlu0 %2365
    %v2367 = vsel %vm156, %v2345, 0.0
    %2368 = vadd.xlane.f32.xlu0 %v2367
    %v2369 = vpop.xlane.xlu0 %2368
    %v2370 = vrcp.pop %v2348
    %v2371 = vmul.f32 %v2348, %v2370
    %v2372 = vsub.f32 1.0, %v2371
    %v2373 = vmul.f32 %v2370, %v2372
    %v2374 = vadd.f32 %v2370, %v2373
    %vm2375 = vweird.f32 %v2348
    %vm2376 = vweird.f32 %v2370
    %vm2377 = vmor %vm2375, %vm2376
    %v2378 = vsel %vm2377, %v2370, %v2374
    %v2379 = vand.u32 2147483647, %v2348
    %vm2380 = vcmp.eq.f32.partialorder %v2379, 8.507059e+37
    %v2381 = vand.u32 %v2348, 2147483648
    %v2382 = vor.u32 1.1754944e-38, %v2381
    %v2383 = vsel %vm2380, %v2382, %v2378
    %v2384 = vmul.f32 %v2331, %v2383
    %v2385 = vrcp.pop %v2351
    %v2386 = vmul.f32 %v2351, %v2385
    %v2387 = vsub.f32 1.0, %v2386
    %v2388 = vmul.f32 %v2385, %v2387
    %v2389 = vadd.f32 %v2385, %v2388
    %vm2390 = vweird.f32 %v2351
    %vm2391 = vweird.f32 %v2385
    %vm2392 = vmor %vm2390, %vm2391
    %v2393 = vsel %vm2392, %v2385, %v2389
    %v2394 = vand.u32 2147483647, %v2351
    %vm2395 = vcmp.eq.f32.partialorder %v2394, 8.507059e+37
    %v2396 = vand.u32 %v2351, 2147483648
    %v2397 = vor.u32 1.1754944e-38, %v2396
    %v2398 = vsel %vm2395, %v2397, %v2393
    %v2399 = vmul.f32 %v2333, %v2398
    %v2400 = vrcp.pop %v2354
    %v2401 = vmul.f32 %v2354, %v2400
    %v2402 = vsub.f32 1.0, %v2401
    %v2403 = vmul.f32 %v2400, %v2402
    %v2404 = vadd.f32 %v2400, %v2403
    %vm2405 = vweird.f32 %v2354
    %vm2406 = vweird.f32 %v2400
    %vm2407 = vmor %vm2405, %vm2406
    %v2408 = vsel %vm2407, %v2400, %v2404
    %v2409 = vand.u32 2147483647, %v2354
    %vm2410 = vcmp.eq.f32.partialorder %v2409, 8.507059e+37
    %v2411 = vand.u32 %v2354, 2147483648
    %v2412 = vor.u32 1.1754944e-38, %v2411
    %v2413 = vsel %vm2410, %v2412, %v2408
    %v2414 = vmul.f32 %v2335, %v2413
    %v2415 = vrcp.pop %v2357
    %v2416 = vmul.f32 %v2357, %v2415
    %v2417 = vsub.f32 1.0, %v2416
    %v2418 = vmul.f32 %v2415, %v2417
    %v2419 = vadd.f32 %v2415, %v2418
    %vm2420 = vweird.f32 %v2357
    %vm2421 = vweird.f32 %v2415
    %vm2422 = vmor %vm2420, %vm2421
    %v2423 = vsel %vm2422, %v2415, %v2419
    %v2424 = vand.u32 2147483647, %v2357
    %vm2425 = vcmp.eq.f32.partialorder %v2424, 8.507059e+37
    %v2426 = vand.u32 %v2357, 2147483648
    %v2427 = vor.u32 1.1754944e-38, %v2426
    %v2428 = vsel %vm2425, %v2427, %v2423
    %v2429 = vmul.f32 %v2337, %v2428
    %v2430 = vrcp.pop %v2360
    %v2431 = vmul.f32 %v2360, %v2430
    %v2432 = vsub.f32 1.0, %v2431
    %v2433 = vmul.f32 %v2430, %v2432
    %v2434 = vadd.f32 %v2430, %v2433
    %vm2435 = vweird.f32 %v2360
    %vm2436 = vweird.f32 %v2430
    %vm2437 = vmor %vm2435, %vm2436
    %v2438 = vsel %vm2437, %v2430, %v2434
    %v2439 = vand.u32 2147483647, %v2360
    %vm2440 = vcmp.eq.f32.partialorder %v2439, 8.507059e+37
    %v2441 = vand.u32 %v2360, 2147483648
    %v2442 = vor.u32 1.1754944e-38, %v2441
    %v2443 = vsel %vm2440, %v2442, %v2438
    %v2444 = vmul.f32 %v2339, %v2443
    %v2445 = vrcp.pop %v2363
    %v2446 = vmul.f32 %v2363, %v2445
    %v2447 = vsub.f32 1.0, %v2446
    %v2448 = vmul.f32 %v2445, %v2447
    %v2449 = vadd.f32 %v2445, %v2448
    %vm2450 = vweird.f32 %v2363
    %vm2451 = vweird.f32 %v2445
    %vm2452 = vmor %vm2450, %vm2451
    %v2453 = vsel %vm2452, %v2445, %v2449
    %v2454 = vand.u32 2147483647, %v2363
    %vm2455 = vcmp.eq.f32.partialorder %v2454, 8.507059e+37
    %v2456 = vand.u32 %v2363, 2147483648
    %v2457 = vor.u32 1.1754944e-38, %v2456
    %v2458 = vsel %vm2455, %v2457, %v2453
    %v2459 = vmul.f32 %v2341, %v2458
    %v2460 = vrcp.pop %v2366
    %v2461 = vmul.f32 %v2366, %v2460
    %v2462 = vsub.f32 1.0, %v2461
    %v2463 = vmul.f32 %v2460, %v2462
    %v2464 = vadd.f32 %v2460, %v2463
    %vm2465 = vweird.f32 %v2366
    %vm2466 = vweird.f32 %v2460
    %vm2467 = vmor %vm2465, %vm2466
    %v2468 = vsel %vm2467, %v2460, %v2464
    %v2469 = vand.u32 2147483647, %v2366
    %vm2470 = vcmp.eq.f32.partialorder %v2469, 8.507059e+37
    %v2471 = vand.u32 %v2366, 2147483648
    %v2472 = vor.u32 1.1754944e-38, %v2471
    %v2473 = vsel %vm2470, %v2472, %v2468
    %v2474 = vmul.f32 %v2343, %v2473
    %v2475 = vrcp.pop %v2369
    %v2476 = vmul.f32 %v2369, %v2475
    %v2477 = vsub.f32 1.0, %v2476
    %v2478 = vmul.f32 %v2475, %v2477
    %v2479 = vadd.f32 %v2475, %v2478
    %vm2480 = vweird.f32 %v2369
    %vm2481 = vweird.f32 %v2475
    %vm2482 = vmor %vm2480, %vm2481
    %v2483 = vsel %vm2482, %v2475, %v2479
    %v2484 = vand.u32 2147483647, %v2369
    %vm2485 = vcmp.eq.f32.partialorder %v2484, 8.507059e+37
    %v2486 = vand.u32 %v2369, 2147483648
    %v2487 = vor.u32 1.1754944e-38, %v2486
    %v2488 = vsel %vm2485, %v2487, %v2483
    %v2489 = vmul.f32 %v2345, %v2488
    %2498 = vrot.lane.b32.xlu0 %v928, 96
    %v2499 = vpop.permute.xlu0 %2498
    %2500 = vrot.lane.b32.xlu0 %v931, 96
    %v2501 = vpop.permute.xlu0 %2500
    %2502 = vrot.lane.b32.xlu0 %v934, 96
    %v2503 = vpop.permute.xlu0 %2502
    %2504 = vrot.lane.b32.xlu0 %v937, 96
    %v2505 = vpop.permute.xlu0 %2504
    %2506 = vrot.lane.b32.xlu0 %v940, 96
    %v2507 = vpop.permute.xlu0 %2506
    %2508 = vrot.lane.b32.xlu0 %v943, 96
    %v2509 = vpop.permute.xlu0 %2508
    %2510 = vrot.lane.b32.xlu0 %v946, 96
    %v2511 = vpop.permute.xlu0 %2510
    %2512 = vrot.lane.b32.xlu0 %v949, 96
    %v2513 = vpop.permute.xlu0 %2512
    %v2523 = vsel %vm156, %v2384, 0
    %v2526 = vsel %vm156, %v2399, 0
    %v2529 = vsel %vm156, %v2414, 0
    %v2532 = vsel %vm156, %v2429, 0
    %v2535 = vsel %vm156, %v2444, 0
    %v2538 = vsel %vm156, %v2459, 0
    %v2541 = vsel %vm156, %v2474, 0
    %v2544 = vsel %vm156, %v2489, 0
    %2546 = vmatpush.msra.mxu0 0.0
    %2547 = vmatpush.msra.mxu0 0.0
    %2548 = vmatpush.msra.mxu0 0.0
    %2549 = vmatpush.msra.mxu0 0.0
    %2550 = vmatpush.msra.mxu0 0.0
    %2551 = vmatpush.msra.mxu0 0.0
    %2552 = vmatpush.msra.mxu0 0.0
    %2553 = vmatpush.msra.mxu0 0.0
    %2554 = vmatpush.msra.mxu0 %v2513
    %2555 = vmatpush.msra.mxu0 %v2511
    %2556 = vmatpush.msra.mxu0 %v2509
    %2557 = vmatpush.msra.mxu0 %v2507
    %2558 = vmatpush.msra.mxu0 %v2505
    %2559 = vmatpush.msra.mxu0 %v2503
    %2560 = vmatpush.msra.mxu0 %v2501
    %2561 = vmatpush.msra.mxu0 %v2499
    %2562 = vmatmul.f32.gmra.mxu0 %v2523
    %v2563 = vpop.f32.mrf.mxu0
    %v2564 = vadd.f32 0.0, %v2563
    %2565 = vmatmul.f32.gmra.mxu0 %v2526
    %v2566 = vpop.f32.mrf.mxu0
    %v2567 = vadd.f32 0.0, %v2566
    %2568 = vmatmul.f32.gmra.mxu0 %v2529
    %v2569 = vpop.f32.mrf.mxu0
    %v2570 = vadd.f32 0.0, %v2569
    %2571 = vmatmul.f32.gmra.mxu0 %v2532
    %v2572 = vpop.f32.mrf.mxu0
    %v2573 = vadd.f32 0.0, %v2572
    %2574 = vmatmul.f32.gmra.mxu0 %v2535
    %v2575 = vpop.f32.mrf.mxu0
    %v2576 = vadd.f32 0.0, %v2575
    %2577 = vmatmul.f32.gmra.mxu0 %v2538
    %v2578 = vpop.f32.mrf.mxu0
    %v2579 = vadd.f32 0.0, %v2578
    %2580 = vmatmul.f32.gmra.mxu0 %v2541
    %v2581 = vpop.f32.mrf.mxu0
    %v2582 = vadd.f32 0.0, %v2581
    %2583 = vmatmul.f32.gmra.mxu0 %v2544
    %v2584 = vpop.f32.mrf.mxu0
    %v2585 = vadd.f32 0.0, %v2584
    %2586 = vdwg.mxu0
    %v2588 = vsel %vm975, %v2564, 0
    %v2591 = vsel %vm975, %v2567, 0
    %v2594 = vsel %vm975, %v2570, 0
    %v2597 = vsel %vm975, %v2573, 0
    %v2600 = vsel %vm975, %v2576, 0
    %v2603 = vsel %vm975, %v2579, 0
    %v2606 = vsel %vm975, %v2582, 0
    %v2609 = vsel %vm975, %v2585, 0
    %2611 = vmatpush.msra.mxu0 0.0
    %2612 = vmatpush.msra.mxu0 0.0
    %2613 = vmatpush.msra.mxu0 0.0
    %2614 = vmatpush.msra.mxu0 0.0
    %2615 = vmatpush.msra.mxu0 0.0
    %2616 = vmatpush.msra.mxu0 0.0
    %2617 = vmatpush.msra.mxu0 0.0
    %2618 = vmatpush.msra.mxu0 0.0
    %2619 = vmatpush.msra.mxu0 0.0
    %2620 = vmatpush.msra.mxu0 0.0
    %2621 = vmatpush.msra.mxu0 0.0
    %2622 = vmatpush.msra.mxu0 0.0
    %2623 = vmatpush.msra.mxu0 %v1708
    %2624 = vmatpush.msra.mxu0 %v1707
    %2625 = vmatpush.msra.mxu0 %v1706
    %2626 = vmatpush.msra.mxu0 %v1705
    %2627 = vmatmul.f32.gmra.mxu0 %v2588
    %v2628 = vpop.f32.mrf.mxu0
    %v2629 = vadd.f32 0.0, %v2628
    %2630 = vmatmul.f32.gmra.mxu0 %v2591
    %v2631 = vpop.f32.mrf.mxu0
    %v2632 = vadd.f32 0.0, %v2631
    %2633 = vmatmul.f32.gmra.mxu0 %v2594
    %v2634 = vpop.f32.mrf.mxu0
    %v2635 = vadd.f32 0.0, %v2634
    %2636 = vmatmul.f32.gmra.mxu0 %v2597
    %v2637 = vpop.f32.mrf.mxu0
    %v2638 = vadd.f32 0.0, %v2637
    %2639 = vmatmul.f32.gmra.mxu0 %v2600
    %v2640 = vpop.f32.mrf.mxu0
    %v2641 = vadd.f32 0.0, %v2640
    %2642 = vmatmul.f32.gmra.mxu0 %v2603
    %v2643 = vpop.f32.mrf.mxu0
    %v2644 = vadd.f32 0.0, %v2643
    %2645 = vmatmul.f32.gmra.mxu0 %v2606
    %v2646 = vpop.f32.mrf.mxu0
    %v2647 = vadd.f32 0.0, %v2646
    %2648 = vmatmul.f32.gmra.mxu0 %v2609
    %v2649 = vpop.f32.mrf.mxu0
    %v2650 = vadd.f32 0.0, %v2649
    %2651 = vdwg.mxu0
    %v2653 = vsel %vm975, %v2170, 0
    %v2656 = vsel %vm975, %v2173, 0
    %v2659 = vsel %vm975, %v2176, 0
    %v2662 = vsel %vm975, %v2179, 0
    %v2665 = vsel %vm975, %v2182, 0
    %v2668 = vsel %vm975, %v2185, 0
    %v2671 = vsel %vm975, %v2188, 0
    %v2674 = vsel %vm975, %v2191, 0
    %2676 = vmatpush.msra.mxu0 0.0
    %2677 = vmatpush.msra.mxu0 0.0
    %2678 = vmatpush.msra.mxu0 0.0
    %2679 = vmatpush.msra.mxu0 0.0
    %2680 = vmatpush.msra.mxu0 0.0
    %2681 = vmatpush.msra.mxu0 0.0
    %2682 = vmatpush.msra.mxu0 0.0
    %2683 = vmatpush.msra.mxu0 0.0
    %2684 = vmatpush.msra.mxu0 0.0
    %2685 = vmatpush.msra.mxu0 0.0
    %2686 = vmatpush.msra.mxu0 0.0
    %2687 = vmatpush.msra.mxu0 0.0
    %2688 = vmatpush.msra.mxu0 %v1309
    %2689 = vmatpush.msra.mxu0 %v1308
    %2690 = vmatpush.msra.mxu0 %v1307
    %2691 = vmatpush.msra.mxu0 %v1306
    %2692 = vmatmul.f32.gmra.mxu0 %v2653
    %v2693 = vpop.f32.mrf.mxu0
    %v2694 = vadd.f32 %v2629, %v2693
    %2695 = vmatmul.f32.gmra.mxu0 %v2656
    %v2696 = vpop.f32.mrf.mxu0
    %v2697 = vadd.f32 %v2632, %v2696
    %2698 = vmatmul.f32.gmra.mxu0 %v2659
    %v2699 = vpop.f32.mrf.mxu0
    %v2700 = vadd.f32 %v2635, %v2699
    %2701 = vmatmul.f32.gmra.mxu0 %v2662
    %v2702 = vpop.f32.mrf.mxu0
    %v2703 = vadd.f32 %v2638, %v2702
    %2704 = vmatmul.f32.gmra.mxu0 %v2665
    %v2705 = vpop.f32.mrf.mxu0
    %v2706 = vadd.f32 %v2641, %v2705
    %2707 = vmatmul.f32.gmra.mxu0 %v2668
    %v2708 = vpop.f32.mrf.mxu0
    %v2709 = vadd.f32 %v2644, %v2708
    %2710 = vmatmul.f32.gmra.mxu0 %v2671
    %v2711 = vpop.f32.mrf.mxu0
    %v2712 = vadd.f32 %v2647, %v2711
    %2713 = vmatmul.f32.gmra.mxu0 %v2674
    %v2714 = vpop.f32.mrf.mxu0
    %v2715 = vadd.f32 %v2650, %v2714
    %2716 = vdwg.mxu0
    %v2717 = vld [vmem:[#allocation13] sm:$0x1]
    %v2718 = vperm.slane %v2717, 0
    %v2719 = vadd.f32 %v1816, %v2718
    %v2720 = vadd.f32 %v1819, %v2718
    %v2721 = vadd.f32 %v1822, %v2718
    %v2722 = vadd.f32 %v1825, %v2718
    %v2723 = vadd.f32 %v1828, %v2718
    %v2724 = vadd.f32 %v1831, %v2718
    %v2725 = vadd.f32 %v1834, %v2718
    %v2726 = vadd.f32 %v1837, %v2718
    %v2727 = vadd.f32 %v2694, %v2718
    %v2728 = vadd.f32 %v2697, %v2718
    %v2729 = vadd.f32 %v2700, %v2718
    %v2730 = vadd.f32 %v2703, %v2718
    %v2731 = vadd.f32 %v2706, %v2718
    %v2732 = vadd.f32 %v2709, %v2718
    %v2733 = vadd.f32 %v2712, %v2718
    %v2734 = vadd.f32 %v2715, %v2718
    %v2735 = vsel %vm156, %v2719, 0.0
    %2736 = vadd.xlane.f32.xlu0 %v2735
    %v2737 = vpop.xlane.xlu0 %2736
    %v2738 = vsel %vm156, %v2720, 0.0
    %2739 = vadd.xlane.f32.xlu0 %v2738
    %v2740 = vpop.xlane.xlu0 %2739
    %v2741 = vsel %vm156, %v2721, 0.0
    %2742 = vadd.xlane.f32.xlu0 %v2741
    %v2743 = vpop.xlane.xlu0 %2742
    %v2744 = vsel %vm156, %v2722, 0.0
    %2745 = vadd.xlane.f32.xlu0 %v2744
    %v2746 = vpop.xlane.xlu0 %2745
    %v2747 = vsel %vm156, %v2723, 0.0
    %2748 = vadd.xlane.f32.xlu0 %v2747
    %v2749 = vpop.xlane.xlu0 %2748
    %v2750 = vsel %vm156, %v2724, 0.0
    %2751 = vadd.xlane.f32.xlu0 %v2750
    %v2752 = vpop.xlane.xlu0 %2751
    %v2753 = vsel %vm156, %v2725, 0.0
    %2754 = vadd.xlane.f32.xlu0 %v2753
    %v2755 = vpop.xlane.xlu0 %2754
    %v2756 = vsel %vm156, %v2726, 0.0
    %2757 = vadd.xlane.f32.xlu0 %v2756
    %v2758 = vpop.xlane.xlu0 %2757
    %v2759 = vsel %vm156, %v2727, 0.0
    %2760 = vadd.xlane.f32.xlu0 %v2759
    %v2761 = vpop.xlane.xlu0 %2760
    %v2762 = vsel %vm156, %v2728, 0.0
    %2763 = vadd.xlane.f32.xlu0 %v2762
    %v2764 = vpop.xlane.xlu0 %2763
    %v2765 = vsel %vm156, %v2729, 0.0
    %2766 = vadd.xlane.f32.xlu0 %v2765
    %v2767 = vpop.xlane.xlu0 %2766
    %v2768 = vsel %vm156, %v2730, 0.0
    %2769 = vadd.xlane.f32.xlu0 %v2768
    %v2770 = vpop.xlane.xlu0 %2769
    %v2771 = vsel %vm156, %v2731, 0.0
    %2772 = vadd.xlane.f32.xlu0 %v2771
    %v2773 = vpop.xlane.xlu0 %2772
    %v2774 = vsel %vm156, %v2732, 0.0
    %2775 = vadd.xlane.f32.xlu0 %v2774
    %v2776 = vpop.xlane.xlu0 %2775
    %v2777 = vsel %vm156, %v2733, 0.0
    %2778 = vadd.xlane.f32.xlu0 %v2777
    %v2779 = vpop.xlane.xlu0 %2778
    %v2780 = vsel %vm156, %v2734, 0.0
    %2781 = vadd.xlane.f32.xlu0 %v2780
    %v2782 = vpop.xlane.xlu0 %2781
    %v2783 = vrcp.pop 64.0
    %v2784 = vmul.f32 64.0, %v2783
    %v2785 = vsub.f32 1.0, %v2784
    %v2786 = vmul.f32 %v2783, %v2785
    %v2787 = vadd.f32 %v2783, %v2786
    %vm2788 = vweird.f32 %v2783
    %v2789 = vsel %vm2788, %v2783, %v2787
    %v2790 = vmul.f32 %v2737, %v2789
    %v2791 = vmul.f32 %v2740, %v2789
    %v2792 = vmul.f32 %v2743, %v2789
    %v2793 = vmul.f32 %v2746, %v2789
    %v2794 = vmul.f32 %v2749, %v2789
    %v2795 = vmul.f32 %v2752, %v2789
    %v2796 = vmul.f32 %v2755, %v2789
    %v2797 = vmul.f32 %v2758, %v2789
    %v2798 = vmul.f32 %v2761, %v2789
    %v2799 = vmul.f32 %v2764, %v2789
    %v2800 = vmul.f32 %v2767, %v2789
    %v2801 = vmul.f32 %v2770, %v2789
    %v2802 = vmul.f32 %v2773, %v2789
    %v2803 = vmul.f32 %v2776, %v2789
    %v2804 = vmul.f32 %v2779, %v2789
    %v2805 = vmul.f32 %v2782, %v2789
    %v2806 = vsub.f32 %v2719, %v2790
    %v2807 = vsub.f32 %v2720, %v2791
    %v2808 = vsub.f32 %v2721, %v2792
    %v2809 = vsub.f32 %v2722, %v2793
    %v2810 = vsub.f32 %v2723, %v2794
    %v2811 = vsub.f32 %v2724, %v2795
    %v2812 = vsub.f32 %v2725, %v2796
    %v2813 = vsub.f32 %v2726, %v2797
    %v2814 = vsub.f32 %v2727, %v2798
    %v2815 = vsub.f32 %v2728, %v2799
    %v2816 = vsub.f32 %v2729, %v2800
    %v2817 = vsub.f32 %v2730, %v2801
    %v2818 = vsub.f32 %v2731, %v2802
    %v2819 = vsub.f32 %v2732, %v2803
    %v2820 = vsub.f32 %v2733, %v2804
    %v2821 = vsub.f32 %v2734, %v2805
    %v2822 = vmul.f32 %v2806, %v2806
    %v2823 = vmul.f32 %v2807, %v2807
    %v2824 = vmul.f32 %v2808, %v2808
    %v2825 = vmul.f32 %v2809, %v2809
    %v2826 = vmul.f32 %v2810, %v2810
    %v2827 = vmul.f32 %v2811, %v2811
    %v2828 = vmul.f32 %v2812, %v2812
    %v2829 = vmul.f32 %v2813, %v2813
    %v2830 = vmul.f32 %v2814, %v2814
    %v2831 = vmul.f32 %v2815, %v2815
    %v2832 = vmul.f32 %v2816, %v2816
    %v2833 = vmul.f32 %v2817, %v2817
    %v2834 = vmul.f32 %v2818, %v2818
    %v2835 = vmul.f32 %v2819, %v2819
    %v2836 = vmul.f32 %v2820, %v2820
    %v2837 = vmul.f32 %v2821, %v2821
    %v2838 = vsel %vm156, %v2822, 0.0
    %2839 = vadd.xlane.f32.xlu0 %v2838
    %v2840 = vpop.xlane.xlu0 %2839
    %v2841 = vsel %vm156, %v2823, 0.0
    %2842 = vadd.xlane.f32.xlu0 %v2841
    %v2843 = vpop.xlane.xlu0 %2842
    %v2844 = vsel %vm156, %v2824, 0.0
    %2845 = vadd.xlane.f32.xlu0 %v2844
    %v2846 = vpop.xlane.xlu0 %2845
    %v2847 = vsel %vm156, %v2825, 0.0
    %2848 = vadd.xlane.f32.xlu0 %v2847
    %v2849 = vpop.xlane.xlu0 %2848
    %v2850 = vsel %vm156, %v2826, 0.0
    %2851 = vadd.xlane.f32.xlu0 %v2850
    %v2852 = vpop.xlane.xlu0 %2851
    %v2853 = vsel %vm156, %v2827, 0.0
    %2854 = vadd.xlane.f32.xlu0 %v2853
    %v2855 = vpop.xlane.xlu0 %2854
    %v2856 = vsel %vm156, %v2828, 0.0
    %2857 = vadd.xlane.f32.xlu0 %v2856
    %v2858 = vpop.xlane.xlu0 %2857
    %v2859 = vsel %vm156, %v2829, 0.0
    %2860 = vadd.xlane.f32.xlu0 %v2859
    %v2861 = vpop.xlane.xlu0 %2860
    %v2862 = vsel %vm156, %v2830, 0.0
    %2863 = vadd.xlane.f32.xlu0 %v2862
    %v2864 = vpop.xlane.xlu0 %2863
    %v2865 = vsel %vm156, %v2831, 0.0
    %2866 = vadd.xlane.f32.xlu0 %v2865
    %v2867 = vpop.xlane.xlu0 %2866
    %v2868 = vsel %vm156, %v2832, 0.0
    %2869 = vadd.xlane.f32.xlu0 %v2868
    %v2870 = vpop.xlane.xlu0 %2869
    %v2871 = vsel %vm156, %v2833, 0.0
    %2872 = vadd.xlane.f32.xlu0 %v2871
    %v2873 = vpop.xlane.xlu0 %2872
    %v2874 = vsel %vm156, %v2834, 0.0
    %2875 = vadd.xlane.f32.xlu0 %v2874
    %v2876 = vpop.xlane.xlu0 %2875
    %v2877 = vsel %vm156, %v2835, 0.0
    %2878 = vadd.xlane.f32.xlu0 %v2877
    %v2879 = vpop.xlane.xlu0 %2878
    %v2880 = vsel %vm156, %v2836, 0.0
    %2881 = vadd.xlane.f32.xlu0 %v2880
    %v2882 = vpop.xlane.xlu0 %2881
    %v2883 = vsel %vm156, %v2837, 0.0
    %2884 = vadd.xlane.f32.xlu0 %v2883
    %v2885 = vpop.xlane.xlu0 %2884
    %v2886 = vmul.f32 %v2840, %v2789
    %v2887 = vmul.f32 %v2843, %v2789
    %v2888 = vmul.f32 %v2846, %v2789
    %v2889 = vmul.f32 %v2849, %v2789
    %v2890 = vmul.f32 %v2852, %v2789
    %v2891 = vmul.f32 %v2855, %v2789
    %v2892 = vmul.f32 %v2858, %v2789
    %v2893 = vmul.f32 %v2861, %v2789
    %v2894 = vmul.f32 %v2864, %v2789
    %v2895 = vmul.f32 %v2867, %v2789
    %v2896 = vmul.f32 %v2870, %v2789
    %v2897 = vmul.f32 %v2873, %v2789
    %v2898 = vmul.f32 %v2876, %v2789
    %v2899 = vmul.f32 %v2879, %v2789
    %v2900 = vmul.f32 %v2882, %v2789
    %v2901 = vmul.f32 %v2885, %v2789
    %v2902 = vadd.f32 %v2886, 1e-05
    %v2903 = vadd.f32 %v2887, 1e-05
    %v2904 = vadd.f32 %v2888, 1e-05
    %v2905 = vadd.f32 %v2889, 1e-05
    %v2906 = vadd.f32 %v2890, 1e-05
    %v2907 = vadd.f32 %v2891, 1e-05
    %v2908 = vadd.f32 %v2892, 1e-05
    %v2909 = vadd.f32 %v2893, 1e-05
    %v2910 = vadd.f32 %v2894, 1e-05
    %v2911 = vadd.f32 %v2895, 1e-05
    %v2912 = vadd.f32 %v2896, 1e-05
    %v2913 = vadd.f32 %v2897, 1e-05
    %v2914 = vadd.f32 %v2898, 1e-05
    %v2915 = vadd.f32 %v2899, 1e-05
    %v2916 = vadd.f32 %v2900, 1e-05
    %v2917 = vadd.f32 %v2901, 1e-05
    %v2918 = vrsqrt.pop %v2902
    %v2919 = vmul.f32 %v2918, %v2902
    %v2920 = vmul.f32 %v2919, %v2918
    %v2921 = vmul.f32 0.5, %v2920
    %v2922 = vsub.f32 1.5, %v2921
    %v2923 = vmul.f32 %v2918, %v2922
    %vm2924 = vweird.f32 %v2902
    %vm2925 = vweird.f32 %v2918
    %vm2926 = vmor %vm2924, %vm2925
    %v2927 = vsel %vm2926, %v2918, %v2923
    %v2928 = vrsqrt.pop %v2903
    %v2929 = vmul.f32 %v2928, %v2903
    %v2930 = vmul.f32 %v2929, %v2928
    %v2931 = vmul.f32 0.5, %v2930
    %v2932 = vsub.f32 1.5, %v2931
    %v2933 = vmul.f32 %v2928, %v2932
    %vm2934 = vweird.f32 %v2903
    %vm2935 = vweird.f32 %v2928
    %vm2936 = vmor %vm2934, %vm2935
    %v2937 = vsel %vm2936, %v2928, %v2933
    %v2938 = vrsqrt.pop %v2904
    %v2939 = vmul.f32 %v2938, %v2904
    %v2940 = vmul.f32 %v2939, %v2938
    %v2941 = vmul.f32 0.5, %v2940
    %v2942 = vsub.f32 1.5, %v2941
    %v2943 = vmul.f32 %v2938, %v2942
    %vm2944 = vweird.f32 %v2904
    %vm2945 = vweird.f32 %v2938
    %vm2946 = vmor %vm2944, %vm2945
    %v2947 = vsel %vm2946, %v2938, %v2943
    %v2948 = vrsqrt.pop %v2905
    %v2949 = vmul.f32 %v2948, %v2905
    %v2950 = vmul.f32 %v2949, %v2948
    %v2951 = vmul.f32 0.5, %v2950
    %v2952 = vsub.f32 1.5, %v2951
    %v2953 = vmul.f32 %v2948, %v2952
    %vm2954 = vweird.f32 %v2905
    %vm2955 = vweird.f32 %v2948
    %vm2956 = vmor %vm2954, %vm2955
    %v2957 = vsel %vm2956, %v2948, %v2953
    %v2958 = vrsqrt.pop %v2906
    %v2959 = vmul.f32 %v2958, %v2906
    %v2960 = vmul.f32 %v2959, %v2958
    %v2961 = vmul.f32 0.5, %v2960
    %v2962 = vsub.f32 1.5, %v2961
    %v2963 = vmul.f32 %v2958, %v2962
    %vm2964 = vweird.f32 %v2906
    %vm2965 = vweird.f32 %v2958
    %vm2966 = vmor %vm2964, %vm2965
    %v2967 = vsel %vm2966, %v2958, %v2963
    %v2968 = vrsqrt.pop %v2907
    %v2969 = vmul.f32 %v2968, %v2907
    %v2970 = vmul.f32 %v2969, %v2968
    %v2971 = vmul.f32 0.5, %v2970
    %v2972 = vsub.f32 1.5, %v2971
    %v2973 = vmul.f32 %v2968, %v2972
    %vm2974 = vweird.f32 %v2907
    %vm2975 = vweird.f32 %v2968
    %vm2976 = vmor %vm2974, %vm2975
    %v2977 = vsel %vm2976, %v2968, %v2973
    %v2978 = vrsqrt.pop %v2908
    %v2979 = vmul.f32 %v2978, %v2908
    %v2980 = vmul.f32 %v2979, %v2978
    %v2981 = vmul.f32 0.5, %v2980
    %v2982 = vsub.f32 1.5, %v2981
    %v2983 = vmul.f32 %v2978, %v2982
    %vm2984 = vweird.f32 %v2908
    %vm2985 = vweird.f32 %v2978
    %vm2986 = vmor %vm2984, %vm2985
    %v2987 = vsel %vm2986, %v2978, %v2983
    %v2988 = vrsqrt.pop %v2909
    %v2989 = vmul.f32 %v2988, %v2909
    %v2990 = vmul.f32 %v2989, %v2988
    %v2991 = vmul.f32 0.5, %v2990
    %v2992 = vsub.f32 1.5, %v2991
    %v2993 = vmul.f32 %v2988, %v2992
    %vm2994 = vweird.f32 %v2909
    %vm2995 = vweird.f32 %v2988
    %vm2996 = vmor %vm2994, %vm2995
    %v2997 = vsel %vm2996, %v2988, %v2993
    %v2998 = vrsqrt.pop %v2910
    %v2999 = vmul.f32 %v2998, %v2910
    %v3000 = vmul.f32 %v2999, %v2998
    %v3001 = vmul.f32 0.5, %v3000
    %v3002 = vsub.f32 1.5, %v3001
    %v3003 = vmul.f32 %v2998, %v3002
    %vm3004 = vweird.f32 %v2910
    %vm3005 = vweird.f32 %v2998
    %vm3006 = vmor %vm3004, %vm3005
    %v3007 = vsel %vm3006, %v2998, %v3003
    %v3008 = vrsqrt.pop %v2911
    %v3009 = vmul.f32 %v3008, %v2911
    %v3010 = vmul.f32 %v3009, %v3008
    %v3011 = vmul.f32 0.5, %v3010
    %v3012 = vsub.f32 1.5, %v3011
    %v3013 = vmul.f32 %v3008, %v3012
    %vm3014 = vweird.f32 %v2911
    %vm3015 = vweird.f32 %v3008
    %vm3016 = vmor %vm3014, %vm3015
    %v3017 = vsel %vm3016, %v3008, %v3013
    %v3018 = vrsqrt.pop %v2912
    %v3019 = vmul.f32 %v3018, %v2912
    %v3020 = vmul.f32 %v3019, %v3018
    %v3021 = vmul.f32 0.5, %v3020
    %v3022 = vsub.f32 1.5, %v3021
    %v3023 = vmul.f32 %v3018, %v3022
    %vm3024 = vweird.f32 %v2912
    %vm3025 = vweird.f32 %v3018
    %vm3026 = vmor %vm3024, %vm3025
    %v3027 = vsel %vm3026, %v3018, %v3023
    %v3028 = vrsqrt.pop %v2913
    %v3029 = vmul.f32 %v3028, %v2913
    %v3030 = vmul.f32 %v3029, %v3028
    %v3031 = vmul.f32 0.5, %v3030
    %v3032 = vsub.f32 1.5, %v3031
    %v3033 = vmul.f32 %v3028, %v3032
    %vm3034 = vweird.f32 %v2913
    %vm3035 = vweird.f32 %v3028
    %vm3036 = vmor %vm3034, %vm3035
    %v3037 = vsel %vm3036, %v3028, %v3033
    %v3038 = vrsqrt.pop %v2914
    %v3039 = vmul.f32 %v3038, %v2914
    %v3040 = vmul.f32 %v3039, %v3038
    %v3041 = vmul.f32 0.5, %v3040
    %v3042 = vsub.f32 1.5, %v3041
    %v3043 = vmul.f32 %v3038, %v3042
    %vm3044 = vweird.f32 %v2914
    %vm3045 = vweird.f32 %v3038
    %vm3046 = vmor %vm3044, %vm3045
    %v3047 = vsel %vm3046, %v3038, %v3043
    %v3048 = vrsqrt.pop %v2915
    %v3049 = vmul.f32 %v3048, %v2915
    %v3050 = vmul.f32 %v3049, %v3048
    %v3051 = vmul.f32 0.5, %v3050
    %v3052 = vsub.f32 1.5, %v3051
    %v3053 = vmul.f32 %v3048, %v3052
    %vm3054 = vweird.f32 %v2915
    %vm3055 = vweird.f32 %v3048
    %vm3056 = vmor %vm3054, %vm3055
    %v3057 = vsel %vm3056, %v3048, %v3053
    %v3058 = vrsqrt.pop %v2916
    %v3059 = vmul.f32 %v3058, %v2916
    %v3060 = vmul.f32 %v3059, %v3058
    %v3061 = vmul.f32 0.5, %v3060
    %v3062 = vsub.f32 1.5, %v3061
    %v3063 = vmul.f32 %v3058, %v3062
    %vm3064 = vweird.f32 %v2916
    %vm3065 = vweird.f32 %v3058
    %vm3066 = vmor %vm3064, %vm3065
    %v3067 = vsel %vm3066, %v3058, %v3063
    %v3068 = vrsqrt.pop %v2917
    %v3069 = vmul.f32 %v3068, %v2917
    %v3070 = vmul.f32 %v3069, %v3068
    %v3071 = vmul.f32 0.5, %v3070
    %v3072 = vsub.f32 1.5, %v3071
    %v3073 = vmul.f32 %v3068, %v3072
    %vm3074 = vweird.f32 %v2917
    %vm3075 = vweird.f32 %v3068
    %vm3076 = vmor %vm3074, %vm3075
    %v3077 = vsel %vm3076, %v3068, %v3073
    %v3078 = vmul.f32 %v2806, %v2927
    %v3079 = vmul.f32 %v2807, %v2937
    %v3080 = vmul.f32 %v2808, %v2947
    %v3081 = vmul.f32 %v2809, %v2957
    %v3082 = vmul.f32 %v2810, %v2967
    %v3083 = vmul.f32 %v2811, %v2977
    %v3084 = vmul.f32 %v2812, %v2987
    %v3085 = vmul.f32 %v2813, %v2997
    %v3086 = vmul.f32 %v2814, %v3007
    %v3087 = vmul.f32 %v2815, %v3017
    %v3088 = vmul.f32 %v2816, %v3027
    %v3089 = vmul.f32 %v2817, %v3037
    %v3090 = vmul.f32 %v2818, %v3047
    %v3091 = vmul.f32 %v2819, %v3057
    %v3092 = vmul.f32 %v2820, %v3067
    %v3093 = vmul.f32 %v2821, %v3077
    %v3094 = vld [vmem:[#allocation13 + $0x1] sm:$0x1]
    %v3095 = vperm.slane %v3094, 0
    %v3096 = vmul.f32 %v3078, %v3095
    %v3097 = vmul.f32 %v3079, %v3095
    %v3098 = vmul.f32 %v3080, %v3095
    %v3099 = vmul.f32 %v3081, %v3095
    %v3100 = vmul.f32 %v3082, %v3095
    %v3101 = vmul.f32 %v3083, %v3095
    %v3102 = vmul.f32 %v3084, %v3095
    %v3103 = vmul.f32 %v3085, %v3095
    %v3104 = vmul.f32 %v3086, %v3095
    %v3105 = vmul.f32 %v3087, %v3095
    %v3106 = vmul.f32 %v3088, %v3095
    %v3107 = vmul.f32 %v3089, %v3095
    %v3108 = vmul.f32 %v3090, %v3095
    %v3109 = vmul.f32 %v3091, %v3095
    %v3110 = vmul.f32 %v3092, %v3095
    %v3111 = vmul.f32 %v3093, %v3095
    %v3112 = vld [vmem:[#allocation13 + $0x2] sm:$0x1]
    %v3113 = vperm.slane %v3112, 0
    %v3114 = vadd.f32 %v3096, %v3113
    %v3115 = vadd.f32 %v3097, %v3113
    %v3116 = vadd.f32 %v3098, %v3113
    %v3117 = vadd.f32 %v3099, %v3113
    %v3118 = vadd.f32 %v3100, %v3113
    %v3119 = vadd.f32 %v3101, %v3113
    %v3120 = vadd.f32 %v3102, %v3113
    %v3121 = vadd.f32 %v3103, %v3113
    %v3122 = vadd.f32 %v3104, %v3113
    %v3123 = vadd.f32 %v3105, %v3113
    %v3124 = vadd.f32 %v3106, %v3113
    %v3125 = vadd.f32 %v3107, %v3113
    %v3126 = vadd.f32 %v3108, %v3113
    %v3127 = vadd.f32 %v3109, %v3113
    %v3128 = vadd.f32 %v3110, %v3113
    %v3129 = vadd.f32 %v3111, %v3113
    %v3130 = vadd.f32 %v3114, %v453
    %v3131 = vadd.f32 %v3115, %v454
    %v3132 = vadd.f32 %v3116, %v455
    %v3133 = vadd.f32 %v3117, %v456
    %v3134 = vadd.f32 %v3118, %v457
    %v3135 = vadd.f32 %v3119, %v458
    %v3136 = vadd.f32 %v3120, %v459
    %v3137 = vadd.f32 %v3121, %v460
    %v3138 = vadd.f32 %v3122, %v700
    %v3139 = vadd.f32 %v3123, %v701
    %v3140 = vadd.f32 %v3124, %v702
    %v3141 = vadd.f32 %v3125, %v703
    %v3142 = vadd.f32 %v3126, %v704
    %v3143 = vadd.f32 %v3127, %v705
    %v3144 = vadd.f32 %v3128, %v706
    %v3145 = vadd.f32 %v3129, %v707
    %v3146 = vmul.f32 %v3130, 0.5
    %v3147 = vmul.f32 %v3131, 0.5
    %v3148 = vmul.f32 %v3132, 0.5
    %v3149 = vmul.f32 %v3133, 0.5
    %v3150 = vmul.f32 %v3134, 0.5
    %v3151 = vmul.f32 %v3135, 0.5
    %v3152 = vmul.f32 %v3136, 0.5
    %v3153 = vmul.f32 %v3137, 0.5
    %v3154 = vmul.f32 %v3138, 0.5
    %v3155 = vmul.f32 %v3139, 0.5
    %v3156 = vmul.f32 %v3140, 0.5
    %v3157 = vmul.f32 %v3141, 0.5
    %v3158 = vmul.f32 %v3142, 0.5
    %v3159 = vmul.f32 %v3143, 0.5
    %v3160 = vmul.f32 %v3144, 0.5
    %v3161 = vmul.f32 %v3145, 0.5
    %v3162 = vmul.f32 %v3130, 0.70710677
    %v3163 = vmul.f32 %v3131, 0.70710677
    %v3164 = vmul.f32 %v3132, 0.70710677
    %v3165 = vmul.f32 %v3133, 0.70710677
    %v3166 = vmul.f32 %v3134, 0.70710677
    %v3167 = vmul.f32 %v3135, 0.70710677
    %v3168 = vmul.f32 %v3136, 0.70710677
    %v3169 = vmul.f32 %v3137, 0.70710677
    %v3170 = vmul.f32 %v3138, 0.70710677
    %v3171 = vmul.f32 %v3139, 0.70710677
    %v3172 = vmul.f32 %v3140, 0.70710677
    %v3173 = vmul.f32 %v3141, 0.70710677
    %v3174 = vmul.f32 %v3142, 0.70710677
    %v3175 = vmul.f32 %v3143, 0.70710677
    %v3176 = vmul.f32 %v3144, 0.70710677
    %v3177 = vmul.f32 %v3145, 0.70710677
    %v3178 = vand.u32 2147483647, %v3162
    %v3179 = vand.u32 2147483647, %v3163
    %v3180 = vand.u32 2147483647, %v3164
    %v3181 = vand.u32 2147483647, %v3165
    %v3182 = vand.u32 2147483647, %v3166
    %v3183 = vand.u32 2147483647, %v3167
    %v3184 = vand.u32 2147483647, %v3168
    %v3185 = vand.u32 2147483647, %v3169
    %v3186 = vand.u32 2147483647, %v3170
    %v3187 = vand.u32 2147483647, %v3171
    %v3188 = vand.u32 2147483647, %v3172
    %v3189 = vand.u32 2147483647, %v3173
    %v3190 = vand.u32 2147483647, %v3174
    %v3191 = vand.u32 2147483647, %v3175
    %v3192 = vand.u32 2147483647, %v3176
    %v3193 = vand.u32 2147483647, %v3177
    %v3194 = vmul.f32 %v3178, 0.3275911
    %v3195 = vmul.f32 %v3179, 0.3275911
    %v3196 = vmul.f32 %v3180, 0.3275911
    %v3197 = vmul.f32 %v3181, 0.3275911
    %v3198 = vmul.f32 %v3182, 0.3275911
    %v3199 = vmul.f32 %v3183, 0.3275911
    %v3200 = vmul.f32 %v3184, 0.3275911
    %v3201 = vmul.f32 %v3185, 0.3275911
    %v3202 = vmul.f32 %v3186, 0.3275911
    %v3203 = vmul.f32 %v3187, 0.3275911
    %v3204 = vmul.f32 %v3188, 0.3275911
    %v3205 = vmul.f32 %v3189, 0.3275911
    %v3206 = vmul.f32 %v3190, 0.3275911
    %v3207 = vmul.f32 %v3191, 0.3275911
    %v3208 = vmul.f32 %v3192, 0.3275911
    %v3209 = vmul.f32 %v3193, 0.3275911
    %v3210 = vadd.f32 %v3194, 1.0
    %v3211 = vadd.f32 %v3195, 1.0
    %v3212 = vadd.f32 %v3196, 1.0
    %v3213 = vadd.f32 %v3197, 1.0
    %v3214 = vadd.f32 %v3198, 1.0
    %v3215 = vadd.f32 %v3199, 1.0
    %v3216 = vadd.f32 %v3200, 1.0
    %v3217 = vadd.f32 %v3201, 1.0
    %v3218 = vadd.f32 %v3202, 1.0
    %v3219 = vadd.f32 %v3203, 1.0
    %v3220 = vadd.f32 %v3204, 1.0
    %v3221 = vadd.f32 %v3205, 1.0
    %v3222 = vadd.f32 %v3206, 1.0
    %v3223 = vadd.f32 %v3207, 1.0
    %v3224 = vadd.f32 %v3208, 1.0
    %v3225 = vadd.f32 %v3209, 1.0
    %v3226 = vrcp.pop %v3210
    %v3227 = vmul.f32 %v3210, %v3226
    %v3228 = vsub.f32 1.0, %v3227
    %v3229 = vmul.f32 %v3226, %v3228
    %v3230 = vadd.f32 %v3226, %v3229
    %vm3231 = vweird.f32 %v3210
    %vm3232 = vweird.f32 %v3226
    %vm3233 = vmor %vm3231, %vm3232
    %v3234 = vsel %vm3233, %v3226, %v3230
    %v3235 = vand.u32 2147483647, %v3210
    %vm3236 = vcmp.eq.f32.partialorder %v3235, 8.507059e+37
    %v3237 = vand.u32 %v3210, 2147483648
    %v3238 = vor.u32 1.1754944e-38, %v3237
    %v3239 = vsel %vm3236, %v3238, %v3234
    %v3240 = vmul.f32 1.0, %v3239
    %v3241 = vrcp.pop %v3211
    %v3242 = vmul.f32 %v3211, %v3241
    %v3243 = vsub.f32 1.0, %v3242
    %v3244 = vmul.f32 %v3241, %v3243
    %v3245 = vadd.f32 %v3241, %v3244
    %vm3246 = vweird.f32 %v3211
    %vm3247 = vweird.f32 %v3241
    %vm3248 = vmor %vm3246, %vm3247
    %v3249 = vsel %vm3248, %v3241, %v3245
    %v3250 = vand.u32 2147483647, %v3211
    %vm3251 = vcmp.eq.f32.partialorder %v3250, 8.507059e+37
    %v3252 = vand.u32 %v3211, 2147483648
    %v3253 = vor.u32 1.1754944e-38, %v3252
    %v3254 = vsel %vm3251, %v3253, %v3249
    %v3255 = vmul.f32 1.0, %v3254
    %v3256 = vrcp.pop %v3212
    %v3257 = vmul.f32 %v3212, %v3256
    %v3258 = vsub.f32 1.0, %v3257
    %v3259 = vmul.f32 %v3256, %v3258
    %v3260 = vadd.f32 %v3256, %v3259
    %vm3261 = vweird.f32 %v3212
    %vm3262 = vweird.f32 %v3256
    %vm3263 = vmor %vm3261, %vm3262
    %v3264 = vsel %vm3263, %v3256, %v3260
    %v3265 = vand.u32 2147483647, %v3212
    %vm3266 = vcmp.eq.f32.partialorder %v3265, 8.507059e+37
    %v3267 = vand.u32 %v3212, 2147483648
    %v3268 = vor.u32 1.1754944e-38, %v3267
    %v3269 = vsel %vm3266, %v3268, %v3264
    %v3270 = vmul.f32 1.0, %v3269
    %v3271 = vrcp.pop %v3213
    %v3272 = vmul.f32 %v3213, %v3271
    %v3273 = vsub.f32 1.0, %v3272
    %v3274 = vmul.f32 %v3271, %v3273
    %v3275 = vadd.f32 %v3271, %v3274
    %vm3276 = vweird.f32 %v3213
    %vm3277 = vweird.f32 %v3271
    %vm3278 = vmor %vm3276, %vm3277
    %v3279 = vsel %vm3278, %v3271, %v3275
    %v3280 = vand.u32 2147483647, %v3213
    %vm3281 = vcmp.eq.f32.partialorder %v3280, 8.507059e+37
    %v3282 = vand.u32 %v3213, 2147483648
    %v3283 = vor.u32 1.1754944e-38, %v3282
    %v3284 = vsel %vm3281, %v3283, %v3279
    %v3285 = vmul.f32 1.0, %v3284
    %v3286 = vrcp.pop %v3214
    %v3287 = vmul.f32 %v3214, %v3286
    %v3288 = vsub.f32 1.0, %v3287
    %v3289 = vmul.f32 %v3286, %v3288
    %v3290 = vadd.f32 %v3286, %v3289
    %vm3291 = vweird.f32 %v3214
    %vm3292 = vweird.f32 %v3286
    %vm3293 = vmor %vm3291, %vm3292
    %v3294 = vsel %vm3293, %v3286, %v3290
    %v3295 = vand.u32 2147483647, %v3214
    %vm3296 = vcmp.eq.f32.partialorder %v3295, 8.507059e+37
    %v3297 = vand.u32 %v3214, 2147483648
    %v3298 = vor.u32 1.1754944e-38, %v3297
    %v3299 = vsel %vm3296, %v3298, %v3294
    %v3300 = vmul.f32 1.0, %v3299
    %v3301 = vrcp.pop %v3215
    %v3302 = vmul.f32 %v3215, %v3301
    %v3303 = vsub.f32 1.0, %v3302
    %v3304 = vmul.f32 %v3301, %v3303
    %v3305 = vadd.f32 %v3301, %v3304
    %vm3306 = vweird.f32 %v3215
    %vm3307 = vweird.f32 %v3301
    %vm3308 = vmor %vm3306, %vm3307
    %v3309 = vsel %vm3308, %v3301, %v3305
    %v3310 = vand.u32 2147483647, %v3215
    %vm3311 = vcmp.eq.f32.partialorder %v3310, 8.507059e+37
    %v3312 = vand.u32 %v3215, 2147483648
    %v3313 = vor.u32 1.1754944e-38, %v3312
    %v3314 = vsel %vm3311, %v3313, %v3309
    %v3315 = vmul.f32 1.0, %v3314
    %v3316 = vrcp.pop %v3216
    %v3317 = vmul.f32 %v3216, %v3316
    %v3318 = vsub.f32 1.0, %v3317
    %v3319 = vmul.f32 %v3316, %v3318
    %v3320 = vadd.f32 %v3316, %v3319
    %vm3321 = vweird.f32 %v3216
    %vm3322 = vweird.f32 %v3316
    %vm3323 = vmor %vm3321, %vm3322
    %v3324 = vsel %vm3323, %v3316, %v3320
    %v3325 = vand.u32 2147483647, %v3216
    %vm3326 = vcmp.eq.f32.partialorder %v3325, 8.507059e+37
    %v3327 = vand.u32 %v3216, 2147483648
    %v3328 = vor.u32 1.1754944e-38, %v3327
    %v3329 = vsel %vm3326, %v3328, %v3324
    %v3330 = vmul.f32 1.0, %v3329
    %v3331 = vrcp.pop %v3217
    %v3332 = vmul.f32 %v3217, %v3331
    %v3333 = vsub.f32 1.0, %v3332
    %v3334 = vmul.f32 %v3331, %v3333
    %v3335 = vadd.f32 %v3331, %v3334
    %vm3336 = vweird.f32 %v3217
    %vm3337 = vweird.f32 %v3331
    %vm3338 = vmor %vm3336, %vm3337
    %v3339 = vsel %vm3338, %v3331, %v3335
    %v3340 = vand.u32 2147483647, %v3217
    %vm3341 = vcmp.eq.f32.partialorder %v3340, 8.507059e+37
    %v3342 = vand.u32 %v3217, 2147483648
    %v3343 = vor.u32 1.1754944e-38, %v3342
    %v3344 = vsel %vm3341, %v3343, %v3339
    %v3345 = vmul.f32 1.0, %v3344
    %v3346 = vrcp.pop %v3218
    %v3347 = vmul.f32 %v3218, %v3346
    %v3348 = vsub.f32 1.0, %v3347
    %v3349 = vmul.f32 %v3346, %v3348
    %v3350 = vadd.f32 %v3346, %v3349
    %vm3351 = vweird.f32 %v3218
    %vm3352 = vweird.f32 %v3346
    %vm3353 = vmor %vm3351, %vm3352
    %v3354 = vsel %vm3353, %v3346, %v3350
    %v3355 = vand.u32 2147483647, %v3218
    %vm3356 = vcmp.eq.f32.partialorder %v3355, 8.507059e+37
    %v3357 = vand.u32 %v3218, 2147483648
    %v3358 = vor.u32 1.1754944e-38, %v3357
    %v3359 = vsel %vm3356, %v3358, %v3354
    %v3360 = vmul.f32 1.0, %v3359
    %v3361 = vrcp.pop %v3219
    %v3362 = vmul.f32 %v3219, %v3361
    %v3363 = vsub.f32 1.0, %v3362
    %v3364 = vmul.f32 %v3361, %v3363
    %v3365 = vadd.f32 %v3361, %v3364
    %vm3366 = vweird.f32 %v3219
    %vm3367 = vweird.f32 %v3361
    %vm3368 = vmor %vm3366, %vm3367
    %v3369 = vsel %vm3368, %v3361, %v3365
    %v3370 = vand.u32 2147483647, %v3219
    %vm3371 = vcmp.eq.f32.partialorder %v3370, 8.507059e+37
    %v3372 = vand.u32 %v3219, 2147483648
    %v3373 = vor.u32 1.1754944e-38, %v3372
    %v3374 = vsel %vm3371, %v3373, %v3369
    %v3375 = vmul.f32 1.0, %v3374
    %v3376 = vrcp.pop %v3220
    %v3377 = vmul.f32 %v3220, %v3376
    %v3378 = vsub.f32 1.0, %v3377
    %v3379 = vmul.f32 %v3376, %v3378
    %v3380 = vadd.f32 %v3376, %v3379
    %vm3381 = vweird.f32 %v3220
    %vm3382 = vweird.f32 %v3376
    %vm3383 = vmor %vm3381, %vm3382
    %v3384 = vsel %vm3383, %v3376, %v3380
    %v3385 = vand.u32 2147483647, %v3220
    %vm3386 = vcmp.eq.f32.partialorder %v3385, 8.507059e+37
    %v3387 = vand.u32 %v3220, 2147483648
    %v3388 = vor.u32 1.1754944e-38, %v3387
    %v3389 = vsel %vm3386, %v3388, %v3384
    %v3390 = vmul.f32 1.0, %v3389
    %v3391 = vrcp.pop %v3221
    %v3392 = vmul.f32 %v3221, %v3391
    %v3393 = vsub.f32 1.0, %v3392
    %v3394 = vmul.f32 %v3391, %v3393
    %v3395 = vadd.f32 %v3391, %v3394
    %vm3396 = vweird.f32 %v3221
    %vm3397 = vweird.f32 %v3391
    %vm3398 = vmor %vm3396, %vm3397
    %v3399 = vsel %vm3398, %v3391, %v3395
    %v3400 = vand.u32 2147483647, %v3221
    %vm3401 = vcmp.eq.f32.partialorder %v3400, 8.507059e+37
    %v3402 = vand.u32 %v3221, 2147483648
    %v3403 = vor.u32 1.1754944e-38, %v3402
    %v3404 = vsel %vm3401, %v3403, %v3399
    %v3405 = vmul.f32 1.0, %v3404
    %v3406 = vrcp.pop %v3222
    %v3407 = vmul.f32 %v3222, %v3406
    %v3408 = vsub.f32 1.0, %v3407
    %v3409 = vmul.f32 %v3406, %v3408
    %v3410 = vadd.f32 %v3406, %v3409
    %vm3411 = vweird.f32 %v3222
    %vm3412 = vweird.f32 %v3406
    %vm3413 = vmor %vm3411, %vm3412
    %v3414 = vsel %vm3413, %v3406, %v3410
    %v3415 = vand.u32 2147483647, %v3222
    %vm3416 = vcmp.eq.f32.partialorder %v3415, 8.507059e+37
    %v3417 = vand.u32 %v3222, 2147483648
    %v3418 = vor.u32 1.1754944e-38, %v3417
    %v3419 = vsel %vm3416, %v3418, %v3414
    %v3420 = vmul.f32 1.0, %v3419
    %v3421 = vrcp.pop %v3223
    %v3422 = vmul.f32 %v3223, %v3421
    %v3423 = vsub.f32 1.0, %v3422
    %v3424 = vmul.f32 %v3421, %v3423
    %v3425 = vadd.f32 %v3421, %v3424
    %vm3426 = vweird.f32 %v3223
    %vm3427 = vweird.f32 %v3421
    %vm3428 = vmor %vm3426, %vm3427
    %v3429 = vsel %vm3428, %v3421, %v3425
    %v3430 = vand.u32 2147483647, %v3223
    %vm3431 = vcmp.eq.f32.partialorder %v3430, 8.507059e+37
    %v3432 = vand.u32 %v3223, 2147483648
    %v3433 = vor.u32 1.1754944e-38, %v3432
    %v3434 = vsel %vm3431, %v3433, %v3429
    %v3435 = vmul.f32 1.0, %v3434
    %v3436 = vrcp.pop %v3224
    %v3437 = vmul.f32 %v3224, %v3436
    %v3438 = vsub.f32 1.0, %v3437
    %v3439 = vmul.f32 %v3436, %v3438
    %v3440 = vadd.f32 %v3436, %v3439
    %vm3441 = vweird.f32 %v3224
    %vm3442 = vweird.f32 %v3436
    %vm3443 = vmor %vm3441, %vm3442
    %v3444 = vsel %vm3443, %v3436, %v3440
    %v3445 = vand.u32 2147483647, %v3224
    %vm3446 = vcmp.eq.f32.partialorder %v3445, 8.507059e+37
    %v3447 = vand.u32 %v3224, 2147483648
    %v3448 = vor.u32 1.1754944e-38, %v3447
    %v3449 = vsel %vm3446, %v3448, %v3444
    %v3450 = vmul.f32 1.0, %v3449
    %v3451 = vrcp.pop %v3225
    %v3452 = vmul.f32 %v3225, %v3451
    %v3453 = vsub.f32 1.0, %v3452
    %v3454 = vmul.f32 %v3451, %v3453
    %v3455 = vadd.f32 %v3451, %v3454
    %vm3456 = vweird.f32 %v3225
    %vm3457 = vweird.f32 %v3451
    %vm3458 = vmor %vm3456, %vm3457
    %v3459 = vsel %vm3458, %v3451, %v3455
    %v3460 = vand.u32 2147483647, %v3225
    %vm3461 = vcmp.eq.f32.partialorder %v3460, 8.507059e+37
    %v3462 = vand.u32 %v3225, 2147483648
    %v3463 = vor.u32 1.1754944e-38, %v3462
    %v3464 = vsel %vm3461, %v3463, %v3459
    %v3465 = vmul.f32 1.0, %v3464
    %v3466 = vmul.f32 %v3240, 1.0614054
    %v3467 = vmul.f32 %v3255, 1.0614054
    %v3468 = vmul.f32 %v3270, 1.0614054
    %v3469 = vmul.f32 %v3285, 1.0614054
    %v3470 = vmul.f32 %v3300, 1.0614054
    %v3471 = vmul.f32 %v3315, 1.0614054
    %v3472 = vmul.f32 %v3330, 1.0614054
    %v3473 = vmul.f32 %v3345, 1.0614054
    %v3474 = vmul.f32 %v3360, 1.0614054
    %v3475 = vmul.f32 %v3375, 1.0614054
    %v3476 = vmul.f32 %v3390, 1.0614054
    %v3477 = vmul.f32 %v3405, 1.0614054
    %v3478 = vmul.f32 %v3420, 1.0614054
    %v3479 = vmul.f32 %v3435, 1.0614054
    %v3480 = vmul.f32 %v3450, 1.0614054
    %v3481 = vmul.f32 %v3465, 1.0614054
    %v3482 = vadd.f32 %v3466, -1.4531521
    %v3483 = vadd.f32 %v3467, -1.4531521
    %v3484 = vadd.f32 %v3468, -1.4531521
    %v3485 = vadd.f32 %v3469, -1.4531521
    %v3486 = vadd.f32 %v3470, -1.4531521
    %v3487 = vadd.f32 %v3471, -1.4531521
    %v3488 = vadd.f32 %v3472, -1.4531521
    %v3489 = vadd.f32 %v3473, -1.4531521
    %v3490 = vadd.f32 %v3474, -1.4531521
    %v3491 = vadd.f32 %v3475, -1.4531521
    %v3492 = vadd.f32 %v3476, -1.4531521
    %v3493 = vadd.f32 %v3477, -1.4531521
    %v3494 = vadd.f32 %v3478, -1.4531521
    %v3495 = vadd.f32 %v3479, -1.4531521
    %v3496 = vadd.f32 %v3480, -1.4531521
    %v3497 = vadd.f32 %v3481, -1.4531521
    %v3498 = vmul.f32 %v3482, %v3240
    %v3499 = vmul.f32 %v3483, %v3255
    %v3500 = vmul.f32 %v3484, %v3270
    %v3501 = vmul.f32 %v3485, %v3285
    %v3502 = vmul.f32 %v3486, %v3300
    %v3503 = vmul.f32 %v3487, %v3315
    %v3504 = vmul.f32 %v3488, %v3330
    %v3505 = vmul.f32 %v3489, %v3345
    %v3506 = vmul.f32 %v3490, %v3360
    %v3507 = vmul.f32 %v3491, %v3375
    %v3508 = vmul.f32 %v3492, %v3390
    %v3509 = vmul.f32 %v3493, %v3405
    %v3510 = vmul.f32 %v3494, %v3420
    %v3511 = vmul.f32 %v3495, %v3435
    %v3512 = vmul.f32 %v3496, %v3450
    %v3513 = vmul.f32 %v3497, %v3465
    %v3514 = vadd.f32 %v3498, 1.4214138
    %v3515 = vadd.f32 %v3499, 1.4214138
    %v3516 = vadd.f32 %v3500, 1.4214138
    %v3517 = vadd.f32 %v3501, 1.4214138
    %v3518 = vadd.f32 %v3502, 1.4214138
    %v3519 = vadd.f32 %v3503, 1.4214138
    %v3520 = vadd.f32 %v3504, 1.4214138
    %v3521 = vadd.f32 %v3505, 1.4214138
    %v3522 = vadd.f32 %v3506, 1.4214138
    %v3523 = vadd.f32 %v3507, 1.4214138
    %v3524 = vadd.f32 %v3508, 1.4214138
    %v3525 = vadd.f32 %v3509, 1.4214138
    %v3526 = vadd.f32 %v3510, 1.4214138
    %v3527 = vadd.f32 %v3511, 1.4214138
    %v3528 = vadd.f32 %v3512, 1.4214138
    %v3529 = vadd.f32 %v3513, 1.4214138
    %v3530 = vmul.f32 %v3514, %v3240
    %v3531 = vmul.f32 %v3515, %v3255
    %v3532 = vmul.f32 %v3516, %v3270
    %v3533 = vmul.f32 %v3517, %v3285
    %v3534 = vmul.f32 %v3518, %v3300
    %v3535 = vmul.f32 %v3519, %v3315
    %v3536 = vmul.f32 %v3520, %v3330
    %v3537 = vmul.f32 %v3521, %v3345
    %v3538 = vmul.f32 %v3522, %v3360
    %v3539 = vmul.f32 %v3523, %v3375
    %v3540 = vmul.f32 %v3524, %v3390
    %v3541 = vmul.f32 %v3525, %v3405
    %v3542 = vmul.f32 %v3526, %v3420
    %v3543 = vmul.f32 %v3527, %v3435
    %v3544 = vmul.f32 %v3528, %v3450
    %v3545 = vmul.f32 %v3529, %v3465
    %v3546 = vadd.f32 %v3530, -0.28449672
    %v3547 = vadd.f32 %v3531, -0.28449672
    %v3548 = vadd.f32 %v3532, -0.28449672
    %v3549 = vadd.f32 %v3533, -0.28449672
    %v3550 = vadd.f32 %v3534, -0.28449672
    %v3551 = vadd.f32 %v3535, -0.28449672
    %v3552 = vadd.f32 %v3536, -0.28449672
    %v3553 = vadd.f32 %v3537, -0.28449672
    %v3554 = vadd.f32 %v3538, -0.28449672
    %v3555 = vadd.f32 %v3539, -0.28449672
    %v3556 = vadd.f32 %v3540, -0.28449672
    %v3557 = vadd.f32 %v3541, -0.28449672
    %v3558 = vadd.f32 %v3542, -0.28449672
    %v3559 = vadd.f32 %v3543, -0.28449672
    %v3560 = vadd.f32 %v3544, -0.28449672
    %v3561 = vadd.f32 %v3545, -0.28449672
    %v3562 = vmul.f32 %v3546, %v3240
    %v3563 = vmul.f32 %v3547, %v3255
    %v3564 = vmul.f32 %v3548, %v3270
    %v3565 = vmul.f32 %v3549, %v3285
    %v3566 = vmul.f32 %v3550, %v3300
    %v3567 = vmul.f32 %v3551, %v3315
    %v3568 = vmul.f32 %v3552, %v3330
    %v3569 = vmul.f32 %v3553, %v3345
    %v3570 = vmul.f32 %v3554, %v3360
    %v3571 = vmul.f32 %v3555, %v3375
    %v3572 = vmul.f32 %v3556, %v3390
    %v3573 = vmul.f32 %v3557, %v3405
    %v3574 = vmul.f32 %v3558, %v3420
    %v3575 = vmul.f32 %v3559, %v3435
    %v3576 = vmul.f32 %v3560, %v3450
    %v3577 = vmul.f32 %v3561, %v3465
    %v3578 = vadd.f32 %v3562, 0.2548296
    %v3579 = vadd.f32 %v3563, 0.2548296
    %v3580 = vadd.f32 %v3564, 0.2548296
    %v3581 = vadd.f32 %v3565, 0.2548296
    %v3582 = vadd.f32 %v3566, 0.2548296
    %v3583 = vadd.f32 %v3567, 0.2548296
    %v3584 = vadd.f32 %v3568, 0.2548296
    %v3585 = vadd.f32 %v3569, 0.2548296
    %v3586 = vadd.f32 %v3570, 0.2548296
    %v3587 = vadd.f32 %v3571, 0.2548296
    %v3588 = vadd.f32 %v3572, 0.2548296
    %v3589 = vadd.f32 %v3573, 0.2548296
    %v3590 = vadd.f32 %v3574, 0.2548296
    %v3591 = vadd.f32 %v3575, 0.2548296
    %v3592 = vadd.f32 %v3576, 0.2548296
    %v3593 = vadd.f32 %v3577, 0.2548296
    %v3594 = vmul.f32 %v3578, %v3240
    %v3595 = vmul.f32 %v3579, %v3255
    %v3596 = vmul.f32 %v3580, %v3270
    %v3597 = vmul.f32 %v3581, %v3285
    %v3598 = vmul.f32 %v3582, %v3300
    %v3599 = vmul.f32 %v3583, %v3315
    %v3600 = vmul.f32 %v3584, %v3330
    %v3601 = vmul.f32 %v3585, %v3345
    %v3602 = vmul.f32 %v3586, %v3360
    %v3603 = vmul.f32 %v3587, %v3375
    %v3604 = vmul.f32 %v3588, %v3390
    %v3605 = vmul.f32 %v3589, %v3405
    %v3606 = vmul.f32 %v3590, %v3420
    %v3607 = vmul.f32 %v3591, %v3435
    %v3608 = vmul.f32 %v3592, %v3450
    %v3609 = vmul.f32 %v3593, %v3465
    %v3610 = vsub.f32 0.0, %v3178
    %v3611 = vsub.f32 0.0, %v3179
    %v3612 = vsub.f32 0.0, %v3180
    %v3613 = vsub.f32 0.0, %v3181
    %v3614 = vsub.f32 0.0, %v3182
    %v3615 = vsub.f32 0.0, %v3183
    %v3616 = vsub.f32 0.0, %v3184
    %v3617 = vsub.f32 0.0, %v3185
    %v3618 = vsub.f32 0.0, %v3186
    %v3619 = vsub.f32 0.0, %v3187
    %v3620 = vsub.f32 0.0, %v3188
    %v3621 = vsub.f32 0.0, %v3189
    %v3622 = vsub.f32 0.0, %v3190
    %v3623 = vsub.f32 0.0, %v3191
    %v3624 = vsub.f32 0.0, %v3192
    %v3625 = vsub.f32 0.0, %v3193
    %v3626 = vmul.f32 %v3610, %v3178
    %v3627 = vmul.f32 %v3611, %v3179
    %v3628 = vmul.f32 %v3612, %v3180
    %v3629 = vmul.f32 %v3613, %v3181
    %v3630 = vmul.f32 %v3614, %v3182
    %v3631 = vmul.f32 %v3615, %v3183
    %v3632 = vmul.f32 %v3616, %v3184
    %v3633 = vmul.f32 %v3617, %v3185
    %v3634 = vmul.f32 %v3618, %v3186
    %v3635 = vmul.f32 %v3619, %v3187
    %v3636 = vmul.f32 %v3620, %v3188
    %v3637 = vmul.f32 %v3621, %v3189
    %v3638 = vmul.f32 %v3622, %v3190
    %v3639 = vmul.f32 %v3623, %v3191
    %v3640 = vmul.f32 %v3624, %v3192
    %v3641 = vmul.f32 %v3625, %v3193
    %v3642 = vmul.f32 %v3626, 1.442695
    %v3643 = vpow.pop %v3642
    %v3644 = vmul.f32 %v3627, 1.442695
    %v3645 = vpow.pop %v3644
    %v3646 = vmul.f32 %v3628, 1.442695
    %v3647 = vpow.pop %v3646
    %v3648 = vmul.f32 %v3629, 1.442695
    %v3649 = vpow.pop %v3648
    %v3650 = vmul.f32 %v3630, 1.442695
    %v3651 = vpow.pop %v3650
    %v3652 = vmul.f32 %v3631, 1.442695
    %v3653 = vpow.pop %v3652
    %v3654 = vmul.f32 %v3632, 1.442695
    %v3655 = vpow.pop %v3654
    %v3656 = vmul.f32 %v3633, 1.442695
    %v3657 = vpow.pop %v3656
    %v3658 = vmul.f32 %v3634, 1.442695
    %v3659 = vpow.pop %v3658
    %v3660 = vmul.f32 %v3635, 1.442695
    %v3661 = vpow.pop %v3660
    %v3662 = vmul.f32 %v3636, 1.442695
    %v3663 = vpow.pop %v3662
    %v3664 = vmul.f32 %v3637, 1.442695
    %v3665 = vpow.pop %v3664
    %v3666 = vmul.f32 %v3638, 1.442695
    %v3667 = vpow.pop %v3666
    %v3668 = vmul.f32 %v3639, 1.442695
    %v3669 = vpow.pop %v3668
    %v3670 = vmul.f32 %v3640, 1.442695
    %v3671 = vpow.pop %v3670
    %v3672 = vmul.f32 %v3641, 1.442695
    %v3673 = vpow.pop %v3672
    %v3674 = vmul.f32 %v3594, %v3643
    %v3675 = vmul.f32 %v3595, %v3645
    %v3676 = vmul.f32 %v3596, %v3647
    %v3677 = vmul.f32 %v3597, %v3649
    %v3678 = vmul.f32 %v3598, %v3651
    %v3679 = vmul.f32 %v3599, %v3653
    %v3680 = vmul.f32 %v3600, %v3655
    %v3681 = vmul.f32 %v3601, %v3657
    %v3682 = vmul.f32 %v3602, %v3659
    %v3683 = vmul.f32 %v3603, %v3661
    %v3684 = vmul.f32 %v3604, %v3663
    %v3685 = vmul.f32 %v3605, %v3665
    %v3686 = vmul.f32 %v3606, %v3667
    %v3687 = vmul.f32 %v3607, %v3669
    %v3688 = vmul.f32 %v3608, %v3671
    %v3689 = vmul.f32 %v3609, %v3673
    %v3690 = vsub.f32 1.0, %v3674
    %v3691 = vsub.f32 1.0, %v3675
    %v3692 = vsub.f32 1.0, %v3676
    %v3693 = vsub.f32 1.0, %v3677
    %v3694 = vsub.f32 1.0, %v3678
    %v3695 = vsub.f32 1.0, %v3679
    %v3696 = vsub.f32 1.0, %v3680
    %v3697 = vsub.f32 1.0, %v3681
    %v3698 = vsub.f32 1.0, %v3682
    %v3699 = vsub.f32 1.0, %v3683
    %v3700 = vsub.f32 1.0, %v3684
    %v3701 = vsub.f32 1.0, %v3685
    %v3702 = vsub.f32 1.0, %v3686
    %v3703 = vsub.f32 1.0, %v3687
    %v3704 = vsub.f32 1.0, %v3688
    %v3705 = vsub.f32 1.0, %v3689
    %vm3706 = vcmp.lt.f32.partialorder %v3162, 0.0
    %vm3707 = vcmp.lt.f32.partialorder %v3163, 0.0
    %vm3708 = vcmp.lt.f32.partialorder %v3164, 0.0
    %vm3709 = vcmp.lt.f32.partialorder %v3165, 0.0
    %vm3710 = vcmp.lt.f32.partialorder %v3166, 0.0
    %vm3711 = vcmp.lt.f32.partialorder %v3167, 0.0
    %vm3712 = vcmp.lt.f32.partialorder %v3168, 0.0
    %vm3713 = vcmp.lt.f32.partialorder %v3169, 0.0
    %vm3714 = vcmp.lt.f32.partialorder %v3170, 0.0
    %vm3715 = vcmp.lt.f32.partialorder %v3171, 0.0
    %vm3716 = vcmp.lt.f32.partialorder %v3172, 0.0
    %vm3717 = vcmp.lt.f32.partialorder %v3173, 0.0
    %vm3718 = vcmp.lt.f32.partialorder %v3174, 0.0
    %vm3719 = vcmp.lt.f32.partialorder %v3175, 0.0
    %vm3720 = vcmp.lt.f32.partialorder %v3176, 0.0
    %vm3721 = vcmp.lt.f32.partialorder %v3177, 0.0
    %v3722 = vsub.f32 0.0, %v3690
    %v3723 = vsub.f32 0.0, %v3691
    %v3724 = vsub.f32 0.0, %v3692
    %v3725 = vsub.f32 0.0, %v3693
    %v3726 = vsub.f32 0.0, %v3694
    %v3727 = vsub.f32 0.0, %v3695
    %v3728 = vsub.f32 0.0, %v3696
    %v3729 = vsub.f32 0.0, %v3697
    %v3730 = vsub.f32 0.0, %v3698
    %v3731 = vsub.f32 0.0, %v3699
    %v3732 = vsub.f32 0.0, %v3700
    %v3733 = vsub.f32 0.0, %v3701
    %v3734 = vsub.f32 0.0, %v3702
    %v3735 = vsub.f32 0.0, %v3703
    %v3736 = vsub.f32 0.0, %v3704
    %v3737 = vsub.f32 0.0, %v3705
    %v3738 = vsel %vm3706, %v3722, %v3690
    %v3739 = vsel %vm3707, %v3723, %v3691
    %v3740 = vsel %vm3708, %v3724, %v3692
    %v3741 = vsel %vm3709, %v3725, %v3693
    %v3742 = vsel %vm3710, %v3726, %v3694
    %v3743 = vsel %vm3711, %v3727, %v3695
    %v3744 = vsel %vm3712, %v3728, %v3696
    %v3745 = vsel %vm3713, %v3729, %v3697
    %v3746 = vsel %vm3714, %v3730, %v3698
    %v3747 = vsel %vm3715, %v3731, %v3699
    %v3748 = vsel %vm3716, %v3732, %v3700
    %v3749 = vsel %vm3717, %v3733, %v3701
    %v3750 = vsel %vm3718, %v3734, %v3702
    %v3751 = vsel %vm3719, %v3735, %v3703
    %v3752 = vsel %vm3720, %v3736, %v3704
    %v3753 = vsel %vm3721, %v3737, %v3705
    %v3754 = vadd.f32 %v3738, 1.0
    %v3755 = vadd.f32 %v3739, 1.0
    %v3756 = vadd.f32 %v3740, 1.0
    %v3757 = vadd.f32 %v3741, 1.0
    %v3758 = vadd.f32 %v3742, 1.0
    %v3759 = vadd.f32 %v3743, 1.0
    %v3760 = vadd.f32 %v3744, 1.0
    %v3761 = vadd.f32 %v3745, 1.0
    %v3762 = vadd.f32 %v3746, 1.0
    %v3763 = vadd.f32 %v3747, 1.0
    %v3764 = vadd.f32 %v3748, 1.0
    %v3765 = vadd.f32 %v3749, 1.0
    %v3766 = vadd.f32 %v3750, 1.0
    %v3767 = vadd.f32 %v3751, 1.0
    %v3768 = vadd.f32 %v3752, 1.0
    %v3769 = vadd.f32 %v3753, 1.0
    %v3770 = vmul.f32 %v3146, %v3754
    %v3771 = vmul.f32 %v3147, %v3755
    %v3772 = vmul.f32 %v3148, %v3756
    %v3773 = vmul.f32 %v3149, %v3757
    %v3774 = vmul.f32 %v3150, %v3758
    %v3775 = vmul.f32 %v3151, %v3759
    %v3776 = vmul.f32 %v3152, %v3760
    %v3777 = vmul.f32 %v3153, %v3761
    %v3778 = vmul.f32 %v3154, %v3762
    %v3779 = vmul.f32 %v3155, %v3763
    %v3780 = vmul.f32 %v3156, %v3764
    %v3781 = vmul.f32 %v3157, %v3765
    %v3782 = vmul.f32 %v3158, %v3766
    %v3783 = vmul.f32 %v3159, %v3767
    %v3784 = vmul.f32 %v3160, %v3768
    %v3785 = vmul.f32 %v3161, %v3769
    %s3786 = scalar_lea.vmem [#allocation11], 128
    %v3787 = vld [vmem:[%s3786] sm:$0xff]
    %v3788 = vld [vmem:[%s3786 + $0x8] sm:$0xff]
    %v3789 = vld [vmem:[%s3786 + $0x10] sm:$0xff]
    %v3790 = vld [vmem:[%s3786 + $0x18] sm:$0xff]
    %v3791 = vld [vmem:[%s3786 + $0x20] sm:$0xff]
    %v3792 = vld [vmem:[%s3786 + $0x28] sm:$0xff]
    %v3793 = vld [vmem:[%s3786 + $0x30] sm:$0xff]
    %v3794 = vld [vmem:[%s3786 + $0x38] sm:$0xff]
    %v3795 = vld [vmem:[#allocation13 + $0x3] sm:$0x1]
    %v3796 = vperm.slane %v3795, 0
    %v3798 = vsel %vm156, %v3770, 0
    %v3801 = vsel %vm156, %v3771, 0
    %v3804 = vsel %vm156, %v3772, 0
    %v3807 = vsel %vm156, %v3773, 0
    %v3810 = vsel %vm156, %v3774, 0
    %v3813 = vsel %vm156, %v3775, 0
    %v3816 = vsel %vm156, %v3776, 0
    %v3819 = vsel %vm156, %v3777, 0
    %v3822 = vsel %vm156, %v3778, 0
    %v3825 = vsel %vm156, %v3779, 0
    %v3828 = vsel %vm156, %v3780, 0
    %v3831 = vsel %vm156, %v3781, 0
    %v3834 = vsel %vm156, %v3782, 0
    %v3837 = vsel %vm156, %v3783, 0
    %v3840 = vsel %vm156, %v3784, 0
    %v3843 = vsel %vm156, %v3785, 0
    %3845 = vmatpush.msra.mxu0 0.0
    %3846 = vmatpush.msra.mxu0 0.0
    %3847 = vmatpush.msra.mxu0 0.0
    %3848 = vmatpush.msra.mxu0 0.0
    %3849 = vmatpush.msra.mxu0 0.0
    %3850 = vmatpush.msra.mxu0 0.0
    %3851 = vmatpush.msra.mxu0 0.0
    %3852 = vmatpush.msra.mxu0 0.0
    %3853 = vmatpush.msra.mxu0 %v3794
    %3854 = vmatpush.msra.mxu0 %v3793
    %3855 = vmatpush.msra.mxu0 %v3792
    %3856 = vmatpush.msra.mxu0 %v3791
    %3857 = vmatpush.msra.mxu0 %v3790
    %3858 = vmatpush.msra.mxu0 %v3789
    %3859 = vmatpush.msra.mxu0 %v3788
    %3860 = vmatpush.msra.mxu0 %v3787
    %3861 = vmatmul.f32.gmra.mxu0 %v3798
    %v3862 = vpop.f32.mrf.mxu0
    %v3863 = vadd.f32 %v3796, %v3862
    %3864 = vmatmul.f32.gmra.mxu0 %v3801
    %v3865 = vpop.f32.mrf.mxu0
    %v3866 = vadd.f32 %v3796, %v3865
    %3867 = vmatmul.f32.gmra.mxu0 %v3804
    %v3868 = vpop.f32.mrf.mxu0
    %v3869 = vadd.f32 %v3796, %v3868
    %3870 = vmatmul.f32.gmra.mxu0 %v3807
    %v3871 = vpop.f32.mrf.mxu0
    %v3872 = vadd.f32 %v3796, %v3871
    %3873 = vmatmul.f32.gmra.mxu0 %v3810
    %v3874 = vpop.f32.mrf.mxu0
    %v3875 = vadd.f32 %v3796, %v3874
    %3876 = vmatmul.f32.gmra.mxu0 %v3813
    %v3877 = vpop.f32.mrf.mxu0
    %v3878 = vadd.f32 %v3796, %v3877
    %3879 = vmatmul.f32.gmra.mxu0 %v3816
    %v3880 = vpop.f32.mrf.mxu0
    %v3881 = vadd.f32 %v3796, %v3880
    %3882 = vmatmul.f32.gmra.mxu0 %v3819
    %v3883 = vpop.f32.mrf.mxu0
    %v3884 = vadd.f32 %v3796, %v3883
    %3885 = vmatmul.f32.gmra.mxu0 %v3822
    %v3886 = vpop.f32.mrf.mxu0
    %v3887 = vadd.f32 %v3796, %v3886
    %3888 = vmatmul.f32.gmra.mxu0 %v3825
    %v3889 = vpop.f32.mrf.mxu0
    %v3890 = vadd.f32 %v3796, %v3889
    %3891 = vmatmul.f32.gmra.mxu0 %v3828
    %v3892 = vpop.f32.mrf.mxu0
    %v3893 = vadd.f32 %v3796, %v3892
    %3894 = vmatmul.f32.gmra.mxu0 %v3831
    %v3895 = vpop.f32.mrf.mxu0
    %v3896 = vadd.f32 %v3796, %v3895
    %3897 = vmatmul.f32.gmra.mxu0 %v3834
    %v3898 = vpop.f32.mrf.mxu0
    %v3899 = vadd.f32 %v3796, %v3898
    %3900 = vmatmul.f32.gmra.mxu0 %v3837
    %v3901 = vpop.f32.mrf.mxu0
    %v3902 = vadd.f32 %v3796, %v3901
    %3903 = vmatmul.f32.gmra.mxu0 %v3840
    %v3904 = vpop.f32.mrf.mxu0
    %v3905 = vadd.f32 %v3796, %v3904
    %3906 = vmatmul.f32.gmra.mxu0 %v3843
    %v3907 = vpop.f32.mrf.mxu0
    %v3908 = vadd.f32 %v3796, %v3907
    %3909 = vdwg.mxu0
    %v3911 = vsel %vm975, %v3863, 0
    %v3914 = vsel %vm975, %v3866, 0
    %v3917 = vsel %vm975, %v3869, 0
    %v3920 = vsel %vm975, %v3872, 0
    %v3923 = vsel %vm975, %v3875, 0
    %v3926 = vsel %vm975, %v3878, 0
    %v3929 = vsel %vm975, %v3881, 0
    %v3932 = vsel %vm975, %v3884, 0
    %v3935 = vsel %vm975, %v746, 0
    %3937 = vmatpush.xpose.msra.mxu0 0.0
    %3938 = vmatpush.xpose.msra.mxu0 0.0
    %3939 = vmatpush.xpose.msra.mxu0 0.0
    %3940 = vmatpush.xpose.msra.mxu0 0.0
    %3941 = vmatpush.xpose.msra.mxu0 0.0
    %3942 = vmatpush.xpose.msra.mxu0 0.0
    %3943 = vmatpush.xpose.msra.mxu0 0.0
    %3944 = vmatpush.xpose.msra.mxu0 0.0
    %3945 = vmatpush.xpose.msra.mxu0 0.0
    %3946 = vmatpush.xpose.msra.mxu0 0.0
    %3947 = vmatpush.xpose.msra.mxu0 0.0
    %3948 = vmatpush.xpose.msra.mxu0 0.0
    %3949 = vmatpush.xpose.msra.mxu0 0.0
    %3950 = vmatpush.xpose.msra.mxu0 0.0
    %3951 = vmatpush.xpose.msra.mxu0 0.0
    %3952 = vmatpush.xpose.msra.mxu0 %v3935
    %3953 = vmatmul.f32.gmra.mxu0 %v3911
    %v3954 = vpop.f32.mrf.mxu0
    %v3955 = vadd.f32 0.0, %v3954
    %3956 = vmatmul.f32.gmra.mxu0 %v3914
    %v3957 = vpop.f32.mrf.mxu0
    %v3958 = vadd.f32 0.0, %v3957
    %3959 = vmatmul.f32.gmra.mxu0 %v3917
    %v3960 = vpop.f32.mrf.mxu0
    %v3961 = vadd.f32 0.0, %v3960
    %3962 = vmatmul.f32.gmra.mxu0 %v3920
    %v3963 = vpop.f32.mrf.mxu0
    %v3964 = vadd.f32 0.0, %v3963
    %3965 = vmatmul.f32.gmra.mxu0 %v3923
    %v3966 = vpop.f32.mrf.mxu0
    %v3967 = vadd.f32 0.0, %v3966
    %3968 = vmatmul.f32.gmra.mxu0 %v3926
    %v3969 = vpop.f32.mrf.mxu0
    %v3970 = vadd.f32 0.0, %v3969
    %3971 = vmatmul.f32.gmra.mxu0 %v3929
    %v3972 = vpop.f32.mrf.mxu0
    %v3973 = vadd.f32 0.0, %v3972
    %3974 = vmatmul.f32.gmra.mxu0 %v3932
    %v3975 = vpop.f32.mrf.mxu0
    %v3976 = vadd.f32 0.0, %v3975
    %3977 = vdwg.mxu0
    %vm3978 = vcmask 64512
    %v3979 = vsel %vm3978, %v3955, -inf
    %3980 = vmax.xlane.f32.xlu0 %v3979
    %v3981 = vpop.xlane.xlu0 %3980
    %v3982 = vsel %vm3978, %v3958, -inf
    %3983 = vmax.xlane.f32.xlu0 %v3982
    %v3984 = vpop.xlane.xlu0 %3983
    %v3985 = vsel %vm3978, %v3961, -inf
    %3986 = vmax.xlane.f32.xlu0 %v3985
    %v3987 = vpop.xlane.xlu0 %3986
    %v3988 = vsel %vm3978, %v3964, -inf
    %3989 = vmax.xlane.f32.xlu0 %v3988
    %v3990 = vpop.xlane.xlu0 %3989
    %v3991 = vsel %vm3978, %v3967, -inf
    %3992 = vmax.xlane.f32.xlu0 %v3991
    %v3993 = vpop.xlane.xlu0 %3992
    %v3994 = vsel %vm3978, %v3970, -inf
    %3995 = vmax.xlane.f32.xlu0 %v3994
    %v3996 = vpop.xlane.xlu0 %3995
    %v3997 = vsel %vm3978, %v3973, -inf
    %3998 = vmax.xlane.f32.xlu0 %v3997
    %v3999 = vpop.xlane.xlu0 %3998
    %v4000 = vsel %vm3978, %v3976, -inf
    %4001 = vmax.xlane.f32.xlu0 %v4000
    %v4002 = vpop.xlane.xlu0 %4001
    %v4003 = vsub.f32 %v3955, %v3981
    %v4004 = vsub.f32 %v3958, %v3984
    %v4005 = vsub.f32 %v3961, %v3987
    %v4006 = vsub.f32 %v3964, %v3990
    %v4007 = vsub.f32 %v3967, %v3993
    %v4008 = vsub.f32 %v3970, %v3996
    %v4009 = vsub.f32 %v3973, %v3999
    %v4010 = vsub.f32 %v3976, %v4002
    %v4011 = vmul.f32 %v4003, 1.442695
    %v4012 = vpow.pop %v4011
    %v4013 = vmul.f32 %v4004, 1.442695
    %v4014 = vpow.pop %v4013
    %v4015 = vmul.f32 %v4005, 1.442695
    %v4016 = vpow.pop %v4015
    %v4017 = vmul.f32 %v4006, 1.442695
    %v4018 = vpow.pop %v4017
    %v4019 = vmul.f32 %v4007, 1.442695
    %v4020 = vpow.pop %v4019
    %v4021 = vmul.f32 %v4008, 1.442695
    %v4022 = vpow.pop %v4021
    %v4023 = vmul.f32 %v4009, 1.442695
    %v4024 = vpow.pop %v4023
    %v4025 = vmul.f32 %v4010, 1.442695
    %v4026 = vpow.pop %v4025
    %v4027 = vsel %vm3978, %v4012, 0.0
    %4028 = vadd.xlane.f32.xlu0 %v4027
    %v4029 = vpop.xlane.xlu0 %4028
    %v4030 = vsel %vm3978, %v4014, 0.0
    %4031 = vadd.xlane.f32.xlu0 %v4030
    %v4032 = vpop.xlane.xlu0 %4031
    %v4033 = vsel %vm3978, %v4016, 0.0
    %4034 = vadd.xlane.f32.xlu0 %v4033
    %v4035 = vpop.xlane.xlu0 %4034
    %v4036 = vsel %vm3978, %v4018, 0.0
    %4037 = vadd.xlane.f32.xlu0 %v4036
    %v4038 = vpop.xlane.xlu0 %4037
    %v4039 = vsel %vm3978, %v4020, 0.0
    %4040 = vadd.xlane.f32.xlu0 %v4039
    %v4041 = vpop.xlane.xlu0 %4040
    %v4042 = vsel %vm3978, %v4022, 0.0
    %4043 = vadd.xlane.f32.xlu0 %v4042
    %v4044 = vpop.xlane.xlu0 %4043
    %v4045 = vsel %vm3978, %v4024, 0.0
    %4046 = vadd.xlane.f32.xlu0 %v4045
    %v4047 = vpop.xlane.xlu0 %4046
    %v4048 = vsel %vm3978, %v4026, 0.0
    %4049 = vadd.xlane.f32.xlu0 %v4048
    %v4050 = vpop.xlane.xlu0 %4049
    %v4051 = vrcp.pop %v4029
    %v4052 = vmul.f32 %v4029, %v4051
    %v4053 = vsub.f32 1.0, %v4052
    %v4054 = vmul.f32 %v4051, %v4053
    %v4055 = vadd.f32 %v4051, %v4054
    %vm4056 = vweird.f32 %v4029
    %vm4057 = vweird.f32 %v4051
    %vm4058 = vmor %vm4056, %vm4057
    %v4059 = vsel %vm4058, %v4051, %v4055
    %v4060 = vand.u32 2147483647, %v4029
    %vm4061 = vcmp.eq.f32.partialorder %v4060, 8.507059e+37
    %v4062 = vand.u32 %v4029, 2147483648
    %v4063 = vor.u32 1.1754944e-38, %v4062
    %v4064 = vsel %vm4061, %v4063, %v4059
    %v4065 = vmul.f32 %v4012, %v4064
    %v4066 = vrcp.pop %v4032
    %v4067 = vmul.f32 %v4032, %v4066
    %v4068 = vsub.f32 1.0, %v4067
    %v4069 = vmul.f32 %v4066, %v4068
    %v4070 = vadd.f32 %v4066, %v4069
    %vm4071 = vweird.f32 %v4032
    %vm4072 = vweird.f32 %v4066
    %vm4073 = vmor %vm4071, %vm4072
    %v4074 = vsel %vm4073, %v4066, %v4070
    %v4075 = vand.u32 2147483647, %v4032
    %vm4076 = vcmp.eq.f32.partialorder %v4075, 8.507059e+37
    %v4077 = vand.u32 %v4032, 2147483648
    %v4078 = vor.u32 1.1754944e-38, %v4077
    %v4079 = vsel %vm4076, %v4078, %v4074
    %v4080 = vmul.f32 %v4014, %v4079
    %v4081 = vrcp.pop %v4035
    %v4082 = vmul.f32 %v4035, %v4081
    %v4083 = vsub.f32 1.0, %v4082
    %v4084 = vmul.f32 %v4081, %v4083
    %v4085 = vadd.f32 %v4081, %v4084
    %vm4086 = vweird.f32 %v4035
    %vm4087 = vweird.f32 %v4081
    %vm4088 = vmor %vm4086, %vm4087
    %v4089 = vsel %vm4088, %v4081, %v4085
    %v4090 = vand.u32 2147483647, %v4035
    %vm4091 = vcmp.eq.f32.partialorder %v4090, 8.507059e+37
    %v4092 = vand.u32 %v4035, 2147483648
    %v4093 = vor.u32 1.1754944e-38, %v4092
    %v4094 = vsel %vm4091, %v4093, %v4089
    %v4095 = vmul.f32 %v4016, %v4094
    %v4096 = vrcp.pop %v4038
    %v4097 = vmul.f32 %v4038, %v4096
    %v4098 = vsub.f32 1.0, %v4097
    %v4099 = vmul.f32 %v4096, %v4098
    %v4100 = vadd.f32 %v4096, %v4099
    %vm4101 = vweird.f32 %v4038
    %vm4102 = vweird.f32 %v4096
    %vm4103 = vmor %vm4101, %vm4102
    %v4104 = vsel %vm4103, %v4096, %v4100
    %v4105 = vand.u32 2147483647, %v4038
    %vm4106 = vcmp.eq.f32.partialorder %v4105, 8.507059e+37
    %v4107 = vand.u32 %v4038, 2147483648
    %v4108 = vor.u32 1.1754944e-38, %v4107
    %v4109 = vsel %vm4106, %v4108, %v4104
    %v4110 = vmul.f32 %v4018, %v4109
    %v4111 = vrcp.pop %v4041
    %v4112 = vmul.f32 %v4041, %v4111
    %v4113 = vsub.f32 1.0, %v4112
    %v4114 = vmul.f32 %v4111, %v4113
    %v4115 = vadd.f32 %v4111, %v4114
    %vm4116 = vweird.f32 %v4041
    %vm4117 = vweird.f32 %v4111
    %vm4118 = vmor %vm4116, %vm4117
    %v4119 = vsel %vm4118, %v4111, %v4115
    %v4120 = vand.u32 2147483647, %v4041
    %vm4121 = vcmp.eq.f32.partialorder %v4120, 8.507059e+37
    %v4122 = vand.u32 %v4041, 2147483648
    %v4123 = vor.u32 1.1754944e-38, %v4122
    %v4124 = vsel %vm4121, %v4123, %v4119
    %v4125 = vmul.f32 %v4020, %v4124
    %v4126 = vrcp.pop %v4044
    %v4127 = vmul.f32 %v4044, %v4126
    %v4128 = vsub.f32 1.0, %v4127
    %v4129 = vmul.f32 %v4126, %v4128
    %v4130 = vadd.f32 %v4126, %v4129
    %vm4131 = vweird.f32 %v4044
    %vm4132 = vweird.f32 %v4126
    %vm4133 = vmor %vm4131, %vm4132
    %v4134 = vsel %vm4133, %v4126, %v4130
    %v4135 = vand.u32 2147483647, %v4044
    %vm4136 = vcmp.eq.f32.partialorder %v4135, 8.507059e+37
    %v4137 = vand.u32 %v4044, 2147483648
    %v4138 = vor.u32 1.1754944e-38, %v4137
    %v4139 = vsel %vm4136, %v4138, %v4134
    %v4140 = vmul.f32 %v4022, %v4139
    %v4141 = vrcp.pop %v4047
    %v4142 = vmul.f32 %v4047, %v4141
    %v4143 = vsub.f32 1.0, %v4142
    %v4144 = vmul.f32 %v4141, %v4143
    %v4145 = vadd.f32 %v4141, %v4144
    %vm4146 = vweird.f32 %v4047
    %vm4147 = vweird.f32 %v4141
    %vm4148 = vmor %vm4146, %vm4147
    %v4149 = vsel %vm4148, %v4141, %v4145
    %v4150 = vand.u32 2147483647, %v4047
    %vm4151 = vcmp.eq.f32.partialorder %v4150, 8.507059e+37
    %v4152 = vand.u32 %v4047, 2147483648
    %v4153 = vor.u32 1.1754944e-38, %v4152
    %v4154 = vsel %vm4151, %v4153, %v4149
    %v4155 = vmul.f32 %v4024, %v4154
    %v4156 = vrcp.pop %v4050
    %v4157 = vmul.f32 %v4050, %v4156
    %v4158 = vsub.f32 1.0, %v4157
    %v4159 = vmul.f32 %v4156, %v4158
    %v4160 = vadd.f32 %v4156, %v4159
    %vm4161 = vweird.f32 %v4050
    %vm4162 = vweird.f32 %v4156
    %vm4163 = vmor %vm4161, %vm4162
    %v4164 = vsel %vm4163, %v4156, %v4160
    %v4165 = vand.u32 2147483647, %v4050
    %vm4166 = vcmp.eq.f32.partialorder %v4165, 8.507059e+37
    %v4167 = vand.u32 %v4050, 2147483648
    %v4168 = vor.u32 1.1754944e-38, %v4167
    %v4169 = vsel %vm4166, %v4168, %v4164
    %v4170 = vmul.f32 %v4026, %v4169
    %4171 = vrot.lane.b32.xlu0 %v746, 64
    %v4172 = vpop.permute.xlu0 %4171
    %v4175 = vsel %vm3978, %v4065, 0
    %v4178 = vsel %vm3978, %v4080, 0
    %v4181 = vsel %vm3978, %v4095, 0
    %v4184 = vsel %vm3978, %v4110, 0
    %v4187 = vsel %vm3978, %v4125, 0
    %v4190 = vsel %vm3978, %v4140, 0
    %v4193 = vsel %vm3978, %v4155, 0
    %v4196 = vsel %vm3978, %v4170, 0
    %4198 = vmatpush.msra.mxu0 0.0
    %4199 = vmatpush.msra.mxu0 0.0
    %4200 = vmatpush.msra.mxu0 0.0
    %4201 = vmatpush.msra.mxu0 0.0
    %4202 = vmatpush.msra.mxu0 0.0
    %4203 = vmatpush.msra.mxu0 0.0
    %4204 = vmatpush.msra.mxu0 0.0
    %4205 = vmatpush.msra.mxu0 0.0
    %4206 = vmatpush.msra.mxu0 0.0
    %4207 = vmatpush.msra.mxu0 0.0
    %4208 = vmatpush.msra.mxu0 0.0
    %4209 = vmatpush.msra.mxu0 0.0
    %4210 = vmatpush.msra.mxu0 0.0
    %4211 = vmatpush.msra.mxu0 0.0
    %4212 = vmatpush.msra.mxu0 0.0
    %4213 = vmatpush.msra.mxu0 %v4172
    %4214 = vmatmul.f32.gmra.mxu0 %v4175
    %v4215 = vpop.f32.mrf.mxu0
    %v4216 = vadd.f32 0.0, %v4215
    %4217 = vmatmul.f32.gmra.mxu0 %v4178
    %v4218 = vpop.f32.mrf.mxu0
    %v4219 = vadd.f32 0.0, %v4218
    %4220 = vmatmul.f32.gmra.mxu0 %v4181
    %v4221 = vpop.f32.mrf.mxu0
    %v4222 = vadd.f32 0.0, %v4221
    %4223 = vmatmul.f32.gmra.mxu0 %v4184
    %v4224 = vpop.f32.mrf.mxu0
    %v4225 = vadd.f32 0.0, %v4224
    %4226 = vmatmul.f32.gmra.mxu0 %v4187
    %v4227 = vpop.f32.mrf.mxu0
    %v4228 = vadd.f32 0.0, %v4227
    %4229 = vmatmul.f32.gmra.mxu0 %v4190
    %v4230 = vpop.f32.mrf.mxu0
    %v4231 = vadd.f32 0.0, %v4230
    %4232 = vmatmul.f32.gmra.mxu0 %v4193
    %v4233 = vpop.f32.mrf.mxu0
    %v4234 = vadd.f32 0.0, %v4233
    %4235 = vmatmul.f32.gmra.mxu0 %v4196
    %v4236 = vpop.f32.mrf.mxu0
    %v4237 = vadd.f32 0.0, %v4236
    %4238 = vdwg.mxu0
    %v4239 = vld [vmem:[#allocation10] sm:$0xff]
    %v4240 = vld [vmem:[#allocation10 + $0x8] sm:$0xff]
    %v4241 = vld [vmem:[#allocation10 + $0x10] sm:$0xff]
    %v4242 = vld [vmem:[#allocation10 + $0x18] sm:$0xff]
    %4243 = vrot.lane.b32.xlu0 %v3863, 96
    %v4244 = vpop.permute.xlu0 %4243
    %4245 = vrot.lane.b32.xlu0 %v3866, 96
    %v4246 = vpop.permute.xlu0 %4245
    %4247 = vrot.lane.b32.xlu0 %v3869, 96
    %v4248 = vpop.permute.xlu0 %4247
    %4249 = vrot.lane.b32.xlu0 %v3872, 96
    %v4250 = vpop.permute.xlu0 %4249
    %4251 = vrot.lane.b32.xlu0 %v3875, 96
    %v4252 = vpop.permute.xlu0 %4251
    %4253 = vrot.lane.b32.xlu0 %v3878, 96
    %v4254 = vpop.permute.xlu0 %4253
    %4255 = vrot.lane.b32.xlu0 %v3881, 96
    %v4256 = vpop.permute.xlu0 %4255
    %4257 = vrot.lane.b32.xlu0 %v3884, 96
    %v4258 = vpop.permute.xlu0 %4257
    %4259 = vrot.lane.b32.xlu0 %v746, 96
    %v4260 = vpop.permute.xlu0 %4259
    %v4261 = vsel %vm975, %v4244, 0
    %v4263 = vsel %vm975, %v4246, 0
    %v4265 = vsel %vm975, %v4248, 0
    %v4267 = vsel %vm975, %v4250, 0
    %v4269 = vsel %vm975, %v4252, 0
    %v4271 = vsel %vm975, %v4254, 0
    %v4273 = vsel %vm975, %v4256, 0
    %v4275 = vsel %vm975, %v4258, 0
    %v4277 = vsel %vm975, %v4260, 0
    %4279 = vmatpush.xpose.msra.mxu0 0.0
    %4280 = vmatpush.xpose.msra.mxu0 0.0
    %4281 = vmatpush.xpose.msra.mxu0 0.0
    %4282 = vmatpush.xpose.msra.mxu0 0.0
    %4283 = vmatpush.xpose.msra.mxu0 0.0
    %4284 = vmatpush.xpose.msra.mxu0 0.0
    %4285 = vmatpush.xpose.msra.mxu0 0.0
    %4286 = vmatpush.xpose.msra.mxu0 0.0
    %4287 = vmatpush.xpose.msra.mxu0 0.0
    %4288 = vmatpush.xpose.msra.mxu0 0.0
    %4289 = vmatpush.xpose.msra.mxu0 0.0
    %4290 = vmatpush.xpose.msra.mxu0 0.0
    %4291 = vmatpush.xpose.msra.mxu0 0.0
    %4292 = vmatpush.xpose.msra.mxu0 0.0
    %4293 = vmatpush.xpose.msra.mxu0 0.0
    %4294 = vmatpush.xpose.msra.mxu0 %v4277
    %4295 = vmatmul.f32.gmra.mxu0 %v4261
    %v4296 = vpop.f32.mrf.mxu0
    %v4297 = vadd.f32 0.0, %v4296
    %4298 = vmatmul.f32.gmra.mxu0 %v4263
    %v4299 = vpop.f32.mrf.mxu0
    %v4300 = vadd.f32 0.0, %v4299
    %4301 = vmatmul.f32.gmra.mxu0 %v4265
    %v4302 = vpop.f32.mrf.mxu0
    %v4303 = vadd.f32 0.0, %v4302
    %4304 = vmatmul.f32.gmra.mxu0 %v4267
    %v4305 = vpop.f32.mrf.mxu0
    %v4306 = vadd.f32 0.0, %v4305
    %4307 = vmatmul.f32.gmra.mxu0 %v4269
    %v4308 = vpop.f32.mrf.mxu0
    %v4309 = vadd.f32 0.0, %v4308
    %4310 = vmatmul.f32.gmra.mxu0 %v4271
    %v4311 = vpop.f32.mrf.mxu0
    %v4312 = vadd.f32 0.0, %v4311
    %4313 = vmatmul.f32.gmra.mxu0 %v4273
    %v4314 = vpop.f32.mrf.mxu0
    %v4315 = vadd.f32 0.0, %v4314
    %4316 = vmatmul.f32.gmra.mxu0 %v4275
    %v4317 = vpop.f32.mrf.mxu0
    %v4318 = vadd.f32 0.0, %v4317
    %4319 = vdwg.mxu0
    %v4320 = vsel %vm3978, %v4297, -inf
    %4321 = vmax.xlane.f32.xlu0 %v4320
    %v4322 = vpop.xlane.xlu0 %4321
    %v4323 = vsel %vm3978, %v4300, -inf
    %4324 = vmax.xlane.f32.xlu0 %v4323
    %v4325 = vpop.xlane.xlu0 %4324
    %v4326 = vsel %vm3978, %v4303, -inf
    %4327 = vmax.xlane.f32.xlu0 %v4326
    %v4328 = vpop.xlane.xlu0 %4327
    %v4329 = vsel %vm3978, %v4306, -inf
    %4330 = vmax.xlane.f32.xlu0 %v4329
    %v4331 = vpop.xlane.xlu0 %4330
    %v4332 = vsel %vm3978, %v4309, -inf
    %4333 = vmax.xlane.f32.xlu0 %v4332
    %v4334 = vpop.xlane.xlu0 %4333
    %v4335 = vsel %vm3978, %v4312, -inf
    %4336 = vmax.xlane.f32.xlu0 %v4335
    %v4337 = vpop.xlane.xlu0 %4336
    %v4338 = vsel %vm3978, %v4315, -inf
    %4339 = vmax.xlane.f32.xlu0 %v4338
    %v4340 = vpop.xlane.xlu0 %4339
    %v4341 = vsel %vm3978, %v4318, -inf
    %4342 = vmax.xlane.f32.xlu0 %v4341
    %v4343 = vpop.xlane.xlu0 %4342
    %v4344 = vsub.f32 %v4297, %v4322
    %v4345 = vsub.f32 %v4300, %v4325
    %v4346 = vsub.f32 %v4303, %v4328
    %v4347 = vsub.f32 %v4306, %v4331
    %v4348 = vsub.f32 %v4309, %v4334
    %v4349 = vsub.f32 %v4312, %v4337
    %v4350 = vsub.f32 %v4315, %v4340
    %v4351 = vsub.f32 %v4318, %v4343
    %v4352 = vmul.f32 %v4344, 1.442695
    %v4353 = vpow.pop %v4352
    %v4354 = vmul.f32 %v4345, 1.442695
    %v4355 = vpow.pop %v4354
    %v4356 = vmul.f32 %v4346, 1.442695
    %v4357 = vpow.pop %v4356
    %v4358 = vmul.f32 %v4347, 1.442695
    %v4359 = vpow.pop %v4358
    %v4360 = vmul.f32 %v4348, 1.442695
    %v4361 = vpow.pop %v4360
    %v4362 = vmul.f32 %v4349, 1.442695
    %v4363 = vpow.pop %v4362
    %v4364 = vmul.f32 %v4350, 1.442695
    %v4365 = vpow.pop %v4364
    %v4366 = vmul.f32 %v4351, 1.442695
    %v4367 = vpow.pop %v4366
    %v4368 = vsel %vm3978, %v4353, 0.0
    %4369 = vadd.xlane.f32.xlu0 %v4368
    %v4370 = vpop.xlane.xlu0 %4369
    %v4371 = vsel %vm3978, %v4355, 0.0
    %4372 = vadd.xlane.f32.xlu0 %v4371
    %v4373 = vpop.xlane.xlu0 %4372
    %v4374 = vsel %vm3978, %v4357, 0.0
    %4375 = vadd.xlane.f32.xlu0 %v4374
    %v4376 = vpop.xlane.xlu0 %4375
    %v4377 = vsel %vm3978, %v4359, 0.0
    %4378 = vadd.xlane.f32.xlu0 %v4377
    %v4379 = vpop.xlane.xlu0 %4378
    %v4380 = vsel %vm3978, %v4361, 0.0
    %4381 = vadd.xlane.f32.xlu0 %v4380
    %v4382 = vpop.xlane.xlu0 %4381
    %v4383 = vsel %vm3978, %v4363, 0.0
    %4384 = vadd.xlane.f32.xlu0 %v4383
    %v4385 = vpop.xlane.xlu0 %4384
    %v4386 = vsel %vm3978, %v4365, 0.0
    %4387 = vadd.xlane.f32.xlu0 %v4386
    %v4388 = vpop.xlane.xlu0 %4387
    %v4389 = vsel %vm3978, %v4367, 0.0
    %4390 = vadd.xlane.f32.xlu0 %v4389
    %v4391 = vpop.xlane.xlu0 %4390
    %v4392 = vrcp.pop %v4370
    %v4393 = vmul.f32 %v4370, %v4392
    %v4394 = vsub.f32 1.0, %v4393
    %v4395 = vmul.f32 %v4392, %v4394
    %v4396 = vadd.f32 %v4392, %v4395
    %vm4397 = vweird.f32 %v4370
    %vm4398 = vweird.f32 %v4392
    %vm4399 = vmor %vm4397, %vm4398
    %v4400 = vsel %vm4399, %v4392, %v4396
    %v4401 = vand.u32 2147483647, %v4370
    %vm4402 = vcmp.eq.f32.partialorder %v4401, 8.507059e+37
    %v4403 = vand.u32 %v4370, 2147483648
    %v4404 = vor.u32 1.1754944e-38, %v4403
    %v4405 = vsel %vm4402, %v4404, %v4400
    %v4406 = vmul.f32 %v4353, %v4405
    %v4407 = vrcp.pop %v4373
    %v4408 = vmul.f32 %v4373, %v4407
    %v4409 = vsub.f32 1.0, %v4408
    %v4410 = vmul.f32 %v4407, %v4409
    %v4411 = vadd.f32 %v4407, %v4410
    %vm4412 = vweird.f32 %v4373
    %vm4413 = vweird.f32 %v4407
    %vm4414 = vmor %vm4412, %vm4413
    %v4415 = vsel %vm4414, %v4407, %v4411
    %v4416 = vand.u32 2147483647, %v4373
    %vm4417 = vcmp.eq.f32.partialorder %v4416, 8.507059e+37
    %v4418 = vand.u32 %v4373, 2147483648
    %v4419 = vor.u32 1.1754944e-38, %v4418
    %v4420 = vsel %vm4417, %v4419, %v4415
    %v4421 = vmul.f32 %v4355, %v4420
    %v4422 = vrcp.pop %v4376
    %v4423 = vmul.f32 %v4376, %v4422
    %v4424 = vsub.f32 1.0, %v4423
    %v4425 = vmul.f32 %v4422, %v4424
    %v4426 = vadd.f32 %v4422, %v4425
    %vm4427 = vweird.f32 %v4376
    %vm4428 = vweird.f32 %v4422
    %vm4429 = vmor %vm4427, %vm4428
    %v4430 = vsel %vm4429, %v4422, %v4426
    %v4431 = vand.u32 2147483647, %v4376
    %vm4432 = vcmp.eq.f32.partialorder %v4431, 8.507059e+37
    %v4433 = vand.u32 %v4376, 2147483648
    %v4434 = vor.u32 1.1754944e-38, %v4433
    %v4435 = vsel %vm4432, %v4434, %v4430
    %v4436 = vmul.f32 %v4357, %v4435
    %v4437 = vrcp.pop %v4379
    %v4438 = vmul.f32 %v4379, %v4437
    %v4439 = vsub.f32 1.0, %v4438
    %v4440 = vmul.f32 %v4437, %v4439
    %v4441 = vadd.f32 %v4437, %v4440
    %vm4442 = vweird.f32 %v4379
    %vm4443 = vweird.f32 %v4437
    %vm4444 = vmor %vm4442, %vm4443
    %v4445 = vsel %vm4444, %v4437, %v4441
    %v4446 = vand.u32 2147483647, %v4379
    %vm4447 = vcmp.eq.f32.partialorder %v4446, 8.507059e+37
    %v4448 = vand.u32 %v4379, 2147483648
    %v4449 = vor.u32 1.1754944e-38, %v4448
    %v4450 = vsel %vm4447, %v4449, %v4445
    %v4451 = vmul.f32 %v4359, %v4450
    %v4452 = vrcp.pop %v4382
    %v4453 = vmul.f32 %v4382, %v4452
    %v4454 = vsub.f32 1.0, %v4453
    %v4455 = vmul.f32 %v4452, %v4454
    %v4456 = vadd.f32 %v4452, %v4455
    %vm4457 = vweird.f32 %v4382
    %vm4458 = vweird.f32 %v4452
    %vm4459 = vmor %vm4457, %vm4458
    %v4460 = vsel %vm4459, %v4452, %v4456
    %v4461 = vand.u32 2147483647, %v4382
    %vm4462 = vcmp.eq.f32.partialorder %v4461, 8.507059e+37
    %v4463 = vand.u32 %v4382, 2147483648
    %v4464 = vor.u32 1.1754944e-38, %v4463
    %v4465 = vsel %vm4462, %v4464, %v4460
    %v4466 = vmul.f32 %v4361, %v4465
    %v4467 = vrcp.pop %v4385
    %v4468 = vmul.f32 %v4385, %v4467
    %v4469 = vsub.f32 1.0, %v4468
    %v4470 = vmul.f32 %v4467, %v4469
    %v4471 = vadd.f32 %v4467, %v4470
    %vm4472 = vweird.f32 %v4385
    %vm4473 = vweird.f32 %v4467
    %vm4474 = vmor %vm4472, %vm4473
    %v4475 = vsel %vm4474, %v4467, %v4471
    %v4476 = vand.u32 2147483647, %v4385
    %vm4477 = vcmp.eq.f32.partialorder %v4476, 8.507059e+37
    %v4478 = vand.u32 %v4385, 2147483648
    %v4479 = vor.u32 1.1754944e-38, %v4478
    %v4480 = vsel %vm4477, %v4479, %v4475
    %v4481 = vmul.f32 %v4363, %v4480
    %v4482 = vrcp.pop %v4388
    %v4483 = vmul.f32 %v4388, %v4482
    %v4484 = vsub.f32 1.0, %v4483
    %v4485 = vmul.f32 %v4482, %v4484
    %v4486 = vadd.f32 %v4482, %v4485
    %vm4487 = vweird.f32 %v4388
    %vm4488 = vweird.f32 %v4482
    %vm4489 = vmor %vm4487, %vm4488
    %v4490 = vsel %vm4489, %v4482, %v4486
    %v4491 = vand.u32 2147483647, %v4388
    %vm4492 = vcmp.eq.f32.partialorder %v4491, 8.507059e+37
    %v4493 = vand.u32 %v4388, 2147483648
    %v4494 = vor.u32 1.1754944e-38, %v4493
    %v4495 = vsel %vm4492, %v4494, %v4490
    %v4496 = vmul.f32 %v4365, %v4495
    %v4497 = vrcp.pop %v4391
    %v4498 = vmul.f32 %v4391, %v4497
    %v4499 = vsub.f32 1.0, %v4498
    %v4500 = vmul.f32 %v4497, %v4499
    %v4501 = vadd.f32 %v4497, %v4500
    %vm4502 = vweird.f32 %v4391
    %vm4503 = vweird.f32 %v4497
    %vm4504 = vmor %vm4502, %vm4503
    %v4505 = vsel %vm4504, %v4497, %v4501
    %v4506 = vand.u32 2147483647, %v4391
    %vm4507 = vcmp.eq.f32.partialorder %v4506, 8.507059e+37
    %v4508 = vand.u32 %v4391, 2147483648
    %v4509 = vor.u32 1.1754944e-38, %v4508
    %v4510 = vsel %vm4507, %v4509, %v4505
    %v4511 = vmul.f32 %v4367, %v4510
    %4512 = vrot.lane.b32.xlu0 %v746, 32
    %v4513 = vpop.permute.xlu0 %4512
    %v4516 = vsel %vm3978, %v4406, 0
    %v4519 = vsel %vm3978, %v4421, 0
    %v4522 = vsel %vm3978, %v4436, 0
    %v4525 = vsel %vm3978, %v4451, 0
    %v4528 = vsel %vm3978, %v4466, 0
    %v4531 = vsel %vm3978, %v4481, 0
    %v4534 = vsel %vm3978, %v4496, 0
    %v4537 = vsel %vm3978, %v4511, 0
    %4539 = vmatpush.msra.mxu0 0.0
    %4540 = vmatpush.msra.mxu0 0.0
    %4541 = vmatpush.msra.mxu0 0.0
    %4542 = vmatpush.msra.mxu0 0.0
    %4543 = vmatpush.msra.mxu0 0.0
    %4544 = vmatpush.msra.mxu0 0.0
    %4545 = vmatpush.msra.mxu0 0.0
    %4546 = vmatpush.msra.mxu0 0.0
    %4547 = vmatpush.msra.mxu0 0.0
    %4548 = vmatpush.msra.mxu0 0.0
    %4549 = vmatpush.msra.mxu0 0.0
    %4550 = vmatpush.msra.mxu0 0.0
    %4551 = vmatpush.msra.mxu0 0.0
    %4552 = vmatpush.msra.mxu0 0.0
    %4553 = vmatpush.msra.mxu0 0.0
    %4554 = vmatpush.msra.mxu0 %v4513
    %4555 = vmatmul.f32.gmra.mxu0 %v4516
    %v4556 = vpop.f32.mrf.mxu0
    %v4557 = vadd.f32 0.0, %v4556
    %4558 = vmatmul.f32.gmra.mxu0 %v4519
    %v4559 = vpop.f32.mrf.mxu0
    %v4560 = vadd.f32 0.0, %v4559
    %4561 = vmatmul.f32.gmra.mxu0 %v4522
    %v4562 = vpop.f32.mrf.mxu0
    %v4563 = vadd.f32 0.0, %v4562
    %4564 = vmatmul.f32.gmra.mxu0 %v4525
    %v4565 = vpop.f32.mrf.mxu0
    %v4566 = vadd.f32 0.0, %v4565
    %4567 = vmatmul.f32.gmra.mxu0 %v4528
    %v4568 = vpop.f32.mrf.mxu0
    %v4569 = vadd.f32 0.0, %v4568
    %4570 = vmatmul.f32.gmra.mxu0 %v4531
    %v4571 = vpop.f32.mrf.mxu0
    %v4572 = vadd.f32 0.0, %v4571
    %4573 = vmatmul.f32.gmra.mxu0 %v4534
    %v4574 = vpop.f32.mrf.mxu0
    %v4575 = vadd.f32 0.0, %v4574
    %4576 = vmatmul.f32.gmra.mxu0 %v4537
    %v4577 = vpop.f32.mrf.mxu0
    %v4578 = vadd.f32 0.0, %v4577
    %4579 = vdwg.mxu0
    %s4580 = scalar_lea.vmem [#allocation10], 32
    %v4581 = vld [vmem:[%s4580] sm:$0xff]
    %v4582 = vld [vmem:[%s4580 + $0x8] sm:$0xff]
    %v4583 = vld [vmem:[%s4580 + $0x10] sm:$0xff]
    %v4584 = vld [vmem:[%s4580 + $0x18] sm:$0xff]
    %v4586 = vsel %vm975, %v4557, 0
    %v4589 = vsel %vm975, %v4560, 0
    %v4592 = vsel %vm975, %v4563, 0
    %v4595 = vsel %vm975, %v4566, 0
    %v4598 = vsel %vm975, %v4569, 0
    %v4601 = vsel %vm975, %v4572, 0
    %v4604 = vsel %vm975, %v4575, 0
    %v4607 = vsel %vm975, %v4578, 0
    %4609 = vmatpush.msra.mxu0 0.0
    %4610 = vmatpush.msra.mxu0 0.0
    %4611 = vmatpush.msra.mxu0 0.0
    %4612 = vmatpush.msra.mxu0 0.0
    %4613 = vmatpush.msra.mxu0 0.0
    %4614 = vmatpush.msra.mxu0 0.0
    %4615 = vmatpush.msra.mxu0 0.0
    %4616 = vmatpush.msra.mxu0 0.0
    %4617 = vmatpush.msra.mxu0 0.0
    %4618 = vmatpush.msra.mxu0 0.0
    %4619 = vmatpush.msra.mxu0 0.0
    %4620 = vmatpush.msra.mxu0 0.0
    %4621 = vmatpush.msra.mxu0 %v4584
    %4622 = vmatpush.msra.mxu0 %v4583
    %4623 = vmatpush.msra.mxu0 %v4582
    %4624 = vmatpush.msra.mxu0 %v4581
    %4625 = vmatmul.f32.gmra.mxu0 %v4586
    %v4626 = vpop.f32.mrf.mxu0
    %v4627 = vadd.f32 0.0, %v4626
    %4628 = vmatmul.f32.gmra.mxu0 %v4589
    %v4629 = vpop.f32.mrf.mxu0
    %v4630 = vadd.f32 0.0, %v4629
    %4631 = vmatmul.f32.gmra.mxu0 %v4592
    %v4632 = vpop.f32.mrf.mxu0
    %v4633 = vadd.f32 0.0, %v4632
    %4634 = vmatmul.f32.gmra.mxu0 %v4595
    %v4635 = vpop.f32.mrf.mxu0
    %v4636 = vadd.f32 0.0, %v4635
    %4637 = vmatmul.f32.gmra.mxu0 %v4598
    %v4638 = vpop.f32.mrf.mxu0
    %v4639 = vadd.f32 0.0, %v4638
    %4640 = vmatmul.f32.gmra.mxu0 %v4601
    %v4641 = vpop.f32.mrf.mxu0
    %v4642 = vadd.f32 0.0, %v4641
    %4643 = vmatmul.f32.gmra.mxu0 %v4604
    %v4644 = vpop.f32.mrf.mxu0
    %v4645 = vadd.f32 0.0, %v4644
    %4646 = vmatmul.f32.gmra.mxu0 %v4607
    %v4647 = vpop.f32.mrf.mxu0
    %v4648 = vadd.f32 0.0, %v4647
    %4649 = vdwg.mxu0
    %v4651 = vsel %vm975, %v4216, 0
    %v4654 = vsel %vm975, %v4219, 0
    %v4657 = vsel %vm975, %v4222, 0
    %v4660 = vsel %vm975, %v4225, 0
    %v4663 = vsel %vm975, %v4228, 0
    %v4666 = vsel %vm975, %v4231, 0
    %v4669 = vsel %vm975, %v4234, 0
    %v4672 = vsel %vm975, %v4237, 0
    %4674 = vmatpush.msra.mxu0 0.0
    %4675 = vmatpush.msra.mxu0 0.0
    %4676 = vmatpush.msra.mxu0 0.0
    %4677 = vmatpush.msra.mxu0 0.0
    %4678 = vmatpush.msra.mxu0 0.0
    %4679 = vmatpush.msra.mxu0 0.0
    %4680 = vmatpush.msra.mxu0 0.0
    %4681 = vmatpush.msra.mxu0 0.0
    %4682 = vmatpush.msra.mxu0 0.0
    %4683 = vmatpush.msra.mxu0 0.0
    %4684 = vmatpush.msra.mxu0 0.0
    %4685 = vmatpush.msra.mxu0 0.0
    %4686 = vmatpush.msra.mxu0 %v4242
    %4687 = vmatpush.msra.mxu0 %v4241
    %4688 = vmatpush.msra.mxu0 %v4240
    %4689 = vmatpush.msra.mxu0 %v4239
    %4690 = vmatmul.f32.gmra.mxu0 %v4651
    %v4691 = vpop.f32.mrf.mxu0
    %v4692 = vadd.f32 %v4627, %v4691
    %4693 = vmatmul.f32.gmra.mxu0 %v4654
    %v4694 = vpop.f32.mrf.mxu0
    %v4695 = vadd.f32 %v4630, %v4694
    %4696 = vmatmul.f32.gmra.mxu0 %v4657
    %v4697 = vpop.f32.mrf.mxu0
    %v4698 = vadd.f32 %v4633, %v4697
    %4699 = vmatmul.f32.gmra.mxu0 %v4660
    %v4700 = vpop.f32.mrf.mxu0
    %v4701 = vadd.f32 %v4636, %v4700
    %4702 = vmatmul.f32.gmra.mxu0 %v4663
    %v4703 = vpop.f32.mrf.mxu0
    %v4704 = vadd.f32 %v4639, %v4703
    %4705 = vmatmul.f32.gmra.mxu0 %v4666
    %v4706 = vpop.f32.mrf.mxu0
    %v4707 = vadd.f32 %v4642, %v4706
    %4708 = vmatmul.f32.gmra.mxu0 %v4669
    %v4709 = vpop.f32.mrf.mxu0
    %v4710 = vadd.f32 %v4645, %v4709
    %4711 = vmatmul.f32.gmra.mxu0 %v4672
    %v4712 = vpop.f32.mrf.mxu0
    %v4713 = vadd.f32 %v4648, %v4712
    %4714 = vdwg.mxu0
    %v4716 = vsel %vm975, %v3887, 0
    %v4719 = vsel %vm975, %v3890, 0
    %v4722 = vsel %vm975, %v3893, 0
    %v4725 = vsel %vm975, %v3896, 0
    %v4728 = vsel %vm975, %v3899, 0
    %v4731 = vsel %vm975, %v3902, 0
    %v4734 = vsel %vm975, %v3905, 0
    %v4737 = vsel %vm975, %v3908, 0
    %v4740 = vsel %vm975, %v749, 0
    %4742 = vmatpush.xpose.msra.mxu0 0.0
    %4743 = vmatpush.xpose.msra.mxu0 0.0
    %4744 = vmatpush.xpose.msra.mxu0 0.0
    %4745 = vmatpush.xpose.msra.mxu0 0.0
    %4746 = vmatpush.xpose.msra.mxu0 0.0
    %4747 = vmatpush.xpose.msra.mxu0 0.0
    %4748 = vmatpush.xpose.msra.mxu0 0.0
    %4749 = vmatpush.xpose.msra.mxu0 0.0
    %4750 = vmatpush.xpose.msra.mxu0 0.0
    %4751 = vmatpush.xpose.msra.mxu0 0.0
    %4752 = vmatpush.xpose.msra.mxu0 0.0
    %4753 = vmatpush.xpose.msra.mxu0 0.0
    %4754 = vmatpush.xpose.msra.mxu0 0.0
    %4755 = vmatpush.xpose.msra.mxu0 0.0
    %4756 = vmatpush.xpose.msra.mxu0 0.0
    %4757 = vmatpush.xpose.msra.mxu0 %v4740
    %4758 = vmatmul.f32.gmra.mxu0 %v4716
    %v4759 = vpop.f32.mrf.mxu0
    %v4760 = vadd.f32 0.0, %v4759
    %4761 = vmatmul.f32.gmra.mxu0 %v4719
    %v4762 = vpop.f32.mrf.mxu0
    %v4763 = vadd.f32 0.0, %v4762
    %4764 = vmatmul.f32.gmra.mxu0 %v4722
    %v4765 = vpop.f32.mrf.mxu0
    %v4766 = vadd.f32 0.0, %v4765
    %4767 = vmatmul.f32.gmra.mxu0 %v4725
    %v4768 = vpop.f32.mrf.mxu0
    %v4769 = vadd.f32 0.0, %v4768
    %4770 = vmatmul.f32.gmra.mxu0 %v4728
    %v4771 = vpop.f32.mrf.mxu0
    %v4772 = vadd.f32 0.0, %v4771
    %4773 = vmatmul.f32.gmra.mxu0 %v4731
    %v4774 = vpop.f32.mrf.mxu0
    %v4775 = vadd.f32 0.0, %v4774
    %4776 = vmatmul.f32.gmra.mxu0 %v4734
    %v4777 = vpop.f32.mrf.mxu0
    %v4778 = vadd.f32 0.0, %v4777
    %4779 = vmatmul.f32.gmra.mxu0 %v4737
    %v4780 = vpop.f32.mrf.mxu0
    %v4781 = vadd.f32 0.0, %v4780
    %4782 = vdwg.mxu0
    %v4783 = vsel %vm3978, %v4760, -inf
    %4784 = vmax.xlane.f32.xlu0 %v4783
    %v4785 = vpop.xlane.xlu0 %4784
    %v4786 = vsel %vm3978, %v4763, -inf
    %4787 = vmax.xlane.f32.xlu0 %v4786
    %v4788 = vpop.xlane.xlu0 %4787
    %v4789 = vsel %vm3978, %v4766, -inf
    %4790 = vmax.xlane.f32.xlu0 %v4789
    %v4791 = vpop.xlane.xlu0 %4790
    %v4792 = vsel %vm3978, %v4769, -inf
    %4793 = vmax.xlane.f32.xlu0 %v4792
    %v4794 = vpop.xlane.xlu0 %4793
    %v4795 = vsel %vm3978, %v4772, -inf
    %4796 = vmax.xlane.f32.xlu0 %v4795
    %v4797 = vpop.xlane.xlu0 %4796
    %v4798 = vsel %vm3978, %v4775, -inf
    %4799 = vmax.xlane.f32.xlu0 %v4798
    %v4800 = vpop.xlane.xlu0 %4799
    %v4801 = vsel %vm3978, %v4778, -inf
    %4802 = vmax.xlane.f32.xlu0 %v4801
    %v4803 = vpop.xlane.xlu0 %4802
    %v4804 = vsel %vm3978, %v4781, -inf
    %4805 = vmax.xlane.f32.xlu0 %v4804
    %v4806 = vpop.xlane.xlu0 %4805
    %v4807 = vsub.f32 %v4760, %v4785
    %v4808 = vsub.f32 %v4763, %v4788
    %v4809 = vsub.f32 %v4766, %v4791
    %v4810 = vsub.f32 %v4769, %v4794
    %v4811 = vsub.f32 %v4772, %v4797
    %v4812 = vsub.f32 %v4775, %v4800
    %v4813 = vsub.f32 %v4778, %v4803
    %v4814 = vsub.f32 %v4781, %v4806
    %v4815 = vmul.f32 %v4807, 1.442695
    %v4816 = vpow.pop %v4815
    %v4817 = vmul.f32 %v4808, 1.442695
    %v4818 = vpow.pop %v4817
    %v4819 = vmul.f32 %v4809, 1.442695
    %v4820 = vpow.pop %v4819
    %v4821 = vmul.f32 %v4810, 1.442695
    %v4822 = vpow.pop %v4821
    %v4823 = vmul.f32 %v4811, 1.442695
    %v4824 = vpow.pop %v4823
    %v4825 = vmul.f32 %v4812, 1.442695
    %v4826 = vpow.pop %v4825
    %v4827 = vmul.f32 %v4813, 1.442695
    %v4828 = vpow.pop %v4827
    %v4829 = vmul.f32 %v4814, 1.442695
    %v4830 = vpow.pop %v4829
    %v4831 = vsel %vm3978, %v4816, 0.0
    %4832 = vadd.xlane.f32.xlu0 %v4831
    %v4833 = vpop.xlane.xlu0 %4832
    %v4834 = vsel %vm3978, %v4818, 0.0
    %4835 = vadd.xlane.f32.xlu0 %v4834
    %v4836 = vpop.xlane.xlu0 %4835
    %v4837 = vsel %vm3978, %v4820, 0.0
    %4838 = vadd.xlane.f32.xlu0 %v4837
    %v4839 = vpop.xlane.xlu0 %4838
    %v4840 = vsel %vm3978, %v4822, 0.0
    %4841 = vadd.xlane.f32.xlu0 %v4840
    %v4842 = vpop.xlane.xlu0 %4841
    %v4843 = vsel %vm3978, %v4824, 0.0
    %4844 = vadd.xlane.f32.xlu0 %v4843
    %v4845 = vpop.xlane.xlu0 %4844
    %v4846 = vsel %vm3978, %v4826, 0.0
    %4847 = vadd.xlane.f32.xlu0 %v4846
    %v4848 = vpop.xlane.xlu0 %4847
    %v4849 = vsel %vm3978, %v4828, 0.0
    %4850 = vadd.xlane.f32.xlu0 %v4849
    %v4851 = vpop.xlane.xlu0 %4850
    %v4852 = vsel %vm3978, %v4830, 0.0
    %4853 = vadd.xlane.f32.xlu0 %v4852
    %v4854 = vpop.xlane.xlu0 %4853
    %v4855 = vrcp.pop %v4833
    %v4856 = vmul.f32 %v4833, %v4855
    %v4857 = vsub.f32 1.0, %v4856
    %v4858 = vmul.f32 %v4855, %v4857
    %v4859 = vadd.f32 %v4855, %v4858
    %vm4860 = vweird.f32 %v4833
    %vm4861 = vweird.f32 %v4855
    %vm4862 = vmor %vm4860, %vm4861
    %v4863 = vsel %vm4862, %v4855, %v4859
    %v4864 = vand.u32 2147483647, %v4833
    %vm4865 = vcmp.eq.f32.partialorder %v4864, 8.507059e+37
    %v4866 = vand.u32 %v4833, 2147483648
    %v4867 = vor.u32 1.1754944e-38, %v4866
    %v4868 = vsel %vm4865, %v4867, %v4863
    %v4869 = vmul.f32 %v4816, %v4868
    %v4870 = vrcp.pop %v4836
    %v4871 = vmul.f32 %v4836, %v4870
    %v4872 = vsub.f32 1.0, %v4871
    %v4873 = vmul.f32 %v4870, %v4872
    %v4874 = vadd.f32 %v4870, %v4873
    %vm4875 = vweird.f32 %v4836
    %vm4876 = vweird.f32 %v4870
    %vm4877 = vmor %vm4875, %vm4876
    %v4878 = vsel %vm4877, %v4870, %v4874
    %v4879 = vand.u32 2147483647, %v4836
    %vm4880 = vcmp.eq.f32.partialorder %v4879, 8.507059e+37
    %v4881 = vand.u32 %v4836, 2147483648
    %v4882 = vor.u32 1.1754944e-38, %v4881
    %v4883 = vsel %vm4880, %v4882, %v4878
    %v4884 = vmul.f32 %v4818, %v4883
    %v4885 = vrcp.pop %v4839
    %v4886 = vmul.f32 %v4839, %v4885
    %v4887 = vsub.f32 1.0, %v4886
    %v4888 = vmul.f32 %v4885, %v4887
    %v4889 = vadd.f32 %v4885, %v4888
    %vm4890 = vweird.f32 %v4839
    %vm4891 = vweird.f32 %v4885
    %vm4892 = vmor %vm4890, %vm4891
    %v4893 = vsel %vm4892, %v4885, %v4889
    %v4894 = vand.u32 2147483647, %v4839
    %vm4895 = vcmp.eq.f32.partialorder %v4894, 8.507059e+37
    %v4896 = vand.u32 %v4839, 2147483648
    %v4897 = vor.u32 1.1754944e-38, %v4896
    %v4898 = vsel %vm4895, %v4897, %v4893
    %v4899 = vmul.f32 %v4820, %v4898
    %v4900 = vrcp.pop %v4842
    %v4901 = vmul.f32 %v4842, %v4900
    %v4902 = vsub.f32 1.0, %v4901
    %v4903 = vmul.f32 %v4900, %v4902
    %v4904 = vadd.f32 %v4900, %v4903
    %vm4905 = vweird.f32 %v4842
    %vm4906 = vweird.f32 %v4900
    %vm4907 = vmor %vm4905, %vm4906
    %v4908 = vsel %vm4907, %v4900, %v4904
    %v4909 = vand.u32 2147483647, %v4842
    %vm4910 = vcmp.eq.f32.partialorder %v4909, 8.507059e+37
    %v4911 = vand.u32 %v4842, 2147483648
    %v4912 = vor.u32 1.1754944e-38, %v4911
    %v4913 = vsel %vm4910, %v4912, %v4908
    %v4914 = vmul.f32 %v4822, %v4913
    %v4915 = vrcp.pop %v4845
    %v4916 = vmul.f32 %v4845, %v4915
    %v4917 = vsub.f32 1.0, %v4916
    %v4918 = vmul.f32 %v4915, %v4917
    %v4919 = vadd.f32 %v4915, %v4918
    %vm4920 = vweird.f32 %v4845
    %vm4921 = vweird.f32 %v4915
    %vm4922 = vmor %vm4920, %vm4921
    %v4923 = vsel %vm4922, %v4915, %v4919
    %v4924 = vand.u32 2147483647, %v4845
    %vm4925 = vcmp.eq.f32.partialorder %v4924, 8.507059e+37
    %v4926 = vand.u32 %v4845, 2147483648
    %v4927 = vor.u32 1.1754944e-38, %v4926
    %v4928 = vsel %vm4925, %v4927, %v4923
    %v4929 = vmul.f32 %v4824, %v4928
    %v4930 = vrcp.pop %v4848
    %v4931 = vmul.f32 %v4848, %v4930
    %v4932 = vsub.f32 1.0, %v4931
    %v4933 = vmul.f32 %v4930, %v4932
    %v4934 = vadd.f32 %v4930, %v4933
    %vm4935 = vweird.f32 %v4848
    %vm4936 = vweird.f32 %v4930
    %vm4937 = vmor %vm4935, %vm4936
    %v4938 = vsel %vm4937, %v4930, %v4934
    %v4939 = vand.u32 2147483647, %v4848
    %vm4940 = vcmp.eq.f32.partialorder %v4939, 8.507059e+37
    %v4941 = vand.u32 %v4848, 2147483648
    %v4942 = vor.u32 1.1754944e-38, %v4941
    %v4943 = vsel %vm4940, %v4942, %v4938
    %v4944 = vmul.f32 %v4826, %v4943
    %v4945 = vrcp.pop %v4851
    %v4946 = vmul.f32 %v4851, %v4945
    %v4947 = vsub.f32 1.0, %v4946
    %v4948 = vmul.f32 %v4945, %v4947
    %v4949 = vadd.f32 %v4945, %v4948
    %vm4950 = vweird.f32 %v4851
    %vm4951 = vweird.f32 %v4945
    %vm4952 = vmor %vm4950, %vm4951
    %v4953 = vsel %vm4952, %v4945, %v4949
    %v4954 = vand.u32 2147483647, %v4851
    %vm4955 = vcmp.eq.f32.partialorder %v4954, 8.507059e+37
    %v4956 = vand.u32 %v4851, 2147483648
    %v4957 = vor.u32 1.1754944e-38, %v4956
    %v4958 = vsel %vm4955, %v4957, %v4953
    %v4959 = vmul.f32 %v4828, %v4958
    %v4960 = vrcp.pop %v4854
    %v4961 = vmul.f32 %v4854, %v4960
    %v4962 = vsub.f32 1.0, %v4961
    %v4963 = vmul.f32 %v4960, %v4962
    %v4964 = vadd.f32 %v4960, %v4963
    %vm4965 = vweird.f32 %v4854
    %vm4966 = vweird.f32 %v4960
    %vm4967 = vmor %vm4965, %vm4966
    %v4968 = vsel %vm4967, %v4960, %v4964
    %v4969 = vand.u32 2147483647, %v4854
    %vm4970 = vcmp.eq.f32.partialorder %v4969, 8.507059e+37
    %v4971 = vand.u32 %v4854, 2147483648
    %v4972 = vor.u32 1.1754944e-38, %v4971
    %v4973 = vsel %vm4970, %v4972, %v4968
    %v4974 = vmul.f32 %v4830, %v4973
    %4975 = vrot.lane.b32.xlu0 %v749, 64
    %v4976 = vpop.permute.xlu0 %4975
    %v4979 = vsel %vm3978, %v4869, 0
    %v4982 = vsel %vm3978, %v4884, 0
    %v4985 = vsel %vm3978, %v4899, 0
    %v4988 = vsel %vm3978, %v4914, 0
    %v4991 = vsel %vm3978, %v4929, 0
    %v4994 = vsel %vm3978, %v4944, 0
    %v4997 = vsel %vm3978, %v4959, 0
    %v5000 = vsel %vm3978, %v4974, 0
    %5002 = vmatpush.msra.mxu0 0.0
    %5003 = vmatpush.msra.mxu0 0.0
    %5004 = vmatpush.msra.mxu0 0.0
    %5005 = vmatpush.msra.mxu0 0.0
    %5006 = vmatpush.msra.mxu0 0.0
    %5007 = vmatpush.msra.mxu0 0.0
    %5008 = vmatpush.msra.mxu0 0.0
    %5009 = vmatpush.msra.mxu0 0.0
    %5010 = vmatpush.msra.mxu0 0.0
    %5011 = vmatpush.msra.mxu0 0.0
    %5012 = vmatpush.msra.mxu0 0.0
    %5013 = vmatpush.msra.mxu0 0.0
    %5014 = vmatpush.msra.mxu0 0.0
    %5015 = vmatpush.msra.mxu0 0.0
    %5016 = vmatpush.msra.mxu0 0.0
    %5017 = vmatpush.msra.mxu0 %v4976
    %5018 = vmatmul.f32.gmra.mxu0 %v4979
    %v5019 = vpop.f32.mrf.mxu0
    %v5020 = vadd.f32 0.0, %v5019
    %5021 = vmatmul.f32.gmra.mxu0 %v4982
    %v5022 = vpop.f32.mrf.mxu0
    %v5023 = vadd.f32 0.0, %v5022
    %5024 = vmatmul.f32.gmra.mxu0 %v4985
    %v5025 = vpop.f32.mrf.mxu0
    %v5026 = vadd.f32 0.0, %v5025
    %5027 = vmatmul.f32.gmra.mxu0 %v4988
    %v5028 = vpop.f32.mrf.mxu0
    %v5029 = vadd.f32 0.0, %v5028
    %5030 = vmatmul.f32.gmra.mxu0 %v4991
    %v5031 = vpop.f32.mrf.mxu0
    %v5032 = vadd.f32 0.0, %v5031
    %5033 = vmatmul.f32.gmra.mxu0 %v4994
    %v5034 = vpop.f32.mrf.mxu0
    %v5035 = vadd.f32 0.0, %v5034
    %5036 = vmatmul.f32.gmra.mxu0 %v4997
    %v5037 = vpop.f32.mrf.mxu0
    %v5038 = vadd.f32 0.0, %v5037
    %5039 = vmatmul.f32.gmra.mxu0 %v5000
    %v5040 = vpop.f32.mrf.mxu0
    %v5041 = vadd.f32 0.0, %v5040
    %5042 = vdwg.mxu0
    %5043 = vrot.lane.b32.xlu0 %v3887, 96
    %v5044 = vpop.permute.xlu0 %5043
    %5045 = vrot.lane.b32.xlu0 %v3890, 96
    %v5046 = vpop.permute.xlu0 %5045
    %5047 = vrot.lane.b32.xlu0 %v3893, 96
    %v5048 = vpop.permute.xlu0 %5047
    %5049 = vrot.lane.b32.xlu0 %v3896, 96
    %v5050 = vpop.permute.xlu0 %5049
    %5051 = vrot.lane.b32.xlu0 %v3899, 96
    %v5052 = vpop.permute.xlu0 %5051
    %5053 = vrot.lane.b32.xlu0 %v3902, 96
    %v5054 = vpop.permute.xlu0 %5053
    %5055 = vrot.lane.b32.xlu0 %v3905, 96
    %v5056 = vpop.permute.xlu0 %5055
    %5057 = vrot.lane.b32.xlu0 %v3908, 96
    %v5058 = vpop.permute.xlu0 %5057
    %5059 = vrot.lane.b32.xlu0 %v749, 96
    %v5060 = vpop.permute.xlu0 %5059
    %v5061 = vsel %vm975, %v5044, 0
    %v5063 = vsel %vm975, %v5046, 0
    %v5065 = vsel %vm975, %v5048, 0
    %v5067 = vsel %vm975, %v5050, 0
    %v5069 = vsel %vm975, %v5052, 0
    %v5071 = vsel %vm975, %v5054, 0
    %v5073 = vsel %vm975, %v5056, 0
    %v5075 = vsel %vm975, %v5058, 0
    %v5077 = vsel %vm975, %v5060, 0
    %5079 = vmatpush.xpose.msra.mxu0 0.0
    %5080 = vmatpush.xpose.msra.mxu0 0.0
    %5081 = vmatpush.xpose.msra.mxu0 0.0
    %5082 = vmatpush.xpose.msra.mxu0 0.0
    %5083 = vmatpush.xpose.msra.mxu0 0.0
    %5084 = vmatpush.xpose.msra.mxu0 0.0
    %5085 = vmatpush.xpose.msra.mxu0 0.0
    %5086 = vmatpush.xpose.msra.mxu0 0.0
    %5087 = vmatpush.xpose.msra.mxu0 0.0
    %5088 = vmatpush.xpose.msra.mxu0 0.0
    %5089 = vmatpush.xpose.msra.mxu0 0.0
    %5090 = vmatpush.xpose.msra.mxu0 0.0
    %5091 = vmatpush.xpose.msra.mxu0 0.0
    %5092 = vmatpush.xpose.msra.mxu0 0.0
    %5093 = vmatpush.xpose.msra.mxu0 0.0
    %5094 = vmatpush.xpose.msra.mxu0 %v5077
    %5095 = vmatmul.f32.gmra.mxu0 %v5061
    %v5096 = vpop.f32.mrf.mxu0
    %v5097 = vadd.f32 0.0, %v5096
    %5098 = vmatmul.f32.gmra.mxu0 %v5063
    %v5099 = vpop.f32.mrf.mxu0
    %v5100 = vadd.f32 0.0, %v5099
    %5101 = vmatmul.f32.gmra.mxu0 %v5065
    %v5102 = vpop.f32.mrf.mxu0
    %v5103 = vadd.f32 0.0, %v5102
    %5104 = vmatmul.f32.gmra.mxu0 %v5067
    %v5105 = vpop.f32.mrf.mxu0
    %v5106 = vadd.f32 0.0, %v5105
    %5107 = vmatmul.f32.gmra.mxu0 %v5069
    %v5108 = vpop.f32.mrf.mxu0
    %v5109 = vadd.f32 0.0, %v5108
    %5110 = vmatmul.f32.gmra.mxu0 %v5071
    %v5111 = vpop.f32.mrf.mxu0
    %v5112 = vadd.f32 0.0, %v5111
    %5113 = vmatmul.f32.gmra.mxu0 %v5073
    %v5114 = vpop.f32.mrf.mxu0
    %v5115 = vadd.f32 0.0, %v5114
    %5116 = vmatmul.f32.gmra.mxu0 %v5075
    %v5117 = vpop.f32.mrf.mxu0
    %v5118 = vadd.f32 0.0, %v5117
    %5119 = vdwg.mxu0
    %v5120 = vsel %vm3978, %v5097, -inf
    %5121 = vmax.xlane.f32.xlu0 %v5120
    %v5122 = vpop.xlane.xlu0 %5121
    %v5123 = vsel %vm3978, %v5100, -inf
    %5124 = vmax.xlane.f32.xlu0 %v5123
    %v5125 = vpop.xlane.xlu0 %5124
    %v5126 = vsel %vm3978, %v5103, -inf
    %5127 = vmax.xlane.f32.xlu0 %v5126
    %v5128 = vpop.xlane.xlu0 %5127
    %v5129 = vsel %vm3978, %v5106, -inf
    %5130 = vmax.xlane.f32.xlu0 %v5129
    %v5131 = vpop.xlane.xlu0 %5130
    %v5132 = vsel %vm3978, %v5109, -inf
    %5133 = vmax.xlane.f32.xlu0 %v5132
    %v5134 = vpop.xlane.xlu0 %5133
    %v5135 = vsel %vm3978, %v5112, -inf
    %5136 = vmax.xlane.f32.xlu0 %v5135
    %v5137 = vpop.xlane.xlu0 %5136
    %v5138 = vsel %vm3978, %v5115, -inf
    %5139 = vmax.xlane.f32.xlu0 %v5138
    %v5140 = vpop.xlane.xlu0 %5139
    %v5141 = vsel %vm3978, %v5118, -inf
    %5142 = vmax.xlane.f32.xlu0 %v5141
    %v5143 = vpop.xlane.xlu0 %5142
    %v5144 = vsub.f32 %v5097, %v5122
    %v5145 = vsub.f32 %v5100, %v5125
    %v5146 = vsub.f32 %v5103, %v5128
    %v5147 = vsub.f32 %v5106, %v5131
    %v5148 = vsub.f32 %v5109, %v5134
    %v5149 = vsub.f32 %v5112, %v5137
    %v5150 = vsub.f32 %v5115, %v5140
    %v5151 = vsub.f32 %v5118, %v5143
    %v5152 = vmul.f32 %v5144, 1.442695
    %v5153 = vpow.pop %v5152
    %v5154 = vmul.f32 %v5145, 1.442695
    %v5155 = vpow.pop %v5154
    %v5156 = vmul.f32 %v5146, 1.442695
    %v5157 = vpow.pop %v5156
    %v5158 = vmul.f32 %v5147, 1.442695
    %v5159 = vpow.pop %v5158
    %v5160 = vmul.f32 %v5148, 1.442695
    %v5161 = vpow.pop %v5160
    %v5162 = vmul.f32 %v5149, 1.442695
    %v5163 = vpow.pop %v5162
    %v5164 = vmul.f32 %v5150, 1.442695
    %v5165 = vpow.pop %v5164
    %v5166 = vmul.f32 %v5151, 1.442695
    %v5167 = vpow.pop %v5166
    %v5168 = vsel %vm3978, %v5153, 0.0
    %5169 = vadd.xlane.f32.xlu0 %v5168
    %v5170 = vpop.xlane.xlu0 %5169
    %v5171 = vsel %vm3978, %v5155, 0.0
    %5172 = vadd.xlane.f32.xlu0 %v5171
    %v5173 = vpop.xlane.xlu0 %5172
    %v5174 = vsel %vm3978, %v5157, 0.0
    %5175 = vadd.xlane.f32.xlu0 %v5174
    %v5176 = vpop.xlane.xlu0 %5175
    %v5177 = vsel %vm3978, %v5159, 0.0
    %5178 = vadd.xlane.f32.xlu0 %v5177
    %v5179 = vpop.xlane.xlu0 %5178
    %v5180 = vsel %vm3978, %v5161, 0.0
    %5181 = vadd.xlane.f32.xlu0 %v5180
    %v5182 = vpop.xlane.xlu0 %5181
    %v5183 = vsel %vm3978, %v5163, 0.0
    %5184 = vadd.xlane.f32.xlu0 %v5183
    %v5185 = vpop.xlane.xlu0 %5184
    %v5186 = vsel %vm3978, %v5165, 0.0
    %5187 = vadd.xlane.f32.xlu0 %v5186
    %v5188 = vpop.xlane.xlu0 %5187
    %v5189 = vsel %vm3978, %v5167, 0.0
    %5190 = vadd.xlane.f32.xlu0 %v5189
    %v5191 = vpop.xlane.xlu0 %5190
    %v5192 = vrcp.pop %v5170
    %v5193 = vmul.f32 %v5170, %v5192
    %v5194 = vsub.f32 1.0, %v5193
    %v5195 = vmul.f32 %v5192, %v5194
    %v5196 = vadd.f32 %v5192, %v5195
    %vm5197 = vweird.f32 %v5170
    %vm5198 = vweird.f32 %v5192
    %vm5199 = vmor %vm5197, %vm5198
    %v5200 = vsel %vm5199, %v5192, %v5196
    %v5201 = vand.u32 2147483647, %v5170
    %vm5202 = vcmp.eq.f32.partialorder %v5201, 8.507059e+37
    %v5203 = vand.u32 %v5170, 2147483648
    %v5204 = vor.u32 1.1754944e-38, %v5203
    %v5205 = vsel %vm5202, %v5204, %v5200
    %v5206 = vmul.f32 %v5153, %v5205
    %v5207 = vrcp.pop %v5173
    %v5208 = vmul.f32 %v5173, %v5207
    %v5209 = vsub.f32 1.0, %v5208
    %v5210 = vmul.f32 %v5207, %v5209
    %v5211 = vadd.f32 %v5207, %v5210
    %vm5212 = vweird.f32 %v5173
    %vm5213 = vweird.f32 %v5207
    %vm5214 = vmor %vm5212, %vm5213
    %v5215 = vsel %vm5214, %v5207, %v5211
    %v5216 = vand.u32 2147483647, %v5173
    %vm5217 = vcmp.eq.f32.partialorder %v5216, 8.507059e+37
    %v5218 = vand.u32 %v5173, 2147483648
    %v5219 = vor.u32 1.1754944e-38, %v5218
    %v5220 = vsel %vm5217, %v5219, %v5215
    %v5221 = vmul.f32 %v5155, %v5220
    %v5222 = vrcp.pop %v5176
    %v5223 = vmul.f32 %v5176, %v5222
    %v5224 = vsub.f32 1.0, %v5223
    %v5225 = vmul.f32 %v5222, %v5224
    %v5226 = vadd.f32 %v5222, %v5225
    %vm5227 = vweird.f32 %v5176
    %vm5228 = vweird.f32 %v5222
    %vm5229 = vmor %vm5227, %vm5228
    %v5230 = vsel %vm5229, %v5222, %v5226
    %v5231 = vand.u32 2147483647, %v5176
    %vm5232 = vcmp.eq.f32.partialorder %v5231, 8.507059e+37
    %v5233 = vand.u32 %v5176, 2147483648
    %v5234 = vor.u32 1.1754944e-38, %v5233
    %v5235 = vsel %vm5232, %v5234, %v5230
    %v5236 = vmul.f32 %v5157, %v5235
    %v5237 = vrcp.pop %v5179
    %v5238 = vmul.f32 %v5179, %v5237
    %v5239 = vsub.f32 1.0, %v5238
    %v5240 = vmul.f32 %v5237, %v5239
    %v5241 = vadd.f32 %v5237, %v5240
    %vm5242 = vweird.f32 %v5179
    %vm5243 = vweird.f32 %v5237
    %vm5244 = vmor %vm5242, %vm5243
    %v5245 = vsel %vm5244, %v5237, %v5241
    %v5246 = vand.u32 2147483647, %v5179
    %vm5247 = vcmp.eq.f32.partialorder %v5246, 8.507059e+37
    %v5248 = vand.u32 %v5179, 2147483648
    %v5249 = vor.u32 1.1754944e-38, %v5248
    %v5250 = vsel %vm5247, %v5249, %v5245
    %v5251 = vmul.f32 %v5159, %v5250
    %v5252 = vrcp.pop %v5182
    %v5253 = vmul.f32 %v5182, %v5252
    %v5254 = vsub.f32 1.0, %v5253
    %v5255 = vmul.f32 %v5252, %v5254
    %v5256 = vadd.f32 %v5252, %v5255
    %vm5257 = vweird.f32 %v5182
    %vm5258 = vweird.f32 %v5252
    %vm5259 = vmor %vm5257, %vm5258
    %v5260 = vsel %vm5259, %v5252, %v5256
    %v5261 = vand.u32 2147483647, %v5182
    %vm5262 = vcmp.eq.f32.partialorder %v5261, 8.507059e+37
    %v5263 = vand.u32 %v5182, 2147483648
    %v5264 = vor.u32 1.1754944e-38, %v5263
    %v5265 = vsel %vm5262, %v5264, %v5260
    %v5266 = vmul.f32 %v5161, %v5265
    %v5267 = vrcp.pop %v5185
    %v5268 = vmul.f32 %v5185, %v5267
    %v5269 = vsub.f32 1.0, %v5268
    %v5270 = vmul.f32 %v5267, %v5269
    %v5271 = vadd.f32 %v5267, %v5270
    %vm5272 = vweird.f32 %v5185
    %vm5273 = vweird.f32 %v5267
    %vm5274 = vmor %vm5272, %vm5273
    %v5275 = vsel %vm5274, %v5267, %v5271
    %v5276 = vand.u32 2147483647, %v5185
    %vm5277 = vcmp.eq.f32.partialorder %v5276, 8.507059e+37
    %v5278 = vand.u32 %v5185, 2147483648
    %v5279 = vor.u32 1.1754944e-38, %v5278
    %v5280 = vsel %vm5277, %v5279, %v5275
    %v5281 = vmul.f32 %v5163, %v5280
    %v5282 = vrcp.pop %v5188
    %v5283 = vmul.f32 %v5188, %v5282
    %v5284 = vsub.f32 1.0, %v5283
    %v5285 = vmul.f32 %v5282, %v5284
    %v5286 = vadd.f32 %v5282, %v5285
    %vm5287 = vweird.f32 %v5188
    %vm5288 = vweird.f32 %v5282
    %vm5289 = vmor %vm5287, %vm5288
    %v5290 = vsel %vm5289, %v5282, %v5286
    %v5291 = vand.u32 2147483647, %v5188
    %vm5292 = vcmp.eq.f32.partialorder %v5291, 8.507059e+37
    %v5293 = vand.u32 %v5188, 2147483648
    %v5294 = vor.u32 1.1754944e-38, %v5293
    %v5295 = vsel %vm5292, %v5294, %v5290
    %v5296 = vmul.f32 %v5165, %v5295
    %v5297 = vrcp.pop %v5191
    %v5298 = vmul.f32 %v5191, %v5297
    %v5299 = vsub.f32 1.0, %v5298
    %v5300 = vmul.f32 %v5297, %v5299
    %v5301 = vadd.f32 %v5297, %v5300
    %vm5302 = vweird.f32 %v5191
    %vm5303 = vweird.f32 %v5297
    %vm5304 = vmor %vm5302, %vm5303
    %v5305 = vsel %vm5304, %v5297, %v5301
    %v5306 = vand.u32 2147483647, %v5191
    %vm5307 = vcmp.eq.f32.partialorder %v5306, 8.507059e+37
    %v5308 = vand.u32 %v5191, 2147483648
    %v5309 = vor.u32 1.1754944e-38, %v5308
    %v5310 = vsel %vm5307, %v5309, %v5305
    %v5311 = vmul.f32 %v5167, %v5310
    %5312 = vrot.lane.b32.xlu0 %v749, 32
    %v5313 = vpop.permute.xlu0 %5312
    %v5316 = vsel %vm3978, %v5206, 0
    %v5319 = vsel %vm3978, %v5221, 0
    %v5322 = vsel %vm3978, %v5236, 0
    %v5325 = vsel %vm3978, %v5251, 0
    %v5328 = vsel %vm3978, %v5266, 0
    %v5331 = vsel %vm3978, %v5281, 0
    %v5334 = vsel %vm3978, %v5296, 0
    %v5337 = vsel %vm3978, %v5311, 0
    %5339 = vmatpush.msra.mxu0 0.0
    %5340 = vmatpush.msra.mxu0 0.0
    %5341 = vmatpush.msra.mxu0 0.0
    %5342 = vmatpush.msra.mxu0 0.0
    %5343 = vmatpush.msra.mxu0 0.0
    %5344 = vmatpush.msra.mxu0 0.0
    %5345 = vmatpush.msra.mxu0 0.0
    %5346 = vmatpush.msra.mxu0 0.0
    %5347 = vmatpush.msra.mxu0 0.0
    %5348 = vmatpush.msra.mxu0 0.0
    %5349 = vmatpush.msra.mxu0 0.0
    %5350 = vmatpush.msra.mxu0 0.0
    %5351 = vmatpush.msra.mxu0 0.0
    %5352 = vmatpush.msra.mxu0 0.0
    %5353 = vmatpush.msra.mxu0 0.0
    %5354 = vmatpush.msra.mxu0 %v5313
    %5355 = vmatmul.f32.gmra.mxu0 %v5316
    %v5356 = vpop.f32.mrf.mxu0
    %v5357 = vadd.f32 0.0, %v5356
    %5358 = vmatmul.f32.gmra.mxu0 %v5319
    %v5359 = vpop.f32.mrf.mxu0
    %v5360 = vadd.f32 0.0, %v5359
    %5361 = vmatmul.f32.gmra.mxu0 %v5322
    %v5362 = vpop.f32.mrf.mxu0
    %v5363 = vadd.f32 0.0, %v5362
    %5364 = vmatmul.f32.gmra.mxu0 %v5325
    %v5365 = vpop.f32.mrf.mxu0
    %v5366 = vadd.f32 0.0, %v5365
    %5367 = vmatmul.f32.gmra.mxu0 %v5328
    %v5368 = vpop.f32.mrf.mxu0
    %v5369 = vadd.f32 0.0, %v5368
    %5370 = vmatmul.f32.gmra.mxu0 %v5331
    %v5371 = vpop.f32.mrf.mxu0
    %v5372 = vadd.f32 0.0, %v5371
    %5373 = vmatmul.f32.gmra.mxu0 %v5334
    %v5374 = vpop.f32.mrf.mxu0
    %v5375 = vadd.f32 0.0, %v5374
    %5376 = vmatmul.f32.gmra.mxu0 %v5337
    %v5377 = vpop.f32.mrf.mxu0
    %v5378 = vadd.f32 0.0, %v5377
    %5379 = vdwg.mxu0
    %v5381 = vsel %vm975, %v5357, 0
    %v5384 = vsel %vm975, %v5360, 0
    %v5387 = vsel %vm975, %v5363, 0
    %v5390 = vsel %vm975, %v5366, 0
    %v5393 = vsel %vm975, %v5369, 0
    %v5396 = vsel %vm975, %v5372, 0
    %v5399 = vsel %vm975, %v5375, 0
    %v5402 = vsel %vm975, %v5378, 0
    %5404 = vmatpush.msra.mxu0 0.0
    %5405 = vmatpush.msra.mxu0 0.0
    %5406 = vmatpush.msra.mxu0 0.0
    %5407 = vmatpush.msra.mxu0 0.0
    %5408 = vmatpush.msra.mxu0 0.0
    %5409 = vmatpush.msra.mxu0 0.0
    %5410 = vmatpush.msra.mxu0 0.0
    %5411 = vmatpush.msra.mxu0 0.0
    %5412 = vmatpush.msra.mxu0 0.0
    %5413 = vmatpush.msra.mxu0 0.0
    %5414 = vmatpush.msra.mxu0 0.0
    %5415 = vmatpush.msra.mxu0 0.0
    %5416 = vmatpush.msra.mxu0 %v4584
    %5417 = vmatpush.msra.mxu0 %v4583
    %5418 = vmatpush.msra.mxu0 %v4582
    %5419 = vmatpush.msra.mxu0 %v4581
    %5420 = vmatmul.f32.gmra.mxu0 %v5381
    %v5421 = vpop.f32.mrf.mxu0
    %v5422 = vadd.f32 0.0, %v5421
    %5423 = vmatmul.f32.gmra.mxu0 %v5384
    %v5424 = vpop.f32.mrf.mxu0
    %v5425 = vadd.f32 0.0, %v5424
    %5426 = vmatmul.f32.gmra.mxu0 %v5387
    %v5427 = vpop.f32.mrf.mxu0
    %v5428 = vadd.f32 0.0, %v5427
    %5429 = vmatmul.f32.gmra.mxu0 %v5390
    %v5430 = vpop.f32.mrf.mxu0
    %v5431 = vadd.f32 0.0, %v5430
    %5432 = vmatmul.f32.gmra.mxu0 %v5393
    %v5433 = vpop.f32.mrf.mxu0
    %v5434 = vadd.f32 0.0, %v5433
    %5435 = vmatmul.f32.gmra.mxu0 %v5396
    %v5436 = vpop.f32.mrf.mxu0
    %v5437 = vadd.f32 0.0, %v5436
    %5438 = vmatmul.f32.gmra.mxu0 %v5399
    %v5439 = vpop.f32.mrf.mxu0
    %v5440 = vadd.f32 0.0, %v5439
    %5441 = vmatmul.f32.gmra.mxu0 %v5402
    %v5442 = vpop.f32.mrf.mxu0
    %v5443 = vadd.f32 0.0, %v5442
    %5444 = vdwg.mxu0
    %v5446 = vsel %vm975, %v5020, 0
    %v5449 = vsel %vm975, %v5023, 0
    %v5452 = vsel %vm975, %v5026, 0
    %v5455 = vsel %vm975, %v5029, 0
    %v5458 = vsel %vm975, %v5032, 0
    %v5461 = vsel %vm975, %v5035, 0
    %v5464 = vsel %vm975, %v5038, 0
    %v5467 = vsel %vm975, %v5041, 0
    %5469 = vmatpush.msra.mxu0 0.0
    %5470 = vmatpush.msra.mxu0 0.0
    %5471 = vmatpush.msra.mxu0 0.0
    %5472 = vmatpush.msra.mxu0 0.0
    %5473 = vmatpush.msra.mxu0 0.0
    %5474 = vmatpush.msra.mxu0 0.0
    %5475 = vmatpush.msra.mxu0 0.0
    %5476 = vmatpush.msra.mxu0 0.0
    %5477 = vmatpush.msra.mxu0 0.0
    %5478 = vmatpush.msra.mxu0 0.0
    %5479 = vmatpush.msra.mxu0 0.0
    %5480 = vmatpush.msra.mxu0 0.0
    %5481 = vmatpush.msra.mxu0 %v4242
    %5482 = vmatpush.msra.mxu0 %v4241
    %5483 = vmatpush.msra.mxu0 %v4240
    %5484 = vmatpush.msra.mxu0 %v4239
    %5485 = vmatmul.f32.gmra.mxu0 %v5446
    %v5486 = vpop.f32.mrf.mxu0
    %v5487 = vadd.f32 %v5422, %v5486
    %5488 = vmatmul.f32.gmra.mxu0 %v5449
    %v5489 = vpop.f32.mrf.mxu0
    %v5490 = vadd.f32 %v5425, %v5489
    %5491 = vmatmul.f32.gmra.mxu0 %v5452
    %v5492 = vpop.f32.mrf.mxu0
    %v5493 = vadd.f32 %v5428, %v5492
    %5494 = vmatmul.f32.gmra.mxu0 %v5455
    %v5495 = vpop.f32.mrf.mxu0
    %v5496 = vadd.f32 %v5431, %v5495
    %5497 = vmatmul.f32.gmra.mxu0 %v5458
    %v5498 = vpop.f32.mrf.mxu0
    %v5499 = vadd.f32 %v5434, %v5498
    %5500 = vmatmul.f32.gmra.mxu0 %v5461
    %v5501 = vpop.f32.mrf.mxu0
    %v5502 = vadd.f32 %v5437, %v5501
    %5503 = vmatmul.f32.gmra.mxu0 %v5464
    %v5504 = vpop.f32.mrf.mxu0
    %v5505 = vadd.f32 %v5440, %v5504
    %5506 = vmatmul.f32.gmra.mxu0 %v5467
    %v5507 = vpop.f32.mrf.mxu0
    %v5508 = vadd.f32 %v5443, %v5507
    %5509 = vdwg.mxu0
    %v5510 = vld [vmem:[#allocation13 + $0x4] sm:$0x1]
    %v5511 = vperm.slane %v5510, 0
    %v5512 = vadd.f32 %v4692, %v5511
    %v5513 = vadd.f32 %v4695, %v5511
    %v5514 = vadd.f32 %v4698, %v5511
    %v5515 = vadd.f32 %v4701, %v5511
    %v5516 = vadd.f32 %v4704, %v5511
    %v5517 = vadd.f32 %v4707, %v5511
    %v5518 = vadd.f32 %v4710, %v5511
    %v5519 = vadd.f32 %v4713, %v5511
    %v5520 = vadd.f32 %v5487, %v5511
    %v5521 = vadd.f32 %v5490, %v5511
    %v5522 = vadd.f32 %v5493, %v5511
    %v5523 = vadd.f32 %v5496, %v5511
    %v5524 = vadd.f32 %v5499, %v5511
    %v5525 = vadd.f32 %v5502, %v5511
    %v5526 = vadd.f32 %v5505, %v5511
    %v5527 = vadd.f32 %v5508, %v5511
    %v5528 = vsel %vm156, %v5512, 0.0
    %5529 = vadd.xlane.f32.xlu0 %v5528
    %v5530 = vpop.xlane.xlu0 %5529
    %v5531 = vsel %vm156, %v5513, 0.0
    %5532 = vadd.xlane.f32.xlu0 %v5531
    %v5533 = vpop.xlane.xlu0 %5532
    %v5534 = vsel %vm156, %v5514, 0.0
    %5535 = vadd.xlane.f32.xlu0 %v5534
    %v5536 = vpop.xlane.xlu0 %5535
    %v5537 = vsel %vm156, %v5515, 0.0
    %5538 = vadd.xlane.f32.xlu0 %v5537
    %v5539 = vpop.xlane.xlu0 %5538
    %v5540 = vsel %vm156, %v5516, 0.0
    %5541 = vadd.xlane.f32.xlu0 %v5540
    %v5542 = vpop.xlane.xlu0 %5541
    %v5543 = vsel %vm156, %v5517, 0.0
    %5544 = vadd.xlane.f32.xlu0 %v5543
    %v5545 = vpop.xlane.xlu0 %5544
    %v5546 = vsel %vm156, %v5518, 0.0
    %5547 = vadd.xlane.f32.xlu0 %v5546
    %v5548 = vpop.xlane.xlu0 %5547
    %v5549 = vsel %vm156, %v5519, 0.0
    %5550 = vadd.xlane.f32.xlu0 %v5549
    %v5551 = vpop.xlane.xlu0 %5550
    %v5552 = vsel %vm156, %v5520, 0.0
    %5553 = vadd.xlane.f32.xlu0 %v5552
    %v5554 = vpop.xlane.xlu0 %5553
    %v5555 = vsel %vm156, %v5521, 0.0
    %5556 = vadd.xlane.f32.xlu0 %v5555
    %v5557 = vpop.xlane.xlu0 %5556
    %v5558 = vsel %vm156, %v5522, 0.0
    %5559 = vadd.xlane.f32.xlu0 %v5558
    %v5560 = vpop.xlane.xlu0 %5559
    %v5561 = vsel %vm156, %v5523, 0.0
    %5562 = vadd.xlane.f32.xlu0 %v5561
    %v5563 = vpop.xlane.xlu0 %5562
    %v5564 = vsel %vm156, %v5524, 0.0
    %5565 = vadd.xlane.f32.xlu0 %v5564
    %v5566 = vpop.xlane.xlu0 %5565
    %v5567 = vsel %vm156, %v5525, 0.0
    %5568 = vadd.xlane.f32.xlu0 %v5567
    %v5569 = vpop.xlane.xlu0 %5568
    %v5570 = vsel %vm156, %v5526, 0.0
    %5571 = vadd.xlane.f32.xlu0 %v5570
    %v5572 = vpop.xlane.xlu0 %5571
    %v5573 = vsel %vm156, %v5527, 0.0
    %5574 = vadd.xlane.f32.xlu0 %v5573
    %v5575 = vpop.xlane.xlu0 %5574
    %v5576 = vmul.f32 %v5530, %v2789
    %v5577 = vmul.f32 %v5533, %v2789
    %v5578 = vmul.f32 %v5536, %v2789
    %v5579 = vmul.f32 %v5539, %v2789
    %v5580 = vmul.f32 %v5542, %v2789
    %v5581 = vmul.f32 %v5545, %v2789
    %v5582 = vmul.f32 %v5548, %v2789
    %v5583 = vmul.f32 %v5551, %v2789
    %v5584 = vmul.f32 %v5554, %v2789
    %v5585 = vmul.f32 %v5557, %v2789
    %v5586 = vmul.f32 %v5560, %v2789
    %v5587 = vmul.f32 %v5563, %v2789
    %v5588 = vmul.f32 %v5566, %v2789
    %v5589 = vmul.f32 %v5569, %v2789
    %v5590 = vmul.f32 %v5572, %v2789
    %v5591 = vmul.f32 %v5575, %v2789
    %v5592 = vsub.f32 %v5512, %v5576
    %v5593 = vsub.f32 %v5513, %v5577
    %v5594 = vsub.f32 %v5514, %v5578
    %v5595 = vsub.f32 %v5515, %v5579
    %v5596 = vsub.f32 %v5516, %v5580
    %v5597 = vsub.f32 %v5517, %v5581
    %v5598 = vsub.f32 %v5518, %v5582
    %v5599 = vsub.f32 %v5519, %v5583
    %v5600 = vsub.f32 %v5520, %v5584
    %v5601 = vsub.f32 %v5521, %v5585
    %v5602 = vsub.f32 %v5522, %v5586
    %v5603 = vsub.f32 %v5523, %v5587
    %v5604 = vsub.f32 %v5524, %v5588
    %v5605 = vsub.f32 %v5525, %v5589
    %v5606 = vsub.f32 %v5526, %v5590
    %v5607 = vsub.f32 %v5527, %v5591
    %v5608 = vmul.f32 %v5592, %v5592
    %v5609 = vmul.f32 %v5593, %v5593
    %v5610 = vmul.f32 %v5594, %v5594
    %v5611 = vmul.f32 %v5595, %v5595
    %v5612 = vmul.f32 %v5596, %v5596
    %v5613 = vmul.f32 %v5597, %v5597
    %v5614 = vmul.f32 %v5598, %v5598
    %v5615 = vmul.f32 %v5599, %v5599
    %v5616 = vmul.f32 %v5600, %v5600
    %v5617 = vmul.f32 %v5601, %v5601
    %v5618 = vmul.f32 %v5602, %v5602
    %v5619 = vmul.f32 %v5603, %v5603
    %v5620 = vmul.f32 %v5604, %v5604
    %v5621 = vmul.f32 %v5605, %v5605
    %v5622 = vmul.f32 %v5606, %v5606
    %v5623 = vmul.f32 %v5607, %v5607
    %v5624 = vsel %vm156, %v5608, 0.0
    %5625 = vadd.xlane.f32.xlu0 %v5624
    %v5626 = vpop.xlane.xlu0 %5625
    %v5627 = vsel %vm156, %v5609, 0.0
    %5628 = vadd.xlane.f32.xlu0 %v5627
    %v5629 = vpop.xlane.xlu0 %5628
    %v5630 = vsel %vm156, %v5610, 0.0
    %5631 = vadd.xlane.f32.xlu0 %v5630
    %v5632 = vpop.xlane.xlu0 %5631
    %v5633 = vsel %vm156, %v5611, 0.0
    %5634 = vadd.xlane.f32.xlu0 %v5633
    %v5635 = vpop.xlane.xlu0 %5634
    %v5636 = vsel %vm156, %v5612, 0.0
    %5637 = vadd.xlane.f32.xlu0 %v5636
    %v5638 = vpop.xlane.xlu0 %5637
    %v5639 = vsel %vm156, %v5613, 0.0
    %5640 = vadd.xlane.f32.xlu0 %v5639
    %v5641 = vpop.xlane.xlu0 %5640
    %v5642 = vsel %vm156, %v5614, 0.0
    %5643 = vadd.xlane.f32.xlu0 %v5642
    %v5644 = vpop.xlane.xlu0 %5643
    %v5645 = vsel %vm156, %v5615, 0.0
    %5646 = vadd.xlane.f32.xlu0 %v5645
    %v5647 = vpop.xlane.xlu0 %5646
    %v5648 = vsel %vm156, %v5616, 0.0
    %5649 = vadd.xlane.f32.xlu0 %v5648
    %v5650 = vpop.xlane.xlu0 %5649
    %v5651 = vsel %vm156, %v5617, 0.0
    %5652 = vadd.xlane.f32.xlu0 %v5651
    %v5653 = vpop.xlane.xlu0 %5652
    %v5654 = vsel %vm156, %v5618, 0.0
    %5655 = vadd.xlane.f32.xlu0 %v5654
    %v5656 = vpop.xlane.xlu0 %5655
    %v5657 = vsel %vm156, %v5619, 0.0
    %5658 = vadd.xlane.f32.xlu0 %v5657
    %v5659 = vpop.xlane.xlu0 %5658
    %v5660 = vsel %vm156, %v5620, 0.0
    %5661 = vadd.xlane.f32.xlu0 %v5660
    %v5662 = vpop.xlane.xlu0 %5661
    %v5663 = vsel %vm156, %v5621, 0.0
    %5664 = vadd.xlane.f32.xlu0 %v5663
    %v5665 = vpop.xlane.xlu0 %5664
    %v5666 = vsel %vm156, %v5622, 0.0
    %5667 = vadd.xlane.f32.xlu0 %v5666
    %v5668 = vpop.xlane.xlu0 %5667
    %v5669 = vsel %vm156, %v5623, 0.0
    %5670 = vadd.xlane.f32.xlu0 %v5669
    %v5671 = vpop.xlane.xlu0 %5670
    %v5672 = vmul.f32 %v5626, %v2789
    %v5673 = vmul.f32 %v5629, %v2789
    %v5674 = vmul.f32 %v5632, %v2789
    %v5675 = vmul.f32 %v5635, %v2789
    %v5676 = vmul.f32 %v5638, %v2789
    %v5677 = vmul.f32 %v5641, %v2789
    %v5678 = vmul.f32 %v5644, %v2789
    %v5679 = vmul.f32 %v5647, %v2789
    %v5680 = vmul.f32 %v5650, %v2789
    %v5681 = vmul.f32 %v5653, %v2789
    %v5682 = vmul.f32 %v5656, %v2789
    %v5683 = vmul.f32 %v5659, %v2789
    %v5684 = vmul.f32 %v5662, %v2789
    %v5685 = vmul.f32 %v5665, %v2789
    %v5686 = vmul.f32 %v5668, %v2789
    %v5687 = vmul.f32 %v5671, %v2789
    %v5688 = vadd.f32 %v5672, 1e-05
    %v5689 = vadd.f32 %v5673, 1e-05
    %v5690 = vadd.f32 %v5674, 1e-05
    %v5691 = vadd.f32 %v5675, 1e-05
    %v5692 = vadd.f32 %v5676, 1e-05
    %v5693 = vadd.f32 %v5677, 1e-05
    %v5694 = vadd.f32 %v5678, 1e-05
    %v5695 = vadd.f32 %v5679, 1e-05
    %v5696 = vadd.f32 %v5680, 1e-05
    %v5697 = vadd.f32 %v5681, 1e-05
    %v5698 = vadd.f32 %v5682, 1e-05
    %v5699 = vadd.f32 %v5683, 1e-05
    %v5700 = vadd.f32 %v5684, 1e-05
    %v5701 = vadd.f32 %v5685, 1e-05
    %v5702 = vadd.f32 %v5686, 1e-05
    %v5703 = vadd.f32 %v5687, 1e-05
    %v5704 = vrsqrt.pop %v5688
    %v5705 = vmul.f32 %v5704, %v5688
    %v5706 = vmul.f32 %v5705, %v5704
    %v5707 = vmul.f32 0.5, %v5706
    %v5708 = vsub.f32 1.5, %v5707
    %v5709 = vmul.f32 %v5704, %v5708
    %vm5710 = vweird.f32 %v5688
    %vm5711 = vweird.f32 %v5704
    %vm5712 = vmor %vm5710, %vm5711
    %v5713 = vsel %vm5712, %v5704, %v5709
    %v5714 = vrsqrt.pop %v5689
    %v5715 = vmul.f32 %v5714, %v5689
    %v5716 = vmul.f32 %v5715, %v5714
    %v5717 = vmul.f32 0.5, %v5716
    %v5718 = vsub.f32 1.5, %v5717
    %v5719 = vmul.f32 %v5714, %v5718
    %vm5720 = vweird.f32 %v5689
    %vm5721 = vweird.f32 %v5714
    %vm5722 = vmor %vm5720, %vm5721
    %v5723 = vsel %vm5722, %v5714, %v5719
    %v5724 = vrsqrt.pop %v5690
    %v5725 = vmul.f32 %v5724, %v5690
    %v5726 = vmul.f32 %v5725, %v5724
    %v5727 = vmul.f32 0.5, %v5726
    %v5728 = vsub.f32 1.5, %v5727
    %v5729 = vmul.f32 %v5724, %v5728
    %vm5730 = vweird.f32 %v5690
    %vm5731 = vweird.f32 %v5724
    %vm5732 = vmor %vm5730, %vm5731
    %v5733 = vsel %vm5732, %v5724, %v5729
    %v5734 = vrsqrt.pop %v5691
    %v5735 = vmul.f32 %v5734, %v5691
    %v5736 = vmul.f32 %v5735, %v5734
    %v5737 = vmul.f32 0.5, %v5736
    %v5738 = vsub.f32 1.5, %v5737
    %v5739 = vmul.f32 %v5734, %v5738
    %vm5740 = vweird.f32 %v5691
    %vm5741 = vweird.f32 %v5734
    %vm5742 = vmor %vm5740, %vm5741
    %v5743 = vsel %vm5742, %v5734, %v5739
    %v5744 = vrsqrt.pop %v5692
    %v5745 = vmul.f32 %v5744, %v5692
    %v5746 = vmul.f32 %v5745, %v5744
    %v5747 = vmul.f32 0.5, %v5746
    %v5748 = vsub.f32 1.5, %v5747
    %v5749 = vmul.f32 %v5744, %v5748
    %vm5750 = vweird.f32 %v5692
    %vm5751 = vweird.f32 %v5744
    %vm5752 = vmor %vm5750, %vm5751
    %v5753 = vsel %vm5752, %v5744, %v5749
    %v5754 = vrsqrt.pop %v5693
    %v5755 = vmul.f32 %v5754, %v5693
    %v5756 = vmul.f32 %v5755, %v5754
    %v5757 = vmul.f32 0.5, %v5756
    %v5758 = vsub.f32 1.5, %v5757
    %v5759 = vmul.f32 %v5754, %v5758
    %vm5760 = vweird.f32 %v5693
    %vm5761 = vweird.f32 %v5754
    %vm5762 = vmor %vm5760, %vm5761
    %v5763 = vsel %vm5762, %v5754, %v5759
    %v5764 = vrsqrt.pop %v5694
    %v5765 = vmul.f32 %v5764, %v5694
    %v5766 = vmul.f32 %v5765, %v5764
    %v5767 = vmul.f32 0.5, %v5766
    %v5768 = vsub.f32 1.5, %v5767
    %v5769 = vmul.f32 %v5764, %v5768
    %vm5770 = vweird.f32 %v5694
    %vm5771 = vweird.f32 %v5764
    %vm5772 = vmor %vm5770, %vm5771
    %v5773 = vsel %vm5772, %v5764, %v5769
    %v5774 = vrsqrt.pop %v5695
    %v5775 = vmul.f32 %v5774, %v5695
    %v5776 = vmul.f32 %v5775, %v5774
    %v5777 = vmul.f32 0.5, %v5776
    %v5778 = vsub.f32 1.5, %v5777
    %v5779 = vmul.f32 %v5774, %v5778
    %vm5780 = vweird.f32 %v5695
    %vm5781 = vweird.f32 %v5774
    %vm5782 = vmor %vm5780, %vm5781
    %v5783 = vsel %vm5782, %v5774, %v5779
    %v5784 = vrsqrt.pop %v5696
    %v5785 = vmul.f32 %v5784, %v5696
    %v5786 = vmul.f32 %v5785, %v5784
    %v5787 = vmul.f32 0.5, %v5786
    %v5788 = vsub.f32 1.5, %v5787
    %v5789 = vmul.f32 %v5784, %v5788
    %vm5790 = vweird.f32 %v5696
    %vm5791 = vweird.f32 %v5784
    %vm5792 = vmor %vm5790, %vm5791
    %v5793 = vsel %vm5792, %v5784, %v5789
    %v5794 = vrsqrt.pop %v5697
    %v5795 = vmul.f32 %v5794, %v5697
    %v5796 = vmul.f32 %v5795, %v5794
    %v5797 = vmul.f32 0.5, %v5796
    %v5798 = vsub.f32 1.5, %v5797
    %v5799 = vmul.f32 %v5794, %v5798
    %vm5800 = vweird.f32 %v5697
    %vm5801 = vweird.f32 %v5794
    %vm5802 = vmor %vm5800, %vm5801
    %v5803 = vsel %vm5802, %v5794, %v5799
    %v5804 = vrsqrt.pop %v5698
    %v5805 = vmul.f32 %v5804, %v5698
    %v5806 = vmul.f32 %v5805, %v5804
    %v5807 = vmul.f32 0.5, %v5806
    %v5808 = vsub.f32 1.5, %v5807
    %v5809 = vmul.f32 %v5804, %v5808
    %vm5810 = vweird.f32 %v5698
    %vm5811 = vweird.f32 %v5804
    %vm5812 = vmor %vm5810, %vm5811
    %v5813 = vsel %vm5812, %v5804, %v5809
    %v5814 = vrsqrt.pop %v5699
    %v5815 = vmul.f32 %v5814, %v5699
    %v5816 = vmul.f32 %v5815, %v5814
    %v5817 = vmul.f32 0.5, %v5816
    %v5818 = vsub.f32 1.5, %v5817
    %v5819 = vmul.f32 %v5814, %v5818
    %vm5820 = vweird.f32 %v5699
    %vm5821 = vweird.f32 %v5814
    %vm5822 = vmor %vm5820, %vm5821
    %v5823 = vsel %vm5822, %v5814, %v5819
    %v5824 = vrsqrt.pop %v5700
    %v5825 = vmul.f32 %v5824, %v5700
    %v5826 = vmul.f32 %v5825, %v5824
    %v5827 = vmul.f32 0.5, %v5826
    %v5828 = vsub.f32 1.5, %v5827
    %v5829 = vmul.f32 %v5824, %v5828
    %vm5830 = vweird.f32 %v5700
    %vm5831 = vweird.f32 %v5824
    %vm5832 = vmor %vm5830, %vm5831
    %v5833 = vsel %vm5832, %v5824, %v5829
    %v5834 = vrsqrt.pop %v5701
    %v5835 = vmul.f32 %v5834, %v5701
    %v5836 = vmul.f32 %v5835, %v5834
    %v5837 = vmul.f32 0.5, %v5836
    %v5838 = vsub.f32 1.5, %v5837
    %v5839 = vmul.f32 %v5834, %v5838
    %vm5840 = vweird.f32 %v5701
    %vm5841 = vweird.f32 %v5834
    %vm5842 = vmor %vm5840, %vm5841
    %v5843 = vsel %vm5842, %v5834, %v5839
    %v5844 = vrsqrt.pop %v5702
    %v5845 = vmul.f32 %v5844, %v5702
    %v5846 = vmul.f32 %v5845, %v5844
    %v5847 = vmul.f32 0.5, %v5846
    %v5848 = vsub.f32 1.5, %v5847
    %v5849 = vmul.f32 %v5844, %v5848
    %vm5850 = vweird.f32 %v5702
    %vm5851 = vweird.f32 %v5844
    %vm5852 = vmor %vm5850, %vm5851
    %v5853 = vsel %vm5852, %v5844, %v5849
    %v5854 = vrsqrt.pop %v5703
    %v5855 = vmul.f32 %v5854, %v5703
    %v5856 = vmul.f32 %v5855, %v5854
    %v5857 = vmul.f32 0.5, %v5856
    %v5858 = vsub.f32 1.5, %v5857
    %v5859 = vmul.f32 %v5854, %v5858
    %vm5860 = vweird.f32 %v5703
    %vm5861 = vweird.f32 %v5854
    %vm5862 = vmor %vm5860, %vm5861
    %v5863 = vsel %vm5862, %v5854, %v5859
    %v5864 = vmul.f32 %v5592, %v5713
    %v5865 = vmul.f32 %v5593, %v5723
    %v5866 = vmul.f32 %v5594, %v5733
    %v5867 = vmul.f32 %v5595, %v5743
    %v5868 = vmul.f32 %v5596, %v5753
    %v5869 = vmul.f32 %v5597, %v5763
    %v5870 = vmul.f32 %v5598, %v5773
    %v5871 = vmul.f32 %v5599, %v5783
    %v5872 = vmul.f32 %v5600, %v5793
    %v5873 = vmul.f32 %v5601, %v5803
    %v5874 = vmul.f32 %v5602, %v5813
    %v5875 = vmul.f32 %v5603, %v5823
    %v5876 = vmul.f32 %v5604, %v5833
    %v5877 = vmul.f32 %v5605, %v5843
    %v5878 = vmul.f32 %v5606, %v5853
    %v5879 = vmul.f32 %v5607, %v5863
    %v5880 = vld [vmem:[#allocation13 + $0x5] sm:$0x1]
    %v5881 = vperm.slane %v5880, 0
    %v5882 = vmul.f32 %v5864, %v5881
    %v5883 = vmul.f32 %v5865, %v5881
    %v5884 = vmul.f32 %v5866, %v5881
    %v5885 = vmul.f32 %v5867, %v5881
    %v5886 = vmul.f32 %v5868, %v5881
    %v5887 = vmul.f32 %v5869, %v5881
    %v5888 = vmul.f32 %v5870, %v5881
    %v5889 = vmul.f32 %v5871, %v5881
    %v5890 = vmul.f32 %v5872, %v5881
    %v5891 = vmul.f32 %v5873, %v5881
    %v5892 = vmul.f32 %v5874, %v5881
    %v5893 = vmul.f32 %v5875, %v5881
    %v5894 = vmul.f32 %v5876, %v5881
    %v5895 = vmul.f32 %v5877, %v5881
    %v5896 = vmul.f32 %v5878, %v5881
    %v5897 = vmul.f32 %v5879, %v5881
    %v5898 = vld [vmem:[#allocation13 + $0x6] sm:$0x1]
    %v5899 = vperm.slane %v5898, 0
    %v5900 = vadd.f32 %v5882, %v5899
    %v5901 = vadd.f32 %v5883, %v5899
    %v5902 = vadd.f32 %v5884, %v5899
    %v5903 = vadd.f32 %v5885, %v5899
    %v5904 = vadd.f32 %v5886, %v5899
    %v5905 = vadd.f32 %v5887, %v5899
    %v5906 = vadd.f32 %v5888, %v5899
    %v5907 = vadd.f32 %v5889, %v5899
    %v5908 = vadd.f32 %v5890, %v5899
    %v5909 = vadd.f32 %v5891, %v5899
    %v5910 = vadd.f32 %v5892, %v5899
    %v5911 = vadd.f32 %v5893, %v5899
    %v5912 = vadd.f32 %v5894, %v5899
    %v5913 = vadd.f32 %v5895, %v5899
    %v5914 = vadd.f32 %v5896, %v5899
    %v5915 = vadd.f32 %v5897, %v5899
    %v5916 = vadd.f32 %v5900, %v3770
    %v5917 = vadd.f32 %v5901, %v3771
    %v5918 = vadd.f32 %v5902, %v3772
    %v5919 = vadd.f32 %v5903, %v3773
    %v5920 = vadd.f32 %v5904, %v3774
    %v5921 = vadd.f32 %v5905, %v3775
    %v5922 = vadd.f32 %v5906, %v3776
    %v5923 = vadd.f32 %v5907, %v3777
    %v5924 = vadd.f32 %v5908, %v3778
    %v5925 = vadd.f32 %v5909, %v3779
    %v5926 = vadd.f32 %v5910, %v3780
    %v5927 = vadd.f32 %v5911, %v3781
    %v5928 = vadd.f32 %v5912, %v3782
    %v5929 = vadd.f32 %v5913, %v3783
    %v5930 = vadd.f32 %v5914, %v3784
    %v5931 = vadd.f32 %v5915, %v3785
    %s5932 = scalar_lea.vmem [#allocation11], 192
    %v5933 = vld [vmem:[%s5932] sm:$0xff]
    %v5934 = vld [vmem:[%s5932 + $0x8] sm:$0xff]
    %v5935 = vld [vmem:[%s5932 + $0x10] sm:$0xff]
    %v5936 = vld [vmem:[%s5932 + $0x18] sm:$0xff]
    %v5937 = vld [vmem:[%s5932 + $0x20] sm:$0xff]
    %v5938 = vld [vmem:[%s5932 + $0x28] sm:$0xff]
    %v5939 = vld [vmem:[%s5932 + $0x30] sm:$0xff]
    %v5940 = vld [vmem:[%s5932 + $0x38] sm:$0xff]
    %v5941 = vld [vmem:[#allocation13 + $0x7] sm:$0x1]
    %v5942 = vperm.slane %v5941, 0
    %v5944 = vsel %vm156, %v5916, 0
    %v5947 = vsel %vm156, %v5917, 0
    %v5950 = vsel %vm156, %v5918, 0
    %v5953 = vsel %vm156, %v5919, 0
    %v5956 = vsel %vm156, %v5920, 0
    %v5959 = vsel %vm156, %v5921, 0
    %v5962 = vsel %vm156, %v5922, 0
    %v5965 = vsel %vm156, %v5923, 0
    %v5968 = vsel %vm156, %v5924, 0
    %v5971 = vsel %vm156, %v5925, 0
    %v5974 = vsel %vm156, %v5926, 0
    %v5977 = vsel %vm156, %v5927, 0
    %v5980 = vsel %vm156, %v5928, 0
    %v5983 = vsel %vm156, %v5929, 0
    %v5986 = vsel %vm156, %v5930, 0
    %v5989 = vsel %vm156, %v5931, 0
    %5991 = vmatpush.msra.mxu0 0.0
    %5992 = vmatpush.msra.mxu0 0.0
    %5993 = vmatpush.msra.mxu0 0.0
    %5994 = vmatpush.msra.mxu0 0.0
    %5995 = vmatpush.msra.mxu0 0.0
    %5996 = vmatpush.msra.mxu0 0.0
    %5997 = vmatpush.msra.mxu0 0.0
    %5998 = vmatpush.msra.mxu0 0.0
    %5999 = vmatpush.msra.mxu0 %v5940
    %6000 = vmatpush.msra.mxu0 %v5939
    %6001 = vmatpush.msra.mxu0 %v5938
    %6002 = vmatpush.msra.mxu0 %v5937
    %6003 = vmatpush.msra.mxu0 %v5936
    %6004 = vmatpush.msra.mxu0 %v5935
    %6005 = vmatpush.msra.mxu0 %v5934
    %6006 = vmatpush.msra.mxu0 %v5933
    %6007 = vmatmul.f32.gmra.mxu0 %v5944
    %v6008 = vpop.f32.mrf.mxu0
    %v6009 = vadd.f32 %v5942, %v6008
    %6010 = vmatmul.f32.gmra.mxu0 %v5947
    %v6011 = vpop.f32.mrf.mxu0
    %v6012 = vadd.f32 %v5942, %v6011
    %6013 = vmatmul.f32.gmra.mxu0 %v5950
    %v6014 = vpop.f32.mrf.mxu0
    %v6015 = vadd.f32 %v5942, %v6014
    %6016 = vmatmul.f32.gmra.mxu0 %v5953
    %v6017 = vpop.f32.mrf.mxu0
    %v6018 = vadd.f32 %v5942, %v6017
    %6019 = vmatmul.f32.gmra.mxu0 %v5956
    %v6020 = vpop.f32.mrf.mxu0
    %v6021 = vadd.f32 %v5942, %v6020
    %6022 = vmatmul.f32.gmra.mxu0 %v5959
    %v6023 = vpop.f32.mrf.mxu0
    %v6024 = vadd.f32 %v5942, %v6023
    %6025 = vmatmul.f32.gmra.mxu0 %v5962
    %v6026 = vpop.f32.mrf.mxu0
    %v6027 = vadd.f32 %v5942, %v6026
    %6028 = vmatmul.f32.gmra.mxu0 %v5965
    %v6029 = vpop.f32.mrf.mxu0
    %v6030 = vadd.f32 %v5942, %v6029
    %6031 = vmatmul.f32.gmra.mxu0 %v5968
    %v6032 = vpop.f32.mrf.mxu0
    %v6033 = vadd.f32 %v5942, %v6032
    %6034 = vmatmul.f32.gmra.mxu0 %v5971
    %v6035 = vpop.f32.mrf.mxu0
    %v6036 = vadd.f32 %v5942, %v6035
    %6037 = vmatmul.f32.gmra.mxu0 %v5974
    %v6038 = vpop.f32.mrf.mxu0
    %v6039 = vadd.f32 %v5942, %v6038
    %6040 = vmatmul.f32.gmra.mxu0 %v5977
    %v6041 = vpop.f32.mrf.mxu0
    %v6042 = vadd.f32 %v5942, %v6041
    %6043 = vmatmul.f32.gmra.mxu0 %v5980
    %v6044 = vpop.f32.mrf.mxu0
    %v6045 = vadd.f32 %v5942, %v6044
    %6046 = vmatmul.f32.gmra.mxu0 %v5983
    %v6047 = vpop.f32.mrf.mxu0
    %v6048 = vadd.f32 %v5942, %v6047
    %6049 = vmatmul.f32.gmra.mxu0 %v5986
    %v6050 = vpop.f32.mrf.mxu0
    %v6051 = vadd.f32 %v5942, %v6050
    %6052 = vmatmul.f32.gmra.mxu0 %v5989
    %v6053 = vpop.f32.mrf.mxu0
    %v6054 = vadd.f32 %v5942, %v6053
    %6055 = vdwg.mxu0
    %v6056 = vsel %vm156, %v6009, 0.0
    %6057 = vadd.xlane.f32.xlu0 %v6056
    %v6058 = vpop.xlane.xlu0 %6057
    %v6059 = vsel %vm156, %v6012, 0.0
    %6060 = vadd.xlane.f32.xlu0 %v6059
    %v6061 = vpop.xlane.xlu0 %6060
    %v6062 = vsel %vm156, %v6015, 0.0
    %6063 = vadd.xlane.f32.xlu0 %v6062
    %v6064 = vpop.xlane.xlu0 %6063
    %v6065 = vsel %vm156, %v6018, 0.0
    %6066 = vadd.xlane.f32.xlu0 %v6065
    %v6067 = vpop.xlane.xlu0 %6066
    %v6068 = vsel %vm156, %v6021, 0.0
    %6069 = vadd.xlane.f32.xlu0 %v6068
    %v6070 = vpop.xlane.xlu0 %6069
    %v6071 = vsel %vm156, %v6024, 0.0
    %6072 = vadd.xlane.f32.xlu0 %v6071
    %v6073 = vpop.xlane.xlu0 %6072
    %v6074 = vsel %vm156, %v6027, 0.0
    %6075 = vadd.xlane.f32.xlu0 %v6074
    %v6076 = vpop.xlane.xlu0 %6075
    %v6077 = vsel %vm156, %v6030, 0.0
    %6078 = vadd.xlane.f32.xlu0 %v6077
    %v6079 = vpop.xlane.xlu0 %6078
    %v6080 = vsel %vm156, %v6033, 0.0
    %6081 = vadd.xlane.f32.xlu0 %v6080
    %v6082 = vpop.xlane.xlu0 %6081
    %v6083 = vsel %vm156, %v6036, 0.0
    %6084 = vadd.xlane.f32.xlu0 %v6083
    %v6085 = vpop.xlane.xlu0 %6084
    %v6086 = vsel %vm156, %v6039, 0.0
    %6087 = vadd.xlane.f32.xlu0 %v6086
    %v6088 = vpop.xlane.xlu0 %6087
    %v6089 = vsel %vm156, %v6042, 0.0
    %6090 = vadd.xlane.f32.xlu0 %v6089
    %v6091 = vpop.xlane.xlu0 %6090
    %v6092 = vsel %vm156, %v6045, 0.0
    %6093 = vadd.xlane.f32.xlu0 %v6092
    %v6094 = vpop.xlane.xlu0 %6093
    %v6095 = vsel %vm156, %v6048, 0.0
    %6096 = vadd.xlane.f32.xlu0 %v6095
    %v6097 = vpop.xlane.xlu0 %6096
    %v6098 = vsel %vm156, %v6051, 0.0
    %6099 = vadd.xlane.f32.xlu0 %v6098
    %v6100 = vpop.xlane.xlu0 %6099
    %v6101 = vsel %vm156, %v6054, 0.0
    %6102 = vadd.xlane.f32.xlu0 %v6101
    %v6103 = vpop.xlane.xlu0 %6102
    %v6104 = vmul.f32 %v6058, %v2789
    %v6105 = vmul.f32 %v6061, %v2789
    %v6106 = vmul.f32 %v6064, %v2789
    %v6107 = vmul.f32 %v6067, %v2789
    %v6108 = vmul.f32 %v6070, %v2789
    %v6109 = vmul.f32 %v6073, %v2789
    %v6110 = vmul.f32 %v6076, %v2789
    %v6111 = vmul.f32 %v6079, %v2789
    %v6112 = vmul.f32 %v6082, %v2789
    %v6113 = vmul.f32 %v6085, %v2789
    %v6114 = vmul.f32 %v6088, %v2789
    %v6115 = vmul.f32 %v6091, %v2789
    %v6116 = vmul.f32 %v6094, %v2789
    %v6117 = vmul.f32 %v6097, %v2789
    %v6118 = vmul.f32 %v6100, %v2789
    %v6119 = vmul.f32 %v6103, %v2789
    %v6120 = vsub.f32 %v6009, %v6104
    %v6121 = vsub.f32 %v6012, %v6105
    %v6122 = vsub.f32 %v6015, %v6106
    %v6123 = vsub.f32 %v6018, %v6107
    %v6124 = vsub.f32 %v6021, %v6108
    %v6125 = vsub.f32 %v6024, %v6109
    %v6126 = vsub.f32 %v6027, %v6110
    %v6127 = vsub.f32 %v6030, %v6111
    %v6128 = vsub.f32 %v6033, %v6112
    %v6129 = vsub.f32 %v6036, %v6113
    %v6130 = vsub.f32 %v6039, %v6114
    %v6131 = vsub.f32 %v6042, %v6115
    %v6132 = vsub.f32 %v6045, %v6116
    %v6133 = vsub.f32 %v6048, %v6117
    %v6134 = vsub.f32 %v6051, %v6118
    %v6135 = vsub.f32 %v6054, %v6119
    %v6136 = vmul.f32 %v6120, %v6120
    %v6137 = vmul.f32 %v6121, %v6121
    %v6138 = vmul.f32 %v6122, %v6122
    %v6139 = vmul.f32 %v6123, %v6123
    %v6140 = vmul.f32 %v6124, %v6124
    %v6141 = vmul.f32 %v6125, %v6125
    %v6142 = vmul.f32 %v6126, %v6126
    %v6143 = vmul.f32 %v6127, %v6127
    %v6144 = vmul.f32 %v6128, %v6128
    %v6145 = vmul.f32 %v6129, %v6129
    %v6146 = vmul.f32 %v6130, %v6130
    %v6147 = vmul.f32 %v6131, %v6131
    %v6148 = vmul.f32 %v6132, %v6132
    %v6149 = vmul.f32 %v6133, %v6133
    %v6150 = vmul.f32 %v6134, %v6134
    %v6151 = vmul.f32 %v6135, %v6135
    %v6152 = vsel %vm156, %v6136, 0.0
    %6153 = vadd.xlane.f32.xlu0 %v6152
    %v6154 = vpop.xlane.xlu0 %6153
    %v6155 = vsel %vm156, %v6137, 0.0
    %6156 = vadd.xlane.f32.xlu0 %v6155
    %v6157 = vpop.xlane.xlu0 %6156
    %v6158 = vsel %vm156, %v6138, 0.0
    %6159 = vadd.xlane.f32.xlu0 %v6158
    %v6160 = vpop.xlane.xlu0 %6159
    %v6161 = vsel %vm156, %v6139, 0.0
    %6162 = vadd.xlane.f32.xlu0 %v6161
    %v6163 = vpop.xlane.xlu0 %6162
    %v6164 = vsel %vm156, %v6140, 0.0
    %6165 = vadd.xlane.f32.xlu0 %v6164
    %v6166 = vpop.xlane.xlu0 %6165
    %v6167 = vsel %vm156, %v6141, 0.0
    %6168 = vadd.xlane.f32.xlu0 %v6167
    %v6169 = vpop.xlane.xlu0 %6168
    %v6170 = vsel %vm156, %v6142, 0.0
    %6171 = vadd.xlane.f32.xlu0 %v6170
    %v6172 = vpop.xlane.xlu0 %6171
    %v6173 = vsel %vm156, %v6143, 0.0
    %6174 = vadd.xlane.f32.xlu0 %v6173
    %v6175 = vpop.xlane.xlu0 %6174
    %v6176 = vsel %vm156, %v6144, 0.0
    %6177 = vadd.xlane.f32.xlu0 %v6176
    %v6178 = vpop.xlane.xlu0 %6177
    %v6179 = vsel %vm156, %v6145, 0.0
    %6180 = vadd.xlane.f32.xlu0 %v6179
    %v6181 = vpop.xlane.xlu0 %6180
    %v6182 = vsel %vm156, %v6146, 0.0
    %6183 = vadd.xlane.f32.xlu0 %v6182
    %v6184 = vpop.xlane.xlu0 %6183
    %v6185 = vsel %vm156, %v6147, 0.0
    %6186 = vadd.xlane.f32.xlu0 %v6185
    %v6187 = vpop.xlane.xlu0 %6186
    %v6188 = vsel %vm156, %v6148, 0.0
    %6189 = vadd.xlane.f32.xlu0 %v6188
    %v6190 = vpop.xlane.xlu0 %6189
    %v6191 = vsel %vm156, %v6149, 0.0
    %6192 = vadd.xlane.f32.xlu0 %v6191
    %v6193 = vpop.xlane.xlu0 %6192
    %v6194 = vsel %vm156, %v6150, 0.0
    %6195 = vadd.xlane.f32.xlu0 %v6194
    %v6196 = vpop.xlane.xlu0 %6195
    %v6197 = vsel %vm156, %v6151, 0.0
    %6198 = vadd.xlane.f32.xlu0 %v6197
    %v6199 = vpop.xlane.xlu0 %6198
    %v6200 = vmul.f32 %v6154, %v2789
    %v6201 = vmul.f32 %v6157, %v2789
    %v6202 = vmul.f32 %v6160, %v2789
    %v6203 = vmul.f32 %v6163, %v2789
    %v6204 = vmul.f32 %v6166, %v2789
    %v6205 = vmul.f32 %v6169, %v2789
    %v6206 = vmul.f32 %v6172, %v2789
    %v6207 = vmul.f32 %v6175, %v2789
    %v6208 = vmul.f32 %v6178, %v2789
    %v6209 = vmul.f32 %v6181, %v2789
    %v6210 = vmul.f32 %v6184, %v2789
    %v6211 = vmul.f32 %v6187, %v2789
    %v6212 = vmul.f32 %v6190, %v2789
    %v6213 = vmul.f32 %v6193, %v2789
    %v6214 = vmul.f32 %v6196, %v2789
    %v6215 = vmul.f32 %v6199, %v2789
    %v6216 = vadd.f32 %v6200, 1e-05
    %v6217 = vadd.f32 %v6201, 1e-05
    %v6218 = vadd.f32 %v6202, 1e-05
    %v6219 = vadd.f32 %v6203, 1e-05
    %v6220 = vadd.f32 %v6204, 1e-05
    %v6221 = vadd.f32 %v6205, 1e-05
    %v6222 = vadd.f32 %v6206, 1e-05
    %v6223 = vadd.f32 %v6207, 1e-05
    %v6224 = vadd.f32 %v6208, 1e-05
    %v6225 = vadd.f32 %v6209, 1e-05
    %v6226 = vadd.f32 %v6210, 1e-05
    %v6227 = vadd.f32 %v6211, 1e-05
    %v6228 = vadd.f32 %v6212, 1e-05
    %v6229 = vadd.f32 %v6213, 1e-05
    %v6230 = vadd.f32 %v6214, 1e-05
    %v6231 = vadd.f32 %v6215, 1e-05
    %v6232 = vrsqrt.pop %v6216
    %v6233 = vmul.f32 %v6232, %v6216
    %v6234 = vmul.f32 %v6233, %v6232
    %v6235 = vmul.f32 0.5, %v6234
    %v6236 = vsub.f32 1.5, %v6235
    %v6237 = vmul.f32 %v6232, %v6236
    %vm6238 = vweird.f32 %v6216
    %vm6239 = vweird.f32 %v6232
    %vm6240 = vmor %vm6238, %vm6239
    %v6241 = vsel %vm6240, %v6232, %v6237
    %v6242 = vrsqrt.pop %v6217
    %v6243 = vmul.f32 %v6242, %v6217
    %v6244 = vmul.f32 %v6243, %v6242
    %v6245 = vmul.f32 0.5, %v6244
    %v6246 = vsub.f32 1.5, %v6245
    %v6247 = vmul.f32 %v6242, %v6246
    %vm6248 = vweird.f32 %v6217
    %vm6249 = vweird.f32 %v6242
    %vm6250 = vmor %vm6248, %vm6249
    %v6251 = vsel %vm6250, %v6242, %v6247
    %v6252 = vrsqrt.pop %v6218
    %v6253 = vmul.f32 %v6252, %v6218
    %v6254 = vmul.f32 %v6253, %v6252
    %v6255 = vmul.f32 0.5, %v6254
    %v6256 = vsub.f32 1.5, %v6255
    %v6257 = vmul.f32 %v6252, %v6256
    %vm6258 = vweird.f32 %v6218
    %vm6259 = vweird.f32 %v6252
    %vm6260 = vmor %vm6258, %vm6259
    %v6261 = vsel %vm6260, %v6252, %v6257
    %v6262 = vrsqrt.pop %v6219
    %v6263 = vmul.f32 %v6262, %v6219
    %v6264 = vmul.f32 %v6263, %v6262
    %v6265 = vmul.f32 0.5, %v6264
    %v6266 = vsub.f32 1.5, %v6265
    %v6267 = vmul.f32 %v6262, %v6266
    %vm6268 = vweird.f32 %v6219
    %vm6269 = vweird.f32 %v6262
    %vm6270 = vmor %vm6268, %vm6269
    %v6271 = vsel %vm6270, %v6262, %v6267
    %v6272 = vrsqrt.pop %v6220
    %v6273 = vmul.f32 %v6272, %v6220
    %v6274 = vmul.f32 %v6273, %v6272
    %v6275 = vmul.f32 0.5, %v6274
    %v6276 = vsub.f32 1.5, %v6275
    %v6277 = vmul.f32 %v6272, %v6276
    %vm6278 = vweird.f32 %v6220
    %vm6279 = vweird.f32 %v6272
    %vm6280 = vmor %vm6278, %vm6279
    %v6281 = vsel %vm6280, %v6272, %v6277
    %v6282 = vrsqrt.pop %v6221
    %v6283 = vmul.f32 %v6282, %v6221
    %v6284 = vmul.f32 %v6283, %v6282
    %v6285 = vmul.f32 0.5, %v6284
    %v6286 = vsub.f32 1.5, %v6285
    %v6287 = vmul.f32 %v6282, %v6286
    %vm6288 = vweird.f32 %v6221
    %vm6289 = vweird.f32 %v6282
    %vm6290 = vmor %vm6288, %vm6289
    %v6291 = vsel %vm6290, %v6282, %v6287
    %v6292 = vrsqrt.pop %v6222
    %v6293 = vmul.f32 %v6292, %v6222
    %v6294 = vmul.f32 %v6293, %v6292
    %v6295 = vmul.f32 0.5, %v6294
    %v6296 = vsub.f32 1.5, %v6295
    %v6297 = vmul.f32 %v6292, %v6296
    %vm6298 = vweird.f32 %v6222
    %vm6299 = vweird.f32 %v6292
    %vm6300 = vmor %vm6298, %vm6299
    %v6301 = vsel %vm6300, %v6292, %v6297
    %v6302 = vrsqrt.pop %v6223
    %v6303 = vmul.f32 %v6302, %v6223
    %v6304 = vmul.f32 %v6303, %v6302
    %v6305 = vmul.f32 0.5, %v6304
    %v6306 = vsub.f32 1.5, %v6305
    %v6307 = vmul.f32 %v6302, %v6306
    %vm6308 = vweird.f32 %v6223
    %vm6309 = vweird.f32 %v6302
    %vm6310 = vmor %vm6308, %vm6309
    %v6311 = vsel %vm6310, %v6302, %v6307
    %v6312 = vrsqrt.pop %v6224
    %v6313 = vmul.f32 %v6312, %v6224
    %v6314 = vmul.f32 %v6313, %v6312
    %v6315 = vmul.f32 0.5, %v6314
    %v6316 = vsub.f32 1.5, %v6315
    %v6317 = vmul.f32 %v6312, %v6316
    %vm6318 = vweird.f32 %v6224
    %vm6319 = vweird.f32 %v6312
    %vm6320 = vmor %vm6318, %vm6319
    %v6321 = vsel %vm6320, %v6312, %v6317
    %v6322 = vrsqrt.pop %v6225
    %v6323 = vmul.f32 %v6322, %v6225
    %v6324 = vmul.f32 %v6323, %v6322
    %v6325 = vmul.f32 0.5, %v6324
    %v6326 = vsub.f32 1.5, %v6325
    %v6327 = vmul.f32 %v6322, %v6326
    %vm6328 = vweird.f32 %v6225
    %vm6329 = vweird.f32 %v6322
    %vm6330 = vmor %vm6328, %vm6329
    %v6331 = vsel %vm6330, %v6322, %v6327
    %v6332 = vrsqrt.pop %v6226
    %v6333 = vmul.f32 %v6332, %v6226
    %v6334 = vmul.f32 %v6333, %v6332
    %v6335 = vmul.f32 0.5, %v6334
    %v6336 = vsub.f32 1.5, %v6335
    %v6337 = vmul.f32 %v6332, %v6336
    %vm6338 = vweird.f32 %v6226
    %vm6339 = vweird.f32 %v6332
    %vm6340 = vmor %vm6338, %vm6339
    %v6341 = vsel %vm6340, %v6332, %v6337
    %v6342 = vrsqrt.pop %v6227
    %v6343 = vmul.f32 %v6342, %v6227
    %v6344 = vmul.f32 %v6343, %v6342
    %v6345 = vmul.f32 0.5, %v6344
    %v6346 = vsub.f32 1.5, %v6345
    %v6347 = vmul.f32 %v6342, %v6346
    %vm6348 = vweird.f32 %v6227
    %vm6349 = vweird.f32 %v6342
    %vm6350 = vmor %vm6348, %vm6349
    %v6351 = vsel %vm6350, %v6342, %v6347
    %v6352 = vrsqrt.pop %v6228
    %v6353 = vmul.f32 %v6352, %v6228
    %v6354 = vmul.f32 %v6353, %v6352
    %v6355 = vmul.f32 0.5, %v6354
    %v6356 = vsub.f32 1.5, %v6355
    %v6357 = vmul.f32 %v6352, %v6356
    %vm6358 = vweird.f32 %v6228
    %vm6359 = vweird.f32 %v6352
    %vm6360 = vmor %vm6358, %vm6359
    %v6361 = vsel %vm6360, %v6352, %v6357
    %v6362 = vrsqrt.pop %v6229
    %v6363 = vmul.f32 %v6362, %v6229
    %v6364 = vmul.f32 %v6363, %v6362
    %v6365 = vmul.f32 0.5, %v6364
    %v6366 = vsub.f32 1.5, %v6365
    %v6367 = vmul.f32 %v6362, %v6366
    %vm6368 = vweird.f32 %v6229
    %vm6369 = vweird.f32 %v6362
    %vm6370 = vmor %vm6368, %vm6369
    %v6371 = vsel %vm6370, %v6362, %v6367
    %v6372 = vrsqrt.pop %v6230
    %v6373 = vmul.f32 %v6372, %v6230
    %v6374 = vmul.f32 %v6373, %v6372
    %v6375 = vmul.f32 0.5, %v6374
    %v6376 = vsub.f32 1.5, %v6375
    %v6377 = vmul.f32 %v6372, %v6376
    %vm6378 = vweird.f32 %v6230
    %vm6379 = vweird.f32 %v6372
    %vm6380 = vmor %vm6378, %vm6379
    %v6381 = vsel %vm6380, %v6372, %v6377
    %v6382 = vrsqrt.pop %v6231
    %v6383 = vmul.f32 %v6382, %v6231
    %v6384 = vmul.f32 %v6383, %v6382
    %v6385 = vmul.f32 0.5, %v6384
    %v6386 = vsub.f32 1.5, %v6385
    %v6387 = vmul.f32 %v6382, %v6386
    %vm6388 = vweird.f32 %v6231
    %vm6389 = vweird.f32 %v6382
    %vm6390 = vmor %vm6388, %vm6389
    %v6391 = vsel %vm6390, %v6382, %v6387
    %v6392 = vmul.f32 %v6120, %v6241
    %v6393 = vmul.f32 %v6121, %v6251
    %v6394 = vmul.f32 %v6122, %v6261
    %v6395 = vmul.f32 %v6123, %v6271
    %v6396 = vmul.f32 %v6124, %v6281
    %v6397 = vmul.f32 %v6125, %v6291
    %v6398 = vmul.f32 %v6126, %v6301
    %v6399 = vmul.f32 %v6127, %v6311
    %v6400 = vmul.f32 %v6128, %v6321
    %v6401 = vmul.f32 %v6129, %v6331
    %v6402 = vmul.f32 %v6130, %v6341
    %v6403 = vmul.f32 %v6131, %v6351
    %v6404 = vmul.f32 %v6132, %v6361
    %v6405 = vmul.f32 %v6133, %v6371
    %v6406 = vmul.f32 %v6134, %v6381
    %v6407 = vmul.f32 %v6135, %v6391
    %v6408 = vld [vmem:[#allocation13 + $0x8] sm:$0x1]
    %v6409 = vperm.slane %v6408, 0
    %v6410 = vmul.f32 %v6392, %v6409
    %v6411 = vmul.f32 %v6393, %v6409
    %v6412 = vmul.f32 %v6394, %v6409
    %v6413 = vmul.f32 %v6395, %v6409
    %v6414 = vmul.f32 %v6396, %v6409
    %v6415 = vmul.f32 %v6397, %v6409
    %v6416 = vmul.f32 %v6398, %v6409
    %v6417 = vmul.f32 %v6399, %v6409
    %v6418 = vmul.f32 %v6400, %v6409
    %v6419 = vmul.f32 %v6401, %v6409
    %v6420 = vmul.f32 %v6402, %v6409
    %v6421 = vmul.f32 %v6403, %v6409
    %v6422 = vmul.f32 %v6404, %v6409
    %v6423 = vmul.f32 %v6405, %v6409
    %v6424 = vmul.f32 %v6406, %v6409
    %v6425 = vmul.f32 %v6407, %v6409
    %v6426 = vld [vmem:[#allocation13 + $0x9] sm:$0x1]
    %v6427 = vperm.slane %v6426, 0
    %v6428 = vadd.f32 %v6410, %v6427
    %v6429 = vadd.f32 %v6411, %v6427
    %v6430 = vadd.f32 %v6412, %v6427
    %v6431 = vadd.f32 %v6413, %v6427
    %v6432 = vadd.f32 %v6414, %v6427
    %v6433 = vadd.f32 %v6415, %v6427
    %v6434 = vadd.f32 %v6416, %v6427
    %v6435 = vadd.f32 %v6417, %v6427
    %v6436 = vadd.f32 %v6418, %v6427
    %v6437 = vadd.f32 %v6419, %v6427
    %v6438 = vadd.f32 %v6420, %v6427
    %v6439 = vadd.f32 %v6421, %v6427
    %v6440 = vadd.f32 %v6422, %v6427
    %v6441 = vadd.f32 %v6423, %v6427
    %v6442 = vadd.f32 %v6424, %v6427
    %v6443 = vadd.f32 %v6425, %v6427
    %v6444 = vadd.f32 %v6428, %v5916
    %v6445 = vadd.f32 %v6429, %v5917
    %v6446 = vadd.f32 %v6430, %v5918
    %v6447 = vadd.f32 %v6431, %v5919
    %v6448 = vadd.f32 %v6432, %v5920
    %v6449 = vadd.f32 %v6433, %v5921
    %v6450 = vadd.f32 %v6434, %v5922
    %v6451 = vadd.f32 %v6435, %v5923
    %v6452 = vadd.f32 %v6436, %v5924
    %v6453 = vadd.f32 %v6437, %v5925
    %v6454 = vadd.f32 %v6438, %v5926
    %v6455 = vadd.f32 %v6439, %v5927
    %v6456 = vadd.f32 %v6440, %v5928
    %v6457 = vadd.f32 %v6441, %v5929
    %v6458 = vadd.f32 %v6442, %v5930
    %v6459 = vadd.f32 %v6443, %v5931
    %s6460 = scalar_lea.vmem [#allocation11], 256
    %v6461 = vld [vmem:[%s6460] sm:$0xff]
    %v6462 = vld [vmem:[%s6460 + $0x8] sm:$0xff]
    %v6463 = vld [vmem:[%s6460 + $0x10] sm:$0xff]
    %v6464 = vld [vmem:[%s6460 + $0x18] sm:$0xff]
    %v6465 = vld [vmem:[%s6460 + $0x20] sm:$0xff]
    %v6466 = vld [vmem:[%s6460 + $0x28] sm:$0xff]
    %v6467 = vld [vmem:[%s6460 + $0x30] sm:$0xff]
    %v6468 = vld [vmem:[%s6460 + $0x38] sm:$0xff]
    %v6469 = vld [vmem:[#allocation13 + $0xa] sm:$0x1]
    %v6470 = vperm.slane %v6469, 0
    %v6472 = vsel %vm156, %v6444, 0
    %v6475 = vsel %vm156, %v6445, 0
    %v6478 = vsel %vm156, %v6446, 0
    %v6481 = vsel %vm156, %v6447, 0
    %v6484 = vsel %vm156, %v6448, 0
    %v6487 = vsel %vm156, %v6449, 0
    %v6490 = vsel %vm156, %v6450, 0
    %v6493 = vsel %vm156, %v6451, 0
    %v6496 = vsel %vm156, %v6452, 0
    %v6499 = vsel %vm156, %v6453, 0
    %v6502 = vsel %vm156, %v6454, 0
    %v6505 = vsel %vm156, %v6455, 0
    %v6508 = vsel %vm156, %v6456, 0
    %v6511 = vsel %vm156, %v6457, 0
    %v6514 = vsel %vm156, %v6458, 0
    %v6517 = vsel %vm156, %v6459, 0
    %6519 = vmatpush.msra.mxu0 0.0
    %6520 = vmatpush.msra.mxu0 0.0
    %6521 = vmatpush.msra.mxu0 0.0
    %6522 = vmatpush.msra.mxu0 0.0
    %6523 = vmatpush.msra.mxu0 0.0
    %6524 = vmatpush.msra.mxu0 0.0
    %6525 = vmatpush.msra.mxu0 0.0
    %6526 = vmatpush.msra.mxu0 0.0
    %6527 = vmatpush.msra.mxu0 %v6468
    %6528 = vmatpush.msra.mxu0 %v6467
    %6529 = vmatpush.msra.mxu0 %v6466
    %6530 = vmatpush.msra.mxu0 %v6465
    %6531 = vmatpush.msra.mxu0 %v6464
    %6532 = vmatpush.msra.mxu0 %v6463
    %6533 = vmatpush.msra.mxu0 %v6462
    %6534 = vmatpush.msra.mxu0 %v6461
    %6535 = vmatmul.f32.gmra.mxu0 %v6472
    %v6536 = vpop.f32.mrf.mxu0
    %v6537 = vadd.f32 %v6470, %v6536
    %6538 = vmatmul.f32.gmra.mxu0 %v6475
    %v6539 = vpop.f32.mrf.mxu0
    %v6540 = vadd.f32 %v6470, %v6539
    %6541 = vmatmul.f32.gmra.mxu0 %v6478
    %v6542 = vpop.f32.mrf.mxu0
    %v6543 = vadd.f32 %v6470, %v6542
    %6544 = vmatmul.f32.gmra.mxu0 %v6481
    %v6545 = vpop.f32.mrf.mxu0
    %v6546 = vadd.f32 %v6470, %v6545
    %6547 = vmatmul.f32.gmra.mxu0 %v6484
    %v6548 = vpop.f32.mrf.mxu0
    %v6549 = vadd.f32 %v6470, %v6548
    %6550 = vmatmul.f32.gmra.mxu0 %v6487
    %v6551 = vpop.f32.mrf.mxu0
    %v6552 = vadd.f32 %v6470, %v6551
    %6553 = vmatmul.f32.gmra.mxu0 %v6490
    %v6554 = vpop.f32.mrf.mxu0
    %v6555 = vadd.f32 %v6470, %v6554
    %6556 = vmatmul.f32.gmra.mxu0 %v6493
    %v6557 = vpop.f32.mrf.mxu0
    %v6558 = vadd.f32 %v6470, %v6557
    %6559 = vmatmul.f32.gmra.mxu0 %v6496
    %v6560 = vpop.f32.mrf.mxu0
    %v6561 = vadd.f32 %v6470, %v6560
    %6562 = vmatmul.f32.gmra.mxu0 %v6499
    %v6563 = vpop.f32.mrf.mxu0
    %v6564 = vadd.f32 %v6470, %v6563
    %6565 = vmatmul.f32.gmra.mxu0 %v6502
    %v6566 = vpop.f32.mrf.mxu0
    %v6567 = vadd.f32 %v6470, %v6566
    %6568 = vmatmul.f32.gmra.mxu0 %v6505
    %v6569 = vpop.f32.mrf.mxu0
    %v6570 = vadd.f32 %v6470, %v6569
    %6571 = vmatmul.f32.gmra.mxu0 %v6508
    %v6572 = vpop.f32.mrf.mxu0
    %v6573 = vadd.f32 %v6470, %v6572
    %6574 = vmatmul.f32.gmra.mxu0 %v6511
    %v6575 = vpop.f32.mrf.mxu0
    %v6576 = vadd.f32 %v6470, %v6575
    %6577 = vmatmul.f32.gmra.mxu0 %v6514
    %v6578 = vpop.f32.mrf.mxu0
    %v6579 = vadd.f32 %v6470, %v6578
    %6580 = vmatmul.f32.gmra.mxu0 %v6517
    %v6581 = vpop.f32.mrf.mxu0
    %v6582 = vadd.f32 %v6470, %v6581
    %6583 = vdwg.mxu0
    %6584 = vst.msk [vmem:[#allocation14] sm:$0xff] %vm156, %v6537
    %6585 = vst.msk [vmem:[#allocation14 + $0x8] sm:$0xff] %vm156, %v6540
    %6586 = vst.msk [vmem:[#allocation14 + $0x10] sm:$0xff] %vm156, %v6543
    %6587 = vst.msk [vmem:[#allocation14 + $0x18] sm:$0xff] %vm156, %v6546
    %6588 = vst.msk [vmem:[#allocation14 + $0x20] sm:$0xff] %vm156, %v6549
    %6589 = vst.msk [vmem:[#allocation14 + $0x28] sm:$0xff] %vm156, %v6552
    %6590 = vst.msk [vmem:[#allocation14 + $0x30] sm:$0xff] %vm156, %v6555
    %6591 = vst.msk [vmem:[#allocation14 + $0x38] sm:$0xff] %vm156, %v6558
    %6592 = vst.msk [vmem:[#allocation14 + $0x40] sm:$0xff] %vm156, %v6561
    %6593 = vst.msk [vmem:[#allocation14 + $0x48] sm:$0xff] %vm156, %v6564
    %6594 = vst.msk [vmem:[#allocation14 + $0x50] sm:$0xff] %vm156, %v6567
    %6595 = vst.msk [vmem:[#allocation14 + $0x58] sm:$0xff] %vm156, %v6570
    %6596 = vst.msk [vmem:[#allocation14 + $0x60] sm:$0xff] %vm156, %v6573
    %6597 = vst.msk [vmem:[#allocation14 + $0x68] sm:$0xff] %vm156, %v6576
    %6598 = vst.msk [vmem:[#allocation14 + $0x70] sm:$0xff] %vm156, %v6579
    %6599 = vst.msk [vmem:[#allocation14 + $0x78] sm:$0xff] %vm156, %v6582
    // Predicated region
    $region74: #{transformer_forward.1} parent=1 // pred_check
      _
    $region75: #{transformer_forward.1} parent=1 // pred_check_branch
      %6601 = sbr.rel (0) target = $region77
    $region76: #{transformer_forward.1} parent=1 // pred_region
      %6603 = vsyncadd [#allocation4], 0
      %s6604 = sshll.u32 [#allocation14], 4
      %s6605 = int_to_ptr.vmem [resolvable:$true] %s6604
      %s6606 = sshll.u32 %s11, 4
      %s6607 = int_to_ptr.hbm [resolvable:$true] %s6606
      %6612 = dma.vmem_to_hbm [thread:$0]  %s6605, 2048, %s6607, [#allocation4], 128, 128, 8
    $region77: #{transformer_forward.1} parent=1 // pred_fallthru
      _
    // Predicated region
    $region78: #{transformer_forward.1} parent=1 // pred_check
      _
    $region79: #{transformer_forward.1} parent=1 // pred_check_branch
      %6614 = sbr.rel (0) target = $region81
    $region80: #{transformer_forward.1} parent=1 // pred_region
      %6616 = dma.done [#allocation4], 2048
    $region81: #{transformer_forward.1} parent=1 // pred_fallthru
      _
    %6617 = vsyncpa [#allocation3], 1
    %6618 = vsyncpa [#allocation6], 1
    %6619 = vsyncpa [#allocation9], 1
    %6620 = vsyncpa [#allocation12], 1
    %6621 = vsyncpa [#allocation4], 1

</llo_original>
